<compile_context>
chip_gen: v7x
topology: tpu7x:2x2x1
jax: 0.10.0
libtpu: 0.0.40
codegen_flags: <defaults>
</compile_context>

<pallas_src>
import functools

import jax
import jax.numpy as jnp
from jax import lax
from jax.experimental import pallas as pl
from jax.experimental.pallas import tpu as pltpu


def _node_rk4_kernel(y0_ref, w1_ref, w1t_ref, b1_ref, w2_ref, b2_ref, out_ref,
                     *, t_start, dt, n_steps, unroll):
    """Integrates dy/dt = f(t, y) with fixed-step RK4 on a uniform time grid.

    Layout (lane-dense): y is (D, tm) with points on lanes, features on sublanes.
      y0_ref  : VMEM (D, tm)        initial state tile (transposed)
      w1_ref  : VMEM (H, D)         W1x^T
      w1t_ref : VMEM (H, 1)         time-input weight column
      b1_ref  : VMEM (H, 1)
      w2_ref  : VMEM (D, H)         W2^T
      b2_ref  : VMEM (D, 1)
      out_ref : VMEM (T, D, tm)     trajectory for this row tile
    """
    D, tm = y0_ref.shape
    H = w1_ref.shape[0]

    y0 = y0_ref[...]
    out_ref[0, :, :] = y0

    w1 = w1_ref[...]                                   # (H, D) = W1x^T
    w2 = w2_ref[...]                                   # (D, H) = W2^T
    # Hoist lane-broadcasts once (JAX does not CSE broadcast_in_dim; doing this
    # inside each of the 4*steps f() calls would redo the VPU work every time).
    w1t_b = jnp.broadcast_to(w1t_ref[...], (H, tm))
    b1_b = jnp.broadcast_to(b1_ref[...], (H, tm))
    b2_b = jnp.broadcast_to(b2_ref[...], (D, tm))

    half = dt * 0.5
    sixth = dt / 6.0

    def f(bias, y):
        # bias already contains t*w1t + b1 broadcast to (H, tm).
        h = jnp.tanh(jnp.dot(w1, y, preferred_element_type=jnp.float32) + bias)
        return jnp.dot(w2, h, preferred_element_type=jnp.float32) + b2_b

    def body(i, y):
        i_f = jnp.asarray(i, jnp.float32)
        t0 = t_start + dt * i_f          # works for invert too (dt < 0)
        th = t0 + half
        t1 = t0 + dt
        # One bias per distinct stage time (k2 and k3 share th).
        bias0 = t0 * w1t_b + b1_b
        biash = th * w1t_b + b1_b
        bias1 = t1 * w1t_b + b1_b
        # Progressive accumulation: only `k`, `acc`, `y` live simultaneously.
        k = f(bias0, y)                  # k1
        acc = k
        k = f(biash, y + half * k)       # k2
        acc = acc + 2.0 * k
        k = f(biash, y + half * k)       # k3
        acc = acc + 2.0 * k
        k = f(bias1, y + dt * k)         # k4
        y_new = y + sixth * (acc + k)
        out_ref[i + 1, :, :] = y_new
        return y_new

    lax.fori_loop(0, n_steps, body, y0, unroll=unroll)


def node_block_forward(cxyz, params, end_time, steps, invert, *, tm=128):
    """Pallas equivalent of NODEBlock.forward(cxyz, end_time, steps, invert).

    cxyz: (B, N, D) float32 point/code states.
    Returns: (steps+1, B, N, D) trajectory (same convention as torchdiffeq odeint).
    """
    B, N, D = cxyz.shape
    M = B * N
    w1x, w1t, b1, w2, b2 = params
    H = w1x.shape[1]
    T = steps + 1

    # define_time_steps: uniform grid folded to (t_start, dt) scalar constants.
    dt = float(end_time) / float(steps)
    t_start = 0.0
    if invert:
        t_start = float(end_time)
        dt = -dt

    # Lane-dense transposed layout: points on lanes (last axis, tiled by tm),
    # features on sublanes.
    y0 = cxyz.reshape(M, D).astype(jnp.float32).T       # (D, M)
    Mp = pl.cdiv(M, tm) * tm
    if Mp != M:
        y0 = jnp.pad(y0, ((0, 0), (0, Mp - M)))

    w1_t = jnp.asarray(w1x, jnp.float32).T              # (H, D)
    w2_t = jnp.asarray(w2, jnp.float32).T               # (D, H)
    w1t_c = jnp.asarray(w1t, jnp.float32).reshape(H, 1)
    b1_c = jnp.asarray(b1, jnp.float32).reshape(H, 1)
    b2_c = jnp.asarray(b2, jnp.float32).reshape(D, 1)

    unroll = True if steps <= 16 else 8  # full unroll for small static step counts
    kernel_fn = functools.partial(_node_rk4_kernel, t_start=t_start, dt=dt,
                                  n_steps=steps, unroll=unroll)

    grid = (Mp // tm,)
    out = pl.pallas_call(
        kernel_fn,
        out_shape=jax.ShapeDtypeStruct((T, D, Mp), jnp.float32),
        grid_spec=pltpu.PrefetchScalarGridSpec(
            num_scalar_prefetch=0,
            grid=grid,
            in_specs=[
                pl.BlockSpec((D, tm), lambda i: (0, i)),   # y0 tile (transposed)
                pl.BlockSpec((H, D), lambda i: (0, 0)),    # W1x^T (resident)
                pl.BlockSpec((H, 1), lambda i: (0, 0)),    # w1t
                pl.BlockSpec((H, 1), lambda i: (0, 0)),    # b1
                pl.BlockSpec((D, H), lambda i: (0, 0)),    # W2^T
                pl.BlockSpec((D, 1), lambda i: (0, 0)),    # b2
            ],
            out_specs=pl.BlockSpec((T, D, tm), lambda i: (0, 0, i)),
        ),
        compiler_params=pltpu.CompilerParams(
            dimension_semantics=("parallel",)),
    )(y0, w1_t, w1t_c, b1_c, w2_t, b2_c)

    out = out[:, :, :M]                       # (T, D, M)  drop row padding
    out = jnp.transpose(out, (0, 2, 1))       # (T, M, D)  wrapper-side layout plumbing
    return out.reshape(T, B, N, D)


def _odefunc_ref(t, y, params):
    w1x, w1t, b1, w2, b2 = params
    h = jnp.tanh(y @ w1x + t * w1t + b1)
    return h @ w2 + b2


def _node_block_ref(cxyz, params, end_time, steps, invert):
    """Pure-JAX RK4 reference (same fixed-step grid, standard layout)."""
    B, N, D = cxyz.shape
    times = jnp.linspace(0.0, float(end_time), steps + 1, dtype=jnp.float32)
    if invert:
        times = times[::-1]
    y = cxyz.reshape(B * N, D).astype(jnp.float32)
    traj = [y]
    for i in range(steps):
        t0, t1 = times[i], times[i + 1]
        dt = t1 - t0
        half = dt * 0.5
        k1 = _odefunc_ref(t0, y, params)
        k2 = _odefunc_ref(t0 + half, y + half * k1, params)
        k3 = _odefunc_ref(t0 + half, y + half * k2, params)
        k4 = _odefunc_ref(t1, y + dt * k3, params)
        y = y + (dt / 6.0) * (k1 + 2.0 * k2 + 2.0 * k3 + k4)
        traj.append(y)
    return jnp.stack(traj, axis=0).reshape(steps + 1, B, N, D)


def init_params(key, d, h):
    """Deterministic odefunc (MLP) parameter init."""
    k1, k2, k3, k4, k5 = jax.random.split(key, 5)
    scale1 = 1.0 / jnp.sqrt(d + 1.0)
    scale2 = 1.0 / jnp.sqrt(float(h))
    w1x = jax.random.normal(k1, (d, h), jnp.float32) * scale1
    w1t = jax.random.normal(k2, (1, h), jnp.float32) * scale1
    b1 = jax.random.normal(k3, (1, h), jnp.float32) * 0.01
    w2 = jax.random.normal(k4, (h, d), jnp.float32) * scale2
    b2 = jax.random.normal(k5, (1, d), jnp.float32) * 0.01
    return (w1x, w1t, b1, w2, b2)


if __name__ == "__main__":
    B, N, D, H = 2, 128, 8, 32
    steps = 8
    end_time = 1.0
    invert = False

    key = jax.random.PRNGKey(0)
    k_x, k_p = jax.random.split(key)
    cxyz = jax.random.normal(k_x, (B, N, D), jnp.float32)
    params = init_params(k_p, D, H)

    fwd = jax.jit(functools.partial(node_block_forward,
                                    end_time=end_time, steps=steps, invert=invert))
    out = fwd(cxyz, params)
    out = jax.block_until_ready(out)

    ref = _node_block_ref(cxyz, params, end_time, steps, invert)
    assert out.shape == (steps + 1, B, N, D)
    assert jnp.allclose(out, ref, rtol=1e-4, atol=1e-5), "mismatch vs JAX reference"

    # Also exercise the inverted-time path (dt < 0).
    fwd_inv = jax.jit(functools.partial(node_block_forward,
                                        end_time=end_time, steps=steps, invert=True))
    out_inv = jax.block_until_ready(fwd_inv(cxyz, params))
    ref_inv = _node_block_ref(cxyz, params, end_time, steps, True)
    assert jnp.allclose(out_inv, ref_inv, rtol=1e-4, atol=1e-5), "mismatch (invert)"

    print("KERNEL_OK")
</pallas_src>

<mosaic_0001>
module attributes {stable_mosaic.version = 11 : i64} {
  func.func @_node_rk4_kernel(%arg0: i32, %arg1: memref<8x128xf32, #tpu.memory_space<vmem>>, %arg2: memref<32x8xf32, #tpu.memory_space<vmem>>, %arg3: memref<32x1xf32, #tpu.memory_space<vmem>>, %arg4: memref<32x1xf32, #tpu.memory_space<vmem>>, %arg5: memref<8x32xf32, #tpu.memory_space<vmem>>, %arg6: memref<8x1xf32, #tpu.memory_space<vmem>>, %arg7: memref<9x8x128xf32, #tpu.memory_space<vmem>>) attributes {dimension_semantics = [#tpu.dimension_semantics<parallel>], iteration_bounds = array<i64: 2>, scalar_prefetch = 0 : i64, scratch_operands = 0 : i64, tpu.core_type = #tpu.core_type<tc>, window_params = [{transform_indices = @transform_0, window_bounds = array<i64: 8, 128>}, {pipeline_mode = #tpu.pipeline_mode<synchronous>, transform_indices = @transform_1, window_bounds = array<i64: 32, 8>}, {pipeline_mode = #tpu.pipeline_mode<synchronous>, transform_indices = @transform_2, window_bounds = array<i64: 32, 1>}, {pipeline_mode = #tpu.pipeline_mode<synchronous>, transform_indices = @transform_3, window_bounds = array<i64: 32, 1>}, {pipeline_mode = #tpu.pipeline_mode<synchronous>, transform_indices = @transform_4, window_bounds = array<i64: 8, 32>}, {pipeline_mode = #tpu.pipeline_mode<synchronous>, transform_indices = @transform_5, window_bounds = array<i64: 8, 1>}, {transform_indices = @transform_6, window_bounds = array<i64: 9, 8, 128>}]} {
    %c0 = arith.constant 0 : index
    %c0_0 = arith.constant 0 : index
    %0 = vector.load %arg1[%c0, %c0_0] : memref<8x128xf32, #tpu.memory_space<vmem>>, vector<8x128xf32>
    %c0_1 = arith.constant 0 : index
    %c0_2 = arith.constant 0 : index
    %c0_3 = arith.constant 0 : index
    %1 = vector.load %arg7[%c0_1, %c0_2, %c0_3] : memref<9x8x128xf32, #tpu.memory_space<vmem>>, vector<1x8x128xf32>
    %2 = vector.shape_cast %1 : vector<1x8x128xf32> to vector<8x128xf32>
    %3 = vector.shape_cast %0 : vector<8x128xf32> to vector<1x8x128xf32>
    tpu.vector_store %arg7[%c0_1, %c0_2, %c0_3], %3 {strides = array<i32>} : memref<9x8x128xf32, #tpu.memory_space<vmem>>, vector<1x8x128xf32>,
    %c0_4 = arith.constant 0 : index
    %c0_5 = arith.constant 0 : index
    %4 = vector.load %arg2[%c0_4, %c0_5] : memref<32x8xf32, #tpu.memory_space<vmem>>, vector<32x8xf32>
    %c0_6 = arith.constant 0 : index
    %c0_7 = arith.constant 0 : index
    %5 = vector.load %arg5[%c0_6, %c0_7] : memref<8x32xf32, #tpu.memory_space<vmem>>, vector<8x32xf32>
    %c0_8 = arith.constant 0 : index
    %c0_9 = arith.constant 0 : index
    %6 = vector.load %arg3[%c0_8, %c0_9] : memref<32x1xf32, #tpu.memory_space<vmem>>, vector<32x1xf32>
    %7 = vector.shape_cast %6 : vector<32x1xf32> to vector<32x1xf32>
    %8 = vector.broadcast %7 : vector<32x1xf32> to vector<32x128xf32>
    %c0_10 = arith.constant 0 : index
    %c0_11 = arith.constant 0 : index
    %9 = vector.load %arg4[%c0_10, %c0_11] : memref<32x1xf32, #tpu.memory_space<vmem>>, vector<32x1xf32>
    %10 = vector.shape_cast %9 : vector<32x1xf32> to vector<32x1xf32>
    %11 = vector.broadcast %10 : vector<32x1xf32> to vector<32x128xf32>
    %c0_12 = arith.constant 0 : index
    %c0_13 = arith.constant 0 : index
    %12 = vector.load %arg6[%c0_12, %c0_13] : memref<8x1xf32, #tpu.memory_space<vmem>>, vector<8x1xf32>
    %13 = vector.shape_cast %12 : vector<8x1xf32> to vector<8x1xf32>
    %14 = vector.broadcast %13 : vector<8x1xf32> to vector<8x128xf32>
    %c0_i32 = arith.constant 0 : i32
    %15 = arith.sitofp %c0_i32 : i32 to f32
    %cst = arith.constant 1.250000e-01 : f32
    %16 = arith.mulf %cst, %15 : f32
    %cst_14 = arith.constant 0.000000e+00 : f32
    %17 = arith.addf %cst_14, %16 : f32
    %cst_15 = arith.constant 6.250000e-02 : f32
    %18 = arith.addf %17, %cst_15 : f32
    %cst_16 = arith.constant 1.250000e-01 : f32
    %19 = arith.addf %17, %cst_16 : f32
    %20 = vector.broadcast %17 : f32 to vector<32x128xf32>
    %21 = arith.mulf %20, %8 : vector<32x128xf32>
    %22 = arith.addf %21, %11 : vector<32x128xf32>
    %23 = vector.broadcast %18 : f32 to vector<32x128xf32>
    %24 = arith.mulf %23, %8 : vector<32x128xf32>
    %25 = arith.addf %24, %11 : vector<32x128xf32>
    %26 = vector.broadcast %19 : f32 to vector<32x128xf32>
    %27 = arith.mulf %26, %8 : vector<32x128xf32>
    %28 = arith.addf %27, %11 : vector<32x128xf32>
    %cst_17 = arith.constant dense<0.000000e+00> : vector<32x128xf32>
    %29 = tpu.matmul %4, %0, %cst_17 {dimension_numbers = #tpu.dot_dimension_numbers<[1], [0], [0], [1], [0, 0, 1, 1], [], []>} : vector<32x8xf32>, vector<8x128xf32>, vector<32x128xf32> -> vector<32x128xf32>
    %30 = arith.addf %29, %22 : vector<32x128xf32>
    %31 = math.tanh %30 : vector<32x128xf32>
    %cst_18 = arith.constant dense<0.000000e+00> : vector<8x128xf32>
    %32 = tpu.matmul %5, %31, %cst_18 {dimension_numbers = #tpu.dot_dimension_numbers<[1], [0], [0], [1], [0, 0, 1, 1], [], []>} : vector<8x32xf32>, vector<32x128xf32>, vector<8x128xf32> -> vector<8x128xf32>
    %33 = arith.addf %32, %14 : vector<8x128xf32>
    %cst_19 = arith.constant 6.250000e-02 : f32
    %34 = vector.broadcast %cst_19 : f32 to vector<8x128xf32>
    %35 = arith.mulf %34, %33 : vector<8x128xf32>
    %36 = arith.addf %0, %35 : vector<8x128xf32>
    %cst_20 = arith.constant dense<0.000000e+00> : vector<32x128xf32>
    %37 = tpu.matmul %4, %36, %cst_20 {dimension_numbers = #tpu.dot_dimension_numbers<[1], [0], [0], [1], [0, 0, 1, 1], [], []>} : vector<32x8xf32>, vector<8x128xf32>, vector<32x128xf32> -> vector<32x128xf32>
    %38 = arith.addf %37, %25 : vector<32x128xf32>
    %39 = math.tanh %38 : vector<32x128xf32>
    %cst_21 = arith.constant dense<0.000000e+00> : vector<8x128xf32>
    %40 = tpu.matmul %5, %39, %cst_21 {dimension_numbers = #tpu.dot_dimension_numbers<[1], [0], [0], [1], [0, 0, 1, 1], [], []>} : vector<8x32xf32>, vector<32x128xf32>, vector<8x128xf32> -> vector<8x128xf32>
    %41 = arith.addf %40, %14 : vector<8x128xf32>
    %cst_22 = arith.constant 2.000000e+00 : f32
    %42 = vector.broadcast %cst_22 : f32 to vector<8x128xf32>
    %43 = arith.mulf %42, %41 : vector<8x128xf32>
    %44 = arith.addf %33, %43 : vector<8x128xf32>
    %cst_23 = arith.constant 6.250000e-02 : f32
    %45 = vector.broadcast %cst_23 : f32 to vector<8x128xf32>
    %46 = arith.mulf %45, %41 : vector<8x128xf32>
    %47 = arith.addf %0, %46 : vector<8x128xf32>
    %cst_24 = arith.constant dense<0.000000e+00> : vector<32x128xf32>
    %48 = tpu.matmul %4, %47, %cst_24 {dimension_numbers = #tpu.dot_dimension_numbers<[1], [0], [0], [1], [0, 0, 1, 1], [], []>} : vector<32x8xf32>, vector<8x128xf32>, vector<32x128xf32> -> vector<32x128xf32>
    %49 = arith.addf %48, %25 : vector<32x128xf32>
    %50 = math.tanh %49 : vector<32x128xf32>
    %cst_25 = arith.constant dense<0.000000e+00> : vector<8x128xf32>
    %51 = tpu.matmul %5, %50, %cst_25 {dimension_numbers = #tpu.dot_dimension_numbers<[1], [0], [0], [1], [0, 0, 1, 1], [], []>} : vector<8x32xf32>, vector<32x128xf32>, vector<8x128xf32> -> vector<8x128xf32>
    %52 = arith.addf %51, %14 : vector<8x128xf32>
    %cst_26 = arith.constant 2.000000e+00 : f32
    %53 = vector.broadcast %cst_26 : f32 to vector<8x128xf32>
    %54 = arith.mulf %53, %52 : vector<8x128xf32>
    %55 = arith.addf %44, %54 : vector<8x128xf32>
    %cst_27 = arith.constant 1.250000e-01 : f32
    %56 = vector.broadcast %cst_27 : f32 to vector<8x128xf32>
    %57 = arith.mulf %56, %52 : vector<8x128xf32>
    %58 = arith.addf %0, %57 : vector<8x128xf32>
    %cst_28 = arith.constant dense<0.000000e+00> : vector<32x128xf32>
    %59 = tpu.matmul %4, %58, %cst_28 {dimension_numbers = #tpu.dot_dimension_numbers<[1], [0], [0], [1], [0, 0, 1, 1], [], []>} : vector<32x8xf32>, vector<8x128xf32>, vector<32x128xf32> -> vector<32x128xf32>
    %60 = arith.addf %59, %28 : vector<32x128xf32>
    %61 = math.tanh %60 : vector<32x128xf32>
    %cst_29 = arith.constant dense<0.000000e+00> : vector<8x128xf32>
    %62 = tpu.matmul %5, %61, %cst_29 {dimension_numbers = #tpu.dot_dimension_numbers<[1], [0], [0], [1], [0, 0, 1, 1], [], []>} : vector<8x32xf32>, vector<32x128xf32>, vector<8x128xf32> -> vector<8x128xf32>
    %63 = arith.addf %62, %14 : vector<8x128xf32>
    %64 = arith.addf %55, %63 : vector<8x128xf32>
    %cst_30 = arith.constant 0.020833334 : f32
    %65 = vector.broadcast %cst_30 : f32 to vector<8x128xf32>
    %66 = arith.mulf %65, %64 : vector<8x128xf32>
    %67 = arith.addf %0, %66 : vector<8x128xf32>
    %c1_i32 = arith.constant 1 : i32
    %68 = arith.addi %c0_i32, %c1_i32 : i32
    %69 = arith.index_cast %68 : i32 to index
    %c0_31 = arith.constant 0 : index
    %c0_32 = arith.constant 0 : index
    %70 = vector.load %arg7[%69, %c0_31, %c0_32] : memref<9x8x128xf32, #tpu.memory_space<vmem>>, vector<1x8x128xf32>
    %71 = vector.shape_cast %70 : vector<1x8x128xf32> to vector<8x128xf32>
    %72 = vector.shape_cast %67 : vector<8x128xf32> to vector<1x8x128xf32>
    tpu.vector_store %arg7[%69, %c0_31, %c0_32], %72 {strides = array<i32>} : memref<9x8x128xf32, #tpu.memory_space<vmem>>, vector<1x8x128xf32>,
    %c1_i32_33 = arith.constant 1 : i32
    %73 = arith.sitofp %c1_i32_33 : i32 to f32
    %cst_34 = arith.constant 1.250000e-01 : f32
    %74 = arith.mulf %cst_34, %73 : f32
    %cst_35 = arith.constant 0.000000e+00 : f32
    %75 = arith.addf %cst_35, %74 : f32
    %cst_36 = arith.constant 6.250000e-02 : f32
    %76 = arith.addf %75, %cst_36 : f32
    %cst_37 = arith.constant 1.250000e-01 : f32
    %77 = arith.addf %75, %cst_37 : f32
    %78 = vector.broadcast %75 : f32 to vector<32x128xf32>
    %79 = arith.mulf %78, %8 : vector<32x128xf32>
    %80 = arith.addf %79, %11 : vector<32x128xf32>
    %81 = vector.broadcast %76 : f32 to vector<32x128xf32>
    %82 = arith.mulf %81, %8 : vector<32x128xf32>
    %83 = arith.addf %82, %11 : vector<32x128xf32>
    %84 = vector.broadcast %77 : f32 to vector<32x128xf32>
    %85 = arith.mulf %84, %8 : vector<32x128xf32>
    %86 = arith.addf %85, %11 : vector<32x128xf32>
    %cst_38 = arith.constant dense<0.000000e+00> : vector<32x128xf32>
    %87 = tpu.matmul %4, %67, %cst_38 {dimension_numbers = #tpu.dot_dimension_numbers<[1], [0], [0], [1], [0, 0, 1, 1], [], []>} : vector<32x8xf32>, vector<8x128xf32>, vector<32x128xf32> -> vector<32x128xf32>
    %88 = arith.addf %87, %80 : vector<32x128xf32>
    %89 = math.tanh %88 : vector<32x128xf32>
    %cst_39 = arith.constant dense<0.000000e+00> : vector<8x128xf32>
    %90 = tpu.matmul %5, %89, %cst_39 {dimension_numbers = #tpu.dot_dimension_numbers<[1], [0], [0], [1], [0, 0, 1, 1], [], []>} : vector<8x32xf32>, vector<32x128xf32>, vector<8x128xf32> -> vector<8x128xf32>
    %91 = arith.addf %90, %14 : vector<8x128xf32>
    %cst_40 = arith.constant 6.250000e-02 : f32
    %92 = vector.broadcast %cst_40 : f32 to vector<8x128xf32>
    %93 = arith.mulf %92, %91 : vector<8x128xf32>
    %94 = arith.addf %67, %93 : vector<8x128xf32>
    %cst_41 = arith.constant dense<0.000000e+00> : vector<32x128xf32>
    %95 = tpu.matmul %4, %94, %cst_41 {dimension_numbers = #tpu.dot_dimension_numbers<[1], [0], [0], [1], [0, 0, 1, 1], [], []>} : vector<32x8xf32>, vector<8x128xf32>, vector<32x128xf32> -> vector<32x128xf32>
    %96 = arith.addf %95, %83 : vector<32x128xf32>
    %97 = math.tanh %96 : vector<32x128xf32>
    %cst_42 = arith.constant dense<0.000000e+00> : vector<8x128xf32>
    %98 = tpu.matmul %5, %97, %cst_42 {dimension_numbers = #tpu.dot_dimension_numbers<[1], [0], [0], [1], [0, 0, 1, 1], [], []>} : vector<8x32xf32>, vector<32x128xf32>, vector<8x128xf32> -> vector<8x128xf32>
    %99 = arith.addf %98, %14 : vector<8x128xf32>
    %cst_43 = arith.constant 2.000000e+00 : f32
    %100 = vector.broadcast %cst_43 : f32 to vector<8x128xf32>
    %101 = arith.mulf %100, %99 : vector<8x128xf32>
    %102 = arith.addf %91, %101 : vector<8x128xf32>
    %cst_44 = arith.constant 6.250000e-02 : f32
    %103 = vector.broadcast %cst_44 : f32 to vector<8x128xf32>
    %104 = arith.mulf %103, %99 : vector<8x128xf32>
    %105 = arith.addf %67, %104 : vector<8x128xf32>
    %cst_45 = arith.constant dense<0.000000e+00> : vector<32x128xf32>
    %106 = tpu.matmul %4, %105, %cst_45 {dimension_numbers = #tpu.dot_dimension_numbers<[1], [0], [0], [1], [0, 0, 1, 1], [], []>} : vector<32x8xf32>, vector<8x128xf32>, vector<32x128xf32> -> vector<32x128xf32>
    %107 = arith.addf %106, %83 : vector<32x128xf32>
    %108 = math.tanh %107 : vector<32x128xf32>
    %cst_46 = arith.constant dense<0.000000e+00> : vector<8x128xf32>
    %109 = tpu.matmul %5, %108, %cst_46 {dimension_numbers = #tpu.dot_dimension_numbers<[1], [0], [0], [1], [0, 0, 1, 1], [], []>} : vector<8x32xf32>, vector<32x128xf32>, vector<8x128xf32> -> vector<8x128xf32>
    %110 = arith.addf %109, %14 : vector<8x128xf32>
    %cst_47 = arith.constant 2.000000e+00 : f32
    %111 = vector.broadcast %cst_47 : f32 to vector<8x128xf32>
    %112 = arith.mulf %111, %110 : vector<8x128xf32>
    %113 = arith.addf %102, %112 : vector<8x128xf32>
    %cst_48 = arith.constant 1.250000e-01 : f32
    %114 = vector.broadcast %cst_48 : f32 to vector<8x128xf32>
    %115 = arith.mulf %114, %110 : vector<8x128xf32>
    %116 = arith.addf %67, %115 : vector<8x128xf32>
    %cst_49 = arith.constant dense<0.000000e+00> : vector<32x128xf32>
    %117 = tpu.matmul %4, %116, %cst_49 {dimension_numbers = #tpu.dot_dimension_numbers<[1], [0], [0], [1], [0, 0, 1, 1], [], []>} : vector<32x8xf32>, vector<8x128xf32>, vector<32x128xf32> -> vector<32x128xf32>
    %118 = arith.addf %117, %86 : vector<32x128xf32>
    %119 = math.tanh %118 : vector<32x128xf32>
    %cst_50 = arith.constant dense<0.000000e+00> : vector<8x128xf32>
    %120 = tpu.matmul %5, %119, %cst_50 {dimension_numbers = #tpu.dot_dimension_numbers<[1], [0], [0], [1], [0, 0, 1, 1], [], []>} : vector<8x32xf32>, vector<32x128xf32>, vector<8x128xf32> -> vector<8x128xf32>
    %121 = arith.addf %120, %14 : vector<8x128xf32>
    %122 = arith.addf %113, %121 : vector<8x128xf32>
    %cst_51 = arith.constant 0.020833334 : f32
    %123 = vector.broadcast %cst_51 : f32 to vector<8x128xf32>
    %124 = arith.mulf %123, %122 : vector<8x128xf32>
    %125 = arith.addf %67, %124 : vector<8x128xf32>
    %c1_i32_52 = arith.constant 1 : i32
    %126 = arith.addi %c1_i32_33, %c1_i32_52 : i32
    %127 = arith.index_cast %126 : i32 to index
    %c0_53 = arith.constant 0 : index
    %c0_54 = arith.constant 0 : index
    %128 = vector.load %arg7[%127, %c0_53, %c0_54] : memref<9x8x128xf32, #tpu.memory_space<vmem>>, vector<1x8x128xf32>
    %129 = vector.shape_cast %128 : vector<1x8x128xf32> to vector<8x128xf32>
    %130 = vector.shape_cast %125 : vector<8x128xf32> to vector<1x8x128xf32>
    tpu.vector_store %arg7[%127, %c0_53, %c0_54], %130 {strides = array<i32>} : memref<9x8x128xf32, #tpu.memory_space<vmem>>, vector<1x8x128xf32>,
    %c2_i32 = arith.constant 2 : i32
    %131 = arith.sitofp %c2_i32 : i32 to f32
    %cst_55 = arith.constant 1.250000e-01 : f32
    %132 = arith.mulf %cst_55, %131 : f32
    %cst_56 = arith.constant 0.000000e+00 : f32
    %133 = arith.addf %cst_56, %132 : f32
    %cst_57 = arith.constant 6.250000e-02 : f32
    %134 = arith.addf %133, %cst_57 : f32
    %cst_58 = arith.constant 1.250000e-01 : f32
    %135 = arith.addf %133, %cst_58 : f32
    %136 = vector.broadcast %133 : f32 to vector<32x128xf32>
    %137 = arith.mulf %136, %8 : vector<32x128xf32>
    %138 = arith.addf %137, %11 : vector<32x128xf32>
    %139 = vector.broadcast %134 : f32 to vector<32x128xf32>
    %140 = arith.mulf %139, %8 : vector<32x128xf32>
    %141 = arith.addf %140, %11 : vector<32x128xf32>
    %142 = vector.broadcast %135 : f32 to vector<32x128xf32>
    %143 = arith.mulf %142, %8 : vector<32x128xf32>
    %144 = arith.addf %143, %11 : vector<32x128xf32>
    %cst_59 = arith.constant dense<0.000000e+00> : vector<32x128xf32>
    %145 = tpu.matmul %4, %125, %cst_59 {dimension_numbers = #tpu.dot_dimension_numbers<[1], [0], [0], [1], [0, 0, 1, 1], [], []>} : vector<32x8xf32>, vector<8x128xf32>, vector<32x128xf32> -> vector<32x128xf32>
    %146 = arith.addf %145, %138 : vector<32x128xf32>
    %147 = math.tanh %146 : vector<32x128xf32>
    %cst_60 = arith.constant dense<0.000000e+00> : vector<8x128xf32>
    %148 = tpu.matmul %5, %147, %cst_60 {dimension_numbers = #tpu.dot_dimension_numbers<[1], [0], [0], [1], [0, 0, 1, 1], [], []>} : vector<8x32xf32>, vector<32x128xf32>, vector<8x128xf32> -> vector<8x128xf32>
    %149 = arith.addf %148, %14 : vector<8x128xf32>
    %cst_61 = arith.constant 6.250000e-02 : f32
    %150 = vector.broadcast %cst_61 : f32 to vector<8x128xf32>
    %151 = arith.mulf %150, %149 : vector<8x128xf32>
    %152 = arith.addf %125, %151 : vector<8x128xf32>
    %cst_62 = arith.constant dense<0.000000e+00> : vector<32x128xf32>
    %153 = tpu.matmul %4, %152, %cst_62 {dimension_numbers = #tpu.dot_dimension_numbers<[1], [0], [0], [1], [0, 0, 1, 1], [], []>} : vector<32x8xf32>, vector<8x128xf32>, vector<32x128xf32> -> vector<32x128xf32>
    %154 = arith.addf %153, %141 : vector<32x128xf32>
    %155 = math.tanh %154 : vector<32x128xf32>
    %cst_63 = arith.constant dense<0.000000e+00> : vector<8x128xf32>
    %156 = tpu.matmul %5, %155, %cst_63 {dimension_numbers = #tpu.dot_dimension_numbers<[1], [0], [0], [1], [0, 0, 1, 1], [], []>} : vector<8x32xf32>, vector<32x128xf32>, vector<8x128xf32> -> vector<8x128xf32>
    %157 = arith.addf %156, %14 : vector<8x128xf32>
    %cst_64 = arith.constant 2.000000e+00 : f32
    %158 = vector.broadcast %cst_64 : f32 to vector<8x128xf32>
    %159 = arith.mulf %158, %157 : vector<8x128xf32>
    %160 = arith.addf %149, %159 : vector<8x128xf32>
    %cst_65 = arith.constant 6.250000e-02 : f32
    %161 = vector.broadcast %cst_65 : f32 to vector<8x128xf32>
    %162 = arith.mulf %161, %157 : vector<8x128xf32>
    %163 = arith.addf %125, %162 : vector<8x128xf32>
    %cst_66 = arith.constant dense<0.000000e+00> : vector<32x128xf32>
    %164 = tpu.matmul %4, %163, %cst_66 {dimension_numbers = #tpu.dot_dimension_numbers<[1], [0], [0], [1], [0, 0, 1, 1], [], []>} : vector<32x8xf32>, vector<8x128xf32>, vector<32x128xf32> -> vector<32x128xf32>
    %165 = arith.addf %164, %141 : vector<32x128xf32>
    %166 = math.tanh %165 : vector<32x128xf32>
    %cst_67 = arith.constant dense<0.000000e+00> : vector<8x128xf32>
    %167 = tpu.matmul %5, %166, %cst_67 {dimension_numbers = #tpu.dot_dimension_numbers<[1], [0], [0], [1], [0, 0, 1, 1], [], []>} : vector<8x32xf32>, vector<32x128xf32>, vector<8x128xf32> -> vector<8x128xf32>
    %168 = arith.addf %167, %14 : vector<8x128xf32>
    %cst_68 = arith.constant 2.000000e+00 : f32
    %169 = vector.broadcast %cst_68 : f32 to vector<8x128xf32>
    %170 = arith.mulf %169, %168 : vector<8x128xf32>
    %171 = arith.addf %160, %170 : vector<8x128xf32>
    %cst_69 = arith.constant 1.250000e-01 : f32
    %172 = vector.broadcast %cst_69 : f32 to vector<8x128xf32>
    %173 = arith.mulf %172, %168 : vector<8x128xf32>
    %174 = arith.addf %125, %173 : vector<8x128xf32>
    %cst_70 = arith.constant dense<0.000000e+00> : vector<32x128xf32>
    %175 = tpu.matmul %4, %174, %cst_70 {dimension_numbers = #tpu.dot_dimension_numbers<[1], [0], [0], [1], [0, 0, 1, 1], [], []>} : vector<32x8xf32>, vector<8x128xf32>, vector<32x128xf32> -> vector<32x128xf32>
    %176 = arith.addf %175, %144 : vector<32x128xf32>
    %177 = math.tanh %176 : vector<32x128xf32>
    %cst_71 = arith.constant dense<0.000000e+00> : vector<8x128xf32>
    %178 = tpu.matmul %5, %177, %cst_71 {dimension_numbers = #tpu.dot_dimension_numbers<[1], [0], [0], [1], [0, 0, 1, 1], [], []>} : vector<8x32xf32>, vector<32x128xf32>, vector<8x128xf32> -> vector<8x128xf32>
    %179 = arith.addf %178, %14 : vector<8x128xf32>
    %180 = arith.addf %171, %179 : vector<8x128xf32>
    %cst_72 = arith.constant 0.020833334 : f32
    %181 = vector.broadcast %cst_72 : f32 to vector<8x128xf32>
    %182 = arith.mulf %181, %180 : vector<8x128xf32>
    %183 = arith.addf %125, %182 : vector<8x128xf32>
    %c1_i32_73 = arith.constant 1 : i32
    %184 = arith.addi %c2_i32, %c1_i32_73 : i32
    %185 = arith.index_cast %184 : i32 to index
    %c0_74 = arith.constant 0 : index
    %c0_75 = arith.constant 0 : index
    %186 = vector.load %arg7[%185, %c0_74, %c0_75] : memref<9x8x128xf32, #tpu.memory_space<vmem>>, vector<1x8x128xf32>
    %187 = vector.shape_cast %186 : vector<1x8x128xf32> to vector<8x128xf32>
    %188 = vector.shape_cast %183 : vector<8x128xf32> to vector<1x8x128xf32>
    tpu.vector_store %arg7[%185, %c0_74, %c0_75], %188 {strides = array<i32>} : memref<9x8x128xf32, #tpu.memory_space<vmem>>, vector<1x8x128xf32>,
    %c3_i32 = arith.constant 3 : i32
    %189 = arith.sitofp %c3_i32 : i32 to f32
    %cst_76 = arith.constant 1.250000e-01 : f32
    %190 = arith.mulf %cst_76, %189 : f32
    %cst_77 = arith.constant 0.000000e+00 : f32
    %191 = arith.addf %cst_77, %190 : f32
    %cst_78 = arith.constant 6.250000e-02 : f32
    %192 = arith.addf %191, %cst_78 : f32
    %cst_79 = arith.constant 1.250000e-01 : f32
    %193 = arith.addf %191, %cst_79 : f32
    %194 = vector.broadcast %191 : f32 to vector<32x128xf32>
    %195 = arith.mulf %194, %8 : vector<32x128xf32>
    %196 = arith.addf %195, %11 : vector<32x128xf32>
    %197 = vector.broadcast %192 : f32 to vector<32x128xf32>
    %198 = arith.mulf %197, %8 : vector<32x128xf32>
    %199 = arith.addf %198, %11 : vector<32x128xf32>
    %200 = vector.broadcast %193 : f32 to vector<32x128xf32>
    %201 = arith.mulf %200, %8 : vector<32x128xf32>
    %202 = arith.addf %201, %11 : vector<32x128xf32>
    %cst_80 = arith.constant dense<0.000000e+00> : vector<32x128xf32>
    %203 = tpu.matmul %4, %183, %cst_80 {dimension_numbers = #tpu.dot_dimension_numbers<[1], [0], [0], [1], [0, 0, 1, 1], [], []>} : vector<32x8xf32>, vector<8x128xf32>, vector<32x128xf32> -> vector<32x128xf32>
    %204 = arith.addf %203, %196 : vector<32x128xf32>
    %205 = math.tanh %204 : vector<32x128xf32>
    %cst_81 = arith.constant dense<0.000000e+00> : vector<8x128xf32>
    %206 = tpu.matmul %5, %205, %cst_81 {dimension_numbers = #tpu.dot_dimension_numbers<[1], [0], [0], [1], [0, 0, 1, 1], [], []>} : vector<8x32xf32>, vector<32x128xf32>, vector<8x128xf32> -> vector<8x128xf32>
    %207 = arith.addf %206, %14 : vector<8x128xf32>
    %cst_82 = arith.constant 6.250000e-02 : f32
    %208 = vector.broadcast %cst_82 : f32 to vector<8x128xf32>
    %209 = arith.mulf %208, %207 : vector<8x128xf32>
    %210 = arith.addf %183, %209 : vector<8x128xf32>
    %cst_83 = arith.constant dense<0.000000e+00> : vector<32x128xf32>
    %211 = tpu.matmul %4, %210, %cst_83 {dimension_numbers = #tpu.dot_dimension_numbers<[1], [0], [0], [1], [0, 0, 1, 1], [], []>} : vector<32x8xf32>, vector<8x128xf32>, vector<32x128xf32> -> vector<32x128xf32>
    %212 = arith.addf %211, %199 : vector<32x128xf32>
    %213 = math.tanh %212 : vector<32x128xf32>
    %cst_84 = arith.constant dense<0.000000e+00> : vector<8x128xf32>
    %214 = tpu.matmul %5, %213, %cst_84 {dimension_numbers = #tpu.dot_dimension_numbers<[1], [0], [0], [1], [0, 0, 1, 1], [], []>} : vector<8x32xf32>, vector<32x128xf32>, vector<8x128xf32> -> vector<8x128xf32>
    %215 = arith.addf %214, %14 : vector<8x128xf32>
    %cst_85 = arith.constant 2.000000e+00 : f32
    %216 = vector.broadcast %cst_85 : f32 to vector<8x128xf32>
    %217 = arith.mulf %216, %215 : vector<8x128xf32>
    %218 = arith.addf %207, %217 : vector<8x128xf32>
    %cst_86 = arith.constant 6.250000e-02 : f32
    %219 = vector.broadcast %cst_86 : f32 to vector<8x128xf32>
    %220 = arith.mulf %219, %215 : vector<8x128xf32>
    %221 = arith.addf %183, %220 : vector<8x128xf32>
    %cst_87 = arith.constant dense<0.000000e+00> : vector<32x128xf32>
    %222 = tpu.matmul %4, %221, %cst_87 {dimension_numbers = #tpu.dot_dimension_numbers<[1], [0], [0], [1], [0, 0, 1, 1], [], []>} : vector<32x8xf32>, vector<8x128xf32>, vector<32x128xf32> -> vector<32x128xf32>
    %223 = arith.addf %222, %199 : vector<32x128xf32>
    %224 = math.tanh %223 : vector<32x128xf32>
    %cst_88 = arith.constant dense<0.000000e+00> : vector<8x128xf32>
    %225 = tpu.matmul %5, %224, %cst_88 {dimension_numbers = #tpu.dot_dimension_numbers<[1], [0], [0], [1], [0, 0, 1, 1], [], []>} : vector<8x32xf32>, vector<32x128xf32>, vector<8x128xf32> -> vector<8x128xf32>
    %226 = arith.addf %225, %14 : vector<8x128xf32>
    %cst_89 = arith.constant 2.000000e+00 : f32
    %227 = vector.broadcast %cst_89 : f32 to vector<8x128xf32>
    %228 = arith.mulf %227, %226 : vector<8x128xf32>
    %229 = arith.addf %218, %228 : vector<8x128xf32>
    %cst_90 = arith.constant 1.250000e-01 : f32
    %230 = vector.broadcast %cst_90 : f32 to vector<8x128xf32>
    %231 = arith.mulf %230, %226 : vector<8x128xf32>
    %232 = arith.addf %183, %231 : vector<8x128xf32>
    %cst_91 = arith.constant dense<0.000000e+00> : vector<32x128xf32>
    %233 = tpu.matmul %4, %232, %cst_91 {dimension_numbers = #tpu.dot_dimension_numbers<[1], [0], [0], [1], [0, 0, 1, 1], [], []>} : vector<32x8xf32>, vector<8x128xf32>, vector<32x128xf32> -> vector<32x128xf32>
    %234 = arith.addf %233, %202 : vector<32x128xf32>
    %235 = math.tanh %234 : vector<32x128xf32>
    %cst_92 = arith.constant dense<0.000000e+00> : vector<8x128xf32>
    %236 = tpu.matmul %5, %235, %cst_92 {dimension_numbers = #tpu.dot_dimension_numbers<[1], [0], [0], [1], [0, 0, 1, 1], [], []>} : vector<8x32xf32>, vector<32x128xf32>, vector<8x128xf32> -> vector<8x128xf32>
    %237 = arith.addf %236, %14 : vector<8x128xf32>
    %238 = arith.addf %229, %237 : vector<8x128xf32>
    %cst_93 = arith.constant 0.020833334 : f32
    %239 = vector.broadcast %cst_93 : f32 to vector<8x128xf32>
    %240 = arith.mulf %239, %238 : vector<8x128xf32>
    %241 = arith.addf %183, %240 : vector<8x128xf32>
    %c1_i32_94 = arith.constant 1 : i32
    %242 = arith.addi %c3_i32, %c1_i32_94 : i32
    %243 = arith.index_cast %242 : i32 to index
    %c0_95 = arith.constant 0 : index
    %c0_96 = arith.constant 0 : index
    %244 = vector.load %arg7[%243, %c0_95, %c0_96] : memref<9x8x128xf32, #tpu.memory_space<vmem>>, vector<1x8x128xf32>
    %245 = vector.shape_cast %244 : vector<1x8x128xf32> to vector<8x128xf32>
    %246 = vector.shape_cast %241 : vector<8x128xf32> to vector<1x8x128xf32>
    tpu.vector_store %arg7[%243, %c0_95, %c0_96], %246 {strides = array<i32>} : memref<9x8x128xf32, #tpu.memory_space<vmem>>, vector<1x8x128xf32>,
    %c4_i32 = arith.constant 4 : i32
    %247 = arith.sitofp %c4_i32 : i32 to f32
    %cst_97 = arith.constant 1.250000e-01 : f32
    %248 = arith.mulf %cst_97, %247 : f32
    %cst_98 = arith.constant 0.000000e+00 : f32
    %249 = arith.addf %cst_98, %248 : f32
    %cst_99 = arith.constant 6.250000e-02 : f32
    %250 = arith.addf %249, %cst_99 : f32
    %cst_100 = arith.constant 1.250000e-01 : f32
    %251 = arith.addf %249, %cst_100 : f32
    %252 = vector.broadcast %249 : f32 to vector<32x128xf32>
    %253 = arith.mulf %252, %8 : vector<32x128xf32>
    %254 = arith.addf %253, %11 : vector<32x128xf32>
    %255 = vector.broadcast %250 : f32 to vector<32x128xf32>
    %256 = arith.mulf %255, %8 : vector<32x128xf32>
    %257 = arith.addf %256, %11 : vector<32x128xf32>
    %258 = vector.broadcast %251 : f32 to vector<32x128xf32>
    %259 = arith.mulf %258, %8 : vector<32x128xf32>
    %260 = arith.addf %259, %11 : vector<32x128xf32>
    %cst_101 = arith.constant dense<0.000000e+00> : vector<32x128xf32>
    %261 = tpu.matmul %4, %241, %cst_101 {dimension_numbers = #tpu.dot_dimension_numbers<[1], [0], [0], [1], [0, 0, 1, 1], [], []>} : vector<32x8xf32>, vector<8x128xf32>, vector<32x128xf32> -> vector<32x128xf32>
    %262 = arith.addf %261, %254 : vector<32x128xf32>
    %263 = math.tanh %262 : vector<32x128xf32>
    %cst_102 = arith.constant dense<0.000000e+00> : vector<8x128xf32>
    %264 = tpu.matmul %5, %263, %cst_102 {dimension_numbers = #tpu.dot_dimension_numbers<[1], [0], [0], [1], [0, 0, 1, 1], [], []>} : vector<8x32xf32>, vector<32x128xf32>, vector<8x128xf32> -> vector<8x128xf32>
    %265 = arith.addf %264, %14 : vector<8x128xf32>
    %cst_103 = arith.constant 6.250000e-02 : f32
    %266 = vector.broadcast %cst_103 : f32 to vector<8x128xf32>
    %267 = arith.mulf %266, %265 : vector<8x128xf32>
    %268 = arith.addf %241, %267 : vector<8x128xf32>
    %cst_104 = arith.constant dense<0.000000e+00> : vector<32x128xf32>
    %269 = tpu.matmul %4, %268, %cst_104 {dimension_numbers = #tpu.dot_dimension_numbers<[1], [0], [0], [1], [0, 0, 1, 1], [], []>} : vector<32x8xf32>, vector<8x128xf32>, vector<32x128xf32> -> vector<32x128xf32>
    %270 = arith.addf %269, %257 : vector<32x128xf32>
    %271 = math.tanh %270 : vector<32x128xf32>
    %cst_105 = arith.constant dense<0.000000e+00> : vector<8x128xf32>
    %272 = tpu.matmul %5, %271, %cst_105 {dimension_numbers = #tpu.dot_dimension_numbers<[1], [0], [0], [1], [0, 0, 1, 1], [], []>} : vector<8x32xf32>, vector<32x128xf32>, vector<8x128xf32> -> vector<8x128xf32>
    %273 = arith.addf %272, %14 : vector<8x128xf32>
    %cst_106 = arith.constant 2.000000e+00 : f32
    %274 = vector.broadcast %cst_106 : f32 to vector<8x128xf32>
    %275 = arith.mulf %274, %273 : vector<8x128xf32>
    %276 = arith.addf %265, %275 : vector<8x128xf32>
    %cst_107 = arith.constant 6.250000e-02 : f32
    %277 = vector.broadcast %cst_107 : f32 to vector<8x128xf32>
    %278 = arith.mulf %277, %273 : vector<8x128xf32>
    %279 = arith.addf %241, %278 : vector<8x128xf32>
    %cst_108 = arith.constant dense<0.000000e+00> : vector<32x128xf32>
    %280 = tpu.matmul %4, %279, %cst_108 {dimension_numbers = #tpu.dot_dimension_numbers<[1], [0], [0], [1], [0, 0, 1, 1], [], []>} : vector<32x8xf32>, vector<8x128xf32>, vector<32x128xf32> -> vector<32x128xf32>
    %281 = arith.addf %280, %257 : vector<32x128xf32>
    %282 = math.tanh %281 : vector<32x128xf32>
    %cst_109 = arith.constant dense<0.000000e+00> : vector<8x128xf32>
    %283 = tpu.matmul %5, %282, %cst_109 {dimension_numbers = #tpu.dot_dimension_numbers<[1], [0], [0], [1], [0, 0, 1, 1], [], []>} : vector<8x32xf32>, vector<32x128xf32>, vector<8x128xf32> -> vector<8x128xf32>
    %284 = arith.addf %283, %14 : vector<8x128xf32>
    %cst_110 = arith.constant 2.000000e+00 : f32
    %285 = vector.broadcast %cst_110 : f32 to vector<8x128xf32>
    %286 = arith.mulf %285, %284 : vector<8x128xf32>
    %287 = arith.addf %276, %286 : vector<8x128xf32>
    %cst_111 = arith.constant 1.250000e-01 : f32
    %288 = vector.broadcast %cst_111 : f32 to vector<8x128xf32>
    %289 = arith.mulf %288, %284 : vector<8x128xf32>
    %290 = arith.addf %241, %289 : vector<8x128xf32>
    %cst_112 = arith.constant dense<0.000000e+00> : vector<32x128xf32>
    %291 = tpu.matmul %4, %290, %cst_112 {dimension_numbers = #tpu.dot_dimension_numbers<[1], [0], [0], [1], [0, 0, 1, 1], [], []>} : vector<32x8xf32>, vector<8x128xf32>, vector<32x128xf32> -> vector<32x128xf32>
    %292 = arith.addf %291, %260 : vector<32x128xf32>
    %293 = math.tanh %292 : vector<32x128xf32>
    %cst_113 = arith.constant dense<0.000000e+00> : vector<8x128xf32>
    %294 = tpu.matmul %5, %293, %cst_113 {dimension_numbers = #tpu.dot_dimension_numbers<[1], [0], [0], [1], [0, 0, 1, 1], [], []>} : vector<8x32xf32>, vector<32x128xf32>, vector<8x128xf32> -> vector<8x128xf32>
    %295 = arith.addf %294, %14 : vector<8x128xf32>
    %296 = arith.addf %287, %295 : vector<8x128xf32>
    %cst_114 = arith.constant 0.020833334 : f32
    %297 = vector.broadcast %cst_114 : f32 to vector<8x128xf32>
    %298 = arith.mulf %297, %296 : vector<8x128xf32>
    %299 = arith.addf %241, %298 : vector<8x128xf32>
    %c1_i32_115 = arith.constant 1 : i32
    %300 = arith.addi %c4_i32, %c1_i32_115 : i32
    %301 = arith.index_cast %300 : i32 to index
    %c0_116 = arith.constant 0 : index
    %c0_117 = arith.constant 0 : index
    %302 = vector.load %arg7[%301, %c0_116, %c0_117] : memref<9x8x128xf32, #tpu.memory_space<vmem>>, vector<1x8x128xf32>
    %303 = vector.shape_cast %302 : vector<1x8x128xf32> to vector<8x128xf32>
    %304 = vector.shape_cast %299 : vector<8x128xf32> to vector<1x8x128xf32>
    tpu.vector_store %arg7[%301, %c0_116, %c0_117], %304 {strides = array<i32>} : memref<9x8x128xf32, #tpu.memory_space<vmem>>, vector<1x8x128xf32>,
    %c5_i32 = arith.constant 5 : i32
    %305 = arith.sitofp %c5_i32 : i32 to f32
    %cst_118 = arith.constant 1.250000e-01 : f32
    %306 = arith.mulf %cst_118, %305 : f32
    %cst_119 = arith.constant 0.000000e+00 : f32
    %307 = arith.addf %cst_119, %306 : f32
    %cst_120 = arith.constant 6.250000e-02 : f32
    %308 = arith.addf %307, %cst_120 : f32
    %cst_121 = arith.constant 1.250000e-01 : f32
    %309 = arith.addf %307, %cst_121 : f32
    %310 = vector.broadcast %307 : f32 to vector<32x128xf32>
    %311 = arith.mulf %310, %8 : vector<32x128xf32>
    %312 = arith.addf %311, %11 : vector<32x128xf32>
    %313 = vector.broadcast %308 : f32 to vector<32x128xf32>
    %314 = arith.mulf %313, %8 : vector<32x128xf32>
    %315 = arith.addf %314, %11 : vector<32x128xf32>
    %316 = vector.broadcast %309 : f32 to vector<32x128xf32>
    %317 = arith.mulf %316, %8 : vector<32x128xf32>
    %318 = arith.addf %317, %11 : vector<32x128xf32>
    %cst_122 = arith.constant dense<0.000000e+00> : vector<32x128xf32>
    %319 = tpu.matmul %4, %299, %cst_122 {dimension_numbers = #tpu.dot_dimension_numbers<[1], [0], [0], [1], [0, 0, 1, 1], [], []>} : vector<32x8xf32>, vector<8x128xf32>, vector<32x128xf32> -> vector<32x128xf32>
    %320 = arith.addf %319, %312 : vector<32x128xf32>
    %321 = math.tanh %320 : vector<32x128xf32>
    %cst_123 = arith.constant dense<0.000000e+00> : vector<8x128xf32>
    %322 = tpu.matmul %5, %321, %cst_123 {dimension_numbers = #tpu.dot_dimension_numbers<[1], [0], [0], [1], [0, 0, 1, 1], [], []>} : vector<8x32xf32>, vector<32x128xf32>, vector<8x128xf32> -> vector<8x128xf32>
    %323 = arith.addf %322, %14 : vector<8x128xf32>
    %cst_124 = arith.constant 6.250000e-02 : f32
    %324 = vector.broadcast %cst_124 : f32 to vector<8x128xf32>
    %325 = arith.mulf %324, %323 : vector<8x128xf32>
    %326 = arith.addf %299, %325 : vector<8x128xf32>
    %cst_125 = arith.constant dense<0.000000e+00> : vector<32x128xf32>
    %327 = tpu.matmul %4, %326, %cst_125 {dimension_numbers = #tpu.dot_dimension_numbers<[1], [0], [0], [1], [0, 0, 1, 1], [], []>} : vector<32x8xf32>, vector<8x128xf32>, vector<32x128xf32> -> vector<32x128xf32>
    %328 = arith.addf %327, %315 : vector<32x128xf32>
    %329 = math.tanh %328 : vector<32x128xf32>
    %cst_126 = arith.constant dense<0.000000e+00> : vector<8x128xf32>
    %330 = tpu.matmul %5, %329, %cst_126 {dimension_numbers = #tpu.dot_dimension_numbers<[1], [0], [0], [1], [0, 0, 1, 1], [], []>} : vector<8x32xf32>, vector<32x128xf32>, vector<8x128xf32> -> vector<8x128xf32>
    %331 = arith.addf %330, %14 : vector<8x128xf32>
    %cst_127 = arith.constant 2.000000e+00 : f32
    %332 = vector.broadcast %cst_127 : f32 to vector<8x128xf32>
    %333 = arith.mulf %332, %331 : vector<8x128xf32>
    %334 = arith.addf %323, %333 : vector<8x128xf32>
    %cst_128 = arith.constant 6.250000e-02 : f32
    %335 = vector.broadcast %cst_128 : f32 to vector<8x128xf32>
    %336 = arith.mulf %335, %331 : vector<8x128xf32>
    %337 = arith.addf %299, %336 : vector<8x128xf32>
    %cst_129 = arith.constant dense<0.000000e+00> : vector<32x128xf32>
    %338 = tpu.matmul %4, %337, %cst_129 {dimension_numbers = #tpu.dot_dimension_numbers<[1], [0], [0], [1], [0, 0, 1, 1], [], []>} : vector<32x8xf32>, vector<8x128xf32>, vector<32x128xf32> -> vector<32x128xf32>
    %339 = arith.addf %338, %315 : vector<32x128xf32>
    %340 = math.tanh %339 : vector<32x128xf32>
    %cst_130 = arith.constant dense<0.000000e+00> : vector<8x128xf32>
    %341 = tpu.matmul %5, %340, %cst_130 {dimension_numbers = #tpu.dot_dimension_numbers<[1], [0], [0], [1], [0, 0, 1, 1], [], []>} : vector<8x32xf32>, vector<32x128xf32>, vector<8x128xf32> -> vector<8x128xf32>
    %342 = arith.addf %341, %14 : vector<8x128xf32>
    %cst_131 = arith.constant 2.000000e+00 : f32
    %343 = vector.broadcast %cst_131 : f32 to vector<8x128xf32>
    %344 = arith.mulf %343, %342 : vector<8x128xf32>
    %345 = arith.addf %334, %344 : vector<8x128xf32>
    %cst_132 = arith.constant 1.250000e-01 : f32
    %346 = vector.broadcast %cst_132 : f32 to vector<8x128xf32>
    %347 = arith.mulf %346, %342 : vector<8x128xf32>
    %348 = arith.addf %299, %347 : vector<8x128xf32>
    %cst_133 = arith.constant dense<0.000000e+00> : vector<32x128xf32>
    %349 = tpu.matmul %4, %348, %cst_133 {dimension_numbers = #tpu.dot_dimension_numbers<[1], [0], [0], [1], [0, 0, 1, 1], [], []>} : vector<32x8xf32>, vector<8x128xf32>, vector<32x128xf32> -> vector<32x128xf32>
    %350 = arith.addf %349, %318 : vector<32x128xf32>
    %351 = math.tanh %350 : vector<32x128xf32>
    %cst_134 = arith.constant dense<0.000000e+00> : vector<8x128xf32>
    %352 = tpu.matmul %5, %351, %cst_134 {dimension_numbers = #tpu.dot_dimension_numbers<[1], [0], [0], [1], [0, 0, 1, 1], [], []>} : vector<8x32xf32>, vector<32x128xf32>, vector<8x128xf32> -> vector<8x128xf32>
    %353 = arith.addf %352, %14 : vector<8x128xf32>
    %354 = arith.addf %345, %353 : vector<8x128xf32>
    %cst_135 = arith.constant 0.020833334 : f32
    %355 = vector.broadcast %cst_135 : f32 to vector<8x128xf32>
    %356 = arith.mulf %355, %354 : vector<8x128xf32>
    %357 = arith.addf %299, %356 : vector<8x128xf32>
    %c1_i32_136 = arith.constant 1 : i32
    %358 = arith.addi %c5_i32, %c1_i32_136 : i32
    %359 = arith.index_cast %358 : i32 to index
    %c0_137 = arith.constant 0 : index
    %c0_138 = arith.constant 0 : index
    %360 = vector.load %arg7[%359, %c0_137, %c0_138] : memref<9x8x128xf32, #tpu.memory_space<vmem>>, vector<1x8x128xf32>
    %361 = vector.shape_cast %360 : vector<1x8x128xf32> to vector<8x128xf32>
    %362 = vector.shape_cast %357 : vector<8x128xf32> to vector<1x8x128xf32>
    tpu.vector_store %arg7[%359, %c0_137, %c0_138], %362 {strides = array<i32>} : memref<9x8x128xf32, #tpu.memory_space<vmem>>, vector<1x8x128xf32>,
    %c6_i32 = arith.constant 6 : i32
    %363 = arith.sitofp %c6_i32 : i32 to f32
    %cst_139 = arith.constant 1.250000e-01 : f32
    %364 = arith.mulf %cst_139, %363 : f32
    %cst_140 = arith.constant 0.000000e+00 : f32
    %365 = arith.addf %cst_140, %364 : f32
    %cst_141 = arith.constant 6.250000e-02 : f32
    %366 = arith.addf %365, %cst_141 : f32
    %cst_142 = arith.constant 1.250000e-01 : f32
    %367 = arith.addf %365, %cst_142 : f32
    %368 = vector.broadcast %365 : f32 to vector<32x128xf32>
    %369 = arith.mulf %368, %8 : vector<32x128xf32>
    %370 = arith.addf %369, %11 : vector<32x128xf32>
    %371 = vector.broadcast %366 : f32 to vector<32x128xf32>
    %372 = arith.mulf %371, %8 : vector<32x128xf32>
    %373 = arith.addf %372, %11 : vector<32x128xf32>
    %374 = vector.broadcast %367 : f32 to vector<32x128xf32>
    %375 = arith.mulf %374, %8 : vector<32x128xf32>
    %376 = arith.addf %375, %11 : vector<32x128xf32>
    %cst_143 = arith.constant dense<0.000000e+00> : vector<32x128xf32>
    %377 = tpu.matmul %4, %357, %cst_143 {dimension_numbers = #tpu.dot_dimension_numbers<[1], [0], [0], [1], [0, 0, 1, 1], [], []>} : vector<32x8xf32>, vector<8x128xf32>, vector<32x128xf32> -> vector<32x128xf32>
    %378 = arith.addf %377, %370 : vector<32x128xf32>
    %379 = math.tanh %378 : vector<32x128xf32>
    %cst_144 = arith.constant dense<0.000000e+00> : vector<8x128xf32>
    %380 = tpu.matmul %5, %379, %cst_144 {dimension_numbers = #tpu.dot_dimension_numbers<[1], [0], [0], [1], [0, 0, 1, 1], [], []>} : vector<8x32xf32>, vector<32x128xf32>, vector<8x128xf32> -> vector<8x128xf32>
    %381 = arith.addf %380, %14 : vector<8x128xf32>
    %cst_145 = arith.constant 6.250000e-02 : f32
    %382 = vector.broadcast %cst_145 : f32 to vector<8x128xf32>
    %383 = arith.mulf %382, %381 : vector<8x128xf32>
    %384 = arith.addf %357, %383 : vector<8x128xf32>
    %cst_146 = arith.constant dense<0.000000e+00> : vector<32x128xf32>
    %385 = tpu.matmul %4, %384, %cst_146 {dimension_numbers = #tpu.dot_dimension_numbers<[1], [0], [0], [1], [0, 0, 1, 1], [], []>} : vector<32x8xf32>, vector<8x128xf32>, vector<32x128xf32> -> vector<32x128xf32>
    %386 = arith.addf %385, %373 : vector<32x128xf32>
    %387 = math.tanh %386 : vector<32x128xf32>
    %cst_147 = arith.constant dense<0.000000e+00> : vector<8x128xf32>
    %388 = tpu.matmul %5, %387, %cst_147 {dimension_numbers = #tpu.dot_dimension_numbers<[1], [0], [0], [1], [0, 0, 1, 1], [], []>} : vector<8x32xf32>, vector<32x128xf32>, vector<8x128xf32> -> vector<8x128xf32>
    %389 = arith.addf %388, %14 : vector<8x128xf32>
    %cst_148 = arith.constant 2.000000e+00 : f32
    %390 = vector.broadcast %cst_148 : f32 to vector<8x128xf32>
    %391 = arith.mulf %390, %389 : vector<8x128xf32>
    %392 = arith.addf %381, %391 : vector<8x128xf32>
    %cst_149 = arith.constant 6.250000e-02 : f32
    %393 = vector.broadcast %cst_149 : f32 to vector<8x128xf32>
    %394 = arith.mulf %393, %389 : vector<8x128xf32>
    %395 = arith.addf %357, %394 : vector<8x128xf32>
    %cst_150 = arith.constant dense<0.000000e+00> : vector<32x128xf32>
    %396 = tpu.matmul %4, %395, %cst_150 {dimension_numbers = #tpu.dot_dimension_numbers<[1], [0], [0], [1], [0, 0, 1, 1], [], []>} : vector<32x8xf32>, vector<8x128xf32>, vector<32x128xf32> -> vector<32x128xf32>
    %397 = arith.addf %396, %373 : vector<32x128xf32>
    %398 = math.tanh %397 : vector<32x128xf32>
    %cst_151 = arith.constant dense<0.000000e+00> : vector<8x128xf32>
    %399 = tpu.matmul %5, %398, %cst_151 {dimension_numbers = #tpu.dot_dimension_numbers<[1], [0], [0], [1], [0, 0, 1, 1], [], []>} : vector<8x32xf32>, vector<32x128xf32>, vector<8x128xf32> -> vector<8x128xf32>
    %400 = arith.addf %399, %14 : vector<8x128xf32>
    %cst_152 = arith.constant 2.000000e+00 : f32
    %401 = vector.broadcast %cst_152 : f32 to vector<8x128xf32>
    %402 = arith.mulf %401, %400 : vector<8x128xf32>
    %403 = arith.addf %392, %402 : vector<8x128xf32>
    %cst_153 = arith.constant 1.250000e-01 : f32
    %404 = vector.broadcast %cst_153 : f32 to vector<8x128xf32>
    %405 = arith.mulf %404, %400 : vector<8x128xf32>
    %406 = arith.addf %357, %405 : vector<8x128xf32>
    %cst_154 = arith.constant dense<0.000000e+00> : vector<32x128xf32>
    %407 = tpu.matmul %4, %406, %cst_154 {dimension_numbers = #tpu.dot_dimension_numbers<[1], [0], [0], [1], [0, 0, 1, 1], [], []>} : vector<32x8xf32>, vector<8x128xf32>, vector<32x128xf32> -> vector<32x128xf32>
    %408 = arith.addf %407, %376 : vector<32x128xf32>
    %409 = math.tanh %408 : vector<32x128xf32>
    %cst_155 = arith.constant dense<0.000000e+00> : vector<8x128xf32>
    %410 = tpu.matmul %5, %409, %cst_155 {dimension_numbers = #tpu.dot_dimension_numbers<[1], [0], [0], [1], [0, 0, 1, 1], [], []>} : vector<8x32xf32>, vector<32x128xf32>, vector<8x128xf32> -> vector<8x128xf32>
    %411 = arith.addf %410, %14 : vector<8x128xf32>
    %412 = arith.addf %403, %411 : vector<8x128xf32>
    %cst_156 = arith.constant 0.020833334 : f32
    %413 = vector.broadcast %cst_156 : f32 to vector<8x128xf32>
    %414 = arith.mulf %413, %412 : vector<8x128xf32>
    %415 = arith.addf %357, %414 : vector<8x128xf32>
    %c1_i32_157 = arith.constant 1 : i32
    %416 = arith.addi %c6_i32, %c1_i32_157 : i32
    %417 = arith.index_cast %416 : i32 to index
    %c0_158 = arith.constant 0 : index
    %c0_159 = arith.constant 0 : index
    %418 = vector.load %arg7[%417, %c0_158, %c0_159] : memref<9x8x128xf32, #tpu.memory_space<vmem>>, vector<1x8x128xf32>
    %419 = vector.shape_cast %418 : vector<1x8x128xf32> to vector<8x128xf32>
    %420 = vector.shape_cast %415 : vector<8x128xf32> to vector<1x8x128xf32>
    tpu.vector_store %arg7[%417, %c0_158, %c0_159], %420 {strides = array<i32>} : memref<9x8x128xf32, #tpu.memory_space<vmem>>, vector<1x8x128xf32>,
    %c7_i32 = arith.constant 7 : i32
    %421 = arith.sitofp %c7_i32 : i32 to f32
    %cst_160 = arith.constant 1.250000e-01 : f32
    %422 = arith.mulf %cst_160, %421 : f32
    %cst_161 = arith.constant 0.000000e+00 : f32
    %423 = arith.addf %cst_161, %422 : f32
    %cst_162 = arith.constant 6.250000e-02 : f32
    %424 = arith.addf %423, %cst_162 : f32
    %cst_163 = arith.constant 1.250000e-01 : f32
    %425 = arith.addf %423, %cst_163 : f32
    %426 = vector.broadcast %423 : f32 to vector<32x128xf32>
    %427 = arith.mulf %426, %8 : vector<32x128xf32>
    %428 = arith.addf %427, %11 : vector<32x128xf32>
    %429 = vector.broadcast %424 : f32 to vector<32x128xf32>
    %430 = arith.mulf %429, %8 : vector<32x128xf32>
    %431 = arith.addf %430, %11 : vector<32x128xf32>
    %432 = vector.broadcast %425 : f32 to vector<32x128xf32>
    %433 = arith.mulf %432, %8 : vector<32x128xf32>
    %434 = arith.addf %433, %11 : vector<32x128xf32>
    %cst_164 = arith.constant dense<0.000000e+00> : vector<32x128xf32>
    %435 = tpu.matmul %4, %415, %cst_164 {dimension_numbers = #tpu.dot_dimension_numbers<[1], [0], [0], [1], [0, 0, 1, 1], [], []>} : vector<32x8xf32>, vector<8x128xf32>, vector<32x128xf32> -> vector<32x128xf32>
    %436 = arith.addf %435, %428 : vector<32x128xf32>
    %437 = math.tanh %436 : vector<32x128xf32>
    %cst_165 = arith.constant dense<0.000000e+00> : vector<8x128xf32>
    %438 = tpu.matmul %5, %437, %cst_165 {dimension_numbers = #tpu.dot_dimension_numbers<[1], [0], [0], [1], [0, 0, 1, 1], [], []>} : vector<8x32xf32>, vector<32x128xf32>, vector<8x128xf32> -> vector<8x128xf32>
    %439 = arith.addf %438, %14 : vector<8x128xf32>
    %cst_166 = arith.constant 6.250000e-02 : f32
    %440 = vector.broadcast %cst_166 : f32 to vector<8x128xf32>
    %441 = arith.mulf %440, %439 : vector<8x128xf32>
    %442 = arith.addf %415, %441 : vector<8x128xf32>
    %cst_167 = arith.constant dense<0.000000e+00> : vector<32x128xf32>
    %443 = tpu.matmul %4, %442, %cst_167 {dimension_numbers = #tpu.dot_dimension_numbers<[1], [0], [0], [1], [0, 0, 1, 1], [], []>} : vector<32x8xf32>, vector<8x128xf32>, vector<32x128xf32> -> vector<32x128xf32>
    %444 = arith.addf %443, %431 : vector<32x128xf32>
    %445 = math.tanh %444 : vector<32x128xf32>
    %cst_168 = arith.constant dense<0.000000e+00> : vector<8x128xf32>
    %446 = tpu.matmul %5, %445, %cst_168 {dimension_numbers = #tpu.dot_dimension_numbers<[1], [0], [0], [1], [0, 0, 1, 1], [], []>} : vector<8x32xf32>, vector<32x128xf32>, vector<8x128xf32> -> vector<8x128xf32>
    %447 = arith.addf %446, %14 : vector<8x128xf32>
    %cst_169 = arith.constant 2.000000e+00 : f32
    %448 = vector.broadcast %cst_169 : f32 to vector<8x128xf32>
    %449 = arith.mulf %448, %447 : vector<8x128xf32>
    %450 = arith.addf %439, %449 : vector<8x128xf32>
    %cst_170 = arith.constant 6.250000e-02 : f32
    %451 = vector.broadcast %cst_170 : f32 to vector<8x128xf32>
    %452 = arith.mulf %451, %447 : vector<8x128xf32>
    %453 = arith.addf %415, %452 : vector<8x128xf32>
    %cst_171 = arith.constant dense<0.000000e+00> : vector<32x128xf32>
    %454 = tpu.matmul %4, %453, %cst_171 {dimension_numbers = #tpu.dot_dimension_numbers<[1], [0], [0], [1], [0, 0, 1, 1], [], []>} : vector<32x8xf32>, vector<8x128xf32>, vector<32x128xf32> -> vector<32x128xf32>
    %455 = arith.addf %454, %431 : vector<32x128xf32>
    %456 = math.tanh %455 : vector<32x128xf32>
    %cst_172 = arith.constant dense<0.000000e+00> : vector<8x128xf32>
    %457 = tpu.matmul %5, %456, %cst_172 {dimension_numbers = #tpu.dot_dimension_numbers<[1], [0], [0], [1], [0, 0, 1, 1], [], []>} : vector<8x32xf32>, vector<32x128xf32>, vector<8x128xf32> -> vector<8x128xf32>
    %458 = arith.addf %457, %14 : vector<8x128xf32>
    %cst_173 = arith.constant 2.000000e+00 : f32
    %459 = vector.broadcast %cst_173 : f32 to vector<8x128xf32>
    %460 = arith.mulf %459, %458 : vector<8x128xf32>
    %461 = arith.addf %450, %460 : vector<8x128xf32>
    %cst_174 = arith.constant 1.250000e-01 : f32
    %462 = vector.broadcast %cst_174 : f32 to vector<8x128xf32>
    %463 = arith.mulf %462, %458 : vector<8x128xf32>
    %464 = arith.addf %415, %463 : vector<8x128xf32>
    %cst_175 = arith.constant dense<0.000000e+00> : vector<32x128xf32>
    %465 = tpu.matmul %4, %464, %cst_175 {dimension_numbers = #tpu.dot_dimension_numbers<[1], [0], [0], [1], [0, 0, 1, 1], [], []>} : vector<32x8xf32>, vector<8x128xf32>, vector<32x128xf32> -> vector<32x128xf32>
    %466 = arith.addf %465, %434 : vector<32x128xf32>
    %467 = math.tanh %466 : vector<32x128xf32>
    %cst_176 = arith.constant dense<0.000000e+00> : vector<8x128xf32>
    %468 = tpu.matmul %5, %467, %cst_176 {dimension_numbers = #tpu.dot_dimension_numbers<[1], [0], [0], [1], [0, 0, 1, 1], [], []>} : vector<8x32xf32>, vector<32x128xf32>, vector<8x128xf32> -> vector<8x128xf32>
    %469 = arith.addf %468, %14 : vector<8x128xf32>
    %470 = arith.addf %461, %469 : vector<8x128xf32>
    %cst_177 = arith.constant 0.020833334 : f32
    %471 = vector.broadcast %cst_177 : f32 to vector<8x128xf32>
    %472 = arith.mulf %471, %470 : vector<8x128xf32>
    %473 = arith.addf %415, %472 : vector<8x128xf32>
    %c1_i32_178 = arith.constant 1 : i32
    %474 = arith.addi %c7_i32, %c1_i32_178 : i32
    %475 = arith.index_cast %474 : i32 to index
    %c0_179 = arith.constant 0 : index
    %c0_180 = arith.constant 0 : index
    %476 = vector.load %arg7[%475, %c0_179, %c0_180] : memref<9x8x128xf32, #tpu.memory_space<vmem>>, vector<1x8x128xf32>
    %477 = vector.shape_cast %476 : vector<1x8x128xf32> to vector<8x128xf32>
    %478 = vector.shape_cast %473 : vector<8x128xf32> to vector<1x8x128xf32>
    tpu.vector_store %arg7[%475, %c0_179, %c0_180], %478 {strides = array<i32>} : memref<9x8x128xf32, #tpu.memory_space<vmem>>, vector<1x8x128xf32>,
    %c8_i32 = arith.constant 8 : i32
    return
  }
  func.func @transform_0(%arg0: i32) -> (i32, i32) {
    %c0_i32 = arith.constant 0 : i32
    %c0_i32_0 = arith.constant 0 : i32
    return %c0_i32, %arg0 : i32, i32
  }
  func.func @transform_1(%arg0: i32) -> (i32, i32) {
    %c0_i32 = arith.constant 0 : i32
    %c0_i32_0 = arith.constant 0 : i32
    %c0_i32_1 = arith.constant 0 : i32
    return %c0_i32, %c0_i32_0 : i32, i32
  }
  func.func @transform_2(%arg0: i32) -> (i32, i32) {
    %c0_i32 = arith.constant 0 : i32
    %c0_i32_0 = arith.constant 0 : i32
    %c0_i32_1 = arith.constant 0 : i32
    return %c0_i32, %c0_i32_0 : i32, i32
  }
  func.func @transform_3(%arg0: i32) -> (i32, i32) {
    %c0_i32 = arith.constant 0 : i32
    %c0_i32_0 = arith.constant 0 : i32
    %c0_i32_1 = arith.constant 0 : i32
    return %c0_i32, %c0_i32_0 : i32, i32
  }
  func.func @transform_4(%arg0: i32) -> (i32, i32) {
    %c0_i32 = arith.constant 0 : i32
    %c0_i32_0 = arith.constant 0 : i32
    %c0_i32_1 = arith.constant 0 : i32
    return %c0_i32, %c0_i32_0 : i32, i32
  }
  func.func @transform_5(%arg0: i32) -> (i32, i32) {
    %c0_i32 = arith.constant 0 : i32
    %c0_i32_0 = arith.constant 0 : i32
    %c0_i32_1 = arith.constant 0 : i32
    return %c0_i32, %c0_i32_0 : i32, i32
  }
  func.func @transform_6(%arg0: i32) -> (i32, i32, i32) {
    %c0_i32 = arith.constant 0 : i32
    %c0_i32_0 = arith.constant 0 : i32
    %c0_i32_1 = arith.constant 0 : i32
    return %c0_i32, %c0_i32_0, %arg0 : i32, i32, i32
  }
}

</mosaic_0001>

<llo_original>
// kernel: node_block_forward.1
$region0: #{node_block_forward.1}
  #allocation0 [shape = 'u32[]', space=smem, size = 0x4, offset = 0x4, fixed_abs, tag = 'smem constant byte address 0x4 - core index']
  #allocation1 [shape = 'u32[144,128]{1,0:T(1,128)}', space=vmem, size = 0x12000, scoped, tag = 'internal scratch']
  %s0 = inlined_call_operand.vmem [shape: f32[8,256], index: 0, kind: input, shape index: {}]
  %s1 = inlined_call_operand.vmem [shape: f32[32,8], index: 1, kind: input, shape index: {}]
  %s2 = inlined_call_operand.vmem [shape: f32[32,1], index: 2, kind: input, shape index: {}]
  %s3 = inlined_call_operand.vmem [shape: f32[32,1], index: 3, kind: input, shape index: {}]
  %s4 = inlined_call_operand.vmem [shape: f32[8,32], index: 4, kind: input, shape index: {}]
  %s5 = inlined_call_operand.vmem [shape: f32[8,1], index: 5, kind: input, shape index: {}]
  %s6 = inlined_call_operand.hbm [shape: f32[9,8,256], index: 6, kind: output, shape index: {}]
  %s7 = sld [smem:[#allocation0]]
  $region57: #{node_block_forward.1} parent=0
    _
  %s9 = ssub.s32 1, %s7
  %s10 = scalar_select 0, %s9, %s7
  $region1: #{node_block_forward.1} parent=0
    #allocation2 [shape = 'u8[73728]{0}', space=vmem, size = 0x12000, scoped, tag = 'output window, operand 0']
    #allocation3 [shape = 's32[2]{0}', space=sflag, size = 0x8, scoped, tag = 'scoped memory for node_block_forward.1']
    %11 = vsyncpa [#allocation3], 0
    %s12 = scalar_lea.sflag [#allocation3], 1
    %13 = vsyncpa %s12, 0
    loop: start=0, step=1, limit=4
    $region2: #{node_block_forward.1} parent=1 // loop_pre_header
      _
    $region3: #{node_block_forward.1} parent=1 // loop_header
      %s15 = sphi 0, %s19
      %p16 = scmp.ge.s32.totalorder %s15, 4
      %s25 = sphi 0, %s27
      %s28 = sphi 0, %s25
      %s29 = sphi 0, %s28
      %s45 = sphi 0, %s29
      %s49 = sphi 0, %s49
      %s51 = sphi 0, %s49
      %s52 = sphi 0, %s51
      %s66 = sphi 0, %s52
      %s70 = sphi 0, %s70
      %s72 = sphi 0, %s70
      %s73 = sphi 0, %s72
      %s87 = sphi 0, %s73
      %s91 = sphi 0, %s91
      %s93 = sphi 0, %s91
      %s94 = sphi 0, %s93
      %s108 = sphi 0, %s94
      %s112 = sphi 0, %s112
      %s114 = sphi 0, %s112
      %s115 = sphi 0, %s114
      %s129 = sphi 0, %s115
      %s133 = sphi 0, %s133
      %s135 = sphi 0, %s133
      %s136 = sphi 0, %s135
      %s150 = sphi 0, %s136
      %s156 = sphi 0, %s158
      %s159 = sphi 0, %s156
      %s160 = sphi 0, %s159
      %s176 = sphi 0, %s160
    $region4: #{node_block_forward.1} parent=1 // loop_header_branch
      %18 = sbr.rel (%p16) target = $region8
    $region5: #{node_block_forward.1} parent=1 // loop_body
      %s20 = ssub.s32 %s15, 1
      %s21 = ssub.s32 %s15, 2
      %s22 = sadd.s32 %s15, 1
      %s23 = ssub.s32 %s15, %s22
      %p24 = scmp.eq.s32.totalorder %s23, 0
      %s26 = sadd.s32 %s25, 1
      %s27 = scalar_select %p24, %s25, %s26
      %p30 = pneg %p24
      %p31 = scmp.eq.s32.totalorder %s15, 1
      %p32 = por %p30, %p31
      %p33 = scmp.ne.s32.totalorder %s25, %s28
      %p34 = scmp.eq.s32.totalorder %s15, 0
      %p35 = por %p33, %p34
      %p36 = scmp.ne.s32.totalorder %s25, %s28
      %p37 = scmp.eq.s32.totalorder %s20, 1
      %p38 = por %p36, %p37
      %p39 = scmp.ne.s32.totalorder %s28, %s29
      %p40 = scmp.eq.s32.totalorder %s20, 0
      %p41 = por %p39, %p40
      %p42 = scmp.ne.s32.totalorder %s28, %s29
      %p43 = scmp.eq.s32.totalorder %s21, 1
      %p44 = por %p42, %p43
      %p46 = scmp.ne.s32.totalorder %s29, %s45
      %p47 = scmp.eq.s32.totalorder %s21, 0
      %p48 = por %p46, %p47
      %s50 = sadd.s32 %s49, 1
      %p53 = scmp.eq.s32.totalorder %s15, 1
      %p54 = scmp.ne.s32.totalorder %s49, %s51
      %p55 = scmp.eq.s32.totalorder %s15, 0
      %p56 = por %p54, %p55
      %p57 = scmp.ne.s32.totalorder %s49, %s51
      %p58 = scmp.eq.s32.totalorder %s20, 1
      %p59 = por %p57, %p58
      %p60 = scmp.ne.s32.totalorder %s51, %s52
      %p61 = scmp.eq.s32.totalorder %s20, 0
      %p62 = por %p60, %p61
      %p63 = scmp.ne.s32.totalorder %s51, %s52
      %p64 = scmp.eq.s32.totalorder %s21, 1
      %p65 = por %p63, %p64
      %p67 = scmp.ne.s32.totalorder %s52, %s66
      %p68 = scmp.eq.s32.totalorder %s21, 0
      %p69 = por %p67, %p68
      %s71 = sadd.s32 %s70, 1
      %p74 = scmp.eq.s32.totalorder %s15, 1
      %p75 = scmp.ne.s32.totalorder %s70, %s72
      %p76 = scmp.eq.s32.totalorder %s15, 0
      %p77 = por %p75, %p76
      %p78 = scmp.ne.s32.totalorder %s70, %s72
      %p79 = scmp.eq.s32.totalorder %s20, 1
      %p80 = por %p78, %p79
      %p81 = scmp.ne.s32.totalorder %s72, %s73
      %p82 = scmp.eq.s32.totalorder %s20, 0
      %p83 = por %p81, %p82
      %p84 = scmp.ne.s32.totalorder %s72, %s73
      %p85 = scmp.eq.s32.totalorder %s21, 1
      %p86 = por %p84, %p85
      %p88 = scmp.ne.s32.totalorder %s73, %s87
      %p89 = scmp.eq.s32.totalorder %s21, 0
      %p90 = por %p88, %p89
      %s92 = sadd.s32 %s91, 1
      %p95 = scmp.eq.s32.totalorder %s15, 1
      %p96 = scmp.ne.s32.totalorder %s91, %s93
      %p97 = scmp.eq.s32.totalorder %s15, 0
      %p98 = por %p96, %p97
      %p99 = scmp.ne.s32.totalorder %s91, %s93
      %p100 = scmp.eq.s32.totalorder %s20, 1
      %p101 = por %p99, %p100
      %p102 = scmp.ne.s32.totalorder %s93, %s94
      %p103 = scmp.eq.s32.totalorder %s20, 0
      %p104 = por %p102, %p103
      %p105 = scmp.ne.s32.totalorder %s93, %s94
      %p106 = scmp.eq.s32.totalorder %s21, 1
      %p107 = por %p105, %p106
      %p109 = scmp.ne.s32.totalorder %s94, %s108
      %p110 = scmp.eq.s32.totalorder %s21, 0
      %p111 = por %p109, %p110
      %s113 = sadd.s32 %s112, 1
      %p116 = scmp.eq.s32.totalorder %s15, 1
      %p117 = scmp.ne.s32.totalorder %s112, %s114
      %p118 = scmp.eq.s32.totalorder %s15, 0
      %p119 = por %p117, %p118
      %p120 = scmp.ne.s32.totalorder %s112, %s114
      %p121 = scmp.eq.s32.totalorder %s20, 1
      %p122 = por %p120, %p121
      %p123 = scmp.ne.s32.totalorder %s114, %s115
      %p124 = scmp.eq.s32.totalorder %s20, 0
      %p125 = por %p123, %p124
      %p126 = scmp.ne.s32.totalorder %s114, %s115
      %p127 = scmp.eq.s32.totalorder %s21, 1
      %p128 = por %p126, %p127
      %p130 = scmp.ne.s32.totalorder %s115, %s129
      %p131 = scmp.eq.s32.totalorder %s21, 0
      %p132 = por %p130, %p131
      %s134 = sadd.s32 %s133, 1
      %p137 = scmp.eq.s32.totalorder %s15, 1
      %p138 = scmp.ne.s32.totalorder %s133, %s135
      %p139 = scmp.eq.s32.totalorder %s15, 0
      %p140 = por %p138, %p139
      %p141 = scmp.ne.s32.totalorder %s133, %s135
      %p142 = scmp.eq.s32.totalorder %s20, 1
      %p143 = por %p141, %p142
      %p144 = scmp.ne.s32.totalorder %s135, %s136
      %p145 = scmp.eq.s32.totalorder %s20, 0
      %p146 = por %p144, %p145
      %p147 = scmp.ne.s32.totalorder %s135, %s136
      %p148 = scmp.eq.s32.totalorder %s21, 1
      %p149 = por %p147, %p148
      %p151 = scmp.ne.s32.totalorder %s136, %s150
      %p152 = scmp.eq.s32.totalorder %s21, 0
      %p153 = por %p151, %p152
      %s154 = ssub.s32 %s15, %s22
      %p155 = scmp.eq.s32.totalorder %s154, 0
      %s157 = sadd.s32 %s156, 1
      %s158 = scalar_select %p155, %s156, %s157
      %p161 = pneg %p155
      %p162 = scmp.eq.s32.totalorder %s15, 1
      %p163 = por %p161, %p162
      %p164 = scmp.ne.s32.totalorder %s156, %s159
      %p165 = scmp.eq.s32.totalorder %s15, 0
      %p166 = por %p164, %p165
      %p167 = scmp.ne.s32.totalorder %s156, %s159
      %p168 = scmp.eq.s32.totalorder %s20, 1
      %p169 = por %p167, %p168
      %p170 = scmp.ne.s32.totalorder %s159, %s160
      %p171 = scmp.eq.s32.totalorder %s20, 0
      %p172 = por %p170, %p171
      %p173 = scmp.ne.s32.totalorder %s159, %s160
      %p174 = scmp.eq.s32.totalorder %s21, 1
      %p175 = por %p173, %p174
      %p177 = scmp.ne.s32.totalorder %s160, %s176
      %p178 = scmp.eq.s32.totalorder %s21, 0
      %p179 = por %p177, %p178
      %p180 = scmp.le.s32.totalorder 1, %s15
      %p181 = scmp.lt.s32.totalorder %s15, 3
      %p182 = pnand %p180, %p181
      %p183 = pneg %p182
      // Predicated region
      $region9: #{node_block_forward.1} parent=5 // pred_check
        _
      $region10: #{node_block_forward.1} parent=5 // pred_check_branch
        %185 = sbr.rel (%p182) target = $region12
      $region11: #{node_block_forward.1} parent=5 // pred_region
        %s186 = ssub.s32 %s15, 1
        // Predicated region
        $region13: #{node_block_forward.1} parent=11 // pred_check
          %p187 = pneg %p62
        $region14: #{node_block_forward.1} parent=11 // pred_check_branch
          %189 = sbr.rel (%p187) target = $region16
        $region15: #{node_block_forward.1} parent=11 // pred_region
          _
        $region16: #{node_block_forward.1} parent=11 // pred_fallthru
          _
        // Predicated region
        $region17: #{node_block_forward.1} parent=11 // pred_check
          %p190 = pneg %p83
        $region18: #{node_block_forward.1} parent=11 // pred_check_branch
          %192 = sbr.rel (%p190) target = $region20
        $region19: #{node_block_forward.1} parent=11 // pred_region
          _
        $region20: #{node_block_forward.1} parent=11 // pred_fallthru
          _
        // Predicated region
        $region21: #{node_block_forward.1} parent=11 // pred_check
          %p193 = pneg %p104
        $region22: #{node_block_forward.1} parent=11 // pred_check_branch
          %195 = sbr.rel (%p193) target = $region24
        $region23: #{node_block_forward.1} parent=11 // pred_region
          _
        $region24: #{node_block_forward.1} parent=11 // pred_fallthru
          _
        // Predicated region
        $region25: #{node_block_forward.1} parent=11 // pred_check
          %p196 = pneg %p125
        $region26: #{node_block_forward.1} parent=11 // pred_check_branch
          %198 = sbr.rel (%p196) target = $region28
        $region27: #{node_block_forward.1} parent=11 // pred_region
          _
        $region28: #{node_block_forward.1} parent=11 // pred_fallthru
          _
        // Predicated region
        $region29: #{node_block_forward.1} parent=11 // pred_check
          %p199 = pneg %p146
        $region30: #{node_block_forward.1} parent=11 // pred_check_branch
          %201 = sbr.rel (%p199) target = $region32
        $region31: #{node_block_forward.1} parent=11 // pred_region
          _
        $region32: #{node_block_forward.1} parent=11 // pred_fallthru
          _
      $region12: #{node_block_forward.1} parent=5 // pred_fallthru
        _
      %p202 = scmp.lt.s32.totalorder %s15, 2
      // Predicated region
      $region33: #{node_block_forward.1} parent=5 // pred_check
        %p203 = pneg %p202
      $region34: #{node_block_forward.1} parent=5 // pred_check_branch
        %205 = sbr.rel (%p203) target = $region36
      $region35: #{node_block_forward.1} parent=5 // pred_region
        // Predicated region
        $region37: #{node_block_forward.1} parent=35 // pred_check
          %p206 = pneg %p35
        $region38: #{node_block_forward.1} parent=35 // pred_check_branch
          %208 = sbr.rel (%p206) target = $region40
        $region39: #{node_block_forward.1} parent=35 // pred_region
          %p209 = scmp.lt.s32.totalorder %s15, 1
          %s210 = scalar_select %p209, %s15, 1
          %s211 = smul.addr %s210, 8
          %s212 = scalar_lea.vmem %s0, %s211
        $region40: #{node_block_forward.1} parent=35 // pred_fallthru
          _
      $region36: #{node_block_forward.1} parent=5 // pred_fallthru
        _
      %p213 = scmp.le.s32.totalorder 1, %s15
      %p214 = scmp.lt.s32.totalorder %s15, 3
      %p215 = pnand %p213, %p214
      %p216 = pneg %p215
      // Predicated region
      $region41: #{node_block_forward.1} parent=5 // pred_check
        _
      $region42: #{node_block_forward.1} parent=5 // pred_check_branch
        %218 = sbr.rel (%p215) target = $region44
      $region43: #{node_block_forward.1} parent=5 // pred_region
        %s219 = ssub.s32 %s15, 1
        %p220 = scmp.lt.s32.totalorder %s20, 1
        %s221 = scalar_select %p220, %s20, 1
        %s222 = smul.addr %s221, 8
        %s223 = scalar_lea.vmem %s0, %s222
        %p224 = pneg %p41
        %p225 = pneg %p38
        %p226 = pneg %p62
        %p227 = pneg %p59
        %p228 = pneg %p83
        %p229 = pneg %p80
        %p230 = pneg %p104
        %p231 = pneg %p101
        %p232 = pneg %p125
        %p233 = pneg %p122
        %p234 = pneg %p146
        %p235 = pneg %p143
        %p236 = pneg %p172
        %p237 = pneg %p169
        %s238 = sand.u32 %s159, 1
        %s239 = scalar_lea.sflag [#allocation3], %s238
        %s240 = sand.u32 %s159, 1
        %s241 = smul.addr %s240, 72
        %s242 = scalar_lea.vmem [#allocation2], %s241
        %p243 = scmp.lt.s32.totalorder %s20, 1
        %s244 = scalar_select %p243, %s20, 1
        %s245 = smul.addr %s244, 8
        %s246 = scalar_lea.vmem %s0, %s245
        %v247 = vld [vmem:[%s246] sm:$0xff]
        %248 = vst [vmem:[%s242] sm:$0xff] %v247
        %v249 = vld [vmem:[%s1] sm:$0xff]
        %v250 = vld [vmem:[%s1 + $0x8] sm:$0xff]
        %v251 = vld [vmem:[%s1 + $0x10] sm:$0xff]
        %v252 = vld [vmem:[%s1 + $0x18] sm:$0xff]
        %v253 = vld [vmem:[%s4] sm:$0xff]
        %v254 = vld [vmem:[%s2] sm:$0xff]
        %v255 = vld [vmem:[%s2 + $0x8] sm:$0xff]
        %v256 = vld [vmem:[%s2 + $0x10] sm:$0xff]
        %v257 = vld [vmem:[%s2 + $0x18] sm:$0xff]
        %259 = vset.pattern.permute.xlu0 0
        %260 = vperm.xlu0 %259, %v254
        %v261 = vpop.permute.xlu0 %260
        %264 = vset.pattern.permute.xlu0 0
        %265 = vperm.xlu0 %264, %v255
        %v266 = vpop.permute.xlu0 %265
        %269 = vset.pattern.permute.xlu0 0
        %270 = vperm.xlu0 %269, %v256
        %v271 = vpop.permute.xlu0 %270
        %274 = vset.pattern.permute.xlu0 0
        %275 = vperm.xlu0 %274, %v257
        %v276 = vpop.permute.xlu0 %275
        %v278 = vld [vmem:[%s3] sm:$0xff]
        %v279 = vld [vmem:[%s3 + $0x8] sm:$0xff]
        %v280 = vld [vmem:[%s3 + $0x10] sm:$0xff]
        %v281 = vld [vmem:[%s3 + $0x18] sm:$0xff]
        %283 = vset.pattern.permute.xlu0 0
        %284 = vperm.xlu0 %283, %v278
        %v285 = vpop.permute.xlu0 %284
        %288 = vset.pattern.permute.xlu0 0
        %289 = vperm.xlu0 %288, %v279
        %v290 = vpop.permute.xlu0 %289
        %293 = vset.pattern.permute.xlu0 0
        %294 = vperm.xlu0 %293, %v280
        %v295 = vpop.permute.xlu0 %294
        %298 = vset.pattern.permute.xlu0 0
        %299 = vperm.xlu0 %298, %v281
        %v300 = vpop.permute.xlu0 %299
        %v302 = vld [vmem:[%s5] sm:$0xff]
        %304 = vset.pattern.permute.xlu0 0
        %305 = vperm.xlu0 %304, %v302
        %v306 = vpop.permute.xlu0 %305
        %v308 = vmul.f32 %v261, 0.0
        %v309 = vmul.f32 %v266, 0.0
        %v310 = vmul.f32 %v271, 0.0
        %v311 = vmul.f32 %v276, 0.0
        %v312 = vadd.f32 %v308, %v285
        %v313 = vadd.f32 %v309, %v290
        %v314 = vadd.f32 %v310, %v295
        %v315 = vadd.f32 %v311, %v300
        %v316 = vmul.f32 %v261, 0.0625
        %v317 = vmul.f32 %v266, 0.0625
        %v318 = vmul.f32 %v271, 0.0625
        %v319 = vmul.f32 %v276, 0.0625
        %v320 = vadd.f32 %v316, %v285
        %v321 = vadd.f32 %v317, %v290
        %v322 = vadd.f32 %v318, %v295
        %v323 = vadd.f32 %v319, %v300
        %v324 = vmul.f32 %v261, 0.125
        %v325 = vmul.f32 %v266, 0.125
        %v326 = vmul.f32 %v271, 0.125
        %v327 = vmul.f32 %v276, 0.125
        %v328 = vadd.f32 %v324, %v285
        %v329 = vadd.f32 %v325, %v290
        %v330 = vadd.f32 %v326, %v295
        %v331 = vadd.f32 %v327, %v300
        %vm332 = vcmask 64512
        %v334 = vsel %vm332, %v249, 0
        %v337 = vsel %vm332, %v250, 0
        %v340 = vsel %vm332, %v251, 0
        %v343 = vsel %vm332, %v252, 0
        %345 = vmatprep.subr.mxu0 0.0
        %346 = vmatpush1.msra.mxu0 %v247
        %347 = vmatprep.subr.mxu0 0.0
        %348 = vmatpush1.msra.mxu0 0.0
        %349 = vmatprep.subr.mxu0 0.0
        %350 = vmatpush1.msra.mxu0 0.0
        %351 = vmatprep.subr.mxu0 0.0
        %352 = vmatpush1.msra.mxu0 0.0
        %353 = vmatprep.subr.mxu0 0.0
        %354 = vmatpush1.msra.mxu0 0.0
        %355 = vmatprep.subr.mxu0 0.0
        %356 = vmatpush1.msra.mxu0 0.0
        %357 = vmatprep.subr.mxu0 0.0
        %358 = vmatpush1.msra.mxu0 0.0
        %359 = vmatprep.subr.mxu0 0.0
        %360 = vmatpush1.msra.mxu0 0.0
        %361 = vmatprep.subr.mxu0 0.0
        %362 = vmatpush1.msra.mxu0 0.0
        %363 = vmatprep.subr.mxu0 0.0
        %364 = vmatpush1.msra.mxu0 0.0
        %365 = vmatprep.subr.mxu0 0.0
        %366 = vmatpush1.msra.mxu0 0.0
        %367 = vmatprep.subr.mxu0 0.0
        %368 = vmatpush1.msra.mxu0 0.0
        %369 = vmatprep.subr.mxu0 0.0
        %370 = vmatpush1.msra.mxu0 0.0
        %371 = vmatprep.subr.mxu0 0.0
        %372 = vmatpush1.msra.mxu0 0.0
        %373 = vmatprep.subr.mxu0 0.0
        %374 = vmatpush1.msra.mxu0 0.0
        %375 = vmatprep.subr.mxu0 0.0
        %376 = vmatpush1.msra.mxu0 0.0
        %377 = vmatprep.subr.mxu0 0.0
        %378 = vmatpush1.msra.mxu0 0.0
        %379 = vmatprep.subr.mxu0 0.0
        %380 = vmatpush1.msra.mxu0 0.0
        %381 = vmatprep.subr.mxu0 0.0
        %382 = vmatpush1.msra.mxu0 0.0
        %383 = vmatprep.subr.mxu0 0.0
        %384 = vmatpush1.msra.mxu0 0.0
        %385 = vmatprep.subr.mxu0 0.0
        %386 = vmatpush1.msra.mxu0 0.0
        %387 = vmatprep.subr.mxu0 0.0
        %388 = vmatpush1.msra.mxu0 0.0
        %389 = vmatprep.subr.mxu0 0.0
        %390 = vmatpush1.msra.mxu0 0.0
        %391 = vmatprep.subr.mxu0 0.0
        %392 = vmatpush1.msra.mxu0 0.0
        %393 = vmatprep.subr.mxu0 0.0
        %394 = vmatpush1.msra.mxu0 0.0
        %395 = vmatprep.subr.mxu0 0.0
        %396 = vmatpush1.msra.mxu0 0.0
        %397 = vmatprep.subr.mxu0 0.0
        %398 = vmatpush1.msra.mxu0 0.0
        %399 = vmatprep.subr.mxu0 0.0
        %400 = vmatpush1.msra.mxu0 0.0
        %401 = vmatprep.subr.mxu0 0.0
        %402 = vmatpush1.msra.mxu0 0.0
        %403 = vmatprep.subr.mxu0 0.0
        %404 = vmatpush1.msra.mxu0 0.0
        %405 = vmatprep.subr.mxu0 0.0
        %406 = vmatpush1.msra.mxu0 0.0
        %407 = vmatprep.subr.mxu0 0.0
        %408 = vmatpush1.msra.mxu0 0.0
        %409 = vmatprep.mubr.f32.mxu0 0.0
        %410 = vmatmul.mubr.f32.gmra.mrb[0].mxu0 %v334
        %v411 = vpop.f32.mrb[0].mxu0
        %v412 = vadd.f32 %v312, %v411
        %v413 = vpop.f32.mrb[0].mxu0
        %414 = vmatprep.mubr.f32.mxu0 0.0
        %415 = vmatmul.mubr.f32.gmra.mrb[0].mxu0 %v337
        %v416 = vpop.f32.mrb[0].mxu0
        %v417 = vadd.f32 %v313, %v416
        %v418 = vpop.f32.mrb[0].mxu0
        %419 = vmatprep.mubr.f32.mxu0 0.0
        %420 = vmatmul.mubr.f32.gmra.mrb[0].mxu0 %v340
        %v421 = vpop.f32.mrb[0].mxu0
        %v422 = vadd.f32 %v314, %v421
        %v423 = vpop.f32.mrb[0].mxu0
        %424 = vmatprep.mubr.f32.mxu0 0.0
        %425 = vmatmul.mubr.f32.gmra.mrb[0].mxu0 %v343
        %v426 = vpop.f32.mrb[0].mxu0
        %v427 = vadd.f32 %v315, %v426
        %v428 = vpop.f32.mrb[0].mxu0
        %429 = vdwg.mxu0
        %v430 = vtanh.pop %v412
        %v431 = vtanh.pop %v417
        %v432 = vtanh.pop %v422
        %v433 = vtanh.pop %v427
        %vm434 = vcmask 261120
        %v436 = vsel %vm434, %v253, 0
        %438 = vmatprep.subr.mxu0 0.0
        %439 = vmatpush1.msra.mxu0 %v430
        %440 = vmatprep.subr.mxu0 0.0
        %441 = vmatpush1.msra.mxu0 %v431
        %442 = vmatprep.subr.mxu0 0.0
        %443 = vmatpush1.msra.mxu0 %v432
        %444 = vmatprep.subr.mxu0 0.0
        %445 = vmatpush1.msra.mxu0 %v433
        %446 = vmatprep.subr.mxu0 0.0
        %447 = vmatpush1.msra.mxu0 0.0
        %448 = vmatprep.subr.mxu0 0.0
        %449 = vmatpush1.msra.mxu0 0.0
        %450 = vmatprep.subr.mxu0 0.0
        %451 = vmatpush1.msra.mxu0 0.0
        %452 = vmatprep.subr.mxu0 0.0
        %453 = vmatpush1.msra.mxu0 0.0
        %454 = vmatprep.subr.mxu0 0.0
        %455 = vmatpush1.msra.mxu0 0.0
        %456 = vmatprep.subr.mxu0 0.0
        %457 = vmatpush1.msra.mxu0 0.0
        %458 = vmatprep.subr.mxu0 0.0
        %459 = vmatpush1.msra.mxu0 0.0
        %460 = vmatprep.subr.mxu0 0.0
        %461 = vmatpush1.msra.mxu0 0.0
        %462 = vmatprep.subr.mxu0 0.0
        %463 = vmatpush1.msra.mxu0 0.0
        %464 = vmatprep.subr.mxu0 0.0
        %465 = vmatpush1.msra.mxu0 0.0
        %466 = vmatprep.subr.mxu0 0.0
        %467 = vmatpush1.msra.mxu0 0.0
        %468 = vmatprep.subr.mxu0 0.0
        %469 = vmatpush1.msra.mxu0 0.0
        %470 = vmatprep.subr.mxu0 0.0
        %471 = vmatpush1.msra.mxu0 0.0
        %472 = vmatprep.subr.mxu0 0.0
        %473 = vmatpush1.msra.mxu0 0.0
        %474 = vmatprep.subr.mxu0 0.0
        %475 = vmatpush1.msra.mxu0 0.0
        %476 = vmatprep.subr.mxu0 0.0
        %477 = vmatpush1.msra.mxu0 0.0
        %478 = vmatprep.subr.mxu0 0.0
        %479 = vmatpush1.msra.mxu0 0.0
        %480 = vmatprep.subr.mxu0 0.0
        %481 = vmatpush1.msra.mxu0 0.0
        %482 = vmatprep.subr.mxu0 0.0
        %483 = vmatpush1.msra.mxu0 0.0
        %484 = vmatprep.subr.mxu0 0.0
        %485 = vmatpush1.msra.mxu0 0.0
        %486 = vmatprep.subr.mxu0 0.0
        %487 = vmatpush1.msra.mxu0 0.0
        %488 = vmatprep.subr.mxu0 0.0
        %489 = vmatpush1.msra.mxu0 0.0
        %490 = vmatprep.subr.mxu0 0.0
        %491 = vmatpush1.msra.mxu0 0.0
        %492 = vmatprep.subr.mxu0 0.0
        %493 = vmatpush1.msra.mxu0 0.0
        %494 = vmatprep.subr.mxu0 0.0
        %495 = vmatpush1.msra.mxu0 0.0
        %496 = vmatprep.subr.mxu0 0.0
        %497 = vmatpush1.msra.mxu0 0.0
        %498 = vmatprep.subr.mxu0 0.0
        %499 = vmatpush1.msra.mxu0 0.0
        %500 = vmatprep.subr.mxu0 0.0
        %501 = vmatpush1.msra.mxu0 0.0
        %502 = vmatprep.mubr.f32.mxu0 0.0
        %503 = vmatmul.mubr.f32.gmra.mrb[0].mxu0 %v436
        %v504 = vpop.f32.mrb[0].mxu0
        %v505 = vadd.f32 %v306, %v504
        %v506 = vpop.f32.mrb[0].mxu0
        %507 = vdwg.mxu0
        %v508 = vmul.f32 %v505, 0.0625
        %v509 = vadd.f32 %v247, %v508
        %510 = vmatprep.subr.mxu0 0.0
        %511 = vmatpush1.msra.mxu0 %v509
        %512 = vmatprep.subr.mxu0 0.0
        %513 = vmatpush1.msra.mxu0 0.0
        %514 = vmatprep.subr.mxu0 0.0
        %515 = vmatpush1.msra.mxu0 0.0
        %516 = vmatprep.subr.mxu0 0.0
        %517 = vmatpush1.msra.mxu0 0.0
        %518 = vmatprep.subr.mxu0 0.0
        %519 = vmatpush1.msra.mxu0 0.0
        %520 = vmatprep.subr.mxu0 0.0
        %521 = vmatpush1.msra.mxu0 0.0
        %522 = vmatprep.subr.mxu0 0.0
        %523 = vmatpush1.msra.mxu0 0.0
        %524 = vmatprep.subr.mxu0 0.0
        %525 = vmatpush1.msra.mxu0 0.0
        %526 = vmatprep.subr.mxu0 0.0
        %527 = vmatpush1.msra.mxu0 0.0
        %528 = vmatprep.subr.mxu0 0.0
        %529 = vmatpush1.msra.mxu0 0.0
        %530 = vmatprep.subr.mxu0 0.0
        %531 = vmatpush1.msra.mxu0 0.0
        %532 = vmatprep.subr.mxu0 0.0
        %533 = vmatpush1.msra.mxu0 0.0
        %534 = vmatprep.subr.mxu0 0.0
        %535 = vmatpush1.msra.mxu0 0.0
        %536 = vmatprep.subr.mxu0 0.0
        %537 = vmatpush1.msra.mxu0 0.0
        %538 = vmatprep.subr.mxu0 0.0
        %539 = vmatpush1.msra.mxu0 0.0
        %540 = vmatprep.subr.mxu0 0.0
        %541 = vmatpush1.msra.mxu0 0.0
        %542 = vmatprep.subr.mxu0 0.0
        %543 = vmatpush1.msra.mxu0 0.0
        %544 = vmatprep.subr.mxu0 0.0
        %545 = vmatpush1.msra.mxu0 0.0
        %546 = vmatprep.subr.mxu0 0.0
        %547 = vmatpush1.msra.mxu0 0.0
        %548 = vmatprep.subr.mxu0 0.0
        %549 = vmatpush1.msra.mxu0 0.0
        %550 = vmatprep.subr.mxu0 0.0
        %551 = vmatpush1.msra.mxu0 0.0
        %552 = vmatprep.subr.mxu0 0.0
        %553 = vmatpush1.msra.mxu0 0.0
        %554 = vmatprep.subr.mxu0 0.0
        %555 = vmatpush1.msra.mxu0 0.0
        %556 = vmatprep.subr.mxu0 0.0
        %557 = vmatpush1.msra.mxu0 0.0
        %558 = vmatprep.subr.mxu0 0.0
        %559 = vmatpush1.msra.mxu0 0.0
        %560 = vmatprep.subr.mxu0 0.0
        %561 = vmatpush1.msra.mxu0 0.0
        %562 = vmatprep.subr.mxu0 0.0
        %563 = vmatpush1.msra.mxu0 0.0
        %564 = vmatprep.subr.mxu0 0.0
        %565 = vmatpush1.msra.mxu0 0.0
        %566 = vmatprep.subr.mxu0 0.0
        %567 = vmatpush1.msra.mxu0 0.0
        %568 = vmatprep.subr.mxu0 0.0
        %569 = vmatpush1.msra.mxu0 0.0
        %570 = vmatprep.subr.mxu0 0.0
        %571 = vmatpush1.msra.mxu0 0.0
        %572 = vmatprep.subr.mxu0 0.0
        %573 = vmatpush1.msra.mxu0 0.0
        %574 = vmatprep.mubr.f32.mxu0 0.0
        %575 = vmatmul.mubr.f32.gmra.mrb[0].mxu0 %v334
        %v576 = vpop.f32.mrb[0].mxu0
        %v577 = vadd.f32 %v320, %v576
        %v578 = vpop.f32.mrb[0].mxu0
        %579 = vmatprep.mubr.f32.mxu0 0.0
        %580 = vmatmul.mubr.f32.gmra.mrb[0].mxu0 %v337
        %v581 = vpop.f32.mrb[0].mxu0
        %v582 = vadd.f32 %v321, %v581
        %v583 = vpop.f32.mrb[0].mxu0
        %584 = vmatprep.mubr.f32.mxu0 0.0
        %585 = vmatmul.mubr.f32.gmra.mrb[0].mxu0 %v340
        %v586 = vpop.f32.mrb[0].mxu0
        %v587 = vadd.f32 %v322, %v586
        %v588 = vpop.f32.mrb[0].mxu0
        %589 = vmatprep.mubr.f32.mxu0 0.0
        %590 = vmatmul.mubr.f32.gmra.mrb[0].mxu0 %v343
        %v591 = vpop.f32.mrb[0].mxu0
        %v592 = vadd.f32 %v323, %v591
        %v593 = vpop.f32.mrb[0].mxu0
        %594 = vdwg.mxu0
        %v595 = vtanh.pop %v577
        %v596 = vtanh.pop %v582
        %v597 = vtanh.pop %v587
        %v598 = vtanh.pop %v592
        %599 = vmatprep.subr.mxu0 0.0
        %600 = vmatpush1.msra.mxu0 %v595
        %601 = vmatprep.subr.mxu0 0.0
        %602 = vmatpush1.msra.mxu0 %v596
        %603 = vmatprep.subr.mxu0 0.0
        %604 = vmatpush1.msra.mxu0 %v597
        %605 = vmatprep.subr.mxu0 0.0
        %606 = vmatpush1.msra.mxu0 %v598
        %607 = vmatprep.subr.mxu0 0.0
        %608 = vmatpush1.msra.mxu0 0.0
        %609 = vmatprep.subr.mxu0 0.0
        %610 = vmatpush1.msra.mxu0 0.0
        %611 = vmatprep.subr.mxu0 0.0
        %612 = vmatpush1.msra.mxu0 0.0
        %613 = vmatprep.subr.mxu0 0.0
        %614 = vmatpush1.msra.mxu0 0.0
        %615 = vmatprep.subr.mxu0 0.0
        %616 = vmatpush1.msra.mxu0 0.0
        %617 = vmatprep.subr.mxu0 0.0
        %618 = vmatpush1.msra.mxu0 0.0
        %619 = vmatprep.subr.mxu0 0.0
        %620 = vmatpush1.msra.mxu0 0.0
        %621 = vmatprep.subr.mxu0 0.0
        %622 = vmatpush1.msra.mxu0 0.0
        %623 = vmatprep.subr.mxu0 0.0
        %624 = vmatpush1.msra.mxu0 0.0
        %625 = vmatprep.subr.mxu0 0.0
        %626 = vmatpush1.msra.mxu0 0.0
        %627 = vmatprep.subr.mxu0 0.0
        %628 = vmatpush1.msra.mxu0 0.0
        %629 = vmatprep.subr.mxu0 0.0
        %630 = vmatpush1.msra.mxu0 0.0
        %631 = vmatprep.subr.mxu0 0.0
        %632 = vmatpush1.msra.mxu0 0.0
        %633 = vmatprep.subr.mxu0 0.0
        %634 = vmatpush1.msra.mxu0 0.0
        %635 = vmatprep.subr.mxu0 0.0
        %636 = vmatpush1.msra.mxu0 0.0
        %637 = vmatprep.subr.mxu0 0.0
        %638 = vmatpush1.msra.mxu0 0.0
        %639 = vmatprep.subr.mxu0 0.0
        %640 = vmatpush1.msra.mxu0 0.0
        %641 = vmatprep.subr.mxu0 0.0
        %642 = vmatpush1.msra.mxu0 0.0
        %643 = vmatprep.subr.mxu0 0.0
        %644 = vmatpush1.msra.mxu0 0.0
        %645 = vmatprep.subr.mxu0 0.0
        %646 = vmatpush1.msra.mxu0 0.0
        %647 = vmatprep.subr.mxu0 0.0
        %648 = vmatpush1.msra.mxu0 0.0
        %649 = vmatprep.subr.mxu0 0.0
        %650 = vmatpush1.msra.mxu0 0.0
        %651 = vmatprep.subr.mxu0 0.0
        %652 = vmatpush1.msra.mxu0 0.0
        %653 = vmatprep.subr.mxu0 0.0
        %654 = vmatpush1.msra.mxu0 0.0
        %655 = vmatprep.subr.mxu0 0.0
        %656 = vmatpush1.msra.mxu0 0.0
        %657 = vmatprep.subr.mxu0 0.0
        %658 = vmatpush1.msra.mxu0 0.0
        %659 = vmatprep.subr.mxu0 0.0
        %660 = vmatpush1.msra.mxu0 0.0
        %661 = vmatprep.subr.mxu0 0.0
        %662 = vmatpush1.msra.mxu0 0.0
        %663 = vmatprep.mubr.f32.mxu0 0.0
        %664 = vmatmul.mubr.f32.gmra.mrb[0].mxu0 %v436
        %v665 = vpop.f32.mrb[0].mxu0
        %v666 = vadd.f32 %v306, %v665
        %v667 = vpop.f32.mrb[0].mxu0
        %668 = vdwg.mxu0
        %v669 = vmul.f32 %v666, 2.0
        %v670 = vadd.f32 %v505, %v669
        %v671 = vmul.f32 %v666, 0.0625
        %v672 = vadd.f32 %v247, %v671
        %673 = vmatprep.subr.mxu0 0.0
        %674 = vmatpush1.msra.mxu0 %v672
        %675 = vmatprep.subr.mxu0 0.0
        %676 = vmatpush1.msra.mxu0 0.0
        %677 = vmatprep.subr.mxu0 0.0
        %678 = vmatpush1.msra.mxu0 0.0
        %679 = vmatprep.subr.mxu0 0.0
        %680 = vmatpush1.msra.mxu0 0.0
        %681 = vmatprep.subr.mxu0 0.0
        %682 = vmatpush1.msra.mxu0 0.0
        %683 = vmatprep.subr.mxu0 0.0
        %684 = vmatpush1.msra.mxu0 0.0
        %685 = vmatprep.subr.mxu0 0.0
        %686 = vmatpush1.msra.mxu0 0.0
        %687 = vmatprep.subr.mxu0 0.0
        %688 = vmatpush1.msra.mxu0 0.0
        %689 = vmatprep.subr.mxu0 0.0
        %690 = vmatpush1.msra.mxu0 0.0
        %691 = vmatprep.subr.mxu0 0.0
        %692 = vmatpush1.msra.mxu0 0.0
        %693 = vmatprep.subr.mxu0 0.0
        %694 = vmatpush1.msra.mxu0 0.0
        %695 = vmatprep.subr.mxu0 0.0
        %696 = vmatpush1.msra.mxu0 0.0
        %697 = vmatprep.subr.mxu0 0.0
        %698 = vmatpush1.msra.mxu0 0.0
        %699 = vmatprep.subr.mxu0 0.0
        %700 = vmatpush1.msra.mxu0 0.0
        %701 = vmatprep.subr.mxu0 0.0
        %702 = vmatpush1.msra.mxu0 0.0
        %703 = vmatprep.subr.mxu0 0.0
        %704 = vmatpush1.msra.mxu0 0.0
        %705 = vmatprep.subr.mxu0 0.0
        %706 = vmatpush1.msra.mxu0 0.0
        %707 = vmatprep.subr.mxu0 0.0
        %708 = vmatpush1.msra.mxu0 0.0
        %709 = vmatprep.subr.mxu0 0.0
        %710 = vmatpush1.msra.mxu0 0.0
        %711 = vmatprep.subr.mxu0 0.0
        %712 = vmatpush1.msra.mxu0 0.0
        %713 = vmatprep.subr.mxu0 0.0
        %714 = vmatpush1.msra.mxu0 0.0
        %715 = vmatprep.subr.mxu0 0.0
        %716 = vmatpush1.msra.mxu0 0.0
        %717 = vmatprep.subr.mxu0 0.0
        %718 = vmatpush1.msra.mxu0 0.0
        %719 = vmatprep.subr.mxu0 0.0
        %720 = vmatpush1.msra.mxu0 0.0
        %721 = vmatprep.subr.mxu0 0.0
        %722 = vmatpush1.msra.mxu0 0.0
        %723 = vmatprep.subr.mxu0 0.0
        %724 = vmatpush1.msra.mxu0 0.0
        %725 = vmatprep.subr.mxu0 0.0
        %726 = vmatpush1.msra.mxu0 0.0
        %727 = vmatprep.subr.mxu0 0.0
        %728 = vmatpush1.msra.mxu0 0.0
        %729 = vmatprep.subr.mxu0 0.0
        %730 = vmatpush1.msra.mxu0 0.0
        %731 = vmatprep.subr.mxu0 0.0
        %732 = vmatpush1.msra.mxu0 0.0
        %733 = vmatprep.subr.mxu0 0.0
        %734 = vmatpush1.msra.mxu0 0.0
        %735 = vmatprep.subr.mxu0 0.0
        %736 = vmatpush1.msra.mxu0 0.0
        %737 = vmatprep.mubr.f32.mxu0 0.0
        %738 = vmatmul.mubr.f32.gmra.mrb[0].mxu0 %v334
        %v739 = vpop.f32.mrb[0].mxu0
        %v740 = vadd.f32 %v320, %v739
        %v741 = vpop.f32.mrb[0].mxu0
        %742 = vmatprep.mubr.f32.mxu0 0.0
        %743 = vmatmul.mubr.f32.gmra.mrb[0].mxu0 %v337
        %v744 = vpop.f32.mrb[0].mxu0
        %v745 = vadd.f32 %v321, %v744
        %v746 = vpop.f32.mrb[0].mxu0
        %747 = vmatprep.mubr.f32.mxu0 0.0
        %748 = vmatmul.mubr.f32.gmra.mrb[0].mxu0 %v340
        %v749 = vpop.f32.mrb[0].mxu0
        %v750 = vadd.f32 %v322, %v749
        %v751 = vpop.f32.mrb[0].mxu0
        %752 = vmatprep.mubr.f32.mxu0 0.0
        %753 = vmatmul.mubr.f32.gmra.mrb[0].mxu0 %v343
        %v754 = vpop.f32.mrb[0].mxu0
        %v755 = vadd.f32 %v323, %v754
        %v756 = vpop.f32.mrb[0].mxu0
        %757 = vdwg.mxu0
        %v758 = vtanh.pop %v740
        %v759 = vtanh.pop %v745
        %v760 = vtanh.pop %v750
        %v761 = vtanh.pop %v755
        %762 = vmatprep.subr.mxu0 0.0
        %763 = vmatpush1.msra.mxu0 %v758
        %764 = vmatprep.subr.mxu0 0.0
        %765 = vmatpush1.msra.mxu0 %v759
        %766 = vmatprep.subr.mxu0 0.0
        %767 = vmatpush1.msra.mxu0 %v760
        %768 = vmatprep.subr.mxu0 0.0
        %769 = vmatpush1.msra.mxu0 %v761
        %770 = vmatprep.subr.mxu0 0.0
        %771 = vmatpush1.msra.mxu0 0.0
        %772 = vmatprep.subr.mxu0 0.0
        %773 = vmatpush1.msra.mxu0 0.0
        %774 = vmatprep.subr.mxu0 0.0
        %775 = vmatpush1.msra.mxu0 0.0
        %776 = vmatprep.subr.mxu0 0.0
        %777 = vmatpush1.msra.mxu0 0.0
        %778 = vmatprep.subr.mxu0 0.0
        %779 = vmatpush1.msra.mxu0 0.0
        %780 = vmatprep.subr.mxu0 0.0
        %781 = vmatpush1.msra.mxu0 0.0
        %782 = vmatprep.subr.mxu0 0.0
        %783 = vmatpush1.msra.mxu0 0.0
        %784 = vmatprep.subr.mxu0 0.0
        %785 = vmatpush1.msra.mxu0 0.0
        %786 = vmatprep.subr.mxu0 0.0
        %787 = vmatpush1.msra.mxu0 0.0
        %788 = vmatprep.subr.mxu0 0.0
        %789 = vmatpush1.msra.mxu0 0.0
        %790 = vmatprep.subr.mxu0 0.0
        %791 = vmatpush1.msra.mxu0 0.0
        %792 = vmatprep.subr.mxu0 0.0
        %793 = vmatpush1.msra.mxu0 0.0
        %794 = vmatprep.subr.mxu0 0.0
        %795 = vmatpush1.msra.mxu0 0.0
        %796 = vmatprep.subr.mxu0 0.0
        %797 = vmatpush1.msra.mxu0 0.0
        %798 = vmatprep.subr.mxu0 0.0
        %799 = vmatpush1.msra.mxu0 0.0
        %800 = vmatprep.subr.mxu0 0.0
        %801 = vmatpush1.msra.mxu0 0.0
        %802 = vmatprep.subr.mxu0 0.0
        %803 = vmatpush1.msra.mxu0 0.0
        %804 = vmatprep.subr.mxu0 0.0
        %805 = vmatpush1.msra.mxu0 0.0
        %806 = vmatprep.subr.mxu0 0.0
        %807 = vmatpush1.msra.mxu0 0.0
        %808 = vmatprep.subr.mxu0 0.0
        %809 = vmatpush1.msra.mxu0 0.0
        %810 = vmatprep.subr.mxu0 0.0
        %811 = vmatpush1.msra.mxu0 0.0
        %812 = vmatprep.subr.mxu0 0.0
        %813 = vmatpush1.msra.mxu0 0.0
        %814 = vmatprep.subr.mxu0 0.0
        %815 = vmatpush1.msra.mxu0 0.0
        %816 = vmatprep.subr.mxu0 0.0
        %817 = vmatpush1.msra.mxu0 0.0
        %818 = vmatprep.subr.mxu0 0.0
        %819 = vmatpush1.msra.mxu0 0.0
        %820 = vmatprep.subr.mxu0 0.0
        %821 = vmatpush1.msra.mxu0 0.0
        %822 = vmatprep.subr.mxu0 0.0
        %823 = vmatpush1.msra.mxu0 0.0
        %824 = vmatprep.subr.mxu0 0.0
        %825 = vmatpush1.msra.mxu0 0.0
        %826 = vmatprep.mubr.f32.mxu0 0.0
        %827 = vmatmul.mubr.f32.gmra.mrb[0].mxu0 %v436
        %v828 = vpop.f32.mrb[0].mxu0
        %v829 = vadd.f32 %v306, %v828
        %v830 = vpop.f32.mrb[0].mxu0
        %831 = vdwg.mxu0
        %v832 = vmul.f32 %v829, 2.0
        %v833 = vadd.f32 %v670, %v832
        %v834 = vmul.f32 %v829, 0.125
        %v835 = vadd.f32 %v247, %v834
        %836 = vmatprep.subr.mxu0 0.0
        %837 = vmatpush1.msra.mxu0 %v835
        %838 = vmatprep.subr.mxu0 0.0
        %839 = vmatpush1.msra.mxu0 0.0
        %840 = vmatprep.subr.mxu0 0.0
        %841 = vmatpush1.msra.mxu0 0.0
        %842 = vmatprep.subr.mxu0 0.0
        %843 = vmatpush1.msra.mxu0 0.0
        %844 = vmatprep.subr.mxu0 0.0
        %845 = vmatpush1.msra.mxu0 0.0
        %846 = vmatprep.subr.mxu0 0.0
        %847 = vmatpush1.msra.mxu0 0.0
        %848 = vmatprep.subr.mxu0 0.0
        %849 = vmatpush1.msra.mxu0 0.0
        %850 = vmatprep.subr.mxu0 0.0
        %851 = vmatpush1.msra.mxu0 0.0
        %852 = vmatprep.subr.mxu0 0.0
        %853 = vmatpush1.msra.mxu0 0.0
        %854 = vmatprep.subr.mxu0 0.0
        %855 = vmatpush1.msra.mxu0 0.0
        %856 = vmatprep.subr.mxu0 0.0
        %857 = vmatpush1.msra.mxu0 0.0
        %858 = vmatprep.subr.mxu0 0.0
        %859 = vmatpush1.msra.mxu0 0.0
        %860 = vmatprep.subr.mxu0 0.0
        %861 = vmatpush1.msra.mxu0 0.0
        %862 = vmatprep.subr.mxu0 0.0
        %863 = vmatpush1.msra.mxu0 0.0
        %864 = vmatprep.subr.mxu0 0.0
        %865 = vmatpush1.msra.mxu0 0.0
        %866 = vmatprep.subr.mxu0 0.0
        %867 = vmatpush1.msra.mxu0 0.0
        %868 = vmatprep.subr.mxu0 0.0
        %869 = vmatpush1.msra.mxu0 0.0
        %870 = vmatprep.subr.mxu0 0.0
        %871 = vmatpush1.msra.mxu0 0.0
        %872 = vmatprep.subr.mxu0 0.0
        %873 = vmatpush1.msra.mxu0 0.0
        %874 = vmatprep.subr.mxu0 0.0
        %875 = vmatpush1.msra.mxu0 0.0
        %876 = vmatprep.subr.mxu0 0.0
        %877 = vmatpush1.msra.mxu0 0.0
        %878 = vmatprep.subr.mxu0 0.0
        %879 = vmatpush1.msra.mxu0 0.0
        %880 = vmatprep.subr.mxu0 0.0
        %881 = vmatpush1.msra.mxu0 0.0
        %882 = vmatprep.subr.mxu0 0.0
        %883 = vmatpush1.msra.mxu0 0.0
        %884 = vmatprep.subr.mxu0 0.0
        %885 = vmatpush1.msra.mxu0 0.0
        %886 = vmatprep.subr.mxu0 0.0
        %887 = vmatpush1.msra.mxu0 0.0
        %888 = vmatprep.subr.mxu0 0.0
        %889 = vmatpush1.msra.mxu0 0.0
        %890 = vmatprep.subr.mxu0 0.0
        %891 = vmatpush1.msra.mxu0 0.0
        %892 = vmatprep.subr.mxu0 0.0
        %893 = vmatpush1.msra.mxu0 0.0
        %894 = vmatprep.subr.mxu0 0.0
        %895 = vmatpush1.msra.mxu0 0.0
        %896 = vmatprep.subr.mxu0 0.0
        %897 = vmatpush1.msra.mxu0 0.0
        %898 = vmatprep.subr.mxu0 0.0
        %899 = vmatpush1.msra.mxu0 0.0
        %900 = vmatprep.mubr.f32.mxu0 0.0
        %901 = vmatmul.mubr.f32.gmra.mrb[0].mxu0 %v334
        %v902 = vpop.f32.mrb[0].mxu0
        %v903 = vadd.f32 %v328, %v902
        %v904 = vpop.f32.mrb[0].mxu0
        %905 = vmatprep.mubr.f32.mxu0 0.0
        %906 = vmatmul.mubr.f32.gmra.mrb[0].mxu0 %v337
        %v907 = vpop.f32.mrb[0].mxu0
        %v908 = vadd.f32 %v329, %v907
        %v909 = vpop.f32.mrb[0].mxu0
        %910 = vmatprep.mubr.f32.mxu0 0.0
        %911 = vmatmul.mubr.f32.gmra.mrb[0].mxu0 %v340
        %v912 = vpop.f32.mrb[0].mxu0
        %v913 = vadd.f32 %v330, %v912
        %v914 = vpop.f32.mrb[0].mxu0
        %915 = vmatprep.mubr.f32.mxu0 0.0
        %916 = vmatmul.mubr.f32.gmra.mrb[0].mxu0 %v343
        %v917 = vpop.f32.mrb[0].mxu0
        %v918 = vadd.f32 %v331, %v917
        %v919 = vpop.f32.mrb[0].mxu0
        %920 = vdwg.mxu0
        %v921 = vtanh.pop %v903
        %v922 = vtanh.pop %v908
        %v923 = vtanh.pop %v913
        %v924 = vtanh.pop %v918
        %925 = vmatprep.subr.mxu0 0.0
        %926 = vmatpush1.msra.mxu0 %v921
        %927 = vmatprep.subr.mxu0 0.0
        %928 = vmatpush1.msra.mxu0 %v922
        %929 = vmatprep.subr.mxu0 0.0
        %930 = vmatpush1.msra.mxu0 %v923
        %931 = vmatprep.subr.mxu0 0.0
        %932 = vmatpush1.msra.mxu0 %v924
        %933 = vmatprep.subr.mxu0 0.0
        %934 = vmatpush1.msra.mxu0 0.0
        %935 = vmatprep.subr.mxu0 0.0
        %936 = vmatpush1.msra.mxu0 0.0
        %937 = vmatprep.subr.mxu0 0.0
        %938 = vmatpush1.msra.mxu0 0.0
        %939 = vmatprep.subr.mxu0 0.0
        %940 = vmatpush1.msra.mxu0 0.0
        %941 = vmatprep.subr.mxu0 0.0
        %942 = vmatpush1.msra.mxu0 0.0
        %943 = vmatprep.subr.mxu0 0.0
        %944 = vmatpush1.msra.mxu0 0.0
        %945 = vmatprep.subr.mxu0 0.0
        %946 = vmatpush1.msra.mxu0 0.0
        %947 = vmatprep.subr.mxu0 0.0
        %948 = vmatpush1.msra.mxu0 0.0
        %949 = vmatprep.subr.mxu0 0.0
        %950 = vmatpush1.msra.mxu0 0.0
        %951 = vmatprep.subr.mxu0 0.0
        %952 = vmatpush1.msra.mxu0 0.0
        %953 = vmatprep.subr.mxu0 0.0
        %954 = vmatpush1.msra.mxu0 0.0
        %955 = vmatprep.subr.mxu0 0.0
        %956 = vmatpush1.msra.mxu0 0.0
        %957 = vmatprep.subr.mxu0 0.0
        %958 = vmatpush1.msra.mxu0 0.0
        %959 = vmatprep.subr.mxu0 0.0
        %960 = vmatpush1.msra.mxu0 0.0
        %961 = vmatprep.subr.mxu0 0.0
        %962 = vmatpush1.msra.mxu0 0.0
        %963 = vmatprep.subr.mxu0 0.0
        %964 = vmatpush1.msra.mxu0 0.0
        %965 = vmatprep.subr.mxu0 0.0
        %966 = vmatpush1.msra.mxu0 0.0
        %967 = vmatprep.subr.mxu0 0.0
        %968 = vmatpush1.msra.mxu0 0.0
        %969 = vmatprep.subr.mxu0 0.0
        %970 = vmatpush1.msra.mxu0 0.0
        %971 = vmatprep.subr.mxu0 0.0
        %972 = vmatpush1.msra.mxu0 0.0
        %973 = vmatprep.subr.mxu0 0.0
        %974 = vmatpush1.msra.mxu0 0.0
        %975 = vmatprep.subr.mxu0 0.0
        %976 = vmatpush1.msra.mxu0 0.0
        %977 = vmatprep.subr.mxu0 0.0
        %978 = vmatpush1.msra.mxu0 0.0
        %979 = vmatprep.subr.mxu0 0.0
        %980 = vmatpush1.msra.mxu0 0.0
        %981 = vmatprep.subr.mxu0 0.0
        %982 = vmatpush1.msra.mxu0 0.0
        %983 = vmatprep.subr.mxu0 0.0
        %984 = vmatpush1.msra.mxu0 0.0
        %985 = vmatprep.subr.mxu0 0.0
        %986 = vmatpush1.msra.mxu0 0.0
        %987 = vmatprep.subr.mxu0 0.0
        %988 = vmatpush1.msra.mxu0 0.0
        %989 = vmatprep.mubr.f32.mxu0 0.0
        %990 = vmatmul.mubr.f32.gmra.mrb[0].mxu0 %v436
        %v991 = vpop.f32.mrb[0].mxu0
        %v992 = vadd.f32 %v306, %v991
        %v993 = vpop.f32.mrb[0].mxu0
        %994 = vdwg.mxu0
        %v995 = vadd.f32 %v833, %v992
        %v996 = vmul.f32 %v995, 0.020833334
        %v997 = vadd.f32 %v247, %v996
        %s998 = scalar_lea.vmem %s242, 8 [#allocation2]
        %999 = vst [vmem:[%s998] sm:$0xff] %v997
        %v1000 = vmul.f32 %v261, 0.1875
        %v1001 = vmul.f32 %v266, 0.1875
        %v1002 = vmul.f32 %v271, 0.1875
        %v1003 = vmul.f32 %v276, 0.1875
        %v1004 = vadd.f32 %v1000, %v285
        %v1005 = vadd.f32 %v1001, %v290
        %v1006 = vadd.f32 %v1002, %v295
        %v1007 = vadd.f32 %v1003, %v300
        %v1008 = vmul.f32 %v261, 0.25
        %v1009 = vmul.f32 %v266, 0.25
        %v1010 = vmul.f32 %v271, 0.25
        %v1011 = vmul.f32 %v276, 0.25
        %v1012 = vadd.f32 %v1008, %v285
        %v1013 = vadd.f32 %v1009, %v290
        %v1014 = vadd.f32 %v1010, %v295
        %v1015 = vadd.f32 %v1011, %v300
        %1016 = vmatprep.subr.mxu0 0.0
        %1017 = vmatpush1.msra.mxu0 %v997
        %1018 = vmatprep.subr.mxu0 0.0
        %1019 = vmatpush1.msra.mxu0 0.0
        %1020 = vmatprep.subr.mxu0 0.0
        %1021 = vmatpush1.msra.mxu0 0.0
        %1022 = vmatprep.subr.mxu0 0.0
        %1023 = vmatpush1.msra.mxu0 0.0
        %1024 = vmatprep.subr.mxu0 0.0
        %1025 = vmatpush1.msra.mxu0 0.0
        %1026 = vmatprep.subr.mxu0 0.0
        %1027 = vmatpush1.msra.mxu0 0.0
        %1028 = vmatprep.subr.mxu0 0.0
        %1029 = vmatpush1.msra.mxu0 0.0
        %1030 = vmatprep.subr.mxu0 0.0
        %1031 = vmatpush1.msra.mxu0 0.0
        %1032 = vmatprep.subr.mxu0 0.0
        %1033 = vmatpush1.msra.mxu0 0.0
        %1034 = vmatprep.subr.mxu0 0.0
        %1035 = vmatpush1.msra.mxu0 0.0
        %1036 = vmatprep.subr.mxu0 0.0
        %1037 = vmatpush1.msra.mxu0 0.0
        %1038 = vmatprep.subr.mxu0 0.0
        %1039 = vmatpush1.msra.mxu0 0.0
        %1040 = vmatprep.subr.mxu0 0.0
        %1041 = vmatpush1.msra.mxu0 0.0
        %1042 = vmatprep.subr.mxu0 0.0
        %1043 = vmatpush1.msra.mxu0 0.0
        %1044 = vmatprep.subr.mxu0 0.0
        %1045 = vmatpush1.msra.mxu0 0.0
        %1046 = vmatprep.subr.mxu0 0.0
        %1047 = vmatpush1.msra.mxu0 0.0
        %1048 = vmatprep.subr.mxu0 0.0
        %1049 = vmatpush1.msra.mxu0 0.0
        %1050 = vmatprep.subr.mxu0 0.0
        %1051 = vmatpush1.msra.mxu0 0.0
        %1052 = vmatprep.subr.mxu0 0.0
        %1053 = vmatpush1.msra.mxu0 0.0
        %1054 = vmatprep.subr.mxu0 0.0
        %1055 = vmatpush1.msra.mxu0 0.0
        %1056 = vmatprep.subr.mxu0 0.0
        %1057 = vmatpush1.msra.mxu0 0.0
        %1058 = vmatprep.subr.mxu0 0.0
        %1059 = vmatpush1.msra.mxu0 0.0
        %1060 = vmatprep.subr.mxu0 0.0
        %1061 = vmatpush1.msra.mxu0 0.0
        %1062 = vmatprep.subr.mxu0 0.0
        %1063 = vmatpush1.msra.mxu0 0.0
        %1064 = vmatprep.subr.mxu0 0.0
        %1065 = vmatpush1.msra.mxu0 0.0
        %1066 = vmatprep.subr.mxu0 0.0
        %1067 = vmatpush1.msra.mxu0 0.0
        %1068 = vmatprep.subr.mxu0 0.0
        %1069 = vmatpush1.msra.mxu0 0.0
        %1070 = vmatprep.subr.mxu0 0.0
        %1071 = vmatpush1.msra.mxu0 0.0
        %1072 = vmatprep.subr.mxu0 0.0
        %1073 = vmatpush1.msra.mxu0 0.0
        %1074 = vmatprep.subr.mxu0 0.0
        %1075 = vmatpush1.msra.mxu0 0.0
        %1076 = vmatprep.subr.mxu0 0.0
        %1077 = vmatpush1.msra.mxu0 0.0
        %1078 = vmatprep.subr.mxu0 0.0
        %1079 = vmatpush1.msra.mxu0 0.0
        %1080 = vmatprep.mubr.f32.mxu0 0.0
        %1081 = vmatmul.mubr.f32.gmra.mrb[0].mxu0 %v334
        %v1082 = vpop.f32.mrb[0].mxu0
        %v1083 = vadd.f32 %v328, %v1082
        %v1084 = vpop.f32.mrb[0].mxu0
        %1085 = vmatprep.mubr.f32.mxu0 0.0
        %1086 = vmatmul.mubr.f32.gmra.mrb[0].mxu0 %v337
        %v1087 = vpop.f32.mrb[0].mxu0
        %v1088 = vadd.f32 %v329, %v1087
        %v1089 = vpop.f32.mrb[0].mxu0
        %1090 = vmatprep.mubr.f32.mxu0 0.0
        %1091 = vmatmul.mubr.f32.gmra.mrb[0].mxu0 %v340
        %v1092 = vpop.f32.mrb[0].mxu0
        %v1093 = vadd.f32 %v330, %v1092
        %v1094 = vpop.f32.mrb[0].mxu0
        %1095 = vmatprep.mubr.f32.mxu0 0.0
        %1096 = vmatmul.mubr.f32.gmra.mrb[0].mxu0 %v343
        %v1097 = vpop.f32.mrb[0].mxu0
        %v1098 = vadd.f32 %v331, %v1097
        %v1099 = vpop.f32.mrb[0].mxu0
        %1100 = vdwg.mxu0
        %v1101 = vtanh.pop %v1083
        %v1102 = vtanh.pop %v1088
        %v1103 = vtanh.pop %v1093
        %v1104 = vtanh.pop %v1098
        %1105 = vmatprep.subr.mxu0 0.0
        %1106 = vmatpush1.msra.mxu0 %v1101
        %1107 = vmatprep.subr.mxu0 0.0
        %1108 = vmatpush1.msra.mxu0 %v1102
        %1109 = vmatprep.subr.mxu0 0.0
        %1110 = vmatpush1.msra.mxu0 %v1103
        %1111 = vmatprep.subr.mxu0 0.0
        %1112 = vmatpush1.msra.mxu0 %v1104
        %1113 = vmatprep.subr.mxu0 0.0
        %1114 = vmatpush1.msra.mxu0 0.0
        %1115 = vmatprep.subr.mxu0 0.0
        %1116 = vmatpush1.msra.mxu0 0.0
        %1117 = vmatprep.subr.mxu0 0.0
        %1118 = vmatpush1.msra.mxu0 0.0
        %1119 = vmatprep.subr.mxu0 0.0
        %1120 = vmatpush1.msra.mxu0 0.0
        %1121 = vmatprep.subr.mxu0 0.0
        %1122 = vmatpush1.msra.mxu0 0.0
        %1123 = vmatprep.subr.mxu0 0.0
        %1124 = vmatpush1.msra.mxu0 0.0
        %1125 = vmatprep.subr.mxu0 0.0
        %1126 = vmatpush1.msra.mxu0 0.0
        %1127 = vmatprep.subr.mxu0 0.0
        %1128 = vmatpush1.msra.mxu0 0.0
        %1129 = vmatprep.subr.mxu0 0.0
        %1130 = vmatpush1.msra.mxu0 0.0
        %1131 = vmatprep.subr.mxu0 0.0
        %1132 = vmatpush1.msra.mxu0 0.0
        %1133 = vmatprep.subr.mxu0 0.0
        %1134 = vmatpush1.msra.mxu0 0.0
        %1135 = vmatprep.subr.mxu0 0.0
        %1136 = vmatpush1.msra.mxu0 0.0
        %1137 = vmatprep.subr.mxu0 0.0
        %1138 = vmatpush1.msra.mxu0 0.0
        %1139 = vmatprep.subr.mxu0 0.0
        %1140 = vmatpush1.msra.mxu0 0.0
        %1141 = vmatprep.subr.mxu0 0.0
        %1142 = vmatpush1.msra.mxu0 0.0
        %1143 = vmatprep.subr.mxu0 0.0
        %1144 = vmatpush1.msra.mxu0 0.0
        %1145 = vmatprep.subr.mxu0 0.0
        %1146 = vmatpush1.msra.mxu0 0.0
        %1147 = vmatprep.subr.mxu0 0.0
        %1148 = vmatpush1.msra.mxu0 0.0
        %1149 = vmatprep.subr.mxu0 0.0
        %1150 = vmatpush1.msra.mxu0 0.0
        %1151 = vmatprep.subr.mxu0 0.0
        %1152 = vmatpush1.msra.mxu0 0.0
        %1153 = vmatprep.subr.mxu0 0.0
        %1154 = vmatpush1.msra.mxu0 0.0
        %1155 = vmatprep.subr.mxu0 0.0
        %1156 = vmatpush1.msra.mxu0 0.0
        %1157 = vmatprep.subr.mxu0 0.0
        %1158 = vmatpush1.msra.mxu0 0.0
        %1159 = vmatprep.subr.mxu0 0.0
        %1160 = vmatpush1.msra.mxu0 0.0
        %1161 = vmatprep.subr.mxu0 0.0
        %1162 = vmatpush1.msra.mxu0 0.0
        %1163 = vmatprep.subr.mxu0 0.0
        %1164 = vmatpush1.msra.mxu0 0.0
        %1165 = vmatprep.subr.mxu0 0.0
        %1166 = vmatpush1.msra.mxu0 0.0
        %1167 = vmatprep.subr.mxu0 0.0
        %1168 = vmatpush1.msra.mxu0 0.0
        %1169 = vmatprep.mubr.f32.mxu0 0.0
        %1170 = vmatmul.mubr.f32.gmra.mrb[0].mxu0 %v436
        %v1171 = vpop.f32.mrb[0].mxu0
        %v1172 = vadd.f32 %v306, %v1171
        %v1173 = vpop.f32.mrb[0].mxu0
        %1174 = vdwg.mxu0
        %v1175 = vmul.f32 %v1172, 0.0625
        %v1176 = vadd.f32 %v997, %v1175
        %1177 = vmatprep.subr.mxu0 0.0
        %1178 = vmatpush1.msra.mxu0 %v1176
        %1179 = vmatprep.subr.mxu0 0.0
        %1180 = vmatpush1.msra.mxu0 0.0
        %1181 = vmatprep.subr.mxu0 0.0
        %1182 = vmatpush1.msra.mxu0 0.0
        %1183 = vmatprep.subr.mxu0 0.0
        %1184 = vmatpush1.msra.mxu0 0.0
        %1185 = vmatprep.subr.mxu0 0.0
        %1186 = vmatpush1.msra.mxu0 0.0
        %1187 = vmatprep.subr.mxu0 0.0
        %1188 = vmatpush1.msra.mxu0 0.0
        %1189 = vmatprep.subr.mxu0 0.0
        %1190 = vmatpush1.msra.mxu0 0.0
        %1191 = vmatprep.subr.mxu0 0.0
        %1192 = vmatpush1.msra.mxu0 0.0
        %1193 = vmatprep.subr.mxu0 0.0
        %1194 = vmatpush1.msra.mxu0 0.0
        %1195 = vmatprep.subr.mxu0 0.0
        %1196 = vmatpush1.msra.mxu0 0.0
        %1197 = vmatprep.subr.mxu0 0.0
        %1198 = vmatpush1.msra.mxu0 0.0
        %1199 = vmatprep.subr.mxu0 0.0
        %1200 = vmatpush1.msra.mxu0 0.0
        %1201 = vmatprep.subr.mxu0 0.0
        %1202 = vmatpush1.msra.mxu0 0.0
        %1203 = vmatprep.subr.mxu0 0.0
        %1204 = vmatpush1.msra.mxu0 0.0
        %1205 = vmatprep.subr.mxu0 0.0
        %1206 = vmatpush1.msra.mxu0 0.0
        %1207 = vmatprep.subr.mxu0 0.0
        %1208 = vmatpush1.msra.mxu0 0.0
        %1209 = vmatprep.subr.mxu0 0.0
        %1210 = vmatpush1.msra.mxu0 0.0
        %1211 = vmatprep.subr.mxu0 0.0
        %1212 = vmatpush1.msra.mxu0 0.0
        %1213 = vmatprep.subr.mxu0 0.0
        %1214 = vmatpush1.msra.mxu0 0.0
        %1215 = vmatprep.subr.mxu0 0.0
        %1216 = vmatpush1.msra.mxu0 0.0
        %1217 = vmatprep.subr.mxu0 0.0
        %1218 = vmatpush1.msra.mxu0 0.0
        %1219 = vmatprep.subr.mxu0 0.0
        %1220 = vmatpush1.msra.mxu0 0.0
        %1221 = vmatprep.subr.mxu0 0.0
        %1222 = vmatpush1.msra.mxu0 0.0
        %1223 = vmatprep.subr.mxu0 0.0
        %1224 = vmatpush1.msra.mxu0 0.0
        %1225 = vmatprep.subr.mxu0 0.0
        %1226 = vmatpush1.msra.mxu0 0.0
        %1227 = vmatprep.subr.mxu0 0.0
        %1228 = vmatpush1.msra.mxu0 0.0
        %1229 = vmatprep.subr.mxu0 0.0
        %1230 = vmatpush1.msra.mxu0 0.0
        %1231 = vmatprep.subr.mxu0 0.0
        %1232 = vmatpush1.msra.mxu0 0.0
        %1233 = vmatprep.subr.mxu0 0.0
        %1234 = vmatpush1.msra.mxu0 0.0
        %1235 = vmatprep.subr.mxu0 0.0
        %1236 = vmatpush1.msra.mxu0 0.0
        %1237 = vmatprep.subr.mxu0 0.0
        %1238 = vmatpush1.msra.mxu0 0.0
        %1239 = vmatprep.subr.mxu0 0.0
        %1240 = vmatpush1.msra.mxu0 0.0
        %1241 = vmatprep.mubr.f32.mxu0 0.0
        %1242 = vmatmul.mubr.f32.gmra.mrb[0].mxu0 %v334
        %v1243 = vpop.f32.mrb[0].mxu0
        %v1244 = vadd.f32 %v1004, %v1243
        %v1245 = vpop.f32.mrb[0].mxu0
        %1246 = vmatprep.mubr.f32.mxu0 0.0
        %1247 = vmatmul.mubr.f32.gmra.mrb[0].mxu0 %v337
        %v1248 = vpop.f32.mrb[0].mxu0
        %v1249 = vadd.f32 %v1005, %v1248
        %v1250 = vpop.f32.mrb[0].mxu0
        %1251 = vmatprep.mubr.f32.mxu0 0.0
        %1252 = vmatmul.mubr.f32.gmra.mrb[0].mxu0 %v340
        %v1253 = vpop.f32.mrb[0].mxu0
        %v1254 = vadd.f32 %v1006, %v1253
        %v1255 = vpop.f32.mrb[0].mxu0
        %1256 = vmatprep.mubr.f32.mxu0 0.0
        %1257 = vmatmul.mubr.f32.gmra.mrb[0].mxu0 %v343
        %v1258 = vpop.f32.mrb[0].mxu0
        %v1259 = vadd.f32 %v1007, %v1258
        %v1260 = vpop.f32.mrb[0].mxu0
        %1261 = vdwg.mxu0
        %v1262 = vtanh.pop %v1244
        %v1263 = vtanh.pop %v1249
        %v1264 = vtanh.pop %v1254
        %v1265 = vtanh.pop %v1259
        %1266 = vmatprep.subr.mxu0 0.0
        %1267 = vmatpush1.msra.mxu0 %v1262
        %1268 = vmatprep.subr.mxu0 0.0
        %1269 = vmatpush1.msra.mxu0 %v1263
        %1270 = vmatprep.subr.mxu0 0.0
        %1271 = vmatpush1.msra.mxu0 %v1264
        %1272 = vmatprep.subr.mxu0 0.0
        %1273 = vmatpush1.msra.mxu0 %v1265
        %1274 = vmatprep.subr.mxu0 0.0
        %1275 = vmatpush1.msra.mxu0 0.0
        %1276 = vmatprep.subr.mxu0 0.0
        %1277 = vmatpush1.msra.mxu0 0.0
        %1278 = vmatprep.subr.mxu0 0.0
        %1279 = vmatpush1.msra.mxu0 0.0
        %1280 = vmatprep.subr.mxu0 0.0
        %1281 = vmatpush1.msra.mxu0 0.0
        %1282 = vmatprep.subr.mxu0 0.0
        %1283 = vmatpush1.msra.mxu0 0.0
        %1284 = vmatprep.subr.mxu0 0.0
        %1285 = vmatpush1.msra.mxu0 0.0
        %1286 = vmatprep.subr.mxu0 0.0
        %1287 = vmatpush1.msra.mxu0 0.0
        %1288 = vmatprep.subr.mxu0 0.0
        %1289 = vmatpush1.msra.mxu0 0.0
        %1290 = vmatprep.subr.mxu0 0.0
        %1291 = vmatpush1.msra.mxu0 0.0
        %1292 = vmatprep.subr.mxu0 0.0
        %1293 = vmatpush1.msra.mxu0 0.0
        %1294 = vmatprep.subr.mxu0 0.0
        %1295 = vmatpush1.msra.mxu0 0.0
        %1296 = vmatprep.subr.mxu0 0.0
        %1297 = vmatpush1.msra.mxu0 0.0
        %1298 = vmatprep.subr.mxu0 0.0
        %1299 = vmatpush1.msra.mxu0 0.0
        %1300 = vmatprep.subr.mxu0 0.0
        %1301 = vmatpush1.msra.mxu0 0.0
        %1302 = vmatprep.subr.mxu0 0.0
        %1303 = vmatpush1.msra.mxu0 0.0
        %1304 = vmatprep.subr.mxu0 0.0
        %1305 = vmatpush1.msra.mxu0 0.0
        %1306 = vmatprep.subr.mxu0 0.0
        %1307 = vmatpush1.msra.mxu0 0.0
        %1308 = vmatprep.subr.mxu0 0.0
        %1309 = vmatpush1.msra.mxu0 0.0
        %1310 = vmatprep.subr.mxu0 0.0
        %1311 = vmatpush1.msra.mxu0 0.0
        %1312 = vmatprep.subr.mxu0 0.0
        %1313 = vmatpush1.msra.mxu0 0.0
        %1314 = vmatprep.subr.mxu0 0.0
        %1315 = vmatpush1.msra.mxu0 0.0
        %1316 = vmatprep.subr.mxu0 0.0
        %1317 = vmatpush1.msra.mxu0 0.0
        %1318 = vmatprep.subr.mxu0 0.0
        %1319 = vmatpush1.msra.mxu0 0.0
        %1320 = vmatprep.subr.mxu0 0.0
        %1321 = vmatpush1.msra.mxu0 0.0
        %1322 = vmatprep.subr.mxu0 0.0
        %1323 = vmatpush1.msra.mxu0 0.0
        %1324 = vmatprep.subr.mxu0 0.0
        %1325 = vmatpush1.msra.mxu0 0.0
        %1326 = vmatprep.subr.mxu0 0.0
        %1327 = vmatpush1.msra.mxu0 0.0
        %1328 = vmatprep.subr.mxu0 0.0
        %1329 = vmatpush1.msra.mxu0 0.0
        %1330 = vmatprep.mubr.f32.mxu0 0.0
        %1331 = vmatmul.mubr.f32.gmra.mrb[0].mxu0 %v436
        %v1332 = vpop.f32.mrb[0].mxu0
        %v1333 = vadd.f32 %v306, %v1332
        %v1334 = vpop.f32.mrb[0].mxu0
        %1335 = vdwg.mxu0
        %v1336 = vmul.f32 %v1333, 2.0
        %v1337 = vadd.f32 %v1172, %v1336
        %v1338 = vmul.f32 %v1333, 0.0625
        %v1339 = vadd.f32 %v997, %v1338
        %1340 = vmatprep.subr.mxu0 0.0
        %1341 = vmatpush1.msra.mxu0 %v1339
        %1342 = vmatprep.subr.mxu0 0.0
        %1343 = vmatpush1.msra.mxu0 0.0
        %1344 = vmatprep.subr.mxu0 0.0
        %1345 = vmatpush1.msra.mxu0 0.0
        %1346 = vmatprep.subr.mxu0 0.0
        %1347 = vmatpush1.msra.mxu0 0.0
        %1348 = vmatprep.subr.mxu0 0.0
        %1349 = vmatpush1.msra.mxu0 0.0
        %1350 = vmatprep.subr.mxu0 0.0
        %1351 = vmatpush1.msra.mxu0 0.0
        %1352 = vmatprep.subr.mxu0 0.0
        %1353 = vmatpush1.msra.mxu0 0.0
        %1354 = vmatprep.subr.mxu0 0.0
        %1355 = vmatpush1.msra.mxu0 0.0
        %1356 = vmatprep.subr.mxu0 0.0
        %1357 = vmatpush1.msra.mxu0 0.0
        %1358 = vmatprep.subr.mxu0 0.0
        %1359 = vmatpush1.msra.mxu0 0.0
        %1360 = vmatprep.subr.mxu0 0.0
        %1361 = vmatpush1.msra.mxu0 0.0
        %1362 = vmatprep.subr.mxu0 0.0
        %1363 = vmatpush1.msra.mxu0 0.0
        %1364 = vmatprep.subr.mxu0 0.0
        %1365 = vmatpush1.msra.mxu0 0.0
        %1366 = vmatprep.subr.mxu0 0.0
        %1367 = vmatpush1.msra.mxu0 0.0
        %1368 = vmatprep.subr.mxu0 0.0
        %1369 = vmatpush1.msra.mxu0 0.0
        %1370 = vmatprep.subr.mxu0 0.0
        %1371 = vmatpush1.msra.mxu0 0.0
        %1372 = vmatprep.subr.mxu0 0.0
        %1373 = vmatpush1.msra.mxu0 0.0
        %1374 = vmatprep.subr.mxu0 0.0
        %1375 = vmatpush1.msra.mxu0 0.0
        %1376 = vmatprep.subr.mxu0 0.0
        %1377 = vmatpush1.msra.mxu0 0.0
        %1378 = vmatprep.subr.mxu0 0.0
        %1379 = vmatpush1.msra.mxu0 0.0
        %1380 = vmatprep.subr.mxu0 0.0
        %1381 = vmatpush1.msra.mxu0 0.0
        %1382 = vmatprep.subr.mxu0 0.0
        %1383 = vmatpush1.msra.mxu0 0.0
        %1384 = vmatprep.subr.mxu0 0.0
        %1385 = vmatpush1.msra.mxu0 0.0
        %1386 = vmatprep.subr.mxu0 0.0
        %1387 = vmatpush1.msra.mxu0 0.0
        %1388 = vmatprep.subr.mxu0 0.0
        %1389 = vmatpush1.msra.mxu0 0.0
        %1390 = vmatprep.subr.mxu0 0.0
        %1391 = vmatpush1.msra.mxu0 0.0
        %1392 = vmatprep.subr.mxu0 0.0
        %1393 = vmatpush1.msra.mxu0 0.0
        %1394 = vmatprep.subr.mxu0 0.0
        %1395 = vmatpush1.msra.mxu0 0.0
        %1396 = vmatprep.subr.mxu0 0.0
        %1397 = vmatpush1.msra.mxu0 0.0
        %1398 = vmatprep.subr.mxu0 0.0
        %1399 = vmatpush1.msra.mxu0 0.0
        %1400 = vmatprep.subr.mxu0 0.0
        %1401 = vmatpush1.msra.mxu0 0.0
        %1402 = vmatprep.subr.mxu0 0.0
        %1403 = vmatpush1.msra.mxu0 0.0
        %1404 = vmatprep.mubr.f32.mxu0 0.0
        %1405 = vmatmul.mubr.f32.gmra.mrb[0].mxu0 %v334
        %v1406 = vpop.f32.mrb[0].mxu0
        %v1407 = vadd.f32 %v1004, %v1406
        %v1408 = vpop.f32.mrb[0].mxu0
        %1409 = vmatprep.mubr.f32.mxu0 0.0
        %1410 = vmatmul.mubr.f32.gmra.mrb[0].mxu0 %v337
        %v1411 = vpop.f32.mrb[0].mxu0
        %v1412 = vadd.f32 %v1005, %v1411
        %v1413 = vpop.f32.mrb[0].mxu0
        %1414 = vmatprep.mubr.f32.mxu0 0.0
        %1415 = vmatmul.mubr.f32.gmra.mrb[0].mxu0 %v340
        %v1416 = vpop.f32.mrb[0].mxu0
        %v1417 = vadd.f32 %v1006, %v1416
        %v1418 = vpop.f32.mrb[0].mxu0
        %1419 = vmatprep.mubr.f32.mxu0 0.0
        %1420 = vmatmul.mubr.f32.gmra.mrb[0].mxu0 %v343
        %v1421 = vpop.f32.mrb[0].mxu0
        %v1422 = vadd.f32 %v1007, %v1421
        %v1423 = vpop.f32.mrb[0].mxu0
        %1424 = vdwg.mxu0
        %v1425 = vtanh.pop %v1407
        %v1426 = vtanh.pop %v1412
        %v1427 = vtanh.pop %v1417
        %v1428 = vtanh.pop %v1422
        %1429 = vmatprep.subr.mxu0 0.0
        %1430 = vmatpush1.msra.mxu0 %v1425
        %1431 = vmatprep.subr.mxu0 0.0
        %1432 = vmatpush1.msra.mxu0 %v1426
        %1433 = vmatprep.subr.mxu0 0.0
        %1434 = vmatpush1.msra.mxu0 %v1427
        %1435 = vmatprep.subr.mxu0 0.0
        %1436 = vmatpush1.msra.mxu0 %v1428
        %1437 = vmatprep.subr.mxu0 0.0
        %1438 = vmatpush1.msra.mxu0 0.0
        %1439 = vmatprep.subr.mxu0 0.0
        %1440 = vmatpush1.msra.mxu0 0.0
        %1441 = vmatprep.subr.mxu0 0.0
        %1442 = vmatpush1.msra.mxu0 0.0
        %1443 = vmatprep.subr.mxu0 0.0
        %1444 = vmatpush1.msra.mxu0 0.0
        %1445 = vmatprep.subr.mxu0 0.0
        %1446 = vmatpush1.msra.mxu0 0.0
        %1447 = vmatprep.subr.mxu0 0.0
        %1448 = vmatpush1.msra.mxu0 0.0
        %1449 = vmatprep.subr.mxu0 0.0
        %1450 = vmatpush1.msra.mxu0 0.0
        %1451 = vmatprep.subr.mxu0 0.0
        %1452 = vmatpush1.msra.mxu0 0.0
        %1453 = vmatprep.subr.mxu0 0.0
        %1454 = vmatpush1.msra.mxu0 0.0
        %1455 = vmatprep.subr.mxu0 0.0
        %1456 = vmatpush1.msra.mxu0 0.0
        %1457 = vmatprep.subr.mxu0 0.0
        %1458 = vmatpush1.msra.mxu0 0.0
        %1459 = vmatprep.subr.mxu0 0.0
        %1460 = vmatpush1.msra.mxu0 0.0
        %1461 = vmatprep.subr.mxu0 0.0
        %1462 = vmatpush1.msra.mxu0 0.0
        %1463 = vmatprep.subr.mxu0 0.0
        %1464 = vmatpush1.msra.mxu0 0.0
        %1465 = vmatprep.subr.mxu0 0.0
        %1466 = vmatpush1.msra.mxu0 0.0
        %1467 = vmatprep.subr.mxu0 0.0
        %1468 = vmatpush1.msra.mxu0 0.0
        %1469 = vmatprep.subr.mxu0 0.0
        %1470 = vmatpush1.msra.mxu0 0.0
        %1471 = vmatprep.subr.mxu0 0.0
        %1472 = vmatpush1.msra.mxu0 0.0
        %1473 = vmatprep.subr.mxu0 0.0
        %1474 = vmatpush1.msra.mxu0 0.0
        %1475 = vmatprep.subr.mxu0 0.0
        %1476 = vmatpush1.msra.mxu0 0.0
        %1477 = vmatprep.subr.mxu0 0.0
        %1478 = vmatpush1.msra.mxu0 0.0
        %1479 = vmatprep.subr.mxu0 0.0
        %1480 = vmatpush1.msra.mxu0 0.0
        %1481 = vmatprep.subr.mxu0 0.0
        %1482 = vmatpush1.msra.mxu0 0.0
        %1483 = vmatprep.subr.mxu0 0.0
        %1484 = vmatpush1.msra.mxu0 0.0
        %1485 = vmatprep.subr.mxu0 0.0
        %1486 = vmatpush1.msra.mxu0 0.0
        %1487 = vmatprep.subr.mxu0 0.0
        %1488 = vmatpush1.msra.mxu0 0.0
        %1489 = vmatprep.subr.mxu0 0.0
        %1490 = vmatpush1.msra.mxu0 0.0
        %1491 = vmatprep.subr.mxu0 0.0
        %1492 = vmatpush1.msra.mxu0 0.0
        %1493 = vmatprep.mubr.f32.mxu0 0.0
        %1494 = vmatmul.mubr.f32.gmra.mrb[0].mxu0 %v436
        %v1495 = vpop.f32.mrb[0].mxu0
        %v1496 = vadd.f32 %v306, %v1495
        %v1497 = vpop.f32.mrb[0].mxu0
        %1498 = vdwg.mxu0
        %v1499 = vmul.f32 %v1496, 2.0
        %v1500 = vadd.f32 %v1337, %v1499
        %v1501 = vmul.f32 %v1496, 0.125
        %v1502 = vadd.f32 %v997, %v1501
        %1503 = vmatprep.subr.mxu0 0.0
        %1504 = vmatpush1.msra.mxu0 %v1502
        %1505 = vmatprep.subr.mxu0 0.0
        %1506 = vmatpush1.msra.mxu0 0.0
        %1507 = vmatprep.subr.mxu0 0.0
        %1508 = vmatpush1.msra.mxu0 0.0
        %1509 = vmatprep.subr.mxu0 0.0
        %1510 = vmatpush1.msra.mxu0 0.0
        %1511 = vmatprep.subr.mxu0 0.0
        %1512 = vmatpush1.msra.mxu0 0.0
        %1513 = vmatprep.subr.mxu0 0.0
        %1514 = vmatpush1.msra.mxu0 0.0
        %1515 = vmatprep.subr.mxu0 0.0
        %1516 = vmatpush1.msra.mxu0 0.0
        %1517 = vmatprep.subr.mxu0 0.0
        %1518 = vmatpush1.msra.mxu0 0.0
        %1519 = vmatprep.subr.mxu0 0.0
        %1520 = vmatpush1.msra.mxu0 0.0
        %1521 = vmatprep.subr.mxu0 0.0
        %1522 = vmatpush1.msra.mxu0 0.0
        %1523 = vmatprep.subr.mxu0 0.0
        %1524 = vmatpush1.msra.mxu0 0.0
        %1525 = vmatprep.subr.mxu0 0.0
        %1526 = vmatpush1.msra.mxu0 0.0
        %1527 = vmatprep.subr.mxu0 0.0
        %1528 = vmatpush1.msra.mxu0 0.0
        %1529 = vmatprep.subr.mxu0 0.0
        %1530 = vmatpush1.msra.mxu0 0.0
        %1531 = vmatprep.subr.mxu0 0.0
        %1532 = vmatpush1.msra.mxu0 0.0
        %1533 = vmatprep.subr.mxu0 0.0
        %1534 = vmatpush1.msra.mxu0 0.0
        %1535 = vmatprep.subr.mxu0 0.0
        %1536 = vmatpush1.msra.mxu0 0.0
        %1537 = vmatprep.subr.mxu0 0.0
        %1538 = vmatpush1.msra.mxu0 0.0
        %1539 = vmatprep.subr.mxu0 0.0
        %1540 = vmatpush1.msra.mxu0 0.0
        %1541 = vmatprep.subr.mxu0 0.0
        %1542 = vmatpush1.msra.mxu0 0.0
        %1543 = vmatprep.subr.mxu0 0.0
        %1544 = vmatpush1.msra.mxu0 0.0
        %1545 = vmatprep.subr.mxu0 0.0
        %1546 = vmatpush1.msra.mxu0 0.0
        %1547 = vmatprep.subr.mxu0 0.0
        %1548 = vmatpush1.msra.mxu0 0.0
        %1549 = vmatprep.subr.mxu0 0.0
        %1550 = vmatpush1.msra.mxu0 0.0
        %1551 = vmatprep.subr.mxu0 0.0
        %1552 = vmatpush1.msra.mxu0 0.0
        %1553 = vmatprep.subr.mxu0 0.0
        %1554 = vmatpush1.msra.mxu0 0.0
        %1555 = vmatprep.subr.mxu0 0.0
        %1556 = vmatpush1.msra.mxu0 0.0
        %1557 = vmatprep.subr.mxu0 0.0
        %1558 = vmatpush1.msra.mxu0 0.0
        %1559 = vmatprep.subr.mxu0 0.0
        %1560 = vmatpush1.msra.mxu0 0.0
        %1561 = vmatprep.subr.mxu0 0.0
        %1562 = vmatpush1.msra.mxu0 0.0
        %1563 = vmatprep.subr.mxu0 0.0
        %1564 = vmatpush1.msra.mxu0 0.0
        %1565 = vmatprep.subr.mxu0 0.0
        %1566 = vmatpush1.msra.mxu0 0.0
        %1567 = vmatprep.mubr.f32.mxu0 0.0
        %1568 = vmatmul.mubr.f32.gmra.mrb[0].mxu0 %v334
        %v1569 = vpop.f32.mrb[0].mxu0
        %v1570 = vadd.f32 %v1012, %v1569
        %v1571 = vpop.f32.mrb[0].mxu0
        %1572 = vmatprep.mubr.f32.mxu0 0.0
        %1573 = vmatmul.mubr.f32.gmra.mrb[0].mxu0 %v337
        %v1574 = vpop.f32.mrb[0].mxu0
        %v1575 = vadd.f32 %v1013, %v1574
        %v1576 = vpop.f32.mrb[0].mxu0
        %1577 = vmatprep.mubr.f32.mxu0 0.0
        %1578 = vmatmul.mubr.f32.gmra.mrb[0].mxu0 %v340
        %v1579 = vpop.f32.mrb[0].mxu0
        %v1580 = vadd.f32 %v1014, %v1579
        %v1581 = vpop.f32.mrb[0].mxu0
        %1582 = vmatprep.mubr.f32.mxu0 0.0
        %1583 = vmatmul.mubr.f32.gmra.mrb[0].mxu0 %v343
        %v1584 = vpop.f32.mrb[0].mxu0
        %v1585 = vadd.f32 %v1015, %v1584
        %v1586 = vpop.f32.mrb[0].mxu0
        %1587 = vdwg.mxu0
        %v1588 = vtanh.pop %v1570
        %v1589 = vtanh.pop %v1575
        %v1590 = vtanh.pop %v1580
        %v1591 = vtanh.pop %v1585
        %1592 = vmatprep.subr.mxu0 0.0
        %1593 = vmatpush1.msra.mxu0 %v1588
        %1594 = vmatprep.subr.mxu0 0.0
        %1595 = vmatpush1.msra.mxu0 %v1589
        %1596 = vmatprep.subr.mxu0 0.0
        %1597 = vmatpush1.msra.mxu0 %v1590
        %1598 = vmatprep.subr.mxu0 0.0
        %1599 = vmatpush1.msra.mxu0 %v1591
        %1600 = vmatprep.subr.mxu0 0.0
        %1601 = vmatpush1.msra.mxu0 0.0
        %1602 = vmatprep.subr.mxu0 0.0
        %1603 = vmatpush1.msra.mxu0 0.0
        %1604 = vmatprep.subr.mxu0 0.0
        %1605 = vmatpush1.msra.mxu0 0.0
        %1606 = vmatprep.subr.mxu0 0.0
        %1607 = vmatpush1.msra.mxu0 0.0
        %1608 = vmatprep.subr.mxu0 0.0
        %1609 = vmatpush1.msra.mxu0 0.0
        %1610 = vmatprep.subr.mxu0 0.0
        %1611 = vmatpush1.msra.mxu0 0.0
        %1612 = vmatprep.subr.mxu0 0.0
        %1613 = vmatpush1.msra.mxu0 0.0
        %1614 = vmatprep.subr.mxu0 0.0
        %1615 = vmatpush1.msra.mxu0 0.0
        %1616 = vmatprep.subr.mxu0 0.0
        %1617 = vmatpush1.msra.mxu0 0.0
        %1618 = vmatprep.subr.mxu0 0.0
        %1619 = vmatpush1.msra.mxu0 0.0
        %1620 = vmatprep.subr.mxu0 0.0
        %1621 = vmatpush1.msra.mxu0 0.0
        %1622 = vmatprep.subr.mxu0 0.0
        %1623 = vmatpush1.msra.mxu0 0.0
        %1624 = vmatprep.subr.mxu0 0.0
        %1625 = vmatpush1.msra.mxu0 0.0
        %1626 = vmatprep.subr.mxu0 0.0
        %1627 = vmatpush1.msra.mxu0 0.0
        %1628 = vmatprep.subr.mxu0 0.0
        %1629 = vmatpush1.msra.mxu0 0.0
        %1630 = vmatprep.subr.mxu0 0.0
        %1631 = vmatpush1.msra.mxu0 0.0
        %1632 = vmatprep.subr.mxu0 0.0
        %1633 = vmatpush1.msra.mxu0 0.0
        %1634 = vmatprep.subr.mxu0 0.0
        %1635 = vmatpush1.msra.mxu0 0.0
        %1636 = vmatprep.subr.mxu0 0.0
        %1637 = vmatpush1.msra.mxu0 0.0
        %1638 = vmatprep.subr.mxu0 0.0
        %1639 = vmatpush1.msra.mxu0 0.0
        %1640 = vmatprep.subr.mxu0 0.0
        %1641 = vmatpush1.msra.mxu0 0.0
        %1642 = vmatprep.subr.mxu0 0.0
        %1643 = vmatpush1.msra.mxu0 0.0
        %1644 = vmatprep.subr.mxu0 0.0
        %1645 = vmatpush1.msra.mxu0 0.0
        %1646 = vmatprep.subr.mxu0 0.0
        %1647 = vmatpush1.msra.mxu0 0.0
        %1648 = vmatprep.subr.mxu0 0.0
        %1649 = vmatpush1.msra.mxu0 0.0
        %1650 = vmatprep.subr.mxu0 0.0
        %1651 = vmatpush1.msra.mxu0 0.0
        %1652 = vmatprep.subr.mxu0 0.0
        %1653 = vmatpush1.msra.mxu0 0.0
        %1654 = vmatprep.subr.mxu0 0.0
        %1655 = vmatpush1.msra.mxu0 0.0
        %1656 = vmatprep.mubr.f32.mxu0 0.0
        %1657 = vmatmul.mubr.f32.gmra.mrb[0].mxu0 %v436
        %v1658 = vpop.f32.mrb[0].mxu0
        %v1659 = vadd.f32 %v306, %v1658
        %v1660 = vpop.f32.mrb[0].mxu0
        %1661 = vdwg.mxu0
        %v1662 = vadd.f32 %v1500, %v1659
        %v1663 = vmul.f32 %v1662, 0.020833334
        %v1664 = vadd.f32 %v997, %v1663
        %s1665 = scalar_lea.vmem %s242, 16 [#allocation2]
        %1666 = vst [vmem:[%s1665] sm:$0xff] %v1664
        %v1667 = vmul.f32 %v261, 0.3125
        %v1668 = vmul.f32 %v266, 0.3125
        %v1669 = vmul.f32 %v271, 0.3125
        %v1670 = vmul.f32 %v276, 0.3125
        %v1671 = vadd.f32 %v1667, %v285
        %v1672 = vadd.f32 %v1668, %v290
        %v1673 = vadd.f32 %v1669, %v295
        %v1674 = vadd.f32 %v1670, %v300
        %v1675 = vmul.f32 %v261, 0.375
        %v1676 = vmul.f32 %v266, 0.375
        %v1677 = vmul.f32 %v271, 0.375
        %v1678 = vmul.f32 %v276, 0.375
        %v1679 = vadd.f32 %v1675, %v285
        %v1680 = vadd.f32 %v1676, %v290
        %v1681 = vadd.f32 %v1677, %v295
        %v1682 = vadd.f32 %v1678, %v300
        %1683 = vmatprep.subr.mxu0 0.0
        %1684 = vmatpush1.msra.mxu0 %v1664
        %1685 = vmatprep.subr.mxu0 0.0
        %1686 = vmatpush1.msra.mxu0 0.0
        %1687 = vmatprep.subr.mxu0 0.0
        %1688 = vmatpush1.msra.mxu0 0.0
        %1689 = vmatprep.subr.mxu0 0.0
        %1690 = vmatpush1.msra.mxu0 0.0
        %1691 = vmatprep.subr.mxu0 0.0
        %1692 = vmatpush1.msra.mxu0 0.0
        %1693 = vmatprep.subr.mxu0 0.0
        %1694 = vmatpush1.msra.mxu0 0.0
        %1695 = vmatprep.subr.mxu0 0.0
        %1696 = vmatpush1.msra.mxu0 0.0
        %1697 = vmatprep.subr.mxu0 0.0
        %1698 = vmatpush1.msra.mxu0 0.0
        %1699 = vmatprep.subr.mxu0 0.0
        %1700 = vmatpush1.msra.mxu0 0.0
        %1701 = vmatprep.subr.mxu0 0.0
        %1702 = vmatpush1.msra.mxu0 0.0
        %1703 = vmatprep.subr.mxu0 0.0
        %1704 = vmatpush1.msra.mxu0 0.0
        %1705 = vmatprep.subr.mxu0 0.0
        %1706 = vmatpush1.msra.mxu0 0.0
        %1707 = vmatprep.subr.mxu0 0.0
        %1708 = vmatpush1.msra.mxu0 0.0
        %1709 = vmatprep.subr.mxu0 0.0
        %1710 = vmatpush1.msra.mxu0 0.0
        %1711 = vmatprep.subr.mxu0 0.0
        %1712 = vmatpush1.msra.mxu0 0.0
        %1713 = vmatprep.subr.mxu0 0.0
        %1714 = vmatpush1.msra.mxu0 0.0
        %1715 = vmatprep.subr.mxu0 0.0
        %1716 = vmatpush1.msra.mxu0 0.0
        %1717 = vmatprep.subr.mxu0 0.0
        %1718 = vmatpush1.msra.mxu0 0.0
        %1719 = vmatprep.subr.mxu0 0.0
        %1720 = vmatpush1.msra.mxu0 0.0
        %1721 = vmatprep.subr.mxu0 0.0
        %1722 = vmatpush1.msra.mxu0 0.0
        %1723 = vmatprep.subr.mxu0 0.0
        %1724 = vmatpush1.msra.mxu0 0.0
        %1725 = vmatprep.subr.mxu0 0.0
        %1726 = vmatpush1.msra.mxu0 0.0
        %1727 = vmatprep.subr.mxu0 0.0
        %1728 = vmatpush1.msra.mxu0 0.0
        %1729 = vmatprep.subr.mxu0 0.0
        %1730 = vmatpush1.msra.mxu0 0.0
        %1731 = vmatprep.subr.mxu0 0.0
        %1732 = vmatpush1.msra.mxu0 0.0
        %1733 = vmatprep.subr.mxu0 0.0
        %1734 = vmatpush1.msra.mxu0 0.0
        %1735 = vmatprep.subr.mxu0 0.0
        %1736 = vmatpush1.msra.mxu0 0.0
        %1737 = vmatprep.subr.mxu0 0.0
        %1738 = vmatpush1.msra.mxu0 0.0
        %1739 = vmatprep.subr.mxu0 0.0
        %1740 = vmatpush1.msra.mxu0 0.0
        %1741 = vmatprep.subr.mxu0 0.0
        %1742 = vmatpush1.msra.mxu0 0.0
        %1743 = vmatprep.subr.mxu0 0.0
        %1744 = vmatpush1.msra.mxu0 0.0
        %1745 = vmatprep.subr.mxu0 0.0
        %1746 = vmatpush1.msra.mxu0 0.0
        %1747 = vmatprep.mubr.f32.mxu0 0.0
        %1748 = vmatmul.mubr.f32.gmra.mrb[0].mxu0 %v334
        %v1749 = vpop.f32.mrb[0].mxu0
        %v1750 = vadd.f32 %v1012, %v1749
        %v1751 = vpop.f32.mrb[0].mxu0
        %1752 = vmatprep.mubr.f32.mxu0 0.0
        %1753 = vmatmul.mubr.f32.gmra.mrb[0].mxu0 %v337
        %v1754 = vpop.f32.mrb[0].mxu0
        %v1755 = vadd.f32 %v1013, %v1754
        %v1756 = vpop.f32.mrb[0].mxu0
        %1757 = vmatprep.mubr.f32.mxu0 0.0
        %1758 = vmatmul.mubr.f32.gmra.mrb[0].mxu0 %v340
        %v1759 = vpop.f32.mrb[0].mxu0
        %v1760 = vadd.f32 %v1014, %v1759
        %v1761 = vpop.f32.mrb[0].mxu0
        %1762 = vmatprep.mubr.f32.mxu0 0.0
        %1763 = vmatmul.mubr.f32.gmra.mrb[0].mxu0 %v343
        %v1764 = vpop.f32.mrb[0].mxu0
        %v1765 = vadd.f32 %v1015, %v1764
        %v1766 = vpop.f32.mrb[0].mxu0
        %1767 = vdwg.mxu0
        %v1768 = vtanh.pop %v1750
        %v1769 = vtanh.pop %v1755
        %v1770 = vtanh.pop %v1760
        %v1771 = vtanh.pop %v1765
        %1772 = vmatprep.subr.mxu0 0.0
        %1773 = vmatpush1.msra.mxu0 %v1768
        %1774 = vmatprep.subr.mxu0 0.0
        %1775 = vmatpush1.msra.mxu0 %v1769
        %1776 = vmatprep.subr.mxu0 0.0
        %1777 = vmatpush1.msra.mxu0 %v1770
        %1778 = vmatprep.subr.mxu0 0.0
        %1779 = vmatpush1.msra.mxu0 %v1771
        %1780 = vmatprep.subr.mxu0 0.0
        %1781 = vmatpush1.msra.mxu0 0.0
        %1782 = vmatprep.subr.mxu0 0.0
        %1783 = vmatpush1.msra.mxu0 0.0
        %1784 = vmatprep.subr.mxu0 0.0
        %1785 = vmatpush1.msra.mxu0 0.0
        %1786 = vmatprep.subr.mxu0 0.0
        %1787 = vmatpush1.msra.mxu0 0.0
        %1788 = vmatprep.subr.mxu0 0.0
        %1789 = vmatpush1.msra.mxu0 0.0
        %1790 = vmatprep.subr.mxu0 0.0
        %1791 = vmatpush1.msra.mxu0 0.0
        %1792 = vmatprep.subr.mxu0 0.0
        %1793 = vmatpush1.msra.mxu0 0.0
        %1794 = vmatprep.subr.mxu0 0.0
        %1795 = vmatpush1.msra.mxu0 0.0
        %1796 = vmatprep.subr.mxu0 0.0
        %1797 = vmatpush1.msra.mxu0 0.0
        %1798 = vmatprep.subr.mxu0 0.0
        %1799 = vmatpush1.msra.mxu0 0.0
        %1800 = vmatprep.subr.mxu0 0.0
        %1801 = vmatpush1.msra.mxu0 0.0
        %1802 = vmatprep.subr.mxu0 0.0
        %1803 = vmatpush1.msra.mxu0 0.0
        %1804 = vmatprep.subr.mxu0 0.0
        %1805 = vmatpush1.msra.mxu0 0.0
        %1806 = vmatprep.subr.mxu0 0.0
        %1807 = vmatpush1.msra.mxu0 0.0
        %1808 = vmatprep.subr.mxu0 0.0
        %1809 = vmatpush1.msra.mxu0 0.0
        %1810 = vmatprep.subr.mxu0 0.0
        %1811 = vmatpush1.msra.mxu0 0.0
        %1812 = vmatprep.subr.mxu0 0.0
        %1813 = vmatpush1.msra.mxu0 0.0
        %1814 = vmatprep.subr.mxu0 0.0
        %1815 = vmatpush1.msra.mxu0 0.0
        %1816 = vmatprep.subr.mxu0 0.0
        %1817 = vmatpush1.msra.mxu0 0.0
        %1818 = vmatprep.subr.mxu0 0.0
        %1819 = vmatpush1.msra.mxu0 0.0
        %1820 = vmatprep.subr.mxu0 0.0
        %1821 = vmatpush1.msra.mxu0 0.0
        %1822 = vmatprep.subr.mxu0 0.0
        %1823 = vmatpush1.msra.mxu0 0.0
        %1824 = vmatprep.subr.mxu0 0.0
        %1825 = vmatpush1.msra.mxu0 0.0
        %1826 = vmatprep.subr.mxu0 0.0
        %1827 = vmatpush1.msra.mxu0 0.0
        %1828 = vmatprep.subr.mxu0 0.0
        %1829 = vmatpush1.msra.mxu0 0.0
        %1830 = vmatprep.subr.mxu0 0.0
        %1831 = vmatpush1.msra.mxu0 0.0
        %1832 = vmatprep.subr.mxu0 0.0
        %1833 = vmatpush1.msra.mxu0 0.0
        %1834 = vmatprep.subr.mxu0 0.0
        %1835 = vmatpush1.msra.mxu0 0.0
        %1836 = vmatprep.mubr.f32.mxu0 0.0
        %1837 = vmatmul.mubr.f32.gmra.mrb[0].mxu0 %v436
        %v1838 = vpop.f32.mrb[0].mxu0
        %v1839 = vadd.f32 %v306, %v1838
        %v1840 = vpop.f32.mrb[0].mxu0
        %1841 = vdwg.mxu0
        %v1842 = vmul.f32 %v1839, 0.0625
        %v1843 = vadd.f32 %v1664, %v1842
        %1844 = vmatprep.subr.mxu0 0.0
        %1845 = vmatpush1.msra.mxu0 %v1843
        %1846 = vmatprep.subr.mxu0 0.0
        %1847 = vmatpush1.msra.mxu0 0.0
        %1848 = vmatprep.subr.mxu0 0.0
        %1849 = vmatpush1.msra.mxu0 0.0
        %1850 = vmatprep.subr.mxu0 0.0
        %1851 = vmatpush1.msra.mxu0 0.0
        %1852 = vmatprep.subr.mxu0 0.0
        %1853 = vmatpush1.msra.mxu0 0.0
        %1854 = vmatprep.subr.mxu0 0.0
        %1855 = vmatpush1.msra.mxu0 0.0
        %1856 = vmatprep.subr.mxu0 0.0
        %1857 = vmatpush1.msra.mxu0 0.0
        %1858 = vmatprep.subr.mxu0 0.0
        %1859 = vmatpush1.msra.mxu0 0.0
        %1860 = vmatprep.subr.mxu0 0.0
        %1861 = vmatpush1.msra.mxu0 0.0
        %1862 = vmatprep.subr.mxu0 0.0
        %1863 = vmatpush1.msra.mxu0 0.0
        %1864 = vmatprep.subr.mxu0 0.0
        %1865 = vmatpush1.msra.mxu0 0.0
        %1866 = vmatprep.subr.mxu0 0.0
        %1867 = vmatpush1.msra.mxu0 0.0
        %1868 = vmatprep.subr.mxu0 0.0
        %1869 = vmatpush1.msra.mxu0 0.0
        %1870 = vmatprep.subr.mxu0 0.0
        %1871 = vmatpush1.msra.mxu0 0.0
        %1872 = vmatprep.subr.mxu0 0.0
        %1873 = vmatpush1.msra.mxu0 0.0
        %1874 = vmatprep.subr.mxu0 0.0
        %1875 = vmatpush1.msra.mxu0 0.0
        %1876 = vmatprep.subr.mxu0 0.0
        %1877 = vmatpush1.msra.mxu0 0.0
        %1878 = vmatprep.subr.mxu0 0.0
        %1879 = vmatpush1.msra.mxu0 0.0
        %1880 = vmatprep.subr.mxu0 0.0
        %1881 = vmatpush1.msra.mxu0 0.0
        %1882 = vmatprep.subr.mxu0 0.0
        %1883 = vmatpush1.msra.mxu0 0.0
        %1884 = vmatprep.subr.mxu0 0.0
        %1885 = vmatpush1.msra.mxu0 0.0
        %1886 = vmatprep.subr.mxu0 0.0
        %1887 = vmatpush1.msra.mxu0 0.0
        %1888 = vmatprep.subr.mxu0 0.0
        %1889 = vmatpush1.msra.mxu0 0.0
        %1890 = vmatprep.subr.mxu0 0.0
        %1891 = vmatpush1.msra.mxu0 0.0
        %1892 = vmatprep.subr.mxu0 0.0
        %1893 = vmatpush1.msra.mxu0 0.0
        %1894 = vmatprep.subr.mxu0 0.0
        %1895 = vmatpush1.msra.mxu0 0.0
        %1896 = vmatprep.subr.mxu0 0.0
        %1897 = vmatpush1.msra.mxu0 0.0
        %1898 = vmatprep.subr.mxu0 0.0
        %1899 = vmatpush1.msra.mxu0 0.0
        %1900 = vmatprep.subr.mxu0 0.0
        %1901 = vmatpush1.msra.mxu0 0.0
        %1902 = vmatprep.subr.mxu0 0.0
        %1903 = vmatpush1.msra.mxu0 0.0
        %1904 = vmatprep.subr.mxu0 0.0
        %1905 = vmatpush1.msra.mxu0 0.0
        %1906 = vmatprep.subr.mxu0 0.0
        %1907 = vmatpush1.msra.mxu0 0.0
        %1908 = vmatprep.mubr.f32.mxu0 0.0
        %1909 = vmatmul.mubr.f32.gmra.mrb[0].mxu0 %v334
        %v1910 = vpop.f32.mrb[0].mxu0
        %v1911 = vadd.f32 %v1671, %v1910
        %v1912 = vpop.f32.mrb[0].mxu0
        %1913 = vmatprep.mubr.f32.mxu0 0.0
        %1914 = vmatmul.mubr.f32.gmra.mrb[0].mxu0 %v337
        %v1915 = vpop.f32.mrb[0].mxu0
        %v1916 = vadd.f32 %v1672, %v1915
        %v1917 = vpop.f32.mrb[0].mxu0
        %1918 = vmatprep.mubr.f32.mxu0 0.0
        %1919 = vmatmul.mubr.f32.gmra.mrb[0].mxu0 %v340
        %v1920 = vpop.f32.mrb[0].mxu0
        %v1921 = vadd.f32 %v1673, %v1920
        %v1922 = vpop.f32.mrb[0].mxu0
        %1923 = vmatprep.mubr.f32.mxu0 0.0
        %1924 = vmatmul.mubr.f32.gmra.mrb[0].mxu0 %v343
        %v1925 = vpop.f32.mrb[0].mxu0
        %v1926 = vadd.f32 %v1674, %v1925
        %v1927 = vpop.f32.mrb[0].mxu0
        %1928 = vdwg.mxu0
        %v1929 = vtanh.pop %v1911
        %v1930 = vtanh.pop %v1916
        %v1931 = vtanh.pop %v1921
        %v1932 = vtanh.pop %v1926
        %1933 = vmatprep.subr.mxu0 0.0
        %1934 = vmatpush1.msra.mxu0 %v1929
        %1935 = vmatprep.subr.mxu0 0.0
        %1936 = vmatpush1.msra.mxu0 %v1930
        %1937 = vmatprep.subr.mxu0 0.0
        %1938 = vmatpush1.msra.mxu0 %v1931
        %1939 = vmatprep.subr.mxu0 0.0
        %1940 = vmatpush1.msra.mxu0 %v1932
        %1941 = vmatprep.subr.mxu0 0.0
        %1942 = vmatpush1.msra.mxu0 0.0
        %1943 = vmatprep.subr.mxu0 0.0
        %1944 = vmatpush1.msra.mxu0 0.0
        %1945 = vmatprep.subr.mxu0 0.0
        %1946 = vmatpush1.msra.mxu0 0.0
        %1947 = vmatprep.subr.mxu0 0.0
        %1948 = vmatpush1.msra.mxu0 0.0
        %1949 = vmatprep.subr.mxu0 0.0
        %1950 = vmatpush1.msra.mxu0 0.0
        %1951 = vmatprep.subr.mxu0 0.0
        %1952 = vmatpush1.msra.mxu0 0.0
        %1953 = vmatprep.subr.mxu0 0.0
        %1954 = vmatpush1.msra.mxu0 0.0
        %1955 = vmatprep.subr.mxu0 0.0
        %1956 = vmatpush1.msra.mxu0 0.0
        %1957 = vmatprep.subr.mxu0 0.0
        %1958 = vmatpush1.msra.mxu0 0.0
        %1959 = vmatprep.subr.mxu0 0.0
        %1960 = vmatpush1.msra.mxu0 0.0
        %1961 = vmatprep.subr.mxu0 0.0
        %1962 = vmatpush1.msra.mxu0 0.0
        %1963 = vmatprep.subr.mxu0 0.0
        %1964 = vmatpush1.msra.mxu0 0.0
        %1965 = vmatprep.subr.mxu0 0.0
        %1966 = vmatpush1.msra.mxu0 0.0
        %1967 = vmatprep.subr.mxu0 0.0
        %1968 = vmatpush1.msra.mxu0 0.0
        %1969 = vmatprep.subr.mxu0 0.0
        %1970 = vmatpush1.msra.mxu0 0.0
        %1971 = vmatprep.subr.mxu0 0.0
        %1972 = vmatpush1.msra.mxu0 0.0
        %1973 = vmatprep.subr.mxu0 0.0
        %1974 = vmatpush1.msra.mxu0 0.0
        %1975 = vmatprep.subr.mxu0 0.0
        %1976 = vmatpush1.msra.mxu0 0.0
        %1977 = vmatprep.subr.mxu0 0.0
        %1978 = vmatpush1.msra.mxu0 0.0
        %1979 = vmatprep.subr.mxu0 0.0
        %1980 = vmatpush1.msra.mxu0 0.0
        %1981 = vmatprep.subr.mxu0 0.0
        %1982 = vmatpush1.msra.mxu0 0.0
        %1983 = vmatprep.subr.mxu0 0.0
        %1984 = vmatpush1.msra.mxu0 0.0
        %1985 = vmatprep.subr.mxu0 0.0
        %1986 = vmatpush1.msra.mxu0 0.0
        %1987 = vmatprep.subr.mxu0 0.0
        %1988 = vmatpush1.msra.mxu0 0.0
        %1989 = vmatprep.subr.mxu0 0.0
        %1990 = vmatpush1.msra.mxu0 0.0
        %1991 = vmatprep.subr.mxu0 0.0
        %1992 = vmatpush1.msra.mxu0 0.0
        %1993 = vmatprep.subr.mxu0 0.0
        %1994 = vmatpush1.msra.mxu0 0.0
        %1995 = vmatprep.subr.mxu0 0.0
        %1996 = vmatpush1.msra.mxu0 0.0
        %1997 = vmatprep.mubr.f32.mxu0 0.0
        %1998 = vmatmul.mubr.f32.gmra.mrb[0].mxu0 %v436
        %v1999 = vpop.f32.mrb[0].mxu0
        %v2000 = vadd.f32 %v306, %v1999
        %v2001 = vpop.f32.mrb[0].mxu0
        %2002 = vdwg.mxu0
        %v2003 = vmul.f32 %v2000, 2.0
        %v2004 = vadd.f32 %v1839, %v2003
        %v2005 = vmul.f32 %v2000, 0.0625
        %v2006 = vadd.f32 %v1664, %v2005
        %2007 = vmatprep.subr.mxu0 0.0
        %2008 = vmatpush1.msra.mxu0 %v2006
        %2009 = vmatprep.subr.mxu0 0.0
        %2010 = vmatpush1.msra.mxu0 0.0
        %2011 = vmatprep.subr.mxu0 0.0
        %2012 = vmatpush1.msra.mxu0 0.0
        %2013 = vmatprep.subr.mxu0 0.0
        %2014 = vmatpush1.msra.mxu0 0.0
        %2015 = vmatprep.subr.mxu0 0.0
        %2016 = vmatpush1.msra.mxu0 0.0
        %2017 = vmatprep.subr.mxu0 0.0
        %2018 = vmatpush1.msra.mxu0 0.0
        %2019 = vmatprep.subr.mxu0 0.0
        %2020 = vmatpush1.msra.mxu0 0.0
        %2021 = vmatprep.subr.mxu0 0.0
        %2022 = vmatpush1.msra.mxu0 0.0
        %2023 = vmatprep.subr.mxu0 0.0
        %2024 = vmatpush1.msra.mxu0 0.0
        %2025 = vmatprep.subr.mxu0 0.0
        %2026 = vmatpush1.msra.mxu0 0.0
        %2027 = vmatprep.subr.mxu0 0.0
        %2028 = vmatpush1.msra.mxu0 0.0
        %2029 = vmatprep.subr.mxu0 0.0
        %2030 = vmatpush1.msra.mxu0 0.0
        %2031 = vmatprep.subr.mxu0 0.0
        %2032 = vmatpush1.msra.mxu0 0.0
        %2033 = vmatprep.subr.mxu0 0.0
        %2034 = vmatpush1.msra.mxu0 0.0
        %2035 = vmatprep.subr.mxu0 0.0
        %2036 = vmatpush1.msra.mxu0 0.0
        %2037 = vmatprep.subr.mxu0 0.0
        %2038 = vmatpush1.msra.mxu0 0.0
        %2039 = vmatprep.subr.mxu0 0.0
        %2040 = vmatpush1.msra.mxu0 0.0
        %2041 = vmatprep.subr.mxu0 0.0
        %2042 = vmatpush1.msra.mxu0 0.0
        %2043 = vmatprep.subr.mxu0 0.0
        %2044 = vmatpush1.msra.mxu0 0.0
        %2045 = vmatprep.subr.mxu0 0.0
        %2046 = vmatpush1.msra.mxu0 0.0
        %2047 = vmatprep.subr.mxu0 0.0
        %2048 = vmatpush1.msra.mxu0 0.0
        %2049 = vmatprep.subr.mxu0 0.0
        %2050 = vmatpush1.msra.mxu0 0.0
        %2051 = vmatprep.subr.mxu0 0.0
        %2052 = vmatpush1.msra.mxu0 0.0
        %2053 = vmatprep.subr.mxu0 0.0
        %2054 = vmatpush1.msra.mxu0 0.0
        %2055 = vmatprep.subr.mxu0 0.0
        %2056 = vmatpush1.msra.mxu0 0.0
        %2057 = vmatprep.subr.mxu0 0.0
        %2058 = vmatpush1.msra.mxu0 0.0
        %2059 = vmatprep.subr.mxu0 0.0
        %2060 = vmatpush1.msra.mxu0 0.0
        %2061 = vmatprep.subr.mxu0 0.0
        %2062 = vmatpush1.msra.mxu0 0.0
        %2063 = vmatprep.subr.mxu0 0.0
        %2064 = vmatpush1.msra.mxu0 0.0
        %2065 = vmatprep.subr.mxu0 0.0
        %2066 = vmatpush1.msra.mxu0 0.0
        %2067 = vmatprep.subr.mxu0 0.0
        %2068 = vmatpush1.msra.mxu0 0.0
        %2069 = vmatprep.subr.mxu0 0.0
        %2070 = vmatpush1.msra.mxu0 0.0
        %2071 = vmatprep.mubr.f32.mxu0 0.0
        %2072 = vmatmul.mubr.f32.gmra.mrb[0].mxu0 %v334
        %v2073 = vpop.f32.mrb[0].mxu0
        %v2074 = vadd.f32 %v1671, %v2073
        %v2075 = vpop.f32.mrb[0].mxu0
        %2076 = vmatprep.mubr.f32.mxu0 0.0
        %2077 = vmatmul.mubr.f32.gmra.mrb[0].mxu0 %v337
        %v2078 = vpop.f32.mrb[0].mxu0
        %v2079 = vadd.f32 %v1672, %v2078
        %v2080 = vpop.f32.mrb[0].mxu0
        %2081 = vmatprep.mubr.f32.mxu0 0.0
        %2082 = vmatmul.mubr.f32.gmra.mrb[0].mxu0 %v340
        %v2083 = vpop.f32.mrb[0].mxu0
        %v2084 = vadd.f32 %v1673, %v2083
        %v2085 = vpop.f32.mrb[0].mxu0
        %2086 = vmatprep.mubr.f32.mxu0 0.0
        %2087 = vmatmul.mubr.f32.gmra.mrb[0].mxu0 %v343
        %v2088 = vpop.f32.mrb[0].mxu0
        %v2089 = vadd.f32 %v1674, %v2088
        %v2090 = vpop.f32.mrb[0].mxu0
        %2091 = vdwg.mxu0
        %v2092 = vtanh.pop %v2074
        %v2093 = vtanh.pop %v2079
        %v2094 = vtanh.pop %v2084
        %v2095 = vtanh.pop %v2089
        %2096 = vmatprep.subr.mxu0 0.0
        %2097 = vmatpush1.msra.mxu0 %v2092
        %2098 = vmatprep.subr.mxu0 0.0
        %2099 = vmatpush1.msra.mxu0 %v2093
        %2100 = vmatprep.subr.mxu0 0.0
        %2101 = vmatpush1.msra.mxu0 %v2094
        %2102 = vmatprep.subr.mxu0 0.0
        %2103 = vmatpush1.msra.mxu0 %v2095
        %2104 = vmatprep.subr.mxu0 0.0
        %2105 = vmatpush1.msra.mxu0 0.0
        %2106 = vmatprep.subr.mxu0 0.0
        %2107 = vmatpush1.msra.mxu0 0.0
        %2108 = vmatprep.subr.mxu0 0.0
        %2109 = vmatpush1.msra.mxu0 0.0
        %2110 = vmatprep.subr.mxu0 0.0
        %2111 = vmatpush1.msra.mxu0 0.0
        %2112 = vmatprep.subr.mxu0 0.0
        %2113 = vmatpush1.msra.mxu0 0.0
        %2114 = vmatprep.subr.mxu0 0.0
        %2115 = vmatpush1.msra.mxu0 0.0
        %2116 = vmatprep.subr.mxu0 0.0
        %2117 = vmatpush1.msra.mxu0 0.0
        %2118 = vmatprep.subr.mxu0 0.0
        %2119 = vmatpush1.msra.mxu0 0.0
        %2120 = vmatprep.subr.mxu0 0.0
        %2121 = vmatpush1.msra.mxu0 0.0
        %2122 = vmatprep.subr.mxu0 0.0
        %2123 = vmatpush1.msra.mxu0 0.0
        %2124 = vmatprep.subr.mxu0 0.0
        %2125 = vmatpush1.msra.mxu0 0.0
        %2126 = vmatprep.subr.mxu0 0.0
        %2127 = vmatpush1.msra.mxu0 0.0
        %2128 = vmatprep.subr.mxu0 0.0
        %2129 = vmatpush1.msra.mxu0 0.0
        %2130 = vmatprep.subr.mxu0 0.0
        %2131 = vmatpush1.msra.mxu0 0.0
        %2132 = vmatprep.subr.mxu0 0.0
        %2133 = vmatpush1.msra.mxu0 0.0
        %2134 = vmatprep.subr.mxu0 0.0
        %2135 = vmatpush1.msra.mxu0 0.0
        %2136 = vmatprep.subr.mxu0 0.0
        %2137 = vmatpush1.msra.mxu0 0.0
        %2138 = vmatprep.subr.mxu0 0.0
        %2139 = vmatpush1.msra.mxu0 0.0
        %2140 = vmatprep.subr.mxu0 0.0
        %2141 = vmatpush1.msra.mxu0 0.0
        %2142 = vmatprep.subr.mxu0 0.0
        %2143 = vmatpush1.msra.mxu0 0.0
        %2144 = vmatprep.subr.mxu0 0.0
        %2145 = vmatpush1.msra.mxu0 0.0
        %2146 = vmatprep.subr.mxu0 0.0
        %2147 = vmatpush1.msra.mxu0 0.0
        %2148 = vmatprep.subr.mxu0 0.0
        %2149 = vmatpush1.msra.mxu0 0.0
        %2150 = vmatprep.subr.mxu0 0.0
        %2151 = vmatpush1.msra.mxu0 0.0
        %2152 = vmatprep.subr.mxu0 0.0
        %2153 = vmatpush1.msra.mxu0 0.0
        %2154 = vmatprep.subr.mxu0 0.0
        %2155 = vmatpush1.msra.mxu0 0.0
        %2156 = vmatprep.subr.mxu0 0.0
        %2157 = vmatpush1.msra.mxu0 0.0
        %2158 = vmatprep.subr.mxu0 0.0
        %2159 = vmatpush1.msra.mxu0 0.0
        %2160 = vmatprep.mubr.f32.mxu0 0.0
        %2161 = vmatmul.mubr.f32.gmra.mrb[0].mxu0 %v436
        %v2162 = vpop.f32.mrb[0].mxu0
        %v2163 = vadd.f32 %v306, %v2162
        %v2164 = vpop.f32.mrb[0].mxu0
        %2165 = vdwg.mxu0
        %v2166 = vmul.f32 %v2163, 2.0
        %v2167 = vadd.f32 %v2004, %v2166
        %v2168 = vmul.f32 %v2163, 0.125
        %v2169 = vadd.f32 %v1664, %v2168
        %2170 = vmatprep.subr.mxu0 0.0
        %2171 = vmatpush1.msra.mxu0 %v2169
        %2172 = vmatprep.subr.mxu0 0.0
        %2173 = vmatpush1.msra.mxu0 0.0
        %2174 = vmatprep.subr.mxu0 0.0
        %2175 = vmatpush1.msra.mxu0 0.0
        %2176 = vmatprep.subr.mxu0 0.0
        %2177 = vmatpush1.msra.mxu0 0.0
        %2178 = vmatprep.subr.mxu0 0.0
        %2179 = vmatpush1.msra.mxu0 0.0
        %2180 = vmatprep.subr.mxu0 0.0
        %2181 = vmatpush1.msra.mxu0 0.0
        %2182 = vmatprep.subr.mxu0 0.0
        %2183 = vmatpush1.msra.mxu0 0.0
        %2184 = vmatprep.subr.mxu0 0.0
        %2185 = vmatpush1.msra.mxu0 0.0
        %2186 = vmatprep.subr.mxu0 0.0
        %2187 = vmatpush1.msra.mxu0 0.0
        %2188 = vmatprep.subr.mxu0 0.0
        %2189 = vmatpush1.msra.mxu0 0.0
        %2190 = vmatprep.subr.mxu0 0.0
        %2191 = vmatpush1.msra.mxu0 0.0
        %2192 = vmatprep.subr.mxu0 0.0
        %2193 = vmatpush1.msra.mxu0 0.0
        %2194 = vmatprep.subr.mxu0 0.0
        %2195 = vmatpush1.msra.mxu0 0.0
        %2196 = vmatprep.subr.mxu0 0.0
        %2197 = vmatpush1.msra.mxu0 0.0
        %2198 = vmatprep.subr.mxu0 0.0
        %2199 = vmatpush1.msra.mxu0 0.0
        %2200 = vmatprep.subr.mxu0 0.0
        %2201 = vmatpush1.msra.mxu0 0.0
        %2202 = vmatprep.subr.mxu0 0.0
        %2203 = vmatpush1.msra.mxu0 0.0
        %2204 = vmatprep.subr.mxu0 0.0
        %2205 = vmatpush1.msra.mxu0 0.0
        %2206 = vmatprep.subr.mxu0 0.0
        %2207 = vmatpush1.msra.mxu0 0.0
        %2208 = vmatprep.subr.mxu0 0.0
        %2209 = vmatpush1.msra.mxu0 0.0
        %2210 = vmatprep.subr.mxu0 0.0
        %2211 = vmatpush1.msra.mxu0 0.0
        %2212 = vmatprep.subr.mxu0 0.0
        %2213 = vmatpush1.msra.mxu0 0.0
        %2214 = vmatprep.subr.mxu0 0.0
        %2215 = vmatpush1.msra.mxu0 0.0
        %2216 = vmatprep.subr.mxu0 0.0
        %2217 = vmatpush1.msra.mxu0 0.0
        %2218 = vmatprep.subr.mxu0 0.0
        %2219 = vmatpush1.msra.mxu0 0.0
        %2220 = vmatprep.subr.mxu0 0.0
        %2221 = vmatpush1.msra.mxu0 0.0
        %2222 = vmatprep.subr.mxu0 0.0
        %2223 = vmatpush1.msra.mxu0 0.0
        %2224 = vmatprep.subr.mxu0 0.0
        %2225 = vmatpush1.msra.mxu0 0.0
        %2226 = vmatprep.subr.mxu0 0.0
        %2227 = vmatpush1.msra.mxu0 0.0
        %2228 = vmatprep.subr.mxu0 0.0
        %2229 = vmatpush1.msra.mxu0 0.0
        %2230 = vmatprep.subr.mxu0 0.0
        %2231 = vmatpush1.msra.mxu0 0.0
        %2232 = vmatprep.subr.mxu0 0.0
        %2233 = vmatpush1.msra.mxu0 0.0
        %2234 = vmatprep.mubr.f32.mxu0 0.0
        %2235 = vmatmul.mubr.f32.gmra.mrb[0].mxu0 %v334
        %v2236 = vpop.f32.mrb[0].mxu0
        %v2237 = vadd.f32 %v1679, %v2236
        %v2238 = vpop.f32.mrb[0].mxu0
        %2239 = vmatprep.mubr.f32.mxu0 0.0
        %2240 = vmatmul.mubr.f32.gmra.mrb[0].mxu0 %v337
        %v2241 = vpop.f32.mrb[0].mxu0
        %v2242 = vadd.f32 %v1680, %v2241
        %v2243 = vpop.f32.mrb[0].mxu0
        %2244 = vmatprep.mubr.f32.mxu0 0.0
        %2245 = vmatmul.mubr.f32.gmra.mrb[0].mxu0 %v340
        %v2246 = vpop.f32.mrb[0].mxu0
        %v2247 = vadd.f32 %v1681, %v2246
        %v2248 = vpop.f32.mrb[0].mxu0
        %2249 = vmatprep.mubr.f32.mxu0 0.0
        %2250 = vmatmul.mubr.f32.gmra.mrb[0].mxu0 %v343
        %v2251 = vpop.f32.mrb[0].mxu0
        %v2252 = vadd.f32 %v1682, %v2251
        %v2253 = vpop.f32.mrb[0].mxu0
        %2254 = vdwg.mxu0
        %v2255 = vtanh.pop %v2237
        %v2256 = vtanh.pop %v2242
        %v2257 = vtanh.pop %v2247
        %v2258 = vtanh.pop %v2252
        %2259 = vmatprep.subr.mxu0 0.0
        %2260 = vmatpush1.msra.mxu0 %v2255
        %2261 = vmatprep.subr.mxu0 0.0
        %2262 = vmatpush1.msra.mxu0 %v2256
        %2263 = vmatprep.subr.mxu0 0.0
        %2264 = vmatpush1.msra.mxu0 %v2257
        %2265 = vmatprep.subr.mxu0 0.0
        %2266 = vmatpush1.msra.mxu0 %v2258
        %2267 = vmatprep.subr.mxu0 0.0
        %2268 = vmatpush1.msra.mxu0 0.0
        %2269 = vmatprep.subr.mxu0 0.0
        %2270 = vmatpush1.msra.mxu0 0.0
        %2271 = vmatprep.subr.mxu0 0.0
        %2272 = vmatpush1.msra.mxu0 0.0
        %2273 = vmatprep.subr.mxu0 0.0
        %2274 = vmatpush1.msra.mxu0 0.0
        %2275 = vmatprep.subr.mxu0 0.0
        %2276 = vmatpush1.msra.mxu0 0.0
        %2277 = vmatprep.subr.mxu0 0.0
        %2278 = vmatpush1.msra.mxu0 0.0
        %2279 = vmatprep.subr.mxu0 0.0
        %2280 = vmatpush1.msra.mxu0 0.0
        %2281 = vmatprep.subr.mxu0 0.0
        %2282 = vmatpush1.msra.mxu0 0.0
        %2283 = vmatprep.subr.mxu0 0.0
        %2284 = vmatpush1.msra.mxu0 0.0
        %2285 = vmatprep.subr.mxu0 0.0
        %2286 = vmatpush1.msra.mxu0 0.0
        %2287 = vmatprep.subr.mxu0 0.0
        %2288 = vmatpush1.msra.mxu0 0.0
        %2289 = vmatprep.subr.mxu0 0.0
        %2290 = vmatpush1.msra.mxu0 0.0
        %2291 = vmatprep.subr.mxu0 0.0
        %2292 = vmatpush1.msra.mxu0 0.0
        %2293 = vmatprep.subr.mxu0 0.0
        %2294 = vmatpush1.msra.mxu0 0.0
        %2295 = vmatprep.subr.mxu0 0.0
        %2296 = vmatpush1.msra.mxu0 0.0
        %2297 = vmatprep.subr.mxu0 0.0
        %2298 = vmatpush1.msra.mxu0 0.0
        %2299 = vmatprep.subr.mxu0 0.0
        %2300 = vmatpush1.msra.mxu0 0.0
        %2301 = vmatprep.subr.mxu0 0.0
        %2302 = vmatpush1.msra.mxu0 0.0
        %2303 = vmatprep.subr.mxu0 0.0
        %2304 = vmatpush1.msra.mxu0 0.0
        %2305 = vmatprep.subr.mxu0 0.0
        %2306 = vmatpush1.msra.mxu0 0.0
        %2307 = vmatprep.subr.mxu0 0.0
        %2308 = vmatpush1.msra.mxu0 0.0
        %2309 = vmatprep.subr.mxu0 0.0
        %2310 = vmatpush1.msra.mxu0 0.0
        %2311 = vmatprep.subr.mxu0 0.0
        %2312 = vmatpush1.msra.mxu0 0.0
        %2313 = vmatprep.subr.mxu0 0.0
        %2314 = vmatpush1.msra.mxu0 0.0
        %2315 = vmatprep.subr.mxu0 0.0
        %2316 = vmatpush1.msra.mxu0 0.0
        %2317 = vmatprep.subr.mxu0 0.0
        %2318 = vmatpush1.msra.mxu0 0.0
        %2319 = vmatprep.subr.mxu0 0.0
        %2320 = vmatpush1.msra.mxu0 0.0
        %2321 = vmatprep.subr.mxu0 0.0
        %2322 = vmatpush1.msra.mxu0 0.0
        %2323 = vmatprep.mubr.f32.mxu0 0.0
        %2324 = vmatmul.mubr.f32.gmra.mrb[0].mxu0 %v436
        %v2325 = vpop.f32.mrb[0].mxu0
        %v2326 = vadd.f32 %v306, %v2325
        %v2327 = vpop.f32.mrb[0].mxu0
        %2328 = vdwg.mxu0
        %v2329 = vadd.f32 %v2167, %v2326
        %v2330 = vmul.f32 %v2329, 0.020833334
        %v2331 = vadd.f32 %v1664, %v2330
        %s2332 = scalar_lea.vmem %s242, 24 [#allocation2]
        %2333 = vst [vmem:[%s2332] sm:$0xff] %v2331
        %v2334 = vmul.f32 %v261, 0.4375
        %v2335 = vmul.f32 %v266, 0.4375
        %v2336 = vmul.f32 %v271, 0.4375
        %v2337 = vmul.f32 %v276, 0.4375
        %v2338 = vadd.f32 %v2334, %v285
        %v2339 = vadd.f32 %v2335, %v290
        %v2340 = vadd.f32 %v2336, %v295
        %v2341 = vadd.f32 %v2337, %v300
        %v2342 = vmul.f32 %v261, 0.5
        %v2343 = vmul.f32 %v266, 0.5
        %v2344 = vmul.f32 %v271, 0.5
        %v2345 = vmul.f32 %v276, 0.5
        %v2346 = vadd.f32 %v2342, %v285
        %v2347 = vadd.f32 %v2343, %v290
        %v2348 = vadd.f32 %v2344, %v295
        %v2349 = vadd.f32 %v2345, %v300
        %2350 = vmatprep.subr.mxu0 0.0
        %2351 = vmatpush1.msra.mxu0 %v2331
        %2352 = vmatprep.subr.mxu0 0.0
        %2353 = vmatpush1.msra.mxu0 0.0
        %2354 = vmatprep.subr.mxu0 0.0
        %2355 = vmatpush1.msra.mxu0 0.0
        %2356 = vmatprep.subr.mxu0 0.0
        %2357 = vmatpush1.msra.mxu0 0.0
        %2358 = vmatprep.subr.mxu0 0.0
        %2359 = vmatpush1.msra.mxu0 0.0
        %2360 = vmatprep.subr.mxu0 0.0
        %2361 = vmatpush1.msra.mxu0 0.0
        %2362 = vmatprep.subr.mxu0 0.0
        %2363 = vmatpush1.msra.mxu0 0.0
        %2364 = vmatprep.subr.mxu0 0.0
        %2365 = vmatpush1.msra.mxu0 0.0
        %2366 = vmatprep.subr.mxu0 0.0
        %2367 = vmatpush1.msra.mxu0 0.0
        %2368 = vmatprep.subr.mxu0 0.0
        %2369 = vmatpush1.msra.mxu0 0.0
        %2370 = vmatprep.subr.mxu0 0.0
        %2371 = vmatpush1.msra.mxu0 0.0
        %2372 = vmatprep.subr.mxu0 0.0
        %2373 = vmatpush1.msra.mxu0 0.0
        %2374 = vmatprep.subr.mxu0 0.0
        %2375 = vmatpush1.msra.mxu0 0.0
        %2376 = vmatprep.subr.mxu0 0.0
        %2377 = vmatpush1.msra.mxu0 0.0
        %2378 = vmatprep.subr.mxu0 0.0
        %2379 = vmatpush1.msra.mxu0 0.0
        %2380 = vmatprep.subr.mxu0 0.0
        %2381 = vmatpush1.msra.mxu0 0.0
        %2382 = vmatprep.subr.mxu0 0.0
        %2383 = vmatpush1.msra.mxu0 0.0
        %2384 = vmatprep.subr.mxu0 0.0
        %2385 = vmatpush1.msra.mxu0 0.0
        %2386 = vmatprep.subr.mxu0 0.0
        %2387 = vmatpush1.msra.mxu0 0.0
        %2388 = vmatprep.subr.mxu0 0.0
        %2389 = vmatpush1.msra.mxu0 0.0
        %2390 = vmatprep.subr.mxu0 0.0
        %2391 = vmatpush1.msra.mxu0 0.0
        %2392 = vmatprep.subr.mxu0 0.0
        %2393 = vmatpush1.msra.mxu0 0.0
        %2394 = vmatprep.subr.mxu0 0.0
        %2395 = vmatpush1.msra.mxu0 0.0
        %2396 = vmatprep.subr.mxu0 0.0
        %2397 = vmatpush1.msra.mxu0 0.0
        %2398 = vmatprep.subr.mxu0 0.0
        %2399 = vmatpush1.msra.mxu0 0.0
        %2400 = vmatprep.subr.mxu0 0.0
        %2401 = vmatpush1.msra.mxu0 0.0
        %2402 = vmatprep.subr.mxu0 0.0
        %2403 = vmatpush1.msra.mxu0 0.0
        %2404 = vmatprep.subr.mxu0 0.0
        %2405 = vmatpush1.msra.mxu0 0.0
        %2406 = vmatprep.subr.mxu0 0.0
        %2407 = vmatpush1.msra.mxu0 0.0
        %2408 = vmatprep.subr.mxu0 0.0
        %2409 = vmatpush1.msra.mxu0 0.0
        %2410 = vmatprep.subr.mxu0 0.0
        %2411 = vmatpush1.msra.mxu0 0.0
        %2412 = vmatprep.subr.mxu0 0.0
        %2413 = vmatpush1.msra.mxu0 0.0
        %2414 = vmatprep.mubr.f32.mxu0 0.0
        %2415 = vmatmul.mubr.f32.gmra.mrb[0].mxu0 %v334
        %v2416 = vpop.f32.mrb[0].mxu0
        %v2417 = vadd.f32 %v1679, %v2416
        %v2418 = vpop.f32.mrb[0].mxu0
        %2419 = vmatprep.mubr.f32.mxu0 0.0
        %2420 = vmatmul.mubr.f32.gmra.mrb[0].mxu0 %v337
        %v2421 = vpop.f32.mrb[0].mxu0
        %v2422 = vadd.f32 %v1680, %v2421
        %v2423 = vpop.f32.mrb[0].mxu0
        %2424 = vmatprep.mubr.f32.mxu0 0.0
        %2425 = vmatmul.mubr.f32.gmra.mrb[0].mxu0 %v340
        %v2426 = vpop.f32.mrb[0].mxu0
        %v2427 = vadd.f32 %v1681, %v2426
        %v2428 = vpop.f32.mrb[0].mxu0
        %2429 = vmatprep.mubr.f32.mxu0 0.0
        %2430 = vmatmul.mubr.f32.gmra.mrb[0].mxu0 %v343
        %v2431 = vpop.f32.mrb[0].mxu0
        %v2432 = vadd.f32 %v1682, %v2431
        %v2433 = vpop.f32.mrb[0].mxu0
        %2434 = vdwg.mxu0
        %v2435 = vtanh.pop %v2417
        %v2436 = vtanh.pop %v2422
        %v2437 = vtanh.pop %v2427
        %v2438 = vtanh.pop %v2432
        %2439 = vmatprep.subr.mxu0 0.0
        %2440 = vmatpush1.msra.mxu0 %v2435
        %2441 = vmatprep.subr.mxu0 0.0
        %2442 = vmatpush1.msra.mxu0 %v2436
        %2443 = vmatprep.subr.mxu0 0.0
        %2444 = vmatpush1.msra.mxu0 %v2437
        %2445 = vmatprep.subr.mxu0 0.0
        %2446 = vmatpush1.msra.mxu0 %v2438
        %2447 = vmatprep.subr.mxu0 0.0
        %2448 = vmatpush1.msra.mxu0 0.0
        %2449 = vmatprep.subr.mxu0 0.0
        %2450 = vmatpush1.msra.mxu0 0.0
        %2451 = vmatprep.subr.mxu0 0.0
        %2452 = vmatpush1.msra.mxu0 0.0
        %2453 = vmatprep.subr.mxu0 0.0
        %2454 = vmatpush1.msra.mxu0 0.0
        %2455 = vmatprep.subr.mxu0 0.0
        %2456 = vmatpush1.msra.mxu0 0.0
        %2457 = vmatprep.subr.mxu0 0.0
        %2458 = vmatpush1.msra.mxu0 0.0
        %2459 = vmatprep.subr.mxu0 0.0
        %2460 = vmatpush1.msra.mxu0 0.0
        %2461 = vmatprep.subr.mxu0 0.0
        %2462 = vmatpush1.msra.mxu0 0.0
        %2463 = vmatprep.subr.mxu0 0.0
        %2464 = vmatpush1.msra.mxu0 0.0
        %2465 = vmatprep.subr.mxu0 0.0
        %2466 = vmatpush1.msra.mxu0 0.0
        %2467 = vmatprep.subr.mxu0 0.0
        %2468 = vmatpush1.msra.mxu0 0.0
        %2469 = vmatprep.subr.mxu0 0.0
        %2470 = vmatpush1.msra.mxu0 0.0
        %2471 = vmatprep.subr.mxu0 0.0
        %2472 = vmatpush1.msra.mxu0 0.0
        %2473 = vmatprep.subr.mxu0 0.0
        %2474 = vmatpush1.msra.mxu0 0.0
        %2475 = vmatprep.subr.mxu0 0.0
        %2476 = vmatpush1.msra.mxu0 0.0
        %2477 = vmatprep.subr.mxu0 0.0
        %2478 = vmatpush1.msra.mxu0 0.0
        %2479 = vmatprep.subr.mxu0 0.0
        %2480 = vmatpush1.msra.mxu0 0.0
        %2481 = vmatprep.subr.mxu0 0.0
        %2482 = vmatpush1.msra.mxu0 0.0
        %2483 = vmatprep.subr.mxu0 0.0
        %2484 = vmatpush1.msra.mxu0 0.0
        %2485 = vmatprep.subr.mxu0 0.0
        %2486 = vmatpush1.msra.mxu0 0.0
        %2487 = vmatprep.subr.mxu0 0.0
        %2488 = vmatpush1.msra.mxu0 0.0
        %2489 = vmatprep.subr.mxu0 0.0
        %2490 = vmatpush1.msra.mxu0 0.0
        %2491 = vmatprep.subr.mxu0 0.0
        %2492 = vmatpush1.msra.mxu0 0.0
        %2493 = vmatprep.subr.mxu0 0.0
        %2494 = vmatpush1.msra.mxu0 0.0
        %2495 = vmatprep.subr.mxu0 0.0
        %2496 = vmatpush1.msra.mxu0 0.0
        %2497 = vmatprep.subr.mxu0 0.0
        %2498 = vmatpush1.msra.mxu0 0.0
        %2499 = vmatprep.subr.mxu0 0.0
        %2500 = vmatpush1.msra.mxu0 0.0
        %2501 = vmatprep.subr.mxu0 0.0
        %2502 = vmatpush1.msra.mxu0 0.0
        %2503 = vmatprep.mubr.f32.mxu0 0.0
        %2504 = vmatmul.mubr.f32.gmra.mrb[0].mxu0 %v436
        %v2505 = vpop.f32.mrb[0].mxu0
        %v2506 = vadd.f32 %v306, %v2505
        %v2507 = vpop.f32.mrb[0].mxu0
        %2508 = vdwg.mxu0
        %v2509 = vmul.f32 %v2506, 0.0625
        %v2510 = vadd.f32 %v2331, %v2509
        %2511 = vmatprep.subr.mxu0 0.0
        %2512 = vmatpush1.msra.mxu0 %v2510
        %2513 = vmatprep.subr.mxu0 0.0
        %2514 = vmatpush1.msra.mxu0 0.0
        %2515 = vmatprep.subr.mxu0 0.0
        %2516 = vmatpush1.msra.mxu0 0.0
        %2517 = vmatprep.subr.mxu0 0.0
        %2518 = vmatpush1.msra.mxu0 0.0
        %2519 = vmatprep.subr.mxu0 0.0
        %2520 = vmatpush1.msra.mxu0 0.0
        %2521 = vmatprep.subr.mxu0 0.0
        %2522 = vmatpush1.msra.mxu0 0.0
        %2523 = vmatprep.subr.mxu0 0.0
        %2524 = vmatpush1.msra.mxu0 0.0
        %2525 = vmatprep.subr.mxu0 0.0
        %2526 = vmatpush1.msra.mxu0 0.0
        %2527 = vmatprep.subr.mxu0 0.0
        %2528 = vmatpush1.msra.mxu0 0.0
        %2529 = vmatprep.subr.mxu0 0.0
        %2530 = vmatpush1.msra.mxu0 0.0
        %2531 = vmatprep.subr.mxu0 0.0
        %2532 = vmatpush1.msra.mxu0 0.0
        %2533 = vmatprep.subr.mxu0 0.0
        %2534 = vmatpush1.msra.mxu0 0.0
        %2535 = vmatprep.subr.mxu0 0.0
        %2536 = vmatpush1.msra.mxu0 0.0
        %2537 = vmatprep.subr.mxu0 0.0
        %2538 = vmatpush1.msra.mxu0 0.0
        %2539 = vmatprep.subr.mxu0 0.0
        %2540 = vmatpush1.msra.mxu0 0.0
        %2541 = vmatprep.subr.mxu0 0.0
        %2542 = vmatpush1.msra.mxu0 0.0
        %2543 = vmatprep.subr.mxu0 0.0
        %2544 = vmatpush1.msra.mxu0 0.0
        %2545 = vmatprep.subr.mxu0 0.0
        %2546 = vmatpush1.msra.mxu0 0.0
        %2547 = vmatprep.subr.mxu0 0.0
        %2548 = vmatpush1.msra.mxu0 0.0
        %2549 = vmatprep.subr.mxu0 0.0
        %2550 = vmatpush1.msra.mxu0 0.0
        %2551 = vmatprep.subr.mxu0 0.0
        %2552 = vmatpush1.msra.mxu0 0.0
        %2553 = vmatprep.subr.mxu0 0.0
        %2554 = vmatpush1.msra.mxu0 0.0
        %2555 = vmatprep.subr.mxu0 0.0
        %2556 = vmatpush1.msra.mxu0 0.0
        %2557 = vmatprep.subr.mxu0 0.0
        %2558 = vmatpush1.msra.mxu0 0.0
        %2559 = vmatprep.subr.mxu0 0.0
        %2560 = vmatpush1.msra.mxu0 0.0
        %2561 = vmatprep.subr.mxu0 0.0
        %2562 = vmatpush1.msra.mxu0 0.0
        %2563 = vmatprep.subr.mxu0 0.0
        %2564 = vmatpush1.msra.mxu0 0.0
        %2565 = vmatprep.subr.mxu0 0.0
        %2566 = vmatpush1.msra.mxu0 0.0
        %2567 = vmatprep.subr.mxu0 0.0
        %2568 = vmatpush1.msra.mxu0 0.0
        %2569 = vmatprep.subr.mxu0 0.0
        %2570 = vmatpush1.msra.mxu0 0.0
        %2571 = vmatprep.subr.mxu0 0.0
        %2572 = vmatpush1.msra.mxu0 0.0
        %2573 = vmatprep.subr.mxu0 0.0
        %2574 = vmatpush1.msra.mxu0 0.0
        %2575 = vmatprep.mubr.f32.mxu0 0.0
        %2576 = vmatmul.mubr.f32.gmra.mrb[0].mxu0 %v334
        %v2577 = vpop.f32.mrb[0].mxu0
        %v2578 = vadd.f32 %v2338, %v2577
        %v2579 = vpop.f32.mrb[0].mxu0
        %2580 = vmatprep.mubr.f32.mxu0 0.0
        %2581 = vmatmul.mubr.f32.gmra.mrb[0].mxu0 %v337
        %v2582 = vpop.f32.mrb[0].mxu0
        %v2583 = vadd.f32 %v2339, %v2582
        %v2584 = vpop.f32.mrb[0].mxu0
        %2585 = vmatprep.mubr.f32.mxu0 0.0
        %2586 = vmatmul.mubr.f32.gmra.mrb[0].mxu0 %v340
        %v2587 = vpop.f32.mrb[0].mxu0
        %v2588 = vadd.f32 %v2340, %v2587
        %v2589 = vpop.f32.mrb[0].mxu0
        %2590 = vmatprep.mubr.f32.mxu0 0.0
        %2591 = vmatmul.mubr.f32.gmra.mrb[0].mxu0 %v343
        %v2592 = vpop.f32.mrb[0].mxu0
        %v2593 = vadd.f32 %v2341, %v2592
        %v2594 = vpop.f32.mrb[0].mxu0
        %2595 = vdwg.mxu0
        %v2596 = vtanh.pop %v2578
        %v2597 = vtanh.pop %v2583
        %v2598 = vtanh.pop %v2588
        %v2599 = vtanh.pop %v2593
        %2600 = vmatprep.subr.mxu0 0.0
        %2601 = vmatpush1.msra.mxu0 %v2596
        %2602 = vmatprep.subr.mxu0 0.0
        %2603 = vmatpush1.msra.mxu0 %v2597
        %2604 = vmatprep.subr.mxu0 0.0
        %2605 = vmatpush1.msra.mxu0 %v2598
        %2606 = vmatprep.subr.mxu0 0.0
        %2607 = vmatpush1.msra.mxu0 %v2599
        %2608 = vmatprep.subr.mxu0 0.0
        %2609 = vmatpush1.msra.mxu0 0.0
        %2610 = vmatprep.subr.mxu0 0.0
        %2611 = vmatpush1.msra.mxu0 0.0
        %2612 = vmatprep.subr.mxu0 0.0
        %2613 = vmatpush1.msra.mxu0 0.0
        %2614 = vmatprep.subr.mxu0 0.0
        %2615 = vmatpush1.msra.mxu0 0.0
        %2616 = vmatprep.subr.mxu0 0.0
        %2617 = vmatpush1.msra.mxu0 0.0
        %2618 = vmatprep.subr.mxu0 0.0
        %2619 = vmatpush1.msra.mxu0 0.0
        %2620 = vmatprep.subr.mxu0 0.0
        %2621 = vmatpush1.msra.mxu0 0.0
        %2622 = vmatprep.subr.mxu0 0.0
        %2623 = vmatpush1.msra.mxu0 0.0
        %2624 = vmatprep.subr.mxu0 0.0
        %2625 = vmatpush1.msra.mxu0 0.0
        %2626 = vmatprep.subr.mxu0 0.0
        %2627 = vmatpush1.msra.mxu0 0.0
        %2628 = vmatprep.subr.mxu0 0.0
        %2629 = vmatpush1.msra.mxu0 0.0
        %2630 = vmatprep.subr.mxu0 0.0
        %2631 = vmatpush1.msra.mxu0 0.0
        %2632 = vmatprep.subr.mxu0 0.0
        %2633 = vmatpush1.msra.mxu0 0.0
        %2634 = vmatprep.subr.mxu0 0.0
        %2635 = vmatpush1.msra.mxu0 0.0
        %2636 = vmatprep.subr.mxu0 0.0
        %2637 = vmatpush1.msra.mxu0 0.0
        %2638 = vmatprep.subr.mxu0 0.0
        %2639 = vmatpush1.msra.mxu0 0.0
        %2640 = vmatprep.subr.mxu0 0.0
        %2641 = vmatpush1.msra.mxu0 0.0
        %2642 = vmatprep.subr.mxu0 0.0
        %2643 = vmatpush1.msra.mxu0 0.0
        %2644 = vmatprep.subr.mxu0 0.0
        %2645 = vmatpush1.msra.mxu0 0.0
        %2646 = vmatprep.subr.mxu0 0.0
        %2647 = vmatpush1.msra.mxu0 0.0
        %2648 = vmatprep.subr.mxu0 0.0
        %2649 = vmatpush1.msra.mxu0 0.0
        %2650 = vmatprep.subr.mxu0 0.0
        %2651 = vmatpush1.msra.mxu0 0.0
        %2652 = vmatprep.subr.mxu0 0.0
        %2653 = vmatpush1.msra.mxu0 0.0
        %2654 = vmatprep.subr.mxu0 0.0
        %2655 = vmatpush1.msra.mxu0 0.0
        %2656 = vmatprep.subr.mxu0 0.0
        %2657 = vmatpush1.msra.mxu0 0.0
        %2658 = vmatprep.subr.mxu0 0.0
        %2659 = vmatpush1.msra.mxu0 0.0
        %2660 = vmatprep.subr.mxu0 0.0
        %2661 = vmatpush1.msra.mxu0 0.0
        %2662 = vmatprep.subr.mxu0 0.0
        %2663 = vmatpush1.msra.mxu0 0.0
        %2664 = vmatprep.mubr.f32.mxu0 0.0
        %2665 = vmatmul.mubr.f32.gmra.mrb[0].mxu0 %v436
        %v2666 = vpop.f32.mrb[0].mxu0
        %v2667 = vadd.f32 %v306, %v2666
        %v2668 = vpop.f32.mrb[0].mxu0
        %2669 = vdwg.mxu0
        %v2670 = vmul.f32 %v2667, 2.0
        %v2671 = vadd.f32 %v2506, %v2670
        %v2672 = vmul.f32 %v2667, 0.0625
        %v2673 = vadd.f32 %v2331, %v2672
        %2674 = vmatprep.subr.mxu0 0.0
        %2675 = vmatpush1.msra.mxu0 %v2673
        %2676 = vmatprep.subr.mxu0 0.0
        %2677 = vmatpush1.msra.mxu0 0.0
        %2678 = vmatprep.subr.mxu0 0.0
        %2679 = vmatpush1.msra.mxu0 0.0
        %2680 = vmatprep.subr.mxu0 0.0
        %2681 = vmatpush1.msra.mxu0 0.0
        %2682 = vmatprep.subr.mxu0 0.0
        %2683 = vmatpush1.msra.mxu0 0.0
        %2684 = vmatprep.subr.mxu0 0.0
        %2685 = vmatpush1.msra.mxu0 0.0
        %2686 = vmatprep.subr.mxu0 0.0
        %2687 = vmatpush1.msra.mxu0 0.0
        %2688 = vmatprep.subr.mxu0 0.0
        %2689 = vmatpush1.msra.mxu0 0.0
        %2690 = vmatprep.subr.mxu0 0.0
        %2691 = vmatpush1.msra.mxu0 0.0
        %2692 = vmatprep.subr.mxu0 0.0
        %2693 = vmatpush1.msra.mxu0 0.0
        %2694 = vmatprep.subr.mxu0 0.0
        %2695 = vmatpush1.msra.mxu0 0.0
        %2696 = vmatprep.subr.mxu0 0.0
        %2697 = vmatpush1.msra.mxu0 0.0
        %2698 = vmatprep.subr.mxu0 0.0
        %2699 = vmatpush1.msra.mxu0 0.0
        %2700 = vmatprep.subr.mxu0 0.0
        %2701 = vmatpush1.msra.mxu0 0.0
        %2702 = vmatprep.subr.mxu0 0.0
        %2703 = vmatpush1.msra.mxu0 0.0
        %2704 = vmatprep.subr.mxu0 0.0
        %2705 = vmatpush1.msra.mxu0 0.0
        %2706 = vmatprep.subr.mxu0 0.0
        %2707 = vmatpush1.msra.mxu0 0.0
        %2708 = vmatprep.subr.mxu0 0.0
        %2709 = vmatpush1.msra.mxu0 0.0
        %2710 = vmatprep.subr.mxu0 0.0
        %2711 = vmatpush1.msra.mxu0 0.0
        %2712 = vmatprep.subr.mxu0 0.0
        %2713 = vmatpush1.msra.mxu0 0.0
        %2714 = vmatprep.subr.mxu0 0.0
        %2715 = vmatpush1.msra.mxu0 0.0
        %2716 = vmatprep.subr.mxu0 0.0
        %2717 = vmatpush1.msra.mxu0 0.0
        %2718 = vmatprep.subr.mxu0 0.0
        %2719 = vmatpush1.msra.mxu0 0.0
        %2720 = vmatprep.subr.mxu0 0.0
        %2721 = vmatpush1.msra.mxu0 0.0
        %2722 = vmatprep.subr.mxu0 0.0
        %2723 = vmatpush1.msra.mxu0 0.0
        %2724 = vmatprep.subr.mxu0 0.0
        %2725 = vmatpush1.msra.mxu0 0.0
        %2726 = vmatprep.subr.mxu0 0.0
        %2727 = vmatpush1.msra.mxu0 0.0
        %2728 = vmatprep.subr.mxu0 0.0
        %2729 = vmatpush1.msra.mxu0 0.0
        %2730 = vmatprep.subr.mxu0 0.0
        %2731 = vmatpush1.msra.mxu0 0.0
        %2732 = vmatprep.subr.mxu0 0.0
        %2733 = vmatpush1.msra.mxu0 0.0
        %2734 = vmatprep.subr.mxu0 0.0
        %2735 = vmatpush1.msra.mxu0 0.0
        %2736 = vmatprep.subr.mxu0 0.0
        %2737 = vmatpush1.msra.mxu0 0.0
        %2738 = vmatprep.mubr.f32.mxu0 0.0
        %2739 = vmatmul.mubr.f32.gmra.mrb[0].mxu0 %v334
        %v2740 = vpop.f32.mrb[0].mxu0
        %v2741 = vadd.f32 %v2338, %v2740
        %v2742 = vpop.f32.mrb[0].mxu0
        %2743 = vmatprep.mubr.f32.mxu0 0.0
        %2744 = vmatmul.mubr.f32.gmra.mrb[0].mxu0 %v337
        %v2745 = vpop.f32.mrb[0].mxu0
        %v2746 = vadd.f32 %v2339, %v2745
        %v2747 = vpop.f32.mrb[0].mxu0
        %2748 = vmatprep.mubr.f32.mxu0 0.0
        %2749 = vmatmul.mubr.f32.gmra.mrb[0].mxu0 %v340
        %v2750 = vpop.f32.mrb[0].mxu0
        %v2751 = vadd.f32 %v2340, %v2750
        %v2752 = vpop.f32.mrb[0].mxu0
        %2753 = vmatprep.mubr.f32.mxu0 0.0
        %2754 = vmatmul.mubr.f32.gmra.mrb[0].mxu0 %v343
        %v2755 = vpop.f32.mrb[0].mxu0
        %v2756 = vadd.f32 %v2341, %v2755
        %v2757 = vpop.f32.mrb[0].mxu0
        %2758 = vdwg.mxu0
        %v2759 = vtanh.pop %v2741
        %v2760 = vtanh.pop %v2746
        %v2761 = vtanh.pop %v2751
        %v2762 = vtanh.pop %v2756
        %2763 = vmatprep.subr.mxu0 0.0
        %2764 = vmatpush1.msra.mxu0 %v2759
        %2765 = vmatprep.subr.mxu0 0.0
        %2766 = vmatpush1.msra.mxu0 %v2760
        %2767 = vmatprep.subr.mxu0 0.0
        %2768 = vmatpush1.msra.mxu0 %v2761
        %2769 = vmatprep.subr.mxu0 0.0
        %2770 = vmatpush1.msra.mxu0 %v2762
        %2771 = vmatprep.subr.mxu0 0.0
        %2772 = vmatpush1.msra.mxu0 0.0
        %2773 = vmatprep.subr.mxu0 0.0
        %2774 = vmatpush1.msra.mxu0 0.0
        %2775 = vmatprep.subr.mxu0 0.0
        %2776 = vmatpush1.msra.mxu0 0.0
        %2777 = vmatprep.subr.mxu0 0.0
        %2778 = vmatpush1.msra.mxu0 0.0
        %2779 = vmatprep.subr.mxu0 0.0
        %2780 = vmatpush1.msra.mxu0 0.0
        %2781 = vmatprep.subr.mxu0 0.0
        %2782 = vmatpush1.msra.mxu0 0.0
        %2783 = vmatprep.subr.mxu0 0.0
        %2784 = vmatpush1.msra.mxu0 0.0
        %2785 = vmatprep.subr.mxu0 0.0
        %2786 = vmatpush1.msra.mxu0 0.0
        %2787 = vmatprep.subr.mxu0 0.0
        %2788 = vmatpush1.msra.mxu0 0.0
        %2789 = vmatprep.subr.mxu0 0.0
        %2790 = vmatpush1.msra.mxu0 0.0
        %2791 = vmatprep.subr.mxu0 0.0
        %2792 = vmatpush1.msra.mxu0 0.0
        %2793 = vmatprep.subr.mxu0 0.0
        %2794 = vmatpush1.msra.mxu0 0.0
        %2795 = vmatprep.subr.mxu0 0.0
        %2796 = vmatpush1.msra.mxu0 0.0
        %2797 = vmatprep.subr.mxu0 0.0
        %2798 = vmatpush1.msra.mxu0 0.0
        %2799 = vmatprep.subr.mxu0 0.0
        %2800 = vmatpush1.msra.mxu0 0.0
        %2801 = vmatprep.subr.mxu0 0.0
        %2802 = vmatpush1.msra.mxu0 0.0
        %2803 = vmatprep.subr.mxu0 0.0
        %2804 = vmatpush1.msra.mxu0 0.0
        %2805 = vmatprep.subr.mxu0 0.0
        %2806 = vmatpush1.msra.mxu0 0.0
        %2807 = vmatprep.subr.mxu0 0.0
        %2808 = vmatpush1.msra.mxu0 0.0
        %2809 = vmatprep.subr.mxu0 0.0
        %2810 = vmatpush1.msra.mxu0 0.0
        %2811 = vmatprep.subr.mxu0 0.0
        %2812 = vmatpush1.msra.mxu0 0.0
        %2813 = vmatprep.subr.mxu0 0.0
        %2814 = vmatpush1.msra.mxu0 0.0
        %2815 = vmatprep.subr.mxu0 0.0
        %2816 = vmatpush1.msra.mxu0 0.0
        %2817 = vmatprep.subr.mxu0 0.0
        %2818 = vmatpush1.msra.mxu0 0.0
        %2819 = vmatprep.subr.mxu0 0.0
        %2820 = vmatpush1.msra.mxu0 0.0
        %2821 = vmatprep.subr.mxu0 0.0
        %2822 = vmatpush1.msra.mxu0 0.0
        %2823 = vmatprep.subr.mxu0 0.0
        %2824 = vmatpush1.msra.mxu0 0.0
        %2825 = vmatprep.subr.mxu0 0.0
        %2826 = vmatpush1.msra.mxu0 0.0
        %2827 = vmatprep.mubr.f32.mxu0 0.0
        %2828 = vmatmul.mubr.f32.gmra.mrb[0].mxu0 %v436
        %v2829 = vpop.f32.mrb[0].mxu0
        %v2830 = vadd.f32 %v306, %v2829
        %v2831 = vpop.f32.mrb[0].mxu0
        %2832 = vdwg.mxu0
        %v2833 = vmul.f32 %v2830, 2.0
        %v2834 = vadd.f32 %v2671, %v2833
        %v2835 = vmul.f32 %v2830, 0.125
        %v2836 = vadd.f32 %v2331, %v2835
        %2837 = vmatprep.subr.mxu0 0.0
        %2838 = vmatpush1.msra.mxu0 %v2836
        %2839 = vmatprep.subr.mxu0 0.0
        %2840 = vmatpush1.msra.mxu0 0.0
        %2841 = vmatprep.subr.mxu0 0.0
        %2842 = vmatpush1.msra.mxu0 0.0
        %2843 = vmatprep.subr.mxu0 0.0
        %2844 = vmatpush1.msra.mxu0 0.0
        %2845 = vmatprep.subr.mxu0 0.0
        %2846 = vmatpush1.msra.mxu0 0.0
        %2847 = vmatprep.subr.mxu0 0.0
        %2848 = vmatpush1.msra.mxu0 0.0
        %2849 = vmatprep.subr.mxu0 0.0
        %2850 = vmatpush1.msra.mxu0 0.0
        %2851 = vmatprep.subr.mxu0 0.0
        %2852 = vmatpush1.msra.mxu0 0.0
        %2853 = vmatprep.subr.mxu0 0.0
        %2854 = vmatpush1.msra.mxu0 0.0
        %2855 = vmatprep.subr.mxu0 0.0
        %2856 = vmatpush1.msra.mxu0 0.0
        %2857 = vmatprep.subr.mxu0 0.0
        %2858 = vmatpush1.msra.mxu0 0.0
        %2859 = vmatprep.subr.mxu0 0.0
        %2860 = vmatpush1.msra.mxu0 0.0
        %2861 = vmatprep.subr.mxu0 0.0
        %2862 = vmatpush1.msra.mxu0 0.0
        %2863 = vmatprep.subr.mxu0 0.0
        %2864 = vmatpush1.msra.mxu0 0.0
        %2865 = vmatprep.subr.mxu0 0.0
        %2866 = vmatpush1.msra.mxu0 0.0
        %2867 = vmatprep.subr.mxu0 0.0
        %2868 = vmatpush1.msra.mxu0 0.0
        %2869 = vmatprep.subr.mxu0 0.0
        %2870 = vmatpush1.msra.mxu0 0.0
        %2871 = vmatprep.subr.mxu0 0.0
        %2872 = vmatpush1.msra.mxu0 0.0
        %2873 = vmatprep.subr.mxu0 0.0
        %2874 = vmatpush1.msra.mxu0 0.0
        %2875 = vmatprep.subr.mxu0 0.0
        %2876 = vmatpush1.msra.mxu0 0.0
        %2877 = vmatprep.subr.mxu0 0.0
        %2878 = vmatpush1.msra.mxu0 0.0
        %2879 = vmatprep.subr.mxu0 0.0
        %2880 = vmatpush1.msra.mxu0 0.0
        %2881 = vmatprep.subr.mxu0 0.0
        %2882 = vmatpush1.msra.mxu0 0.0
        %2883 = vmatprep.subr.mxu0 0.0
        %2884 = vmatpush1.msra.mxu0 0.0
        %2885 = vmatprep.subr.mxu0 0.0
        %2886 = vmatpush1.msra.mxu0 0.0
        %2887 = vmatprep.subr.mxu0 0.0
        %2888 = vmatpush1.msra.mxu0 0.0
        %2889 = vmatprep.subr.mxu0 0.0
        %2890 = vmatpush1.msra.mxu0 0.0
        %2891 = vmatprep.subr.mxu0 0.0
        %2892 = vmatpush1.msra.mxu0 0.0
        %2893 = vmatprep.subr.mxu0 0.0
        %2894 = vmatpush1.msra.mxu0 0.0
        %2895 = vmatprep.subr.mxu0 0.0
        %2896 = vmatpush1.msra.mxu0 0.0
        %2897 = vmatprep.subr.mxu0 0.0
        %2898 = vmatpush1.msra.mxu0 0.0
        %2899 = vmatprep.subr.mxu0 0.0
        %2900 = vmatpush1.msra.mxu0 0.0
        %2901 = vmatprep.mubr.f32.mxu0 0.0
        %2902 = vmatmul.mubr.f32.gmra.mrb[0].mxu0 %v334
        %v2903 = vpop.f32.mrb[0].mxu0
        %v2904 = vadd.f32 %v2346, %v2903
        %v2905 = vpop.f32.mrb[0].mxu0
        %2906 = vmatprep.mubr.f32.mxu0 0.0
        %2907 = vmatmul.mubr.f32.gmra.mrb[0].mxu0 %v337
        %v2908 = vpop.f32.mrb[0].mxu0
        %v2909 = vadd.f32 %v2347, %v2908
        %v2910 = vpop.f32.mrb[0].mxu0
        %2911 = vmatprep.mubr.f32.mxu0 0.0
        %2912 = vmatmul.mubr.f32.gmra.mrb[0].mxu0 %v340
        %v2913 = vpop.f32.mrb[0].mxu0
        %v2914 = vadd.f32 %v2348, %v2913
        %v2915 = vpop.f32.mrb[0].mxu0
        %2916 = vmatprep.mubr.f32.mxu0 0.0
        %2917 = vmatmul.mubr.f32.gmra.mrb[0].mxu0 %v343
        %v2918 = vpop.f32.mrb[0].mxu0
        %v2919 = vadd.f32 %v2349, %v2918
        %v2920 = vpop.f32.mrb[0].mxu0
        %2921 = vdwg.mxu0
        %v2922 = vtanh.pop %v2904
        %v2923 = vtanh.pop %v2909
        %v2924 = vtanh.pop %v2914
        %v2925 = vtanh.pop %v2919
        %2926 = vmatprep.subr.mxu0 0.0
        %2927 = vmatpush1.msra.mxu0 %v2922
        %2928 = vmatprep.subr.mxu0 0.0
        %2929 = vmatpush1.msra.mxu0 %v2923
        %2930 = vmatprep.subr.mxu0 0.0
        %2931 = vmatpush1.msra.mxu0 %v2924
        %2932 = vmatprep.subr.mxu0 0.0
        %2933 = vmatpush1.msra.mxu0 %v2925
        %2934 = vmatprep.subr.mxu0 0.0
        %2935 = vmatpush1.msra.mxu0 0.0
        %2936 = vmatprep.subr.mxu0 0.0
        %2937 = vmatpush1.msra.mxu0 0.0
        %2938 = vmatprep.subr.mxu0 0.0
        %2939 = vmatpush1.msra.mxu0 0.0
        %2940 = vmatprep.subr.mxu0 0.0
        %2941 = vmatpush1.msra.mxu0 0.0
        %2942 = vmatprep.subr.mxu0 0.0
        %2943 = vmatpush1.msra.mxu0 0.0
        %2944 = vmatprep.subr.mxu0 0.0
        %2945 = vmatpush1.msra.mxu0 0.0
        %2946 = vmatprep.subr.mxu0 0.0
        %2947 = vmatpush1.msra.mxu0 0.0
        %2948 = vmatprep.subr.mxu0 0.0
        %2949 = vmatpush1.msra.mxu0 0.0
        %2950 = vmatprep.subr.mxu0 0.0
        %2951 = vmatpush1.msra.mxu0 0.0
        %2952 = vmatprep.subr.mxu0 0.0
        %2953 = vmatpush1.msra.mxu0 0.0
        %2954 = vmatprep.subr.mxu0 0.0
        %2955 = vmatpush1.msra.mxu0 0.0
        %2956 = vmatprep.subr.mxu0 0.0
        %2957 = vmatpush1.msra.mxu0 0.0
        %2958 = vmatprep.subr.mxu0 0.0
        %2959 = vmatpush1.msra.mxu0 0.0
        %2960 = vmatprep.subr.mxu0 0.0
        %2961 = vmatpush1.msra.mxu0 0.0
        %2962 = vmatprep.subr.mxu0 0.0
        %2963 = vmatpush1.msra.mxu0 0.0
        %2964 = vmatprep.subr.mxu0 0.0
        %2965 = vmatpush1.msra.mxu0 0.0
        %2966 = vmatprep.subr.mxu0 0.0
        %2967 = vmatpush1.msra.mxu0 0.0
        %2968 = vmatprep.subr.mxu0 0.0
        %2969 = vmatpush1.msra.mxu0 0.0
        %2970 = vmatprep.subr.mxu0 0.0
        %2971 = vmatpush1.msra.mxu0 0.0
        %2972 = vmatprep.subr.mxu0 0.0
        %2973 = vmatpush1.msra.mxu0 0.0
        %2974 = vmatprep.subr.mxu0 0.0
        %2975 = vmatpush1.msra.mxu0 0.0
        %2976 = vmatprep.subr.mxu0 0.0
        %2977 = vmatpush1.msra.mxu0 0.0
        %2978 = vmatprep.subr.mxu0 0.0
        %2979 = vmatpush1.msra.mxu0 0.0
        %2980 = vmatprep.subr.mxu0 0.0
        %2981 = vmatpush1.msra.mxu0 0.0
        %2982 = vmatprep.subr.mxu0 0.0
        %2983 = vmatpush1.msra.mxu0 0.0
        %2984 = vmatprep.subr.mxu0 0.0
        %2985 = vmatpush1.msra.mxu0 0.0
        %2986 = vmatprep.subr.mxu0 0.0
        %2987 = vmatpush1.msra.mxu0 0.0
        %2988 = vmatprep.subr.mxu0 0.0
        %2989 = vmatpush1.msra.mxu0 0.0
        %2990 = vmatprep.mubr.f32.mxu0 0.0
        %2991 = vmatmul.mubr.f32.gmra.mrb[0].mxu0 %v436
        %v2992 = vpop.f32.mrb[0].mxu0
        %v2993 = vadd.f32 %v306, %v2992
        %v2994 = vpop.f32.mrb[0].mxu0
        %2995 = vdwg.mxu0
        %v2996 = vadd.f32 %v2834, %v2993
        %v2997 = vmul.f32 %v2996, 0.020833334
        %v2998 = vadd.f32 %v2331, %v2997
        %s2999 = scalar_lea.vmem %s242, 32 [#allocation2]
        %3000 = vst [vmem:[%s2999] sm:$0xff] %v2998
        %v3001 = vmul.f32 %v261, 0.5625
        %v3002 = vmul.f32 %v266, 0.5625
        %v3003 = vmul.f32 %v271, 0.5625
        %v3004 = vmul.f32 %v276, 0.5625
        %v3005 = vadd.f32 %v3001, %v285
        %v3006 = vadd.f32 %v3002, %v290
        %v3007 = vadd.f32 %v3003, %v295
        %v3008 = vadd.f32 %v3004, %v300
        %v3009 = vmul.f32 %v261, 0.625
        %v3010 = vmul.f32 %v266, 0.625
        %v3011 = vmul.f32 %v271, 0.625
        %v3012 = vmul.f32 %v276, 0.625
        %v3013 = vadd.f32 %v3009, %v285
        %v3014 = vadd.f32 %v3010, %v290
        %v3015 = vadd.f32 %v3011, %v295
        %v3016 = vadd.f32 %v3012, %v300
        %3017 = vmatprep.subr.mxu0 0.0
        %3018 = vmatpush1.msra.mxu0 %v2998
        %3019 = vmatprep.subr.mxu0 0.0
        %3020 = vmatpush1.msra.mxu0 0.0
        %3021 = vmatprep.subr.mxu0 0.0
        %3022 = vmatpush1.msra.mxu0 0.0
        %3023 = vmatprep.subr.mxu0 0.0
        %3024 = vmatpush1.msra.mxu0 0.0
        %3025 = vmatprep.subr.mxu0 0.0
        %3026 = vmatpush1.msra.mxu0 0.0
        %3027 = vmatprep.subr.mxu0 0.0
        %3028 = vmatpush1.msra.mxu0 0.0
        %3029 = vmatprep.subr.mxu0 0.0
        %3030 = vmatpush1.msra.mxu0 0.0
        %3031 = vmatprep.subr.mxu0 0.0
        %3032 = vmatpush1.msra.mxu0 0.0
        %3033 = vmatprep.subr.mxu0 0.0
        %3034 = vmatpush1.msra.mxu0 0.0
        %3035 = vmatprep.subr.mxu0 0.0
        %3036 = vmatpush1.msra.mxu0 0.0
        %3037 = vmatprep.subr.mxu0 0.0
        %3038 = vmatpush1.msra.mxu0 0.0
        %3039 = vmatprep.subr.mxu0 0.0
        %3040 = vmatpush1.msra.mxu0 0.0
        %3041 = vmatprep.subr.mxu0 0.0
        %3042 = vmatpush1.msra.mxu0 0.0
        %3043 = vmatprep.subr.mxu0 0.0
        %3044 = vmatpush1.msra.mxu0 0.0
        %3045 = vmatprep.subr.mxu0 0.0
        %3046 = vmatpush1.msra.mxu0 0.0
        %3047 = vmatprep.subr.mxu0 0.0
        %3048 = vmatpush1.msra.mxu0 0.0
        %3049 = vmatprep.subr.mxu0 0.0
        %3050 = vmatpush1.msra.mxu0 0.0
        %3051 = vmatprep.subr.mxu0 0.0
        %3052 = vmatpush1.msra.mxu0 0.0
        %3053 = vmatprep.subr.mxu0 0.0
        %3054 = vmatpush1.msra.mxu0 0.0
        %3055 = vmatprep.subr.mxu0 0.0
        %3056 = vmatpush1.msra.mxu0 0.0
        %3057 = vmatprep.subr.mxu0 0.0
        %3058 = vmatpush1.msra.mxu0 0.0
        %3059 = vmatprep.subr.mxu0 0.0
        %3060 = vmatpush1.msra.mxu0 0.0
        %3061 = vmatprep.subr.mxu0 0.0
        %3062 = vmatpush1.msra.mxu0 0.0
        %3063 = vmatprep.subr.mxu0 0.0
        %3064 = vmatpush1.msra.mxu0 0.0
        %3065 = vmatprep.subr.mxu0 0.0
        %3066 = vmatpush1.msra.mxu0 0.0
        %3067 = vmatprep.subr.mxu0 0.0
        %3068 = vmatpush1.msra.mxu0 0.0
        %3069 = vmatprep.subr.mxu0 0.0
        %3070 = vmatpush1.msra.mxu0 0.0
        %3071 = vmatprep.subr.mxu0 0.0
        %3072 = vmatpush1.msra.mxu0 0.0
        %3073 = vmatprep.subr.mxu0 0.0
        %3074 = vmatpush1.msra.mxu0 0.0
        %3075 = vmatprep.subr.mxu0 0.0
        %3076 = vmatpush1.msra.mxu0 0.0
        %3077 = vmatprep.subr.mxu0 0.0
        %3078 = vmatpush1.msra.mxu0 0.0
        %3079 = vmatprep.subr.mxu0 0.0
        %3080 = vmatpush1.msra.mxu0 0.0
        %3081 = vmatprep.mubr.f32.mxu0 0.0
        %3082 = vmatmul.mubr.f32.gmra.mrb[0].mxu0 %v334
        %v3083 = vpop.f32.mrb[0].mxu0
        %v3084 = vadd.f32 %v2346, %v3083
        %v3085 = vpop.f32.mrb[0].mxu0
        %3086 = vmatprep.mubr.f32.mxu0 0.0
        %3087 = vmatmul.mubr.f32.gmra.mrb[0].mxu0 %v337
        %v3088 = vpop.f32.mrb[0].mxu0
        %v3089 = vadd.f32 %v2347, %v3088
        %v3090 = vpop.f32.mrb[0].mxu0
        %3091 = vmatprep.mubr.f32.mxu0 0.0
        %3092 = vmatmul.mubr.f32.gmra.mrb[0].mxu0 %v340
        %v3093 = vpop.f32.mrb[0].mxu0
        %v3094 = vadd.f32 %v2348, %v3093
        %v3095 = vpop.f32.mrb[0].mxu0
        %3096 = vmatprep.mubr.f32.mxu0 0.0
        %3097 = vmatmul.mubr.f32.gmra.mrb[0].mxu0 %v343
        %v3098 = vpop.f32.mrb[0].mxu0
        %v3099 = vadd.f32 %v2349, %v3098
        %v3100 = vpop.f32.mrb[0].mxu0
        %3101 = vdwg.mxu0
        %v3102 = vtanh.pop %v3084
        %v3103 = vtanh.pop %v3089
        %v3104 = vtanh.pop %v3094
        %v3105 = vtanh.pop %v3099
        %3106 = vmatprep.subr.mxu0 0.0
        %3107 = vmatpush1.msra.mxu0 %v3102
        %3108 = vmatprep.subr.mxu0 0.0
        %3109 = vmatpush1.msra.mxu0 %v3103
        %3110 = vmatprep.subr.mxu0 0.0
        %3111 = vmatpush1.msra.mxu0 %v3104
        %3112 = vmatprep.subr.mxu0 0.0
        %3113 = vmatpush1.msra.mxu0 %v3105
        %3114 = vmatprep.subr.mxu0 0.0
        %3115 = vmatpush1.msra.mxu0 0.0
        %3116 = vmatprep.subr.mxu0 0.0
        %3117 = vmatpush1.msra.mxu0 0.0
        %3118 = vmatprep.subr.mxu0 0.0
        %3119 = vmatpush1.msra.mxu0 0.0
        %3120 = vmatprep.subr.mxu0 0.0
        %3121 = vmatpush1.msra.mxu0 0.0
        %3122 = vmatprep.subr.mxu0 0.0
        %3123 = vmatpush1.msra.mxu0 0.0
        %3124 = vmatprep.subr.mxu0 0.0
        %3125 = vmatpush1.msra.mxu0 0.0
        %3126 = vmatprep.subr.mxu0 0.0
        %3127 = vmatpush1.msra.mxu0 0.0
        %3128 = vmatprep.subr.mxu0 0.0
        %3129 = vmatpush1.msra.mxu0 0.0
        %3130 = vmatprep.subr.mxu0 0.0
        %3131 = vmatpush1.msra.mxu0 0.0
        %3132 = vmatprep.subr.mxu0 0.0
        %3133 = vmatpush1.msra.mxu0 0.0
        %3134 = vmatprep.subr.mxu0 0.0
        %3135 = vmatpush1.msra.mxu0 0.0
        %3136 = vmatprep.subr.mxu0 0.0
        %3137 = vmatpush1.msra.mxu0 0.0
        %3138 = vmatprep.subr.mxu0 0.0
        %3139 = vmatpush1.msra.mxu0 0.0
        %3140 = vmatprep.subr.mxu0 0.0
        %3141 = vmatpush1.msra.mxu0 0.0
        %3142 = vmatprep.subr.mxu0 0.0
        %3143 = vmatpush1.msra.mxu0 0.0
        %3144 = vmatprep.subr.mxu0 0.0
        %3145 = vmatpush1.msra.mxu0 0.0
        %3146 = vmatprep.subr.mxu0 0.0
        %3147 = vmatpush1.msra.mxu0 0.0
        %3148 = vmatprep.subr.mxu0 0.0
        %3149 = vmatpush1.msra.mxu0 0.0
        %3150 = vmatprep.subr.mxu0 0.0
        %3151 = vmatpush1.msra.mxu0 0.0
        %3152 = vmatprep.subr.mxu0 0.0
        %3153 = vmatpush1.msra.mxu0 0.0
        %3154 = vmatprep.subr.mxu0 0.0
        %3155 = vmatpush1.msra.mxu0 0.0
        %3156 = vmatprep.subr.mxu0 0.0
        %3157 = vmatpush1.msra.mxu0 0.0
        %3158 = vmatprep.subr.mxu0 0.0
        %3159 = vmatpush1.msra.mxu0 0.0
        %3160 = vmatprep.subr.mxu0 0.0
        %3161 = vmatpush1.msra.mxu0 0.0
        %3162 = vmatprep.subr.mxu0 0.0
        %3163 = vmatpush1.msra.mxu0 0.0
        %3164 = vmatprep.subr.mxu0 0.0
        %3165 = vmatpush1.msra.mxu0 0.0
        %3166 = vmatprep.subr.mxu0 0.0
        %3167 = vmatpush1.msra.mxu0 0.0
        %3168 = vmatprep.subr.mxu0 0.0
        %3169 = vmatpush1.msra.mxu0 0.0
        %3170 = vmatprep.mubr.f32.mxu0 0.0
        %3171 = vmatmul.mubr.f32.gmra.mrb[0].mxu0 %v436
        %v3172 = vpop.f32.mrb[0].mxu0
        %v3173 = vadd.f32 %v306, %v3172
        %v3174 = vpop.f32.mrb[0].mxu0
        %3175 = vdwg.mxu0
        %v3176 = vmul.f32 %v3173, 0.0625
        %v3177 = vadd.f32 %v2998, %v3176
        %3178 = vmatprep.subr.mxu0 0.0
        %3179 = vmatpush1.msra.mxu0 %v3177
        %3180 = vmatprep.subr.mxu0 0.0
        %3181 = vmatpush1.msra.mxu0 0.0
        %3182 = vmatprep.subr.mxu0 0.0
        %3183 = vmatpush1.msra.mxu0 0.0
        %3184 = vmatprep.subr.mxu0 0.0
        %3185 = vmatpush1.msra.mxu0 0.0
        %3186 = vmatprep.subr.mxu0 0.0
        %3187 = vmatpush1.msra.mxu0 0.0
        %3188 = vmatprep.subr.mxu0 0.0
        %3189 = vmatpush1.msra.mxu0 0.0
        %3190 = vmatprep.subr.mxu0 0.0
        %3191 = vmatpush1.msra.mxu0 0.0
        %3192 = vmatprep.subr.mxu0 0.0
        %3193 = vmatpush1.msra.mxu0 0.0
        %3194 = vmatprep.subr.mxu0 0.0
        %3195 = vmatpush1.msra.mxu0 0.0
        %3196 = vmatprep.subr.mxu0 0.0
        %3197 = vmatpush1.msra.mxu0 0.0
        %3198 = vmatprep.subr.mxu0 0.0
        %3199 = vmatpush1.msra.mxu0 0.0
        %3200 = vmatprep.subr.mxu0 0.0
        %3201 = vmatpush1.msra.mxu0 0.0
        %3202 = vmatprep.subr.mxu0 0.0
        %3203 = vmatpush1.msra.mxu0 0.0
        %3204 = vmatprep.subr.mxu0 0.0
        %3205 = vmatpush1.msra.mxu0 0.0
        %3206 = vmatprep.subr.mxu0 0.0
        %3207 = vmatpush1.msra.mxu0 0.0
        %3208 = vmatprep.subr.mxu0 0.0
        %3209 = vmatpush1.msra.mxu0 0.0
        %3210 = vmatprep.subr.mxu0 0.0
        %3211 = vmatpush1.msra.mxu0 0.0
        %3212 = vmatprep.subr.mxu0 0.0
        %3213 = vmatpush1.msra.mxu0 0.0
        %3214 = vmatprep.subr.mxu0 0.0
        %3215 = vmatpush1.msra.mxu0 0.0
        %3216 = vmatprep.subr.mxu0 0.0
        %3217 = vmatpush1.msra.mxu0 0.0
        %3218 = vmatprep.subr.mxu0 0.0
        %3219 = vmatpush1.msra.mxu0 0.0
        %3220 = vmatprep.subr.mxu0 0.0
        %3221 = vmatpush1.msra.mxu0 0.0
        %3222 = vmatprep.subr.mxu0 0.0
        %3223 = vmatpush1.msra.mxu0 0.0
        %3224 = vmatprep.subr.mxu0 0.0
        %3225 = vmatpush1.msra.mxu0 0.0
        %3226 = vmatprep.subr.mxu0 0.0
        %3227 = vmatpush1.msra.mxu0 0.0
        %3228 = vmatprep.subr.mxu0 0.0
        %3229 = vmatpush1.msra.mxu0 0.0
        %3230 = vmatprep.subr.mxu0 0.0
        %3231 = vmatpush1.msra.mxu0 0.0
        %3232 = vmatprep.subr.mxu0 0.0
        %3233 = vmatpush1.msra.mxu0 0.0
        %3234 = vmatprep.subr.mxu0 0.0
        %3235 = vmatpush1.msra.mxu0 0.0
        %3236 = vmatprep.subr.mxu0 0.0
        %3237 = vmatpush1.msra.mxu0 0.0
        %3238 = vmatprep.subr.mxu0 0.0
        %3239 = vmatpush1.msra.mxu0 0.0
        %3240 = vmatprep.subr.mxu0 0.0
        %3241 = vmatpush1.msra.mxu0 0.0
        %3242 = vmatprep.mubr.f32.mxu0 0.0
        %3243 = vmatmul.mubr.f32.gmra.mrb[0].mxu0 %v334
        %v3244 = vpop.f32.mrb[0].mxu0
        %v3245 = vadd.f32 %v3005, %v3244
        %v3246 = vpop.f32.mrb[0].mxu0
        %3247 = vmatprep.mubr.f32.mxu0 0.0
        %3248 = vmatmul.mubr.f32.gmra.mrb[0].mxu0 %v337
        %v3249 = vpop.f32.mrb[0].mxu0
        %v3250 = vadd.f32 %v3006, %v3249
        %v3251 = vpop.f32.mrb[0].mxu0
        %3252 = vmatprep.mubr.f32.mxu0 0.0
        %3253 = vmatmul.mubr.f32.gmra.mrb[0].mxu0 %v340
        %v3254 = vpop.f32.mrb[0].mxu0
        %v3255 = vadd.f32 %v3007, %v3254
        %v3256 = vpop.f32.mrb[0].mxu0
        %3257 = vmatprep.mubr.f32.mxu0 0.0
        %3258 = vmatmul.mubr.f32.gmra.mrb[0].mxu0 %v343
        %v3259 = vpop.f32.mrb[0].mxu0
        %v3260 = vadd.f32 %v3008, %v3259
        %v3261 = vpop.f32.mrb[0].mxu0
        %3262 = vdwg.mxu0
        %v3263 = vtanh.pop %v3245
        %v3264 = vtanh.pop %v3250
        %v3265 = vtanh.pop %v3255
        %v3266 = vtanh.pop %v3260
        %3267 = vmatprep.subr.mxu0 0.0
        %3268 = vmatpush1.msra.mxu0 %v3263
        %3269 = vmatprep.subr.mxu0 0.0
        %3270 = vmatpush1.msra.mxu0 %v3264
        %3271 = vmatprep.subr.mxu0 0.0
        %3272 = vmatpush1.msra.mxu0 %v3265
        %3273 = vmatprep.subr.mxu0 0.0
        %3274 = vmatpush1.msra.mxu0 %v3266
        %3275 = vmatprep.subr.mxu0 0.0
        %3276 = vmatpush1.msra.mxu0 0.0
        %3277 = vmatprep.subr.mxu0 0.0
        %3278 = vmatpush1.msra.mxu0 0.0
        %3279 = vmatprep.subr.mxu0 0.0
        %3280 = vmatpush1.msra.mxu0 0.0
        %3281 = vmatprep.subr.mxu0 0.0
        %3282 = vmatpush1.msra.mxu0 0.0
        %3283 = vmatprep.subr.mxu0 0.0
        %3284 = vmatpush1.msra.mxu0 0.0
        %3285 = vmatprep.subr.mxu0 0.0
        %3286 = vmatpush1.msra.mxu0 0.0
        %3287 = vmatprep.subr.mxu0 0.0
        %3288 = vmatpush1.msra.mxu0 0.0
        %3289 = vmatprep.subr.mxu0 0.0
        %3290 = vmatpush1.msra.mxu0 0.0
        %3291 = vmatprep.subr.mxu0 0.0
        %3292 = vmatpush1.msra.mxu0 0.0
        %3293 = vmatprep.subr.mxu0 0.0
        %3294 = vmatpush1.msra.mxu0 0.0
        %3295 = vmatprep.subr.mxu0 0.0
        %3296 = vmatpush1.msra.mxu0 0.0
        %3297 = vmatprep.subr.mxu0 0.0
        %3298 = vmatpush1.msra.mxu0 0.0
        %3299 = vmatprep.subr.mxu0 0.0
        %3300 = vmatpush1.msra.mxu0 0.0
        %3301 = vmatprep.subr.mxu0 0.0
        %3302 = vmatpush1.msra.mxu0 0.0
        %3303 = vmatprep.subr.mxu0 0.0
        %3304 = vmatpush1.msra.mxu0 0.0
        %3305 = vmatprep.subr.mxu0 0.0
        %3306 = vmatpush1.msra.mxu0 0.0
        %3307 = vmatprep.subr.mxu0 0.0
        %3308 = vmatpush1.msra.mxu0 0.0
        %3309 = vmatprep.subr.mxu0 0.0
        %3310 = vmatpush1.msra.mxu0 0.0
        %3311 = vmatprep.subr.mxu0 0.0
        %3312 = vmatpush1.msra.mxu0 0.0
        %3313 = vmatprep.subr.mxu0 0.0
        %3314 = vmatpush1.msra.mxu0 0.0
        %3315 = vmatprep.subr.mxu0 0.0
        %3316 = vmatpush1.msra.mxu0 0.0
        %3317 = vmatprep.subr.mxu0 0.0
        %3318 = vmatpush1.msra.mxu0 0.0
        %3319 = vmatprep.subr.mxu0 0.0
        %3320 = vmatpush1.msra.mxu0 0.0
        %3321 = vmatprep.subr.mxu0 0.0
        %3322 = vmatpush1.msra.mxu0 0.0
        %3323 = vmatprep.subr.mxu0 0.0
        %3324 = vmatpush1.msra.mxu0 0.0
        %3325 = vmatprep.subr.mxu0 0.0
        %3326 = vmatpush1.msra.mxu0 0.0
        %3327 = vmatprep.subr.mxu0 0.0
        %3328 = vmatpush1.msra.mxu0 0.0
        %3329 = vmatprep.subr.mxu0 0.0
        %3330 = vmatpush1.msra.mxu0 0.0
        %3331 = vmatprep.mubr.f32.mxu0 0.0
        %3332 = vmatmul.mubr.f32.gmra.mrb[0].mxu0 %v436
        %v3333 = vpop.f32.mrb[0].mxu0
        %v3334 = vadd.f32 %v306, %v3333
        %v3335 = vpop.f32.mrb[0].mxu0
        %3336 = vdwg.mxu0
        %v3337 = vmul.f32 %v3334, 2.0
        %v3338 = vadd.f32 %v3173, %v3337
        %v3339 = vmul.f32 %v3334, 0.0625
        %v3340 = vadd.f32 %v2998, %v3339
        %3341 = vmatprep.subr.mxu0 0.0
        %3342 = vmatpush1.msra.mxu0 %v3340
        %3343 = vmatprep.subr.mxu0 0.0
        %3344 = vmatpush1.msra.mxu0 0.0
        %3345 = vmatprep.subr.mxu0 0.0
        %3346 = vmatpush1.msra.mxu0 0.0
        %3347 = vmatprep.subr.mxu0 0.0
        %3348 = vmatpush1.msra.mxu0 0.0
        %3349 = vmatprep.subr.mxu0 0.0
        %3350 = vmatpush1.msra.mxu0 0.0
        %3351 = vmatprep.subr.mxu0 0.0
        %3352 = vmatpush1.msra.mxu0 0.0
        %3353 = vmatprep.subr.mxu0 0.0
        %3354 = vmatpush1.msra.mxu0 0.0
        %3355 = vmatprep.subr.mxu0 0.0
        %3356 = vmatpush1.msra.mxu0 0.0
        %3357 = vmatprep.subr.mxu0 0.0
        %3358 = vmatpush1.msra.mxu0 0.0
        %3359 = vmatprep.subr.mxu0 0.0
        %3360 = vmatpush1.msra.mxu0 0.0
        %3361 = vmatprep.subr.mxu0 0.0
        %3362 = vmatpush1.msra.mxu0 0.0
        %3363 = vmatprep.subr.mxu0 0.0
        %3364 = vmatpush1.msra.mxu0 0.0
        %3365 = vmatprep.subr.mxu0 0.0
        %3366 = vmatpush1.msra.mxu0 0.0
        %3367 = vmatprep.subr.mxu0 0.0
        %3368 = vmatpush1.msra.mxu0 0.0
        %3369 = vmatprep.subr.mxu0 0.0
        %3370 = vmatpush1.msra.mxu0 0.0
        %3371 = vmatprep.subr.mxu0 0.0
        %3372 = vmatpush1.msra.mxu0 0.0
        %3373 = vmatprep.subr.mxu0 0.0
        %3374 = vmatpush1.msra.mxu0 0.0
        %3375 = vmatprep.subr.mxu0 0.0
        %3376 = vmatpush1.msra.mxu0 0.0
        %3377 = vmatprep.subr.mxu0 0.0
        %3378 = vmatpush1.msra.mxu0 0.0
        %3379 = vmatprep.subr.mxu0 0.0
        %3380 = vmatpush1.msra.mxu0 0.0
        %3381 = vmatprep.subr.mxu0 0.0
        %3382 = vmatpush1.msra.mxu0 0.0
        %3383 = vmatprep.subr.mxu0 0.0
        %3384 = vmatpush1.msra.mxu0 0.0
        %3385 = vmatprep.subr.mxu0 0.0
        %3386 = vmatpush1.msra.mxu0 0.0
        %3387 = vmatprep.subr.mxu0 0.0
        %3388 = vmatpush1.msra.mxu0 0.0
        %3389 = vmatprep.subr.mxu0 0.0
        %3390 = vmatpush1.msra.mxu0 0.0
        %3391 = vmatprep.subr.mxu0 0.0
        %3392 = vmatpush1.msra.mxu0 0.0
        %3393 = vmatprep.subr.mxu0 0.0
        %3394 = vmatpush1.msra.mxu0 0.0
        %3395 = vmatprep.subr.mxu0 0.0
        %3396 = vmatpush1.msra.mxu0 0.0
        %3397 = vmatprep.subr.mxu0 0.0
        %3398 = vmatpush1.msra.mxu0 0.0
        %3399 = vmatprep.subr.mxu0 0.0
        %3400 = vmatpush1.msra.mxu0 0.0
        %3401 = vmatprep.subr.mxu0 0.0
        %3402 = vmatpush1.msra.mxu0 0.0
        %3403 = vmatprep.subr.mxu0 0.0
        %3404 = vmatpush1.msra.mxu0 0.0
        %3405 = vmatprep.mubr.f32.mxu0 0.0
        %3406 = vmatmul.mubr.f32.gmra.mrb[0].mxu0 %v334
        %v3407 = vpop.f32.mrb[0].mxu0
        %v3408 = vadd.f32 %v3005, %v3407
        %v3409 = vpop.f32.mrb[0].mxu0
        %3410 = vmatprep.mubr.f32.mxu0 0.0
        %3411 = vmatmul.mubr.f32.gmra.mrb[0].mxu0 %v337
        %v3412 = vpop.f32.mrb[0].mxu0
        %v3413 = vadd.f32 %v3006, %v3412
        %v3414 = vpop.f32.mrb[0].mxu0
        %3415 = vmatprep.mubr.f32.mxu0 0.0
        %3416 = vmatmul.mubr.f32.gmra.mrb[0].mxu0 %v340
        %v3417 = vpop.f32.mrb[0].mxu0
        %v3418 = vadd.f32 %v3007, %v3417
        %v3419 = vpop.f32.mrb[0].mxu0
        %3420 = vmatprep.mubr.f32.mxu0 0.0
        %3421 = vmatmul.mubr.f32.gmra.mrb[0].mxu0 %v343
        %v3422 = vpop.f32.mrb[0].mxu0
        %v3423 = vadd.f32 %v3008, %v3422
        %v3424 = vpop.f32.mrb[0].mxu0
        %3425 = vdwg.mxu0
        %v3426 = vtanh.pop %v3408
        %v3427 = vtanh.pop %v3413
        %v3428 = vtanh.pop %v3418
        %v3429 = vtanh.pop %v3423
        %3430 = vmatprep.subr.mxu0 0.0
        %3431 = vmatpush1.msra.mxu0 %v3426
        %3432 = vmatprep.subr.mxu0 0.0
        %3433 = vmatpush1.msra.mxu0 %v3427
        %3434 = vmatprep.subr.mxu0 0.0
        %3435 = vmatpush1.msra.mxu0 %v3428
        %3436 = vmatprep.subr.mxu0 0.0
        %3437 = vmatpush1.msra.mxu0 %v3429
        %3438 = vmatprep.subr.mxu0 0.0
        %3439 = vmatpush1.msra.mxu0 0.0
        %3440 = vmatprep.subr.mxu0 0.0
        %3441 = vmatpush1.msra.mxu0 0.0
        %3442 = vmatprep.subr.mxu0 0.0
        %3443 = vmatpush1.msra.mxu0 0.0
        %3444 = vmatprep.subr.mxu0 0.0
        %3445 = vmatpush1.msra.mxu0 0.0
        %3446 = vmatprep.subr.mxu0 0.0
        %3447 = vmatpush1.msra.mxu0 0.0
        %3448 = vmatprep.subr.mxu0 0.0
        %3449 = vmatpush1.msra.mxu0 0.0
        %3450 = vmatprep.subr.mxu0 0.0
        %3451 = vmatpush1.msra.mxu0 0.0
        %3452 = vmatprep.subr.mxu0 0.0
        %3453 = vmatpush1.msra.mxu0 0.0
        %3454 = vmatprep.subr.mxu0 0.0
        %3455 = vmatpush1.msra.mxu0 0.0
        %3456 = vmatprep.subr.mxu0 0.0
        %3457 = vmatpush1.msra.mxu0 0.0
        %3458 = vmatprep.subr.mxu0 0.0
        %3459 = vmatpush1.msra.mxu0 0.0
        %3460 = vmatprep.subr.mxu0 0.0
        %3461 = vmatpush1.msra.mxu0 0.0
        %3462 = vmatprep.subr.mxu0 0.0
        %3463 = vmatpush1.msra.mxu0 0.0
        %3464 = vmatprep.subr.mxu0 0.0
        %3465 = vmatpush1.msra.mxu0 0.0
        %3466 = vmatprep.subr.mxu0 0.0
        %3467 = vmatpush1.msra.mxu0 0.0
        %3468 = vmatprep.subr.mxu0 0.0
        %3469 = vmatpush1.msra.mxu0 0.0
        %3470 = vmatprep.subr.mxu0 0.0
        %3471 = vmatpush1.msra.mxu0 0.0
        %3472 = vmatprep.subr.mxu0 0.0
        %3473 = vmatpush1.msra.mxu0 0.0
        %3474 = vmatprep.subr.mxu0 0.0
        %3475 = vmatpush1.msra.mxu0 0.0
        %3476 = vmatprep.subr.mxu0 0.0
        %3477 = vmatpush1.msra.mxu0 0.0
        %3478 = vmatprep.subr.mxu0 0.0
        %3479 = vmatpush1.msra.mxu0 0.0
        %3480 = vmatprep.subr.mxu0 0.0
        %3481 = vmatpush1.msra.mxu0 0.0
        %3482 = vmatprep.subr.mxu0 0.0
        %3483 = vmatpush1.msra.mxu0 0.0
        %3484 = vmatprep.subr.mxu0 0.0
        %3485 = vmatpush1.msra.mxu0 0.0
        %3486 = vmatprep.subr.mxu0 0.0
        %3487 = vmatpush1.msra.mxu0 0.0
        %3488 = vmatprep.subr.mxu0 0.0
        %3489 = vmatpush1.msra.mxu0 0.0
        %3490 = vmatprep.subr.mxu0 0.0
        %3491 = vmatpush1.msra.mxu0 0.0
        %3492 = vmatprep.subr.mxu0 0.0
        %3493 = vmatpush1.msra.mxu0 0.0
        %3494 = vmatprep.mubr.f32.mxu0 0.0
        %3495 = vmatmul.mubr.f32.gmra.mrb[0].mxu0 %v436
        %v3496 = vpop.f32.mrb[0].mxu0
        %v3497 = vadd.f32 %v306, %v3496
        %v3498 = vpop.f32.mrb[0].mxu0
        %3499 = vdwg.mxu0
        %v3500 = vmul.f32 %v3497, 2.0
        %v3501 = vadd.f32 %v3338, %v3500
        %v3502 = vmul.f32 %v3497, 0.125
        %v3503 = vadd.f32 %v2998, %v3502
        %3504 = vmatprep.subr.mxu0 0.0
        %3505 = vmatpush1.msra.mxu0 %v3503
        %3506 = vmatprep.subr.mxu0 0.0
        %3507 = vmatpush1.msra.mxu0 0.0
        %3508 = vmatprep.subr.mxu0 0.0
        %3509 = vmatpush1.msra.mxu0 0.0
        %3510 = vmatprep.subr.mxu0 0.0
        %3511 = vmatpush1.msra.mxu0 0.0
        %3512 = vmatprep.subr.mxu0 0.0
        %3513 = vmatpush1.msra.mxu0 0.0
        %3514 = vmatprep.subr.mxu0 0.0
        %3515 = vmatpush1.msra.mxu0 0.0
        %3516 = vmatprep.subr.mxu0 0.0
        %3517 = vmatpush1.msra.mxu0 0.0
        %3518 = vmatprep.subr.mxu0 0.0
        %3519 = vmatpush1.msra.mxu0 0.0
        %3520 = vmatprep.subr.mxu0 0.0
        %3521 = vmatpush1.msra.mxu0 0.0
        %3522 = vmatprep.subr.mxu0 0.0
        %3523 = vmatpush1.msra.mxu0 0.0
        %3524 = vmatprep.subr.mxu0 0.0
        %3525 = vmatpush1.msra.mxu0 0.0
        %3526 = vmatprep.subr.mxu0 0.0
        %3527 = vmatpush1.msra.mxu0 0.0
        %3528 = vmatprep.subr.mxu0 0.0
        %3529 = vmatpush1.msra.mxu0 0.0
        %3530 = vmatprep.subr.mxu0 0.0
        %3531 = vmatpush1.msra.mxu0 0.0
        %3532 = vmatprep.subr.mxu0 0.0
        %3533 = vmatpush1.msra.mxu0 0.0
        %3534 = vmatprep.subr.mxu0 0.0
        %3535 = vmatpush1.msra.mxu0 0.0
        %3536 = vmatprep.subr.mxu0 0.0
        %3537 = vmatpush1.msra.mxu0 0.0
        %3538 = vmatprep.subr.mxu0 0.0
        %3539 = vmatpush1.msra.mxu0 0.0
        %3540 = vmatprep.subr.mxu0 0.0
        %3541 = vmatpush1.msra.mxu0 0.0
        %3542 = vmatprep.subr.mxu0 0.0
        %3543 = vmatpush1.msra.mxu0 0.0
        %3544 = vmatprep.subr.mxu0 0.0
        %3545 = vmatpush1.msra.mxu0 0.0
        %3546 = vmatprep.subr.mxu0 0.0
        %3547 = vmatpush1.msra.mxu0 0.0
        %3548 = vmatprep.subr.mxu0 0.0
        %3549 = vmatpush1.msra.mxu0 0.0
        %3550 = vmatprep.subr.mxu0 0.0
        %3551 = vmatpush1.msra.mxu0 0.0
        %3552 = vmatprep.subr.mxu0 0.0
        %3553 = vmatpush1.msra.mxu0 0.0
        %3554 = vmatprep.subr.mxu0 0.0
        %3555 = vmatpush1.msra.mxu0 0.0
        %3556 = vmatprep.subr.mxu0 0.0
        %3557 = vmatpush1.msra.mxu0 0.0
        %3558 = vmatprep.subr.mxu0 0.0
        %3559 = vmatpush1.msra.mxu0 0.0
        %3560 = vmatprep.subr.mxu0 0.0
        %3561 = vmatpush1.msra.mxu0 0.0
        %3562 = vmatprep.subr.mxu0 0.0
        %3563 = vmatpush1.msra.mxu0 0.0
        %3564 = vmatprep.subr.mxu0 0.0
        %3565 = vmatpush1.msra.mxu0 0.0
        %3566 = vmatprep.subr.mxu0 0.0
        %3567 = vmatpush1.msra.mxu0 0.0
        %3568 = vmatprep.mubr.f32.mxu0 0.0
        %3569 = vmatmul.mubr.f32.gmra.mrb[0].mxu0 %v334
        %v3570 = vpop.f32.mrb[0].mxu0
        %v3571 = vadd.f32 %v3013, %v3570
        %v3572 = vpop.f32.mrb[0].mxu0
        %3573 = vmatprep.mubr.f32.mxu0 0.0
        %3574 = vmatmul.mubr.f32.gmra.mrb[0].mxu0 %v337
        %v3575 = vpop.f32.mrb[0].mxu0
        %v3576 = vadd.f32 %v3014, %v3575
        %v3577 = vpop.f32.mrb[0].mxu0
        %3578 = vmatprep.mubr.f32.mxu0 0.0
        %3579 = vmatmul.mubr.f32.gmra.mrb[0].mxu0 %v340
        %v3580 = vpop.f32.mrb[0].mxu0
        %v3581 = vadd.f32 %v3015, %v3580
        %v3582 = vpop.f32.mrb[0].mxu0
        %3583 = vmatprep.mubr.f32.mxu0 0.0
        %3584 = vmatmul.mubr.f32.gmra.mrb[0].mxu0 %v343
        %v3585 = vpop.f32.mrb[0].mxu0
        %v3586 = vadd.f32 %v3016, %v3585
        %v3587 = vpop.f32.mrb[0].mxu0
        %3588 = vdwg.mxu0
        %v3589 = vtanh.pop %v3571
        %v3590 = vtanh.pop %v3576
        %v3591 = vtanh.pop %v3581
        %v3592 = vtanh.pop %v3586
        %3593 = vmatprep.subr.mxu0 0.0
        %3594 = vmatpush1.msra.mxu0 %v3589
        %3595 = vmatprep.subr.mxu0 0.0
        %3596 = vmatpush1.msra.mxu0 %v3590
        %3597 = vmatprep.subr.mxu0 0.0
        %3598 = vmatpush1.msra.mxu0 %v3591
        %3599 = vmatprep.subr.mxu0 0.0
        %3600 = vmatpush1.msra.mxu0 %v3592
        %3601 = vmatprep.subr.mxu0 0.0
        %3602 = vmatpush1.msra.mxu0 0.0
        %3603 = vmatprep.subr.mxu0 0.0
        %3604 = vmatpush1.msra.mxu0 0.0
        %3605 = vmatprep.subr.mxu0 0.0
        %3606 = vmatpush1.msra.mxu0 0.0
        %3607 = vmatprep.subr.mxu0 0.0
        %3608 = vmatpush1.msra.mxu0 0.0
        %3609 = vmatprep.subr.mxu0 0.0
        %3610 = vmatpush1.msra.mxu0 0.0
        %3611 = vmatprep.subr.mxu0 0.0
        %3612 = vmatpush1.msra.mxu0 0.0
        %3613 = vmatprep.subr.mxu0 0.0
        %3614 = vmatpush1.msra.mxu0 0.0
        %3615 = vmatprep.subr.mxu0 0.0
        %3616 = vmatpush1.msra.mxu0 0.0
        %3617 = vmatprep.subr.mxu0 0.0
        %3618 = vmatpush1.msra.mxu0 0.0
        %3619 = vmatprep.subr.mxu0 0.0
        %3620 = vmatpush1.msra.mxu0 0.0
        %3621 = vmatprep.subr.mxu0 0.0
        %3622 = vmatpush1.msra.mxu0 0.0
        %3623 = vmatprep.subr.mxu0 0.0
        %3624 = vmatpush1.msra.mxu0 0.0
        %3625 = vmatprep.subr.mxu0 0.0
        %3626 = vmatpush1.msra.mxu0 0.0
        %3627 = vmatprep.subr.mxu0 0.0
        %3628 = vmatpush1.msra.mxu0 0.0
        %3629 = vmatprep.subr.mxu0 0.0
        %3630 = vmatpush1.msra.mxu0 0.0
        %3631 = vmatprep.subr.mxu0 0.0
        %3632 = vmatpush1.msra.mxu0 0.0
        %3633 = vmatprep.subr.mxu0 0.0
        %3634 = vmatpush1.msra.mxu0 0.0
        %3635 = vmatprep.subr.mxu0 0.0
        %3636 = vmatpush1.msra.mxu0 0.0
        %3637 = vmatprep.subr.mxu0 0.0
        %3638 = vmatpush1.msra.mxu0 0.0
        %3639 = vmatprep.subr.mxu0 0.0
        %3640 = vmatpush1.msra.mxu0 0.0
        %3641 = vmatprep.subr.mxu0 0.0
        %3642 = vmatpush1.msra.mxu0 0.0
        %3643 = vmatprep.subr.mxu0 0.0
        %3644 = vmatpush1.msra.mxu0 0.0
        %3645 = vmatprep.subr.mxu0 0.0
        %3646 = vmatpush1.msra.mxu0 0.0
        %3647 = vmatprep.subr.mxu0 0.0
        %3648 = vmatpush1.msra.mxu0 0.0
        %3649 = vmatprep.subr.mxu0 0.0
        %3650 = vmatpush1.msra.mxu0 0.0
        %3651 = vmatprep.subr.mxu0 0.0
        %3652 = vmatpush1.msra.mxu0 0.0
        %3653 = vmatprep.subr.mxu0 0.0
        %3654 = vmatpush1.msra.mxu0 0.0
        %3655 = vmatprep.subr.mxu0 0.0
        %3656 = vmatpush1.msra.mxu0 0.0
        %3657 = vmatprep.mubr.f32.mxu0 0.0
        %3658 = vmatmul.mubr.f32.gmra.mrb[0].mxu0 %v436
        %v3659 = vpop.f32.mrb[0].mxu0
        %v3660 = vadd.f32 %v306, %v3659
        %v3661 = vpop.f32.mrb[0].mxu0
        %3662 = vdwg.mxu0
        %v3663 = vadd.f32 %v3501, %v3660
        %v3664 = vmul.f32 %v3663, 0.020833334
        %v3665 = vadd.f32 %v2998, %v3664
        %s3666 = scalar_lea.vmem %s242, 40 [#allocation2]
        %3667 = vst [vmem:[%s3666] sm:$0xff] %v3665
        %v3668 = vmul.f32 %v261, 0.6875
        %v3669 = vmul.f32 %v266, 0.6875
        %v3670 = vmul.f32 %v271, 0.6875
        %v3671 = vmul.f32 %v276, 0.6875
        %v3672 = vadd.f32 %v3668, %v285
        %v3673 = vadd.f32 %v3669, %v290
        %v3674 = vadd.f32 %v3670, %v295
        %v3675 = vadd.f32 %v3671, %v300
        %v3676 = vmul.f32 %v261, 0.75
        %v3677 = vmul.f32 %v266, 0.75
        %v3678 = vmul.f32 %v271, 0.75
        %v3679 = vmul.f32 %v276, 0.75
        %v3680 = vadd.f32 %v3676, %v285
        %v3681 = vadd.f32 %v3677, %v290
        %v3682 = vadd.f32 %v3678, %v295
        %v3683 = vadd.f32 %v3679, %v300
        %3684 = vmatprep.subr.mxu0 0.0
        %3685 = vmatpush1.msra.mxu0 %v3665
        %3686 = vmatprep.subr.mxu0 0.0
        %3687 = vmatpush1.msra.mxu0 0.0
        %3688 = vmatprep.subr.mxu0 0.0
        %3689 = vmatpush1.msra.mxu0 0.0
        %3690 = vmatprep.subr.mxu0 0.0
        %3691 = vmatpush1.msra.mxu0 0.0
        %3692 = vmatprep.subr.mxu0 0.0
        %3693 = vmatpush1.msra.mxu0 0.0
        %3694 = vmatprep.subr.mxu0 0.0
        %3695 = vmatpush1.msra.mxu0 0.0
        %3696 = vmatprep.subr.mxu0 0.0
        %3697 = vmatpush1.msra.mxu0 0.0
        %3698 = vmatprep.subr.mxu0 0.0
        %3699 = vmatpush1.msra.mxu0 0.0
        %3700 = vmatprep.subr.mxu0 0.0
        %3701 = vmatpush1.msra.mxu0 0.0
        %3702 = vmatprep.subr.mxu0 0.0
        %3703 = vmatpush1.msra.mxu0 0.0
        %3704 = vmatprep.subr.mxu0 0.0
        %3705 = vmatpush1.msra.mxu0 0.0
        %3706 = vmatprep.subr.mxu0 0.0
        %3707 = vmatpush1.msra.mxu0 0.0
        %3708 = vmatprep.subr.mxu0 0.0
        %3709 = vmatpush1.msra.mxu0 0.0
        %3710 = vmatprep.subr.mxu0 0.0
        %3711 = vmatpush1.msra.mxu0 0.0
        %3712 = vmatprep.subr.mxu0 0.0
        %3713 = vmatpush1.msra.mxu0 0.0
        %3714 = vmatprep.subr.mxu0 0.0
        %3715 = vmatpush1.msra.mxu0 0.0
        %3716 = vmatprep.subr.mxu0 0.0
        %3717 = vmatpush1.msra.mxu0 0.0
        %3718 = vmatprep.subr.mxu0 0.0
        %3719 = vmatpush1.msra.mxu0 0.0
        %3720 = vmatprep.subr.mxu0 0.0
        %3721 = vmatpush1.msra.mxu0 0.0
        %3722 = vmatprep.subr.mxu0 0.0
        %3723 = vmatpush1.msra.mxu0 0.0
        %3724 = vmatprep.subr.mxu0 0.0
        %3725 = vmatpush1.msra.mxu0 0.0
        %3726 = vmatprep.subr.mxu0 0.0
        %3727 = vmatpush1.msra.mxu0 0.0
        %3728 = vmatprep.subr.mxu0 0.0
        %3729 = vmatpush1.msra.mxu0 0.0
        %3730 = vmatprep.subr.mxu0 0.0
        %3731 = vmatpush1.msra.mxu0 0.0
        %3732 = vmatprep.subr.mxu0 0.0
        %3733 = vmatpush1.msra.mxu0 0.0
        %3734 = vmatprep.subr.mxu0 0.0
        %3735 = vmatpush1.msra.mxu0 0.0
        %3736 = vmatprep.subr.mxu0 0.0
        %3737 = vmatpush1.msra.mxu0 0.0
        %3738 = vmatprep.subr.mxu0 0.0
        %3739 = vmatpush1.msra.mxu0 0.0
        %3740 = vmatprep.subr.mxu0 0.0
        %3741 = vmatpush1.msra.mxu0 0.0
        %3742 = vmatprep.subr.mxu0 0.0
        %3743 = vmatpush1.msra.mxu0 0.0
        %3744 = vmatprep.subr.mxu0 0.0
        %3745 = vmatpush1.msra.mxu0 0.0
        %3746 = vmatprep.subr.mxu0 0.0
        %3747 = vmatpush1.msra.mxu0 0.0
        %3748 = vmatprep.mubr.f32.mxu0 0.0
        %3749 = vmatmul.mubr.f32.gmra.mrb[0].mxu0 %v334
        %v3750 = vpop.f32.mrb[0].mxu0
        %v3751 = vadd.f32 %v3013, %v3750
        %v3752 = vpop.f32.mrb[0].mxu0
        %3753 = vmatprep.mubr.f32.mxu0 0.0
        %3754 = vmatmul.mubr.f32.gmra.mrb[0].mxu0 %v337
        %v3755 = vpop.f32.mrb[0].mxu0
        %v3756 = vadd.f32 %v3014, %v3755
        %v3757 = vpop.f32.mrb[0].mxu0
        %3758 = vmatprep.mubr.f32.mxu0 0.0
        %3759 = vmatmul.mubr.f32.gmra.mrb[0].mxu0 %v340
        %v3760 = vpop.f32.mrb[0].mxu0
        %v3761 = vadd.f32 %v3015, %v3760
        %v3762 = vpop.f32.mrb[0].mxu0
        %3763 = vmatprep.mubr.f32.mxu0 0.0
        %3764 = vmatmul.mubr.f32.gmra.mrb[0].mxu0 %v343
        %v3765 = vpop.f32.mrb[0].mxu0
        %v3766 = vadd.f32 %v3016, %v3765
        %v3767 = vpop.f32.mrb[0].mxu0
        %3768 = vdwg.mxu0
        %v3769 = vtanh.pop %v3751
        %v3770 = vtanh.pop %v3756
        %v3771 = vtanh.pop %v3761
        %v3772 = vtanh.pop %v3766
        %3773 = vmatprep.subr.mxu0 0.0
        %3774 = vmatpush1.msra.mxu0 %v3769
        %3775 = vmatprep.subr.mxu0 0.0
        %3776 = vmatpush1.msra.mxu0 %v3770
        %3777 = vmatprep.subr.mxu0 0.0
        %3778 = vmatpush1.msra.mxu0 %v3771
        %3779 = vmatprep.subr.mxu0 0.0
        %3780 = vmatpush1.msra.mxu0 %v3772
        %3781 = vmatprep.subr.mxu0 0.0
        %3782 = vmatpush1.msra.mxu0 0.0
        %3783 = vmatprep.subr.mxu0 0.0
        %3784 = vmatpush1.msra.mxu0 0.0
        %3785 = vmatprep.subr.mxu0 0.0
        %3786 = vmatpush1.msra.mxu0 0.0
        %3787 = vmatprep.subr.mxu0 0.0
        %3788 = vmatpush1.msra.mxu0 0.0
        %3789 = vmatprep.subr.mxu0 0.0
        %3790 = vmatpush1.msra.mxu0 0.0
        %3791 = vmatprep.subr.mxu0 0.0
        %3792 = vmatpush1.msra.mxu0 0.0
        %3793 = vmatprep.subr.mxu0 0.0
        %3794 = vmatpush1.msra.mxu0 0.0
        %3795 = vmatprep.subr.mxu0 0.0
        %3796 = vmatpush1.msra.mxu0 0.0
        %3797 = vmatprep.subr.mxu0 0.0
        %3798 = vmatpush1.msra.mxu0 0.0
        %3799 = vmatprep.subr.mxu0 0.0
        %3800 = vmatpush1.msra.mxu0 0.0
        %3801 = vmatprep.subr.mxu0 0.0
        %3802 = vmatpush1.msra.mxu0 0.0
        %3803 = vmatprep.subr.mxu0 0.0
        %3804 = vmatpush1.msra.mxu0 0.0
        %3805 = vmatprep.subr.mxu0 0.0
        %3806 = vmatpush1.msra.mxu0 0.0
        %3807 = vmatprep.subr.mxu0 0.0
        %3808 = vmatpush1.msra.mxu0 0.0
        %3809 = vmatprep.subr.mxu0 0.0
        %3810 = vmatpush1.msra.mxu0 0.0
        %3811 = vmatprep.subr.mxu0 0.0
        %3812 = vmatpush1.msra.mxu0 0.0
        %3813 = vmatprep.subr.mxu0 0.0
        %3814 = vmatpush1.msra.mxu0 0.0
        %3815 = vmatprep.subr.mxu0 0.0
        %3816 = vmatpush1.msra.mxu0 0.0
        %3817 = vmatprep.subr.mxu0 0.0
        %3818 = vmatpush1.msra.mxu0 0.0
        %3819 = vmatprep.subr.mxu0 0.0
        %3820 = vmatpush1.msra.mxu0 0.0
        %3821 = vmatprep.subr.mxu0 0.0
        %3822 = vmatpush1.msra.mxu0 0.0
        %3823 = vmatprep.subr.mxu0 0.0
        %3824 = vmatpush1.msra.mxu0 0.0
        %3825 = vmatprep.subr.mxu0 0.0
        %3826 = vmatpush1.msra.mxu0 0.0
        %3827 = vmatprep.subr.mxu0 0.0
        %3828 = vmatpush1.msra.mxu0 0.0
        %3829 = vmatprep.subr.mxu0 0.0
        %3830 = vmatpush1.msra.mxu0 0.0
        %3831 = vmatprep.subr.mxu0 0.0
        %3832 = vmatpush1.msra.mxu0 0.0
        %3833 = vmatprep.subr.mxu0 0.0
        %3834 = vmatpush1.msra.mxu0 0.0
        %3835 = vmatprep.subr.mxu0 0.0
        %3836 = vmatpush1.msra.mxu0 0.0
        %3837 = vmatprep.mubr.f32.mxu0 0.0
        %3838 = vmatmul.mubr.f32.gmra.mrb[0].mxu0 %v436
        %v3839 = vpop.f32.mrb[0].mxu0
        %v3840 = vadd.f32 %v306, %v3839
        %v3841 = vpop.f32.mrb[0].mxu0
        %3842 = vdwg.mxu0
        %v3843 = vmul.f32 %v3840, 0.0625
        %v3844 = vadd.f32 %v3665, %v3843
        %3845 = vmatprep.subr.mxu0 0.0
        %3846 = vmatpush1.msra.mxu0 %v3844
        %3847 = vmatprep.subr.mxu0 0.0
        %3848 = vmatpush1.msra.mxu0 0.0
        %3849 = vmatprep.subr.mxu0 0.0
        %3850 = vmatpush1.msra.mxu0 0.0
        %3851 = vmatprep.subr.mxu0 0.0
        %3852 = vmatpush1.msra.mxu0 0.0
        %3853 = vmatprep.subr.mxu0 0.0
        %3854 = vmatpush1.msra.mxu0 0.0
        %3855 = vmatprep.subr.mxu0 0.0
        %3856 = vmatpush1.msra.mxu0 0.0
        %3857 = vmatprep.subr.mxu0 0.0
        %3858 = vmatpush1.msra.mxu0 0.0
        %3859 = vmatprep.subr.mxu0 0.0
        %3860 = vmatpush1.msra.mxu0 0.0
        %3861 = vmatprep.subr.mxu0 0.0
        %3862 = vmatpush1.msra.mxu0 0.0
        %3863 = vmatprep.subr.mxu0 0.0
        %3864 = vmatpush1.msra.mxu0 0.0
        %3865 = vmatprep.subr.mxu0 0.0
        %3866 = vmatpush1.msra.mxu0 0.0
        %3867 = vmatprep.subr.mxu0 0.0
        %3868 = vmatpush1.msra.mxu0 0.0
        %3869 = vmatprep.subr.mxu0 0.0
        %3870 = vmatpush1.msra.mxu0 0.0
        %3871 = vmatprep.subr.mxu0 0.0
        %3872 = vmatpush1.msra.mxu0 0.0
        %3873 = vmatprep.subr.mxu0 0.0
        %3874 = vmatpush1.msra.mxu0 0.0
        %3875 = vmatprep.subr.mxu0 0.0
        %3876 = vmatpush1.msra.mxu0 0.0
        %3877 = vmatprep.subr.mxu0 0.0
        %3878 = vmatpush1.msra.mxu0 0.0
        %3879 = vmatprep.subr.mxu0 0.0
        %3880 = vmatpush1.msra.mxu0 0.0
        %3881 = vmatprep.subr.mxu0 0.0
        %3882 = vmatpush1.msra.mxu0 0.0
        %3883 = vmatprep.subr.mxu0 0.0
        %3884 = vmatpush1.msra.mxu0 0.0
        %3885 = vmatprep.subr.mxu0 0.0
        %3886 = vmatpush1.msra.mxu0 0.0
        %3887 = vmatprep.subr.mxu0 0.0
        %3888 = vmatpush1.msra.mxu0 0.0
        %3889 = vmatprep.subr.mxu0 0.0
        %3890 = vmatpush1.msra.mxu0 0.0
        %3891 = vmatprep.subr.mxu0 0.0
        %3892 = vmatpush1.msra.mxu0 0.0
        %3893 = vmatprep.subr.mxu0 0.0
        %3894 = vmatpush1.msra.mxu0 0.0
        %3895 = vmatprep.subr.mxu0 0.0
        %3896 = vmatpush1.msra.mxu0 0.0
        %3897 = vmatprep.subr.mxu0 0.0
        %3898 = vmatpush1.msra.mxu0 0.0
        %3899 = vmatprep.subr.mxu0 0.0
        %3900 = vmatpush1.msra.mxu0 0.0
        %3901 = vmatprep.subr.mxu0 0.0
        %3902 = vmatpush1.msra.mxu0 0.0
        %3903 = vmatprep.subr.mxu0 0.0
        %3904 = vmatpush1.msra.mxu0 0.0
        %3905 = vmatprep.subr.mxu0 0.0
        %3906 = vmatpush1.msra.mxu0 0.0
        %3907 = vmatprep.subr.mxu0 0.0
        %3908 = vmatpush1.msra.mxu0 0.0
        %3909 = vmatprep.mubr.f32.mxu0 0.0
        %3910 = vmatmul.mubr.f32.gmra.mrb[0].mxu0 %v334
        %v3911 = vpop.f32.mrb[0].mxu0
        %v3912 = vadd.f32 %v3672, %v3911
        %v3913 = vpop.f32.mrb[0].mxu0
        %3914 = vmatprep.mubr.f32.mxu0 0.0
        %3915 = vmatmul.mubr.f32.gmra.mrb[0].mxu0 %v337
        %v3916 = vpop.f32.mrb[0].mxu0
        %v3917 = vadd.f32 %v3673, %v3916
        %v3918 = vpop.f32.mrb[0].mxu0
        %3919 = vmatprep.mubr.f32.mxu0 0.0
        %3920 = vmatmul.mubr.f32.gmra.mrb[0].mxu0 %v340
        %v3921 = vpop.f32.mrb[0].mxu0
        %v3922 = vadd.f32 %v3674, %v3921
        %v3923 = vpop.f32.mrb[0].mxu0
        %3924 = vmatprep.mubr.f32.mxu0 0.0
        %3925 = vmatmul.mubr.f32.gmra.mrb[0].mxu0 %v343
        %v3926 = vpop.f32.mrb[0].mxu0
        %v3927 = vadd.f32 %v3675, %v3926
        %v3928 = vpop.f32.mrb[0].mxu0
        %3929 = vdwg.mxu0
        %v3930 = vtanh.pop %v3912
        %v3931 = vtanh.pop %v3917
        %v3932 = vtanh.pop %v3922
        %v3933 = vtanh.pop %v3927
        %3934 = vmatprep.subr.mxu0 0.0
        %3935 = vmatpush1.msra.mxu0 %v3930
        %3936 = vmatprep.subr.mxu0 0.0
        %3937 = vmatpush1.msra.mxu0 %v3931
        %3938 = vmatprep.subr.mxu0 0.0
        %3939 = vmatpush1.msra.mxu0 %v3932
        %3940 = vmatprep.subr.mxu0 0.0
        %3941 = vmatpush1.msra.mxu0 %v3933
        %3942 = vmatprep.subr.mxu0 0.0
        %3943 = vmatpush1.msra.mxu0 0.0
        %3944 = vmatprep.subr.mxu0 0.0
        %3945 = vmatpush1.msra.mxu0 0.0
        %3946 = vmatprep.subr.mxu0 0.0
        %3947 = vmatpush1.msra.mxu0 0.0
        %3948 = vmatprep.subr.mxu0 0.0
        %3949 = vmatpush1.msra.mxu0 0.0
        %3950 = vmatprep.subr.mxu0 0.0
        %3951 = vmatpush1.msra.mxu0 0.0
        %3952 = vmatprep.subr.mxu0 0.0
        %3953 = vmatpush1.msra.mxu0 0.0
        %3954 = vmatprep.subr.mxu0 0.0
        %3955 = vmatpush1.msra.mxu0 0.0
        %3956 = vmatprep.subr.mxu0 0.0
        %3957 = vmatpush1.msra.mxu0 0.0
        %3958 = vmatprep.subr.mxu0 0.0
        %3959 = vmatpush1.msra.mxu0 0.0
        %3960 = vmatprep.subr.mxu0 0.0
        %3961 = vmatpush1.msra.mxu0 0.0
        %3962 = vmatprep.subr.mxu0 0.0
        %3963 = vmatpush1.msra.mxu0 0.0
        %3964 = vmatprep.subr.mxu0 0.0
        %3965 = vmatpush1.msra.mxu0 0.0
        %3966 = vmatprep.subr.mxu0 0.0
        %3967 = vmatpush1.msra.mxu0 0.0
        %3968 = vmatprep.subr.mxu0 0.0
        %3969 = vmatpush1.msra.mxu0 0.0
        %3970 = vmatprep.subr.mxu0 0.0
        %3971 = vmatpush1.msra.mxu0 0.0
        %3972 = vmatprep.subr.mxu0 0.0
        %3973 = vmatpush1.msra.mxu0 0.0
        %3974 = vmatprep.subr.mxu0 0.0
        %3975 = vmatpush1.msra.mxu0 0.0
        %3976 = vmatprep.subr.mxu0 0.0
        %3977 = vmatpush1.msra.mxu0 0.0
        %3978 = vmatprep.subr.mxu0 0.0
        %3979 = vmatpush1.msra.mxu0 0.0
        %3980 = vmatprep.subr.mxu0 0.0
        %3981 = vmatpush1.msra.mxu0 0.0
        %3982 = vmatprep.subr.mxu0 0.0
        %3983 = vmatpush1.msra.mxu0 0.0
        %3984 = vmatprep.subr.mxu0 0.0
        %3985 = vmatpush1.msra.mxu0 0.0
        %3986 = vmatprep.subr.mxu0 0.0
        %3987 = vmatpush1.msra.mxu0 0.0
        %3988 = vmatprep.subr.mxu0 0.0
        %3989 = vmatpush1.msra.mxu0 0.0
        %3990 = vmatprep.subr.mxu0 0.0
        %3991 = vmatpush1.msra.mxu0 0.0
        %3992 = vmatprep.subr.mxu0 0.0
        %3993 = vmatpush1.msra.mxu0 0.0
        %3994 = vmatprep.subr.mxu0 0.0
        %3995 = vmatpush1.msra.mxu0 0.0
        %3996 = vmatprep.subr.mxu0 0.0
        %3997 = vmatpush1.msra.mxu0 0.0
        %3998 = vmatprep.mubr.f32.mxu0 0.0
        %3999 = vmatmul.mubr.f32.gmra.mrb[0].mxu0 %v436
        %v4000 = vpop.f32.mrb[0].mxu0
        %v4001 = vadd.f32 %v306, %v4000
        %v4002 = vpop.f32.mrb[0].mxu0
        %4003 = vdwg.mxu0
        %v4004 = vmul.f32 %v4001, 2.0
        %v4005 = vadd.f32 %v3840, %v4004
        %v4006 = vmul.f32 %v4001, 0.0625
        %v4007 = vadd.f32 %v3665, %v4006
        %4008 = vmatprep.subr.mxu0 0.0
        %4009 = vmatpush1.msra.mxu0 %v4007
        %4010 = vmatprep.subr.mxu0 0.0
        %4011 = vmatpush1.msra.mxu0 0.0
        %4012 = vmatprep.subr.mxu0 0.0
        %4013 = vmatpush1.msra.mxu0 0.0
        %4014 = vmatprep.subr.mxu0 0.0
        %4015 = vmatpush1.msra.mxu0 0.0
        %4016 = vmatprep.subr.mxu0 0.0
        %4017 = vmatpush1.msra.mxu0 0.0
        %4018 = vmatprep.subr.mxu0 0.0
        %4019 = vmatpush1.msra.mxu0 0.0
        %4020 = vmatprep.subr.mxu0 0.0
        %4021 = vmatpush1.msra.mxu0 0.0
        %4022 = vmatprep.subr.mxu0 0.0
        %4023 = vmatpush1.msra.mxu0 0.0
        %4024 = vmatprep.subr.mxu0 0.0
        %4025 = vmatpush1.msra.mxu0 0.0
        %4026 = vmatprep.subr.mxu0 0.0
        %4027 = vmatpush1.msra.mxu0 0.0
        %4028 = vmatprep.subr.mxu0 0.0
        %4029 = vmatpush1.msra.mxu0 0.0
        %4030 = vmatprep.subr.mxu0 0.0
        %4031 = vmatpush1.msra.mxu0 0.0
        %4032 = vmatprep.subr.mxu0 0.0
        %4033 = vmatpush1.msra.mxu0 0.0
        %4034 = vmatprep.subr.mxu0 0.0
        %4035 = vmatpush1.msra.mxu0 0.0
        %4036 = vmatprep.subr.mxu0 0.0
        %4037 = vmatpush1.msra.mxu0 0.0
        %4038 = vmatprep.subr.mxu0 0.0
        %4039 = vmatpush1.msra.mxu0 0.0
        %4040 = vmatprep.subr.mxu0 0.0
        %4041 = vmatpush1.msra.mxu0 0.0
        %4042 = vmatprep.subr.mxu0 0.0
        %4043 = vmatpush1.msra.mxu0 0.0
        %4044 = vmatprep.subr.mxu0 0.0
        %4045 = vmatpush1.msra.mxu0 0.0
        %4046 = vmatprep.subr.mxu0 0.0
        %4047 = vmatpush1.msra.mxu0 0.0
        %4048 = vmatprep.subr.mxu0 0.0
        %4049 = vmatpush1.msra.mxu0 0.0
        %4050 = vmatprep.subr.mxu0 0.0
        %4051 = vmatpush1.msra.mxu0 0.0
        %4052 = vmatprep.subr.mxu0 0.0
        %4053 = vmatpush1.msra.mxu0 0.0
        %4054 = vmatprep.subr.mxu0 0.0
        %4055 = vmatpush1.msra.mxu0 0.0
        %4056 = vmatprep.subr.mxu0 0.0
        %4057 = vmatpush1.msra.mxu0 0.0
        %4058 = vmatprep.subr.mxu0 0.0
        %4059 = vmatpush1.msra.mxu0 0.0
        %4060 = vmatprep.subr.mxu0 0.0
        %4061 = vmatpush1.msra.mxu0 0.0
        %4062 = vmatprep.subr.mxu0 0.0
        %4063 = vmatpush1.msra.mxu0 0.0
        %4064 = vmatprep.subr.mxu0 0.0
        %4065 = vmatpush1.msra.mxu0 0.0
        %4066 = vmatprep.subr.mxu0 0.0
        %4067 = vmatpush1.msra.mxu0 0.0
        %4068 = vmatprep.subr.mxu0 0.0
        %4069 = vmatpush1.msra.mxu0 0.0
        %4070 = vmatprep.subr.mxu0 0.0
        %4071 = vmatpush1.msra.mxu0 0.0
        %4072 = vmatprep.mubr.f32.mxu0 0.0
        %4073 = vmatmul.mubr.f32.gmra.mrb[0].mxu0 %v334
        %v4074 = vpop.f32.mrb[0].mxu0
        %v4075 = vadd.f32 %v3672, %v4074
        %v4076 = vpop.f32.mrb[0].mxu0
        %4077 = vmatprep.mubr.f32.mxu0 0.0
        %4078 = vmatmul.mubr.f32.gmra.mrb[0].mxu0 %v337
        %v4079 = vpop.f32.mrb[0].mxu0
        %v4080 = vadd.f32 %v3673, %v4079
        %v4081 = vpop.f32.mrb[0].mxu0
        %4082 = vmatprep.mubr.f32.mxu0 0.0
        %4083 = vmatmul.mubr.f32.gmra.mrb[0].mxu0 %v340
        %v4084 = vpop.f32.mrb[0].mxu0
        %v4085 = vadd.f32 %v3674, %v4084
        %v4086 = vpop.f32.mrb[0].mxu0
        %4087 = vmatprep.mubr.f32.mxu0 0.0
        %4088 = vmatmul.mubr.f32.gmra.mrb[0].mxu0 %v343
        %v4089 = vpop.f32.mrb[0].mxu0
        %v4090 = vadd.f32 %v3675, %v4089
        %v4091 = vpop.f32.mrb[0].mxu0
        %4092 = vdwg.mxu0
        %v4093 = vtanh.pop %v4075
        %v4094 = vtanh.pop %v4080
        %v4095 = vtanh.pop %v4085
        %v4096 = vtanh.pop %v4090
        %4097 = vmatprep.subr.mxu0 0.0
        %4098 = vmatpush1.msra.mxu0 %v4093
        %4099 = vmatprep.subr.mxu0 0.0
        %4100 = vmatpush1.msra.mxu0 %v4094
        %4101 = vmatprep.subr.mxu0 0.0
        %4102 = vmatpush1.msra.mxu0 %v4095
        %4103 = vmatprep.subr.mxu0 0.0
        %4104 = vmatpush1.msra.mxu0 %v4096
        %4105 = vmatprep.subr.mxu0 0.0
        %4106 = vmatpush1.msra.mxu0 0.0
        %4107 = vmatprep.subr.mxu0 0.0
        %4108 = vmatpush1.msra.mxu0 0.0
        %4109 = vmatprep.subr.mxu0 0.0
        %4110 = vmatpush1.msra.mxu0 0.0
        %4111 = vmatprep.subr.mxu0 0.0
        %4112 = vmatpush1.msra.mxu0 0.0
        %4113 = vmatprep.subr.mxu0 0.0
        %4114 = vmatpush1.msra.mxu0 0.0
        %4115 = vmatprep.subr.mxu0 0.0
        %4116 = vmatpush1.msra.mxu0 0.0
        %4117 = vmatprep.subr.mxu0 0.0
        %4118 = vmatpush1.msra.mxu0 0.0
        %4119 = vmatprep.subr.mxu0 0.0
        %4120 = vmatpush1.msra.mxu0 0.0
        %4121 = vmatprep.subr.mxu0 0.0
        %4122 = vmatpush1.msra.mxu0 0.0
        %4123 = vmatprep.subr.mxu0 0.0
        %4124 = vmatpush1.msra.mxu0 0.0
        %4125 = vmatprep.subr.mxu0 0.0
        %4126 = vmatpush1.msra.mxu0 0.0
        %4127 = vmatprep.subr.mxu0 0.0
        %4128 = vmatpush1.msra.mxu0 0.0
        %4129 = vmatprep.subr.mxu0 0.0
        %4130 = vmatpush1.msra.mxu0 0.0
        %4131 = vmatprep.subr.mxu0 0.0
        %4132 = vmatpush1.msra.mxu0 0.0
        %4133 = vmatprep.subr.mxu0 0.0
        %4134 = vmatpush1.msra.mxu0 0.0
        %4135 = vmatprep.subr.mxu0 0.0
        %4136 = vmatpush1.msra.mxu0 0.0
        %4137 = vmatprep.subr.mxu0 0.0
        %4138 = vmatpush1.msra.mxu0 0.0
        %4139 = vmatprep.subr.mxu0 0.0
        %4140 = vmatpush1.msra.mxu0 0.0
        %4141 = vmatprep.subr.mxu0 0.0
        %4142 = vmatpush1.msra.mxu0 0.0
        %4143 = vmatprep.subr.mxu0 0.0
        %4144 = vmatpush1.msra.mxu0 0.0
        %4145 = vmatprep.subr.mxu0 0.0
        %4146 = vmatpush1.msra.mxu0 0.0
        %4147 = vmatprep.subr.mxu0 0.0
        %4148 = vmatpush1.msra.mxu0 0.0
        %4149 = vmatprep.subr.mxu0 0.0
        %4150 = vmatpush1.msra.mxu0 0.0
        %4151 = vmatprep.subr.mxu0 0.0
        %4152 = vmatpush1.msra.mxu0 0.0
        %4153 = vmatprep.subr.mxu0 0.0
        %4154 = vmatpush1.msra.mxu0 0.0
        %4155 = vmatprep.subr.mxu0 0.0
        %4156 = vmatpush1.msra.mxu0 0.0
        %4157 = vmatprep.subr.mxu0 0.0
        %4158 = vmatpush1.msra.mxu0 0.0
        %4159 = vmatprep.subr.mxu0 0.0
        %4160 = vmatpush1.msra.mxu0 0.0
        %4161 = vmatprep.mubr.f32.mxu0 0.0
        %4162 = vmatmul.mubr.f32.gmra.mrb[0].mxu0 %v436
        %v4163 = vpop.f32.mrb[0].mxu0
        %v4164 = vadd.f32 %v306, %v4163
        %v4165 = vpop.f32.mrb[0].mxu0
        %4166 = vdwg.mxu0
        %v4167 = vmul.f32 %v4164, 2.0
        %v4168 = vadd.f32 %v4005, %v4167
        %v4169 = vmul.f32 %v4164, 0.125
        %v4170 = vadd.f32 %v3665, %v4169
        %4171 = vmatprep.subr.mxu0 0.0
        %4172 = vmatpush1.msra.mxu0 %v4170
        %4173 = vmatprep.subr.mxu0 0.0
        %4174 = vmatpush1.msra.mxu0 0.0
        %4175 = vmatprep.subr.mxu0 0.0
        %4176 = vmatpush1.msra.mxu0 0.0
        %4177 = vmatprep.subr.mxu0 0.0
        %4178 = vmatpush1.msra.mxu0 0.0
        %4179 = vmatprep.subr.mxu0 0.0
        %4180 = vmatpush1.msra.mxu0 0.0
        %4181 = vmatprep.subr.mxu0 0.0
        %4182 = vmatpush1.msra.mxu0 0.0
        %4183 = vmatprep.subr.mxu0 0.0
        %4184 = vmatpush1.msra.mxu0 0.0
        %4185 = vmatprep.subr.mxu0 0.0
        %4186 = vmatpush1.msra.mxu0 0.0
        %4187 = vmatprep.subr.mxu0 0.0
        %4188 = vmatpush1.msra.mxu0 0.0
        %4189 = vmatprep.subr.mxu0 0.0
        %4190 = vmatpush1.msra.mxu0 0.0
        %4191 = vmatprep.subr.mxu0 0.0
        %4192 = vmatpush1.msra.mxu0 0.0
        %4193 = vmatprep.subr.mxu0 0.0
        %4194 = vmatpush1.msra.mxu0 0.0
        %4195 = vmatprep.subr.mxu0 0.0
        %4196 = vmatpush1.msra.mxu0 0.0
        %4197 = vmatprep.subr.mxu0 0.0
        %4198 = vmatpush1.msra.mxu0 0.0
        %4199 = vmatprep.subr.mxu0 0.0
        %4200 = vmatpush1.msra.mxu0 0.0
        %4201 = vmatprep.subr.mxu0 0.0
        %4202 = vmatpush1.msra.mxu0 0.0
        %4203 = vmatprep.subr.mxu0 0.0
        %4204 = vmatpush1.msra.mxu0 0.0
        %4205 = vmatprep.subr.mxu0 0.0
        %4206 = vmatpush1.msra.mxu0 0.0
        %4207 = vmatprep.subr.mxu0 0.0
        %4208 = vmatpush1.msra.mxu0 0.0
        %4209 = vmatprep.subr.mxu0 0.0
        %4210 = vmatpush1.msra.mxu0 0.0
        %4211 = vmatprep.subr.mxu0 0.0
        %4212 = vmatpush1.msra.mxu0 0.0
        %4213 = vmatprep.subr.mxu0 0.0
        %4214 = vmatpush1.msra.mxu0 0.0
        %4215 = vmatprep.subr.mxu0 0.0
        %4216 = vmatpush1.msra.mxu0 0.0
        %4217 = vmatprep.subr.mxu0 0.0
        %4218 = vmatpush1.msra.mxu0 0.0
        %4219 = vmatprep.subr.mxu0 0.0
        %4220 = vmatpush1.msra.mxu0 0.0
        %4221 = vmatprep.subr.mxu0 0.0
        %4222 = vmatpush1.msra.mxu0 0.0
        %4223 = vmatprep.subr.mxu0 0.0
        %4224 = vmatpush1.msra.mxu0 0.0
        %4225 = vmatprep.subr.mxu0 0.0
        %4226 = vmatpush1.msra.mxu0 0.0
        %4227 = vmatprep.subr.mxu0 0.0
        %4228 = vmatpush1.msra.mxu0 0.0
        %4229 = vmatprep.subr.mxu0 0.0
        %4230 = vmatpush1.msra.mxu0 0.0
        %4231 = vmatprep.subr.mxu0 0.0
        %4232 = vmatpush1.msra.mxu0 0.0
        %4233 = vmatprep.subr.mxu0 0.0
        %4234 = vmatpush1.msra.mxu0 0.0
        %4235 = vmatprep.mubr.f32.mxu0 0.0
        %4236 = vmatmul.mubr.f32.gmra.mrb[0].mxu0 %v334
        %v4237 = vpop.f32.mrb[0].mxu0
        %v4238 = vadd.f32 %v3680, %v4237
        %v4239 = vpop.f32.mrb[0].mxu0
        %4240 = vmatprep.mubr.f32.mxu0 0.0
        %4241 = vmatmul.mubr.f32.gmra.mrb[0].mxu0 %v337
        %v4242 = vpop.f32.mrb[0].mxu0
        %v4243 = vadd.f32 %v3681, %v4242
        %v4244 = vpop.f32.mrb[0].mxu0
        %4245 = vmatprep.mubr.f32.mxu0 0.0
        %4246 = vmatmul.mubr.f32.gmra.mrb[0].mxu0 %v340
        %v4247 = vpop.f32.mrb[0].mxu0
        %v4248 = vadd.f32 %v3682, %v4247
        %v4249 = vpop.f32.mrb[0].mxu0
        %4250 = vmatprep.mubr.f32.mxu0 0.0
        %4251 = vmatmul.mubr.f32.gmra.mrb[0].mxu0 %v343
        %v4252 = vpop.f32.mrb[0].mxu0
        %v4253 = vadd.f32 %v3683, %v4252
        %v4254 = vpop.f32.mrb[0].mxu0
        %4255 = vdwg.mxu0
        %v4256 = vtanh.pop %v4238
        %v4257 = vtanh.pop %v4243
        %v4258 = vtanh.pop %v4248
        %v4259 = vtanh.pop %v4253
        %4260 = vmatprep.subr.mxu0 0.0
        %4261 = vmatpush1.msra.mxu0 %v4256
        %4262 = vmatprep.subr.mxu0 0.0
        %4263 = vmatpush1.msra.mxu0 %v4257
        %4264 = vmatprep.subr.mxu0 0.0
        %4265 = vmatpush1.msra.mxu0 %v4258
        %4266 = vmatprep.subr.mxu0 0.0
        %4267 = vmatpush1.msra.mxu0 %v4259
        %4268 = vmatprep.subr.mxu0 0.0
        %4269 = vmatpush1.msra.mxu0 0.0
        %4270 = vmatprep.subr.mxu0 0.0
        %4271 = vmatpush1.msra.mxu0 0.0
        %4272 = vmatprep.subr.mxu0 0.0
        %4273 = vmatpush1.msra.mxu0 0.0
        %4274 = vmatprep.subr.mxu0 0.0
        %4275 = vmatpush1.msra.mxu0 0.0
        %4276 = vmatprep.subr.mxu0 0.0
        %4277 = vmatpush1.msra.mxu0 0.0
        %4278 = vmatprep.subr.mxu0 0.0
        %4279 = vmatpush1.msra.mxu0 0.0
        %4280 = vmatprep.subr.mxu0 0.0
        %4281 = vmatpush1.msra.mxu0 0.0
        %4282 = vmatprep.subr.mxu0 0.0
        %4283 = vmatpush1.msra.mxu0 0.0
        %4284 = vmatprep.subr.mxu0 0.0
        %4285 = vmatpush1.msra.mxu0 0.0
        %4286 = vmatprep.subr.mxu0 0.0
        %4287 = vmatpush1.msra.mxu0 0.0
        %4288 = vmatprep.subr.mxu0 0.0
        %4289 = vmatpush1.msra.mxu0 0.0
        %4290 = vmatprep.subr.mxu0 0.0
        %4291 = vmatpush1.msra.mxu0 0.0
        %4292 = vmatprep.subr.mxu0 0.0
        %4293 = vmatpush1.msra.mxu0 0.0
        %4294 = vmatprep.subr.mxu0 0.0
        %4295 = vmatpush1.msra.mxu0 0.0
        %4296 = vmatprep.subr.mxu0 0.0
        %4297 = vmatpush1.msra.mxu0 0.0
        %4298 = vmatprep.subr.mxu0 0.0
        %4299 = vmatpush1.msra.mxu0 0.0
        %4300 = vmatprep.subr.mxu0 0.0
        %4301 = vmatpush1.msra.mxu0 0.0
        %4302 = vmatprep.subr.mxu0 0.0
        %4303 = vmatpush1.msra.mxu0 0.0
        %4304 = vmatprep.subr.mxu0 0.0
        %4305 = vmatpush1.msra.mxu0 0.0
        %4306 = vmatprep.subr.mxu0 0.0
        %4307 = vmatpush1.msra.mxu0 0.0
        %4308 = vmatprep.subr.mxu0 0.0
        %4309 = vmatpush1.msra.mxu0 0.0
        %4310 = vmatprep.subr.mxu0 0.0
        %4311 = vmatpush1.msra.mxu0 0.0
        %4312 = vmatprep.subr.mxu0 0.0
        %4313 = vmatpush1.msra.mxu0 0.0
        %4314 = vmatprep.subr.mxu0 0.0
        %4315 = vmatpush1.msra.mxu0 0.0
        %4316 = vmatprep.subr.mxu0 0.0
        %4317 = vmatpush1.msra.mxu0 0.0
        %4318 = vmatprep.subr.mxu0 0.0
        %4319 = vmatpush1.msra.mxu0 0.0
        %4320 = vmatprep.subr.mxu0 0.0
        %4321 = vmatpush1.msra.mxu0 0.0
        %4322 = vmatprep.subr.mxu0 0.0
        %4323 = vmatpush1.msra.mxu0 0.0
        %4324 = vmatprep.mubr.f32.mxu0 0.0
        %4325 = vmatmul.mubr.f32.gmra.mrb[0].mxu0 %v436
        %v4326 = vpop.f32.mrb[0].mxu0
        %v4327 = vadd.f32 %v306, %v4326
        %v4328 = vpop.f32.mrb[0].mxu0
        %4329 = vdwg.mxu0
        %v4330 = vadd.f32 %v4168, %v4327
        %v4331 = vmul.f32 %v4330, 0.020833334
        %v4332 = vadd.f32 %v3665, %v4331
        %s4333 = scalar_lea.vmem %s242, 48 [#allocation2]
        %4334 = vst [vmem:[%s4333] sm:$0xff] %v4332
        %v4335 = vmul.f32 %v261, 0.8125
        %v4336 = vmul.f32 %v266, 0.8125
        %v4337 = vmul.f32 %v271, 0.8125
        %v4338 = vmul.f32 %v276, 0.8125
        %v4339 = vadd.f32 %v4335, %v285
        %v4340 = vadd.f32 %v4336, %v290
        %v4341 = vadd.f32 %v4337, %v295
        %v4342 = vadd.f32 %v4338, %v300
        %v4343 = vmul.f32 %v261, 0.875
        %v4344 = vmul.f32 %v266, 0.875
        %v4345 = vmul.f32 %v271, 0.875
        %v4346 = vmul.f32 %v276, 0.875
        %v4347 = vadd.f32 %v4343, %v285
        %v4348 = vadd.f32 %v4344, %v290
        %v4349 = vadd.f32 %v4345, %v295
        %v4350 = vadd.f32 %v4346, %v300
        %4351 = vmatprep.subr.mxu0 0.0
        %4352 = vmatpush1.msra.mxu0 %v4332
        %4353 = vmatprep.subr.mxu0 0.0
        %4354 = vmatpush1.msra.mxu0 0.0
        %4355 = vmatprep.subr.mxu0 0.0
        %4356 = vmatpush1.msra.mxu0 0.0
        %4357 = vmatprep.subr.mxu0 0.0
        %4358 = vmatpush1.msra.mxu0 0.0
        %4359 = vmatprep.subr.mxu0 0.0
        %4360 = vmatpush1.msra.mxu0 0.0
        %4361 = vmatprep.subr.mxu0 0.0
        %4362 = vmatpush1.msra.mxu0 0.0
        %4363 = vmatprep.subr.mxu0 0.0
        %4364 = vmatpush1.msra.mxu0 0.0
        %4365 = vmatprep.subr.mxu0 0.0
        %4366 = vmatpush1.msra.mxu0 0.0
        %4367 = vmatprep.subr.mxu0 0.0
        %4368 = vmatpush1.msra.mxu0 0.0
        %4369 = vmatprep.subr.mxu0 0.0
        %4370 = vmatpush1.msra.mxu0 0.0
        %4371 = vmatprep.subr.mxu0 0.0
        %4372 = vmatpush1.msra.mxu0 0.0
        %4373 = vmatprep.subr.mxu0 0.0
        %4374 = vmatpush1.msra.mxu0 0.0
        %4375 = vmatprep.subr.mxu0 0.0
        %4376 = vmatpush1.msra.mxu0 0.0
        %4377 = vmatprep.subr.mxu0 0.0
        %4378 = vmatpush1.msra.mxu0 0.0
        %4379 = vmatprep.subr.mxu0 0.0
        %4380 = vmatpush1.msra.mxu0 0.0
        %4381 = vmatprep.subr.mxu0 0.0
        %4382 = vmatpush1.msra.mxu0 0.0
        %4383 = vmatprep.subr.mxu0 0.0
        %4384 = vmatpush1.msra.mxu0 0.0
        %4385 = vmatprep.subr.mxu0 0.0
        %4386 = vmatpush1.msra.mxu0 0.0
        %4387 = vmatprep.subr.mxu0 0.0
        %4388 = vmatpush1.msra.mxu0 0.0
        %4389 = vmatprep.subr.mxu0 0.0
        %4390 = vmatpush1.msra.mxu0 0.0
        %4391 = vmatprep.subr.mxu0 0.0
        %4392 = vmatpush1.msra.mxu0 0.0
        %4393 = vmatprep.subr.mxu0 0.0
        %4394 = vmatpush1.msra.mxu0 0.0
        %4395 = vmatprep.subr.mxu0 0.0
        %4396 = vmatpush1.msra.mxu0 0.0
        %4397 = vmatprep.subr.mxu0 0.0
        %4398 = vmatpush1.msra.mxu0 0.0
        %4399 = vmatprep.subr.mxu0 0.0
        %4400 = vmatpush1.msra.mxu0 0.0
        %4401 = vmatprep.subr.mxu0 0.0
        %4402 = vmatpush1.msra.mxu0 0.0
        %4403 = vmatprep.subr.mxu0 0.0
        %4404 = vmatpush1.msra.mxu0 0.0
        %4405 = vmatprep.subr.mxu0 0.0
        %4406 = vmatpush1.msra.mxu0 0.0
        %4407 = vmatprep.subr.mxu0 0.0
        %4408 = vmatpush1.msra.mxu0 0.0
        %4409 = vmatprep.subr.mxu0 0.0
        %4410 = vmatpush1.msra.mxu0 0.0
        %4411 = vmatprep.subr.mxu0 0.0
        %4412 = vmatpush1.msra.mxu0 0.0
        %4413 = vmatprep.subr.mxu0 0.0
        %4414 = vmatpush1.msra.mxu0 0.0
        %4415 = vmatprep.mubr.f32.mxu0 0.0
        %4416 = vmatmul.mubr.f32.gmra.mrb[0].mxu0 %v334
        %v4417 = vpop.f32.mrb[0].mxu0
        %v4418 = vadd.f32 %v3680, %v4417
        %v4419 = vpop.f32.mrb[0].mxu0
        %4420 = vmatprep.mubr.f32.mxu0 0.0
        %4421 = vmatmul.mubr.f32.gmra.mrb[0].mxu0 %v337
        %v4422 = vpop.f32.mrb[0].mxu0
        %v4423 = vadd.f32 %v3681, %v4422
        %v4424 = vpop.f32.mrb[0].mxu0
        %4425 = vmatprep.mubr.f32.mxu0 0.0
        %4426 = vmatmul.mubr.f32.gmra.mrb[0].mxu0 %v340
        %v4427 = vpop.f32.mrb[0].mxu0
        %v4428 = vadd.f32 %v3682, %v4427
        %v4429 = vpop.f32.mrb[0].mxu0
        %4430 = vmatprep.mubr.f32.mxu0 0.0
        %4431 = vmatmul.mubr.f32.gmra.mrb[0].mxu0 %v343
        %v4432 = vpop.f32.mrb[0].mxu0
        %v4433 = vadd.f32 %v3683, %v4432
        %v4434 = vpop.f32.mrb[0].mxu0
        %4435 = vdwg.mxu0
        %v4436 = vtanh.pop %v4418
        %v4437 = vtanh.pop %v4423
        %v4438 = vtanh.pop %v4428
        %v4439 = vtanh.pop %v4433
        %4440 = vmatprep.subr.mxu0 0.0
        %4441 = vmatpush1.msra.mxu0 %v4436
        %4442 = vmatprep.subr.mxu0 0.0
        %4443 = vmatpush1.msra.mxu0 %v4437
        %4444 = vmatprep.subr.mxu0 0.0
        %4445 = vmatpush1.msra.mxu0 %v4438
        %4446 = vmatprep.subr.mxu0 0.0
        %4447 = vmatpush1.msra.mxu0 %v4439
        %4448 = vmatprep.subr.mxu0 0.0
        %4449 = vmatpush1.msra.mxu0 0.0
        %4450 = vmatprep.subr.mxu0 0.0
        %4451 = vmatpush1.msra.mxu0 0.0
        %4452 = vmatprep.subr.mxu0 0.0
        %4453 = vmatpush1.msra.mxu0 0.0
        %4454 = vmatprep.subr.mxu0 0.0
        %4455 = vmatpush1.msra.mxu0 0.0
        %4456 = vmatprep.subr.mxu0 0.0
        %4457 = vmatpush1.msra.mxu0 0.0
        %4458 = vmatprep.subr.mxu0 0.0
        %4459 = vmatpush1.msra.mxu0 0.0
        %4460 = vmatprep.subr.mxu0 0.0
        %4461 = vmatpush1.msra.mxu0 0.0
        %4462 = vmatprep.subr.mxu0 0.0
        %4463 = vmatpush1.msra.mxu0 0.0
        %4464 = vmatprep.subr.mxu0 0.0
        %4465 = vmatpush1.msra.mxu0 0.0
        %4466 = vmatprep.subr.mxu0 0.0
        %4467 = vmatpush1.msra.mxu0 0.0
        %4468 = vmatprep.subr.mxu0 0.0
        %4469 = vmatpush1.msra.mxu0 0.0
        %4470 = vmatprep.subr.mxu0 0.0
        %4471 = vmatpush1.msra.mxu0 0.0
        %4472 = vmatprep.subr.mxu0 0.0
        %4473 = vmatpush1.msra.mxu0 0.0
        %4474 = vmatprep.subr.mxu0 0.0
        %4475 = vmatpush1.msra.mxu0 0.0
        %4476 = vmatprep.subr.mxu0 0.0
        %4477 = vmatpush1.msra.mxu0 0.0
        %4478 = vmatprep.subr.mxu0 0.0
        %4479 = vmatpush1.msra.mxu0 0.0
        %4480 = vmatprep.subr.mxu0 0.0
        %4481 = vmatpush1.msra.mxu0 0.0
        %4482 = vmatprep.subr.mxu0 0.0
        %4483 = vmatpush1.msra.mxu0 0.0
        %4484 = vmatprep.subr.mxu0 0.0
        %4485 = vmatpush1.msra.mxu0 0.0
        %4486 = vmatprep.subr.mxu0 0.0
        %4487 = vmatpush1.msra.mxu0 0.0
        %4488 = vmatprep.subr.mxu0 0.0
        %4489 = vmatpush1.msra.mxu0 0.0
        %4490 = vmatprep.subr.mxu0 0.0
        %4491 = vmatpush1.msra.mxu0 0.0
        %4492 = vmatprep.subr.mxu0 0.0
        %4493 = vmatpush1.msra.mxu0 0.0
        %4494 = vmatprep.subr.mxu0 0.0
        %4495 = vmatpush1.msra.mxu0 0.0
        %4496 = vmatprep.subr.mxu0 0.0
        %4497 = vmatpush1.msra.mxu0 0.0
        %4498 = vmatprep.subr.mxu0 0.0
        %4499 = vmatpush1.msra.mxu0 0.0
        %4500 = vmatprep.subr.mxu0 0.0
        %4501 = vmatpush1.msra.mxu0 0.0
        %4502 = vmatprep.subr.mxu0 0.0
        %4503 = vmatpush1.msra.mxu0 0.0
        %4504 = vmatprep.mubr.f32.mxu0 0.0
        %4505 = vmatmul.mubr.f32.gmra.mrb[0].mxu0 %v436
        %v4506 = vpop.f32.mrb[0].mxu0
        %v4507 = vadd.f32 %v306, %v4506
        %v4508 = vpop.f32.mrb[0].mxu0
        %4509 = vdwg.mxu0
        %v4510 = vmul.f32 %v4507, 0.0625
        %v4511 = vadd.f32 %v4332, %v4510
        %4512 = vmatprep.subr.mxu0 0.0
        %4513 = vmatpush1.msra.mxu0 %v4511
        %4514 = vmatprep.subr.mxu0 0.0
        %4515 = vmatpush1.msra.mxu0 0.0
        %4516 = vmatprep.subr.mxu0 0.0
        %4517 = vmatpush1.msra.mxu0 0.0
        %4518 = vmatprep.subr.mxu0 0.0
        %4519 = vmatpush1.msra.mxu0 0.0
        %4520 = vmatprep.subr.mxu0 0.0
        %4521 = vmatpush1.msra.mxu0 0.0
        %4522 = vmatprep.subr.mxu0 0.0
        %4523 = vmatpush1.msra.mxu0 0.0
        %4524 = vmatprep.subr.mxu0 0.0
        %4525 = vmatpush1.msra.mxu0 0.0
        %4526 = vmatprep.subr.mxu0 0.0
        %4527 = vmatpush1.msra.mxu0 0.0
        %4528 = vmatprep.subr.mxu0 0.0
        %4529 = vmatpush1.msra.mxu0 0.0
        %4530 = vmatprep.subr.mxu0 0.0
        %4531 = vmatpush1.msra.mxu0 0.0
        %4532 = vmatprep.subr.mxu0 0.0
        %4533 = vmatpush1.msra.mxu0 0.0
        %4534 = vmatprep.subr.mxu0 0.0
        %4535 = vmatpush1.msra.mxu0 0.0
        %4536 = vmatprep.subr.mxu0 0.0
        %4537 = vmatpush1.msra.mxu0 0.0
        %4538 = vmatprep.subr.mxu0 0.0
        %4539 = vmatpush1.msra.mxu0 0.0
        %4540 = vmatprep.subr.mxu0 0.0
        %4541 = vmatpush1.msra.mxu0 0.0
        %4542 = vmatprep.subr.mxu0 0.0
        %4543 = vmatpush1.msra.mxu0 0.0
        %4544 = vmatprep.subr.mxu0 0.0
        %4545 = vmatpush1.msra.mxu0 0.0
        %4546 = vmatprep.subr.mxu0 0.0
        %4547 = vmatpush1.msra.mxu0 0.0
        %4548 = vmatprep.subr.mxu0 0.0
        %4549 = vmatpush1.msra.mxu0 0.0
        %4550 = vmatprep.subr.mxu0 0.0
        %4551 = vmatpush1.msra.mxu0 0.0
        %4552 = vmatprep.subr.mxu0 0.0
        %4553 = vmatpush1.msra.mxu0 0.0
        %4554 = vmatprep.subr.mxu0 0.0
        %4555 = vmatpush1.msra.mxu0 0.0
        %4556 = vmatprep.subr.mxu0 0.0
        %4557 = vmatpush1.msra.mxu0 0.0
        %4558 = vmatprep.subr.mxu0 0.0
        %4559 = vmatpush1.msra.mxu0 0.0
        %4560 = vmatprep.subr.mxu0 0.0
        %4561 = vmatpush1.msra.mxu0 0.0
        %4562 = vmatprep.subr.mxu0 0.0
        %4563 = vmatpush1.msra.mxu0 0.0
        %4564 = vmatprep.subr.mxu0 0.0
        %4565 = vmatpush1.msra.mxu0 0.0
        %4566 = vmatprep.subr.mxu0 0.0
        %4567 = vmatpush1.msra.mxu0 0.0
        %4568 = vmatprep.subr.mxu0 0.0
        %4569 = vmatpush1.msra.mxu0 0.0
        %4570 = vmatprep.subr.mxu0 0.0
        %4571 = vmatpush1.msra.mxu0 0.0
        %4572 = vmatprep.subr.mxu0 0.0
        %4573 = vmatpush1.msra.mxu0 0.0
        %4574 = vmatprep.subr.mxu0 0.0
        %4575 = vmatpush1.msra.mxu0 0.0
        %4576 = vmatprep.mubr.f32.mxu0 0.0
        %4577 = vmatmul.mubr.f32.gmra.mrb[0].mxu0 %v334
        %v4578 = vpop.f32.mrb[0].mxu0
        %v4579 = vadd.f32 %v4339, %v4578
        %v4580 = vpop.f32.mrb[0].mxu0
        %4581 = vmatprep.mubr.f32.mxu0 0.0
        %4582 = vmatmul.mubr.f32.gmra.mrb[0].mxu0 %v337
        %v4583 = vpop.f32.mrb[0].mxu0
        %v4584 = vadd.f32 %v4340, %v4583
        %v4585 = vpop.f32.mrb[0].mxu0
        %4586 = vmatprep.mubr.f32.mxu0 0.0
        %4587 = vmatmul.mubr.f32.gmra.mrb[0].mxu0 %v340
        %v4588 = vpop.f32.mrb[0].mxu0
        %v4589 = vadd.f32 %v4341, %v4588
        %v4590 = vpop.f32.mrb[0].mxu0
        %4591 = vmatprep.mubr.f32.mxu0 0.0
        %4592 = vmatmul.mubr.f32.gmra.mrb[0].mxu0 %v343
        %v4593 = vpop.f32.mrb[0].mxu0
        %v4594 = vadd.f32 %v4342, %v4593
        %v4595 = vpop.f32.mrb[0].mxu0
        %4596 = vdwg.mxu0
        %v4597 = vtanh.pop %v4579
        %v4598 = vtanh.pop %v4584
        %v4599 = vtanh.pop %v4589
        %v4600 = vtanh.pop %v4594
        %4601 = vmatprep.subr.mxu0 0.0
        %4602 = vmatpush1.msra.mxu0 %v4597
        %4603 = vmatprep.subr.mxu0 0.0
        %4604 = vmatpush1.msra.mxu0 %v4598
        %4605 = vmatprep.subr.mxu0 0.0
        %4606 = vmatpush1.msra.mxu0 %v4599
        %4607 = vmatprep.subr.mxu0 0.0
        %4608 = vmatpush1.msra.mxu0 %v4600
        %4609 = vmatprep.subr.mxu0 0.0
        %4610 = vmatpush1.msra.mxu0 0.0
        %4611 = vmatprep.subr.mxu0 0.0
        %4612 = vmatpush1.msra.mxu0 0.0
        %4613 = vmatprep.subr.mxu0 0.0
        %4614 = vmatpush1.msra.mxu0 0.0
        %4615 = vmatprep.subr.mxu0 0.0
        %4616 = vmatpush1.msra.mxu0 0.0
        %4617 = vmatprep.subr.mxu0 0.0
        %4618 = vmatpush1.msra.mxu0 0.0
        %4619 = vmatprep.subr.mxu0 0.0
        %4620 = vmatpush1.msra.mxu0 0.0
        %4621 = vmatprep.subr.mxu0 0.0
        %4622 = vmatpush1.msra.mxu0 0.0
        %4623 = vmatprep.subr.mxu0 0.0
        %4624 = vmatpush1.msra.mxu0 0.0
        %4625 = vmatprep.subr.mxu0 0.0
        %4626 = vmatpush1.msra.mxu0 0.0
        %4627 = vmatprep.subr.mxu0 0.0
        %4628 = vmatpush1.msra.mxu0 0.0
        %4629 = vmatprep.subr.mxu0 0.0
        %4630 = vmatpush1.msra.mxu0 0.0
        %4631 = vmatprep.subr.mxu0 0.0
        %4632 = vmatpush1.msra.mxu0 0.0
        %4633 = vmatprep.subr.mxu0 0.0
        %4634 = vmatpush1.msra.mxu0 0.0
        %4635 = vmatprep.subr.mxu0 0.0
        %4636 = vmatpush1.msra.mxu0 0.0
        %4637 = vmatprep.subr.mxu0 0.0
        %4638 = vmatpush1.msra.mxu0 0.0
        %4639 = vmatprep.subr.mxu0 0.0
        %4640 = vmatpush1.msra.mxu0 0.0
        %4641 = vmatprep.subr.mxu0 0.0
        %4642 = vmatpush1.msra.mxu0 0.0
        %4643 = vmatprep.subr.mxu0 0.0
        %4644 = vmatpush1.msra.mxu0 0.0
        %4645 = vmatprep.subr.mxu0 0.0
        %4646 = vmatpush1.msra.mxu0 0.0
        %4647 = vmatprep.subr.mxu0 0.0
        %4648 = vmatpush1.msra.mxu0 0.0
        %4649 = vmatprep.subr.mxu0 0.0
        %4650 = vmatpush1.msra.mxu0 0.0
        %4651 = vmatprep.subr.mxu0 0.0
        %4652 = vmatpush1.msra.mxu0 0.0
        %4653 = vmatprep.subr.mxu0 0.0
        %4654 = vmatpush1.msra.mxu0 0.0
        %4655 = vmatprep.subr.mxu0 0.0
        %4656 = vmatpush1.msra.mxu0 0.0
        %4657 = vmatprep.subr.mxu0 0.0
        %4658 = vmatpush1.msra.mxu0 0.0
        %4659 = vmatprep.subr.mxu0 0.0
        %4660 = vmatpush1.msra.mxu0 0.0
        %4661 = vmatprep.subr.mxu0 0.0
        %4662 = vmatpush1.msra.mxu0 0.0
        %4663 = vmatprep.subr.mxu0 0.0
        %4664 = vmatpush1.msra.mxu0 0.0
        %4665 = vmatprep.mubr.f32.mxu0 0.0
        %4666 = vmatmul.mubr.f32.gmra.mrb[0].mxu0 %v436
        %v4667 = vpop.f32.mrb[0].mxu0
        %v4668 = vadd.f32 %v306, %v4667
        %v4669 = vpop.f32.mrb[0].mxu0
        %4670 = vdwg.mxu0
        %v4671 = vmul.f32 %v4668, 2.0
        %v4672 = vadd.f32 %v4507, %v4671
        %v4673 = vmul.f32 %v4668, 0.0625
        %v4674 = vadd.f32 %v4332, %v4673
        %4675 = vmatprep.subr.mxu0 0.0
        %4676 = vmatpush1.msra.mxu0 %v4674
        %4677 = vmatprep.subr.mxu0 0.0
        %4678 = vmatpush1.msra.mxu0 0.0
        %4679 = vmatprep.subr.mxu0 0.0
        %4680 = vmatpush1.msra.mxu0 0.0
        %4681 = vmatprep.subr.mxu0 0.0
        %4682 = vmatpush1.msra.mxu0 0.0
        %4683 = vmatprep.subr.mxu0 0.0
        %4684 = vmatpush1.msra.mxu0 0.0
        %4685 = vmatprep.subr.mxu0 0.0
        %4686 = vmatpush1.msra.mxu0 0.0
        %4687 = vmatprep.subr.mxu0 0.0
        %4688 = vmatpush1.msra.mxu0 0.0
        %4689 = vmatprep.subr.mxu0 0.0
        %4690 = vmatpush1.msra.mxu0 0.0
        %4691 = vmatprep.subr.mxu0 0.0
        %4692 = vmatpush1.msra.mxu0 0.0
        %4693 = vmatprep.subr.mxu0 0.0
        %4694 = vmatpush1.msra.mxu0 0.0
        %4695 = vmatprep.subr.mxu0 0.0
        %4696 = vmatpush1.msra.mxu0 0.0
        %4697 = vmatprep.subr.mxu0 0.0
        %4698 = vmatpush1.msra.mxu0 0.0
        %4699 = vmatprep.subr.mxu0 0.0
        %4700 = vmatpush1.msra.mxu0 0.0
        %4701 = vmatprep.subr.mxu0 0.0
        %4702 = vmatpush1.msra.mxu0 0.0
        %4703 = vmatprep.subr.mxu0 0.0
        %4704 = vmatpush1.msra.mxu0 0.0
        %4705 = vmatprep.subr.mxu0 0.0
        %4706 = vmatpush1.msra.mxu0 0.0
        %4707 = vmatprep.subr.mxu0 0.0
        %4708 = vmatpush1.msra.mxu0 0.0
        %4709 = vmatprep.subr.mxu0 0.0
        %4710 = vmatpush1.msra.mxu0 0.0
        %4711 = vmatprep.subr.mxu0 0.0
        %4712 = vmatpush1.msra.mxu0 0.0
        %4713 = vmatprep.subr.mxu0 0.0
        %4714 = vmatpush1.msra.mxu0 0.0
        %4715 = vmatprep.subr.mxu0 0.0
        %4716 = vmatpush1.msra.mxu0 0.0
        %4717 = vmatprep.subr.mxu0 0.0
        %4718 = vmatpush1.msra.mxu0 0.0
        %4719 = vmatprep.subr.mxu0 0.0
        %4720 = vmatpush1.msra.mxu0 0.0
        %4721 = vmatprep.subr.mxu0 0.0
        %4722 = vmatpush1.msra.mxu0 0.0
        %4723 = vmatprep.subr.mxu0 0.0
        %4724 = vmatpush1.msra.mxu0 0.0
        %4725 = vmatprep.subr.mxu0 0.0
        %4726 = vmatpush1.msra.mxu0 0.0
        %4727 = vmatprep.subr.mxu0 0.0
        %4728 = vmatpush1.msra.mxu0 0.0
        %4729 = vmatprep.subr.mxu0 0.0
        %4730 = vmatpush1.msra.mxu0 0.0
        %4731 = vmatprep.subr.mxu0 0.0
        %4732 = vmatpush1.msra.mxu0 0.0
        %4733 = vmatprep.subr.mxu0 0.0
        %4734 = vmatpush1.msra.mxu0 0.0
        %4735 = vmatprep.subr.mxu0 0.0
        %4736 = vmatpush1.msra.mxu0 0.0
        %4737 = vmatprep.subr.mxu0 0.0
        %4738 = vmatpush1.msra.mxu0 0.0
        %4739 = vmatprep.mubr.f32.mxu0 0.0
        %4740 = vmatmul.mubr.f32.gmra.mrb[0].mxu0 %v334
        %v4741 = vpop.f32.mrb[0].mxu0
        %v4742 = vadd.f32 %v4339, %v4741
        %v4743 = vpop.f32.mrb[0].mxu0
        %4744 = vmatprep.mubr.f32.mxu0 0.0
        %4745 = vmatmul.mubr.f32.gmra.mrb[0].mxu0 %v337
        %v4746 = vpop.f32.mrb[0].mxu0
        %v4747 = vadd.f32 %v4340, %v4746
        %v4748 = vpop.f32.mrb[0].mxu0
        %4749 = vmatprep.mubr.f32.mxu0 0.0
        %4750 = vmatmul.mubr.f32.gmra.mrb[0].mxu0 %v340
        %v4751 = vpop.f32.mrb[0].mxu0
        %v4752 = vadd.f32 %v4341, %v4751
        %v4753 = vpop.f32.mrb[0].mxu0
        %4754 = vmatprep.mubr.f32.mxu0 0.0
        %4755 = vmatmul.mubr.f32.gmra.mrb[0].mxu0 %v343
        %v4756 = vpop.f32.mrb[0].mxu0
        %v4757 = vadd.f32 %v4342, %v4756
        %v4758 = vpop.f32.mrb[0].mxu0
        %4759 = vdwg.mxu0
        %v4760 = vtanh.pop %v4742
        %v4761 = vtanh.pop %v4747
        %v4762 = vtanh.pop %v4752
        %v4763 = vtanh.pop %v4757
        %4764 = vmatprep.subr.mxu0 0.0
        %4765 = vmatpush1.msra.mxu0 %v4760
        %4766 = vmatprep.subr.mxu0 0.0
        %4767 = vmatpush1.msra.mxu0 %v4761
        %4768 = vmatprep.subr.mxu0 0.0
        %4769 = vmatpush1.msra.mxu0 %v4762
        %4770 = vmatprep.subr.mxu0 0.0
        %4771 = vmatpush1.msra.mxu0 %v4763
        %4772 = vmatprep.subr.mxu0 0.0
        %4773 = vmatpush1.msra.mxu0 0.0
        %4774 = vmatprep.subr.mxu0 0.0
        %4775 = vmatpush1.msra.mxu0 0.0
        %4776 = vmatprep.subr.mxu0 0.0
        %4777 = vmatpush1.msra.mxu0 0.0
        %4778 = vmatprep.subr.mxu0 0.0
        %4779 = vmatpush1.msra.mxu0 0.0
        %4780 = vmatprep.subr.mxu0 0.0
        %4781 = vmatpush1.msra.mxu0 0.0
        %4782 = vmatprep.subr.mxu0 0.0
        %4783 = vmatpush1.msra.mxu0 0.0
        %4784 = vmatprep.subr.mxu0 0.0
        %4785 = vmatpush1.msra.mxu0 0.0
        %4786 = vmatprep.subr.mxu0 0.0
        %4787 = vmatpush1.msra.mxu0 0.0
        %4788 = vmatprep.subr.mxu0 0.0
        %4789 = vmatpush1.msra.mxu0 0.0
        %4790 = vmatprep.subr.mxu0 0.0
        %4791 = vmatpush1.msra.mxu0 0.0
        %4792 = vmatprep.subr.mxu0 0.0
        %4793 = vmatpush1.msra.mxu0 0.0
        %4794 = vmatprep.subr.mxu0 0.0
        %4795 = vmatpush1.msra.mxu0 0.0
        %4796 = vmatprep.subr.mxu0 0.0
        %4797 = vmatpush1.msra.mxu0 0.0
        %4798 = vmatprep.subr.mxu0 0.0
        %4799 = vmatpush1.msra.mxu0 0.0
        %4800 = vmatprep.subr.mxu0 0.0
        %4801 = vmatpush1.msra.mxu0 0.0
        %4802 = vmatprep.subr.mxu0 0.0
        %4803 = vmatpush1.msra.mxu0 0.0
        %4804 = vmatprep.subr.mxu0 0.0
        %4805 = vmatpush1.msra.mxu0 0.0
        %4806 = vmatprep.subr.mxu0 0.0
        %4807 = vmatpush1.msra.mxu0 0.0
        %4808 = vmatprep.subr.mxu0 0.0
        %4809 = vmatpush1.msra.mxu0 0.0
        %4810 = vmatprep.subr.mxu0 0.0
        %4811 = vmatpush1.msra.mxu0 0.0
        %4812 = vmatprep.subr.mxu0 0.0
        %4813 = vmatpush1.msra.mxu0 0.0
        %4814 = vmatprep.subr.mxu0 0.0
        %4815 = vmatpush1.msra.mxu0 0.0
        %4816 = vmatprep.subr.mxu0 0.0
        %4817 = vmatpush1.msra.mxu0 0.0
        %4818 = vmatprep.subr.mxu0 0.0
        %4819 = vmatpush1.msra.mxu0 0.0
        %4820 = vmatprep.subr.mxu0 0.0
        %4821 = vmatpush1.msra.mxu0 0.0
        %4822 = vmatprep.subr.mxu0 0.0
        %4823 = vmatpush1.msra.mxu0 0.0
        %4824 = vmatprep.subr.mxu0 0.0
        %4825 = vmatpush1.msra.mxu0 0.0
        %4826 = vmatprep.subr.mxu0 0.0
        %4827 = vmatpush1.msra.mxu0 0.0
        %4828 = vmatprep.mubr.f32.mxu0 0.0
        %4829 = vmatmul.mubr.f32.gmra.mrb[0].mxu0 %v436
        %v4830 = vpop.f32.mrb[0].mxu0
        %v4831 = vadd.f32 %v306, %v4830
        %v4832 = vpop.f32.mrb[0].mxu0
        %4833 = vdwg.mxu0
        %v4834 = vmul.f32 %v4831, 2.0
        %v4835 = vadd.f32 %v4672, %v4834
        %v4836 = vmul.f32 %v4831, 0.125
        %v4837 = vadd.f32 %v4332, %v4836
        %4838 = vmatprep.subr.mxu0 0.0
        %4839 = vmatpush1.msra.mxu0 %v4837
        %4840 = vmatprep.subr.mxu0 0.0
        %4841 = vmatpush1.msra.mxu0 0.0
        %4842 = vmatprep.subr.mxu0 0.0
        %4843 = vmatpush1.msra.mxu0 0.0
        %4844 = vmatprep.subr.mxu0 0.0
        %4845 = vmatpush1.msra.mxu0 0.0
        %4846 = vmatprep.subr.mxu0 0.0
        %4847 = vmatpush1.msra.mxu0 0.0
        %4848 = vmatprep.subr.mxu0 0.0
        %4849 = vmatpush1.msra.mxu0 0.0
        %4850 = vmatprep.subr.mxu0 0.0
        %4851 = vmatpush1.msra.mxu0 0.0
        %4852 = vmatprep.subr.mxu0 0.0
        %4853 = vmatpush1.msra.mxu0 0.0
        %4854 = vmatprep.subr.mxu0 0.0
        %4855 = vmatpush1.msra.mxu0 0.0
        %4856 = vmatprep.subr.mxu0 0.0
        %4857 = vmatpush1.msra.mxu0 0.0
        %4858 = vmatprep.subr.mxu0 0.0
        %4859 = vmatpush1.msra.mxu0 0.0
        %4860 = vmatprep.subr.mxu0 0.0
        %4861 = vmatpush1.msra.mxu0 0.0
        %4862 = vmatprep.subr.mxu0 0.0
        %4863 = vmatpush1.msra.mxu0 0.0
        %4864 = vmatprep.subr.mxu0 0.0
        %4865 = vmatpush1.msra.mxu0 0.0
        %4866 = vmatprep.subr.mxu0 0.0
        %4867 = vmatpush1.msra.mxu0 0.0
        %4868 = vmatprep.subr.mxu0 0.0
        %4869 = vmatpush1.msra.mxu0 0.0
        %4870 = vmatprep.subr.mxu0 0.0
        %4871 = vmatpush1.msra.mxu0 0.0
        %4872 = vmatprep.subr.mxu0 0.0
        %4873 = vmatpush1.msra.mxu0 0.0
        %4874 = vmatprep.subr.mxu0 0.0
        %4875 = vmatpush1.msra.mxu0 0.0
        %4876 = vmatprep.subr.mxu0 0.0
        %4877 = vmatpush1.msra.mxu0 0.0
        %4878 = vmatprep.subr.mxu0 0.0
        %4879 = vmatpush1.msra.mxu0 0.0
        %4880 = vmatprep.subr.mxu0 0.0
        %4881 = vmatpush1.msra.mxu0 0.0
        %4882 = vmatprep.subr.mxu0 0.0
        %4883 = vmatpush1.msra.mxu0 0.0
        %4884 = vmatprep.subr.mxu0 0.0
        %4885 = vmatpush1.msra.mxu0 0.0
        %4886 = vmatprep.subr.mxu0 0.0
        %4887 = vmatpush1.msra.mxu0 0.0
        %4888 = vmatprep.subr.mxu0 0.0
        %4889 = vmatpush1.msra.mxu0 0.0
        %4890 = vmatprep.subr.mxu0 0.0
        %4891 = vmatpush1.msra.mxu0 0.0
        %4892 = vmatprep.subr.mxu0 0.0
        %4893 = vmatpush1.msra.mxu0 0.0
        %4894 = vmatprep.subr.mxu0 0.0
        %4895 = vmatpush1.msra.mxu0 0.0
        %4896 = vmatprep.subr.mxu0 0.0
        %4897 = vmatpush1.msra.mxu0 0.0
        %4898 = vmatprep.subr.mxu0 0.0
        %4899 = vmatpush1.msra.mxu0 0.0
        %4900 = vmatprep.subr.mxu0 0.0
        %4901 = vmatpush1.msra.mxu0 0.0
        %4902 = vmatprep.mubr.f32.mxu0 0.0
        %4903 = vmatmul.mubr.f32.gmra.mrb[0].mxu0 %v334
        %v4904 = vpop.f32.mrb[0].mxu0
        %v4905 = vadd.f32 %v4347, %v4904
        %v4906 = vpop.f32.mrb[0].mxu0
        %4907 = vmatprep.mubr.f32.mxu0 0.0
        %4908 = vmatmul.mubr.f32.gmra.mrb[0].mxu0 %v337
        %v4909 = vpop.f32.mrb[0].mxu0
        %v4910 = vadd.f32 %v4348, %v4909
        %v4911 = vpop.f32.mrb[0].mxu0
        %4912 = vmatprep.mubr.f32.mxu0 0.0
        %4913 = vmatmul.mubr.f32.gmra.mrb[0].mxu0 %v340
        %v4914 = vpop.f32.mrb[0].mxu0
        %v4915 = vadd.f32 %v4349, %v4914
        %v4916 = vpop.f32.mrb[0].mxu0
        %4917 = vmatprep.mubr.f32.mxu0 0.0
        %4918 = vmatmul.mubr.f32.gmra.mrb[0].mxu0 %v343
        %v4919 = vpop.f32.mrb[0].mxu0
        %v4920 = vadd.f32 %v4350, %v4919
        %v4921 = vpop.f32.mrb[0].mxu0
        %4922 = vdwg.mxu0
        %v4923 = vtanh.pop %v4905
        %v4924 = vtanh.pop %v4910
        %v4925 = vtanh.pop %v4915
        %v4926 = vtanh.pop %v4920
        %4927 = vmatprep.subr.mxu0 0.0
        %4928 = vmatpush1.msra.mxu0 %v4923
        %4929 = vmatprep.subr.mxu0 0.0
        %4930 = vmatpush1.msra.mxu0 %v4924
        %4931 = vmatprep.subr.mxu0 0.0
        %4932 = vmatpush1.msra.mxu0 %v4925
        %4933 = vmatprep.subr.mxu0 0.0
        %4934 = vmatpush1.msra.mxu0 %v4926
        %4935 = vmatprep.subr.mxu0 0.0
        %4936 = vmatpush1.msra.mxu0 0.0
        %4937 = vmatprep.subr.mxu0 0.0
        %4938 = vmatpush1.msra.mxu0 0.0
        %4939 = vmatprep.subr.mxu0 0.0
        %4940 = vmatpush1.msra.mxu0 0.0
        %4941 = vmatprep.subr.mxu0 0.0
        %4942 = vmatpush1.msra.mxu0 0.0
        %4943 = vmatprep.subr.mxu0 0.0
        %4944 = vmatpush1.msra.mxu0 0.0
        %4945 = vmatprep.subr.mxu0 0.0
        %4946 = vmatpush1.msra.mxu0 0.0
        %4947 = vmatprep.subr.mxu0 0.0
        %4948 = vmatpush1.msra.mxu0 0.0
        %4949 = vmatprep.subr.mxu0 0.0
        %4950 = vmatpush1.msra.mxu0 0.0
        %4951 = vmatprep.subr.mxu0 0.0
        %4952 = vmatpush1.msra.mxu0 0.0
        %4953 = vmatprep.subr.mxu0 0.0
        %4954 = vmatpush1.msra.mxu0 0.0
        %4955 = vmatprep.subr.mxu0 0.0
        %4956 = vmatpush1.msra.mxu0 0.0
        %4957 = vmatprep.subr.mxu0 0.0
        %4958 = vmatpush1.msra.mxu0 0.0
        %4959 = vmatprep.subr.mxu0 0.0
        %4960 = vmatpush1.msra.mxu0 0.0
        %4961 = vmatprep.subr.mxu0 0.0
        %4962 = vmatpush1.msra.mxu0 0.0
        %4963 = vmatprep.subr.mxu0 0.0
        %4964 = vmatpush1.msra.mxu0 0.0
        %4965 = vmatprep.subr.mxu0 0.0
        %4966 = vmatpush1.msra.mxu0 0.0
        %4967 = vmatprep.subr.mxu0 0.0
        %4968 = vmatpush1.msra.mxu0 0.0
        %4969 = vmatprep.subr.mxu0 0.0
        %4970 = vmatpush1.msra.mxu0 0.0
        %4971 = vmatprep.subr.mxu0 0.0
        %4972 = vmatpush1.msra.mxu0 0.0
        %4973 = vmatprep.subr.mxu0 0.0
        %4974 = vmatpush1.msra.mxu0 0.0
        %4975 = vmatprep.subr.mxu0 0.0
        %4976 = vmatpush1.msra.mxu0 0.0
        %4977 = vmatprep.subr.mxu0 0.0
        %4978 = vmatpush1.msra.mxu0 0.0
        %4979 = vmatprep.subr.mxu0 0.0
        %4980 = vmatpush1.msra.mxu0 0.0
        %4981 = vmatprep.subr.mxu0 0.0
        %4982 = vmatpush1.msra.mxu0 0.0
        %4983 = vmatprep.subr.mxu0 0.0
        %4984 = vmatpush1.msra.mxu0 0.0
        %4985 = vmatprep.subr.mxu0 0.0
        %4986 = vmatpush1.msra.mxu0 0.0
        %4987 = vmatprep.subr.mxu0 0.0
        %4988 = vmatpush1.msra.mxu0 0.0
        %4989 = vmatprep.subr.mxu0 0.0
        %4990 = vmatpush1.msra.mxu0 0.0
        %4991 = vmatprep.mubr.f32.mxu0 0.0
        %4992 = vmatmul.mubr.f32.gmra.mrb[0].mxu0 %v436
        %v4993 = vpop.f32.mrb[0].mxu0
        %v4994 = vadd.f32 %v306, %v4993
        %v4995 = vpop.f32.mrb[0].mxu0
        %4996 = vdwg.mxu0
        %v4997 = vadd.f32 %v4835, %v4994
        %v4998 = vmul.f32 %v4997, 0.020833334
        %v4999 = vadd.f32 %v4332, %v4998
        %s5000 = scalar_lea.vmem %s242, 56 [#allocation2]
        %5001 = vst [vmem:[%s5000] sm:$0xff] %v4999
        %v5002 = vmul.f32 %v261, 0.9375
        %v5003 = vmul.f32 %v266, 0.9375
        %v5004 = vmul.f32 %v271, 0.9375
        %v5005 = vmul.f32 %v276, 0.9375
        %v5006 = vadd.f32 %v5002, %v285
        %v5007 = vadd.f32 %v5003, %v290
        %v5008 = vadd.f32 %v5004, %v295
        %v5009 = vadd.f32 %v5005, %v300
        %v5010 = vadd.f32 %v261, %v285
        %v5011 = vadd.f32 %v266, %v290
        %v5012 = vadd.f32 %v271, %v295
        %v5013 = vadd.f32 %v276, %v300
        %5014 = vmatprep.subr.mxu0 0.0
        %5015 = vmatpush1.msra.mxu0 %v4999
        %5016 = vmatprep.subr.mxu0 0.0
        %5017 = vmatpush1.msra.mxu0 0.0
        %5018 = vmatprep.subr.mxu0 0.0
        %5019 = vmatpush1.msra.mxu0 0.0
        %5020 = vmatprep.subr.mxu0 0.0
        %5021 = vmatpush1.msra.mxu0 0.0
        %5022 = vmatprep.subr.mxu0 0.0
        %5023 = vmatpush1.msra.mxu0 0.0
        %5024 = vmatprep.subr.mxu0 0.0
        %5025 = vmatpush1.msra.mxu0 0.0
        %5026 = vmatprep.subr.mxu0 0.0
        %5027 = vmatpush1.msra.mxu0 0.0
        %5028 = vmatprep.subr.mxu0 0.0
        %5029 = vmatpush1.msra.mxu0 0.0
        %5030 = vmatprep.subr.mxu0 0.0
        %5031 = vmatpush1.msra.mxu0 0.0
        %5032 = vmatprep.subr.mxu0 0.0
        %5033 = vmatpush1.msra.mxu0 0.0
        %5034 = vmatprep.subr.mxu0 0.0
        %5035 = vmatpush1.msra.mxu0 0.0
        %5036 = vmatprep.subr.mxu0 0.0
        %5037 = vmatpush1.msra.mxu0 0.0
        %5038 = vmatprep.subr.mxu0 0.0
        %5039 = vmatpush1.msra.mxu0 0.0
        %5040 = vmatprep.subr.mxu0 0.0
        %5041 = vmatpush1.msra.mxu0 0.0
        %5042 = vmatprep.subr.mxu0 0.0
        %5043 = vmatpush1.msra.mxu0 0.0
        %5044 = vmatprep.subr.mxu0 0.0
        %5045 = vmatpush1.msra.mxu0 0.0
        %5046 = vmatprep.subr.mxu0 0.0
        %5047 = vmatpush1.msra.mxu0 0.0
        %5048 = vmatprep.subr.mxu0 0.0
        %5049 = vmatpush1.msra.mxu0 0.0
        %5050 = vmatprep.subr.mxu0 0.0
        %5051 = vmatpush1.msra.mxu0 0.0
        %5052 = vmatprep.subr.mxu0 0.0
        %5053 = vmatpush1.msra.mxu0 0.0
        %5054 = vmatprep.subr.mxu0 0.0
        %5055 = vmatpush1.msra.mxu0 0.0
        %5056 = vmatprep.subr.mxu0 0.0
        %5057 = vmatpush1.msra.mxu0 0.0
        %5058 = vmatprep.subr.mxu0 0.0
        %5059 = vmatpush1.msra.mxu0 0.0
        %5060 = vmatprep.subr.mxu0 0.0
        %5061 = vmatpush1.msra.mxu0 0.0
        %5062 = vmatprep.subr.mxu0 0.0
        %5063 = vmatpush1.msra.mxu0 0.0
        %5064 = vmatprep.subr.mxu0 0.0
        %5065 = vmatpush1.msra.mxu0 0.0
        %5066 = vmatprep.subr.mxu0 0.0
        %5067 = vmatpush1.msra.mxu0 0.0
        %5068 = vmatprep.subr.mxu0 0.0
        %5069 = vmatpush1.msra.mxu0 0.0
        %5070 = vmatprep.subr.mxu0 0.0
        %5071 = vmatpush1.msra.mxu0 0.0
        %5072 = vmatprep.subr.mxu0 0.0
        %5073 = vmatpush1.msra.mxu0 0.0
        %5074 = vmatprep.subr.mxu0 0.0
        %5075 = vmatpush1.msra.mxu0 0.0
        %5076 = vmatprep.subr.mxu0 0.0
        %5077 = vmatpush1.msra.mxu0 0.0
        %5078 = vmatprep.mubr.f32.mxu0 0.0
        %5079 = vmatmul.mubr.f32.gmra.mrb[0].mxu0 %v334
        %v5080 = vpop.f32.mrb[0].mxu0
        %v5081 = vadd.f32 %v4347, %v5080
        %v5082 = vpop.f32.mrb[0].mxu0
        %5083 = vmatprep.mubr.f32.mxu0 0.0
        %5084 = vmatmul.mubr.f32.gmra.mrb[0].mxu0 %v337
        %v5085 = vpop.f32.mrb[0].mxu0
        %v5086 = vadd.f32 %v4348, %v5085
        %v5087 = vpop.f32.mrb[0].mxu0
        %5088 = vmatprep.mubr.f32.mxu0 0.0
        %5089 = vmatmul.mubr.f32.gmra.mrb[0].mxu0 %v340
        %v5090 = vpop.f32.mrb[0].mxu0
        %v5091 = vadd.f32 %v4349, %v5090
        %v5092 = vpop.f32.mrb[0].mxu0
        %5093 = vmatprep.mubr.f32.mxu0 0.0
        %5094 = vmatmul.mubr.f32.gmra.mrb[0].mxu0 %v343
        %v5095 = vpop.f32.mrb[0].mxu0
        %v5096 = vadd.f32 %v4350, %v5095
        %v5097 = vpop.f32.mrb[0].mxu0
        %5098 = vdwg.mxu0
        %v5099 = vtanh.pop %v5081
        %v5100 = vtanh.pop %v5086
        %v5101 = vtanh.pop %v5091
        %v5102 = vtanh.pop %v5096
        %5103 = vmatprep.subr.mxu0 0.0
        %5104 = vmatpush1.msra.mxu0 %v5099
        %5105 = vmatprep.subr.mxu0 0.0
        %5106 = vmatpush1.msra.mxu0 %v5100
        %5107 = vmatprep.subr.mxu0 0.0
        %5108 = vmatpush1.msra.mxu0 %v5101
        %5109 = vmatprep.subr.mxu0 0.0
        %5110 = vmatpush1.msra.mxu0 %v5102
        %5111 = vmatprep.subr.mxu0 0.0
        %5112 = vmatpush1.msra.mxu0 0.0
        %5113 = vmatprep.subr.mxu0 0.0
        %5114 = vmatpush1.msra.mxu0 0.0
        %5115 = vmatprep.subr.mxu0 0.0
        %5116 = vmatpush1.msra.mxu0 0.0
        %5117 = vmatprep.subr.mxu0 0.0
        %5118 = vmatpush1.msra.mxu0 0.0
        %5119 = vmatprep.subr.mxu0 0.0
        %5120 = vmatpush1.msra.mxu0 0.0
        %5121 = vmatprep.subr.mxu0 0.0
        %5122 = vmatpush1.msra.mxu0 0.0
        %5123 = vmatprep.subr.mxu0 0.0
        %5124 = vmatpush1.msra.mxu0 0.0
        %5125 = vmatprep.subr.mxu0 0.0
        %5126 = vmatpush1.msra.mxu0 0.0
        %5127 = vmatprep.subr.mxu0 0.0
        %5128 = vmatpush1.msra.mxu0 0.0
        %5129 = vmatprep.subr.mxu0 0.0
        %5130 = vmatpush1.msra.mxu0 0.0
        %5131 = vmatprep.subr.mxu0 0.0
        %5132 = vmatpush1.msra.mxu0 0.0
        %5133 = vmatprep.subr.mxu0 0.0
        %5134 = vmatpush1.msra.mxu0 0.0
        %5135 = vmatprep.subr.mxu0 0.0
        %5136 = vmatpush1.msra.mxu0 0.0
        %5137 = vmatprep.subr.mxu0 0.0
        %5138 = vmatpush1.msra.mxu0 0.0
        %5139 = vmatprep.subr.mxu0 0.0
        %5140 = vmatpush1.msra.mxu0 0.0
        %5141 = vmatprep.subr.mxu0 0.0
        %5142 = vmatpush1.msra.mxu0 0.0
        %5143 = vmatprep.subr.mxu0 0.0
        %5144 = vmatpush1.msra.mxu0 0.0
        %5145 = vmatprep.subr.mxu0 0.0
        %5146 = vmatpush1.msra.mxu0 0.0
        %5147 = vmatprep.subr.mxu0 0.0
        %5148 = vmatpush1.msra.mxu0 0.0
        %5149 = vmatprep.subr.mxu0 0.0
        %5150 = vmatpush1.msra.mxu0 0.0
        %5151 = vmatprep.subr.mxu0 0.0
        %5152 = vmatpush1.msra.mxu0 0.0
        %5153 = vmatprep.subr.mxu0 0.0
        %5154 = vmatpush1.msra.mxu0 0.0
        %5155 = vmatprep.subr.mxu0 0.0
        %5156 = vmatpush1.msra.mxu0 0.0
        %5157 = vmatprep.subr.mxu0 0.0
        %5158 = vmatpush1.msra.mxu0 0.0
        %5159 = vmatprep.subr.mxu0 0.0
        %5160 = vmatpush1.msra.mxu0 0.0
        %5161 = vmatprep.subr.mxu0 0.0
        %5162 = vmatpush1.msra.mxu0 0.0
        %5163 = vmatprep.subr.mxu0 0.0
        %5164 = vmatpush1.msra.mxu0 0.0
        %5165 = vmatprep.subr.mxu0 0.0
        %5166 = vmatpush1.msra.mxu0 0.0
        %5167 = vmatprep.mubr.f32.mxu0 0.0
        %5168 = vmatmul.mubr.f32.gmra.mrb[0].mxu0 %v436
        %v5169 = vpop.f32.mrb[0].mxu0
        %v5170 = vadd.f32 %v306, %v5169
        %v5171 = vpop.f32.mrb[0].mxu0
        %5172 = vdwg.mxu0
        %v5173 = vmul.f32 %v5170, 0.0625
        %v5174 = vadd.f32 %v4999, %v5173
        %5175 = vmatprep.subr.mxu0 0.0
        %5176 = vmatpush1.msra.mxu0 %v5174
        %5177 = vmatprep.subr.mxu0 0.0
        %5178 = vmatpush1.msra.mxu0 0.0
        %5179 = vmatprep.subr.mxu0 0.0
        %5180 = vmatpush1.msra.mxu0 0.0
        %5181 = vmatprep.subr.mxu0 0.0
        %5182 = vmatpush1.msra.mxu0 0.0
        %5183 = vmatprep.subr.mxu0 0.0
        %5184 = vmatpush1.msra.mxu0 0.0
        %5185 = vmatprep.subr.mxu0 0.0
        %5186 = vmatpush1.msra.mxu0 0.0
        %5187 = vmatprep.subr.mxu0 0.0
        %5188 = vmatpush1.msra.mxu0 0.0
        %5189 = vmatprep.subr.mxu0 0.0
        %5190 = vmatpush1.msra.mxu0 0.0
        %5191 = vmatprep.subr.mxu0 0.0
        %5192 = vmatpush1.msra.mxu0 0.0
        %5193 = vmatprep.subr.mxu0 0.0
        %5194 = vmatpush1.msra.mxu0 0.0
        %5195 = vmatprep.subr.mxu0 0.0
        %5196 = vmatpush1.msra.mxu0 0.0
        %5197 = vmatprep.subr.mxu0 0.0
        %5198 = vmatpush1.msra.mxu0 0.0
        %5199 = vmatprep.subr.mxu0 0.0
        %5200 = vmatpush1.msra.mxu0 0.0
        %5201 = vmatprep.subr.mxu0 0.0
        %5202 = vmatpush1.msra.mxu0 0.0
        %5203 = vmatprep.subr.mxu0 0.0
        %5204 = vmatpush1.msra.mxu0 0.0
        %5205 = vmatprep.subr.mxu0 0.0
        %5206 = vmatpush1.msra.mxu0 0.0
        %5207 = vmatprep.subr.mxu0 0.0
        %5208 = vmatpush1.msra.mxu0 0.0
        %5209 = vmatprep.subr.mxu0 0.0
        %5210 = vmatpush1.msra.mxu0 0.0
        %5211 = vmatprep.subr.mxu0 0.0
        %5212 = vmatpush1.msra.mxu0 0.0
        %5213 = vmatprep.subr.mxu0 0.0
        %5214 = vmatpush1.msra.mxu0 0.0
        %5215 = vmatprep.subr.mxu0 0.0
        %5216 = vmatpush1.msra.mxu0 0.0
        %5217 = vmatprep.subr.mxu0 0.0
        %5218 = vmatpush1.msra.mxu0 0.0
        %5219 = vmatprep.subr.mxu0 0.0
        %5220 = vmatpush1.msra.mxu0 0.0
        %5221 = vmatprep.subr.mxu0 0.0
        %5222 = vmatpush1.msra.mxu0 0.0
        %5223 = vmatprep.subr.mxu0 0.0
        %5224 = vmatpush1.msra.mxu0 0.0
        %5225 = vmatprep.subr.mxu0 0.0
        %5226 = vmatpush1.msra.mxu0 0.0
        %5227 = vmatprep.subr.mxu0 0.0
        %5228 = vmatpush1.msra.mxu0 0.0
        %5229 = vmatprep.subr.mxu0 0.0
        %5230 = vmatpush1.msra.mxu0 0.0
        %5231 = vmatprep.subr.mxu0 0.0
        %5232 = vmatpush1.msra.mxu0 0.0
        %5233 = vmatprep.subr.mxu0 0.0
        %5234 = vmatpush1.msra.mxu0 0.0
        %5235 = vmatprep.subr.mxu0 0.0
        %5236 = vmatpush1.msra.mxu0 0.0
        %5237 = vmatprep.subr.mxu0 0.0
        %5238 = vmatpush1.msra.mxu0 0.0
        %5239 = vmatprep.mubr.f32.mxu0 0.0
        %5240 = vmatmul.mubr.f32.gmra.mrb[0].mxu0 %v334
        %v5241 = vpop.f32.mrb[0].mxu0
        %v5242 = vadd.f32 %v5006, %v5241
        %v5243 = vpop.f32.mrb[0].mxu0
        %5244 = vmatprep.mubr.f32.mxu0 0.0
        %5245 = vmatmul.mubr.f32.gmra.mrb[0].mxu0 %v337
        %v5246 = vpop.f32.mrb[0].mxu0
        %v5247 = vadd.f32 %v5007, %v5246
        %v5248 = vpop.f32.mrb[0].mxu0
        %5249 = vmatprep.mubr.f32.mxu0 0.0
        %5250 = vmatmul.mubr.f32.gmra.mrb[0].mxu0 %v340
        %v5251 = vpop.f32.mrb[0].mxu0
        %v5252 = vadd.f32 %v5008, %v5251
        %v5253 = vpop.f32.mrb[0].mxu0
        %5254 = vmatprep.mubr.f32.mxu0 0.0
        %5255 = vmatmul.mubr.f32.gmra.mrb[0].mxu0 %v343
        %v5256 = vpop.f32.mrb[0].mxu0
        %v5257 = vadd.f32 %v5009, %v5256
        %v5258 = vpop.f32.mrb[0].mxu0
        %5259 = vdwg.mxu0
        %v5260 = vtanh.pop %v5242
        %v5261 = vtanh.pop %v5247
        %v5262 = vtanh.pop %v5252
        %v5263 = vtanh.pop %v5257
        %5264 = vmatprep.subr.mxu0 0.0
        %5265 = vmatpush1.msra.mxu0 %v5260
        %5266 = vmatprep.subr.mxu0 0.0
        %5267 = vmatpush1.msra.mxu0 %v5261
        %5268 = vmatprep.subr.mxu0 0.0
        %5269 = vmatpush1.msra.mxu0 %v5262
        %5270 = vmatprep.subr.mxu0 0.0
        %5271 = vmatpush1.msra.mxu0 %v5263
        %5272 = vmatprep.subr.mxu0 0.0
        %5273 = vmatpush1.msra.mxu0 0.0
        %5274 = vmatprep.subr.mxu0 0.0
        %5275 = vmatpush1.msra.mxu0 0.0
        %5276 = vmatprep.subr.mxu0 0.0
        %5277 = vmatpush1.msra.mxu0 0.0
        %5278 = vmatprep.subr.mxu0 0.0
        %5279 = vmatpush1.msra.mxu0 0.0
        %5280 = vmatprep.subr.mxu0 0.0
        %5281 = vmatpush1.msra.mxu0 0.0
        %5282 = vmatprep.subr.mxu0 0.0
        %5283 = vmatpush1.msra.mxu0 0.0
        %5284 = vmatprep.subr.mxu0 0.0
        %5285 = vmatpush1.msra.mxu0 0.0
        %5286 = vmatprep.subr.mxu0 0.0
        %5287 = vmatpush1.msra.mxu0 0.0
        %5288 = vmatprep.subr.mxu0 0.0
        %5289 = vmatpush1.msra.mxu0 0.0
        %5290 = vmatprep.subr.mxu0 0.0
        %5291 = vmatpush1.msra.mxu0 0.0
        %5292 = vmatprep.subr.mxu0 0.0
        %5293 = vmatpush1.msra.mxu0 0.0
        %5294 = vmatprep.subr.mxu0 0.0
        %5295 = vmatpush1.msra.mxu0 0.0
        %5296 = vmatprep.subr.mxu0 0.0
        %5297 = vmatpush1.msra.mxu0 0.0
        %5298 = vmatprep.subr.mxu0 0.0
        %5299 = vmatpush1.msra.mxu0 0.0
        %5300 = vmatprep.subr.mxu0 0.0
        %5301 = vmatpush1.msra.mxu0 0.0
        %5302 = vmatprep.subr.mxu0 0.0
        %5303 = vmatpush1.msra.mxu0 0.0
        %5304 = vmatprep.subr.mxu0 0.0
        %5305 = vmatpush1.msra.mxu0 0.0
        %5306 = vmatprep.subr.mxu0 0.0
        %5307 = vmatpush1.msra.mxu0 0.0
        %5308 = vmatprep.subr.mxu0 0.0
        %5309 = vmatpush1.msra.mxu0 0.0
        %5310 = vmatprep.subr.mxu0 0.0
        %5311 = vmatpush1.msra.mxu0 0.0
        %5312 = vmatprep.subr.mxu0 0.0
        %5313 = vmatpush1.msra.mxu0 0.0
        %5314 = vmatprep.subr.mxu0 0.0
        %5315 = vmatpush1.msra.mxu0 0.0
        %5316 = vmatprep.subr.mxu0 0.0
        %5317 = vmatpush1.msra.mxu0 0.0
        %5318 = vmatprep.subr.mxu0 0.0
        %5319 = vmatpush1.msra.mxu0 0.0
        %5320 = vmatprep.subr.mxu0 0.0
        %5321 = vmatpush1.msra.mxu0 0.0
        %5322 = vmatprep.subr.mxu0 0.0
        %5323 = vmatpush1.msra.mxu0 0.0
        %5324 = vmatprep.subr.mxu0 0.0
        %5325 = vmatpush1.msra.mxu0 0.0
        %5326 = vmatprep.subr.mxu0 0.0
        %5327 = vmatpush1.msra.mxu0 0.0
        %5328 = vmatprep.mubr.f32.mxu0 0.0
        %5329 = vmatmul.mubr.f32.gmra.mrb[0].mxu0 %v436
        %v5330 = vpop.f32.mrb[0].mxu0
        %v5331 = vadd.f32 %v306, %v5330
        %v5332 = vpop.f32.mrb[0].mxu0
        %5333 = vdwg.mxu0
        %v5334 = vmul.f32 %v5331, 2.0
        %v5335 = vadd.f32 %v5170, %v5334
        %v5336 = vmul.f32 %v5331, 0.0625
        %v5337 = vadd.f32 %v4999, %v5336
        %5338 = vmatprep.subr.mxu0 0.0
        %5339 = vmatpush1.msra.mxu0 %v5337
        %5340 = vmatprep.subr.mxu0 0.0
        %5341 = vmatpush1.msra.mxu0 0.0
        %5342 = vmatprep.subr.mxu0 0.0
        %5343 = vmatpush1.msra.mxu0 0.0
        %5344 = vmatprep.subr.mxu0 0.0
        %5345 = vmatpush1.msra.mxu0 0.0
        %5346 = vmatprep.subr.mxu0 0.0
        %5347 = vmatpush1.msra.mxu0 0.0
        %5348 = vmatprep.subr.mxu0 0.0
        %5349 = vmatpush1.msra.mxu0 0.0
        %5350 = vmatprep.subr.mxu0 0.0
        %5351 = vmatpush1.msra.mxu0 0.0
        %5352 = vmatprep.subr.mxu0 0.0
        %5353 = vmatpush1.msra.mxu0 0.0
        %5354 = vmatprep.subr.mxu0 0.0
        %5355 = vmatpush1.msra.mxu0 0.0
        %5356 = vmatprep.subr.mxu0 0.0
        %5357 = vmatpush1.msra.mxu0 0.0
        %5358 = vmatprep.subr.mxu0 0.0
        %5359 = vmatpush1.msra.mxu0 0.0
        %5360 = vmatprep.subr.mxu0 0.0
        %5361 = vmatpush1.msra.mxu0 0.0
        %5362 = vmatprep.subr.mxu0 0.0
        %5363 = vmatpush1.msra.mxu0 0.0
        %5364 = vmatprep.subr.mxu0 0.0
        %5365 = vmatpush1.msra.mxu0 0.0
        %5366 = vmatprep.subr.mxu0 0.0
        %5367 = vmatpush1.msra.mxu0 0.0
        %5368 = vmatprep.subr.mxu0 0.0
        %5369 = vmatpush1.msra.mxu0 0.0
        %5370 = vmatprep.subr.mxu0 0.0
        %5371 = vmatpush1.msra.mxu0 0.0
        %5372 = vmatprep.subr.mxu0 0.0
        %5373 = vmatpush1.msra.mxu0 0.0
        %5374 = vmatprep.subr.mxu0 0.0
        %5375 = vmatpush1.msra.mxu0 0.0
        %5376 = vmatprep.subr.mxu0 0.0
        %5377 = vmatpush1.msra.mxu0 0.0
        %5378 = vmatprep.subr.mxu0 0.0
        %5379 = vmatpush1.msra.mxu0 0.0
        %5380 = vmatprep.subr.mxu0 0.0
        %5381 = vmatpush1.msra.mxu0 0.0
        %5382 = vmatprep.subr.mxu0 0.0
        %5383 = vmatpush1.msra.mxu0 0.0
        %5384 = vmatprep.subr.mxu0 0.0
        %5385 = vmatpush1.msra.mxu0 0.0
        %5386 = vmatprep.subr.mxu0 0.0
        %5387 = vmatpush1.msra.mxu0 0.0
        %5388 = vmatprep.subr.mxu0 0.0
        %5389 = vmatpush1.msra.mxu0 0.0
        %5390 = vmatprep.subr.mxu0 0.0
        %5391 = vmatpush1.msra.mxu0 0.0
        %5392 = vmatprep.subr.mxu0 0.0
        %5393 = vmatpush1.msra.mxu0 0.0
        %5394 = vmatprep.subr.mxu0 0.0
        %5395 = vmatpush1.msra.mxu0 0.0
        %5396 = vmatprep.subr.mxu0 0.0
        %5397 = vmatpush1.msra.mxu0 0.0
        %5398 = vmatprep.subr.mxu0 0.0
        %5399 = vmatpush1.msra.mxu0 0.0
        %5400 = vmatprep.subr.mxu0 0.0
        %5401 = vmatpush1.msra.mxu0 0.0
        %5402 = vmatprep.mubr.f32.mxu0 0.0
        %5403 = vmatmul.mubr.f32.gmra.mrb[0].mxu0 %v334
        %v5404 = vpop.f32.mrb[0].mxu0
        %v5405 = vadd.f32 %v5006, %v5404
        %v5406 = vpop.f32.mrb[0].mxu0
        %5407 = vmatprep.mubr.f32.mxu0 0.0
        %5408 = vmatmul.mubr.f32.gmra.mrb[0].mxu0 %v337
        %v5409 = vpop.f32.mrb[0].mxu0
        %v5410 = vadd.f32 %v5007, %v5409
        %v5411 = vpop.f32.mrb[0].mxu0
        %5412 = vmatprep.mubr.f32.mxu0 0.0
        %5413 = vmatmul.mubr.f32.gmra.mrb[0].mxu0 %v340
        %v5414 = vpop.f32.mrb[0].mxu0
        %v5415 = vadd.f32 %v5008, %v5414
        %v5416 = vpop.f32.mrb[0].mxu0
        %5417 = vmatprep.mubr.f32.mxu0 0.0
        %5418 = vmatmul.mubr.f32.gmra.mrb[0].mxu0 %v343
        %v5419 = vpop.f32.mrb[0].mxu0
        %v5420 = vadd.f32 %v5009, %v5419
        %v5421 = vpop.f32.mrb[0].mxu0
        %5422 = vdwg.mxu0
        %v5423 = vtanh.pop %v5405
        %v5424 = vtanh.pop %v5410
        %v5425 = vtanh.pop %v5415
        %v5426 = vtanh.pop %v5420
        %5427 = vmatprep.subr.mxu0 0.0
        %5428 = vmatpush1.msra.mxu0 %v5423
        %5429 = vmatprep.subr.mxu0 0.0
        %5430 = vmatpush1.msra.mxu0 %v5424
        %5431 = vmatprep.subr.mxu0 0.0
        %5432 = vmatpush1.msra.mxu0 %v5425
        %5433 = vmatprep.subr.mxu0 0.0
        %5434 = vmatpush1.msra.mxu0 %v5426
        %5435 = vmatprep.subr.mxu0 0.0
        %5436 = vmatpush1.msra.mxu0 0.0
        %5437 = vmatprep.subr.mxu0 0.0
        %5438 = vmatpush1.msra.mxu0 0.0
        %5439 = vmatprep.subr.mxu0 0.0
        %5440 = vmatpush1.msra.mxu0 0.0
        %5441 = vmatprep.subr.mxu0 0.0
        %5442 = vmatpush1.msra.mxu0 0.0
        %5443 = vmatprep.subr.mxu0 0.0
        %5444 = vmatpush1.msra.mxu0 0.0
        %5445 = vmatprep.subr.mxu0 0.0
        %5446 = vmatpush1.msra.mxu0 0.0
        %5447 = vmatprep.subr.mxu0 0.0
        %5448 = vmatpush1.msra.mxu0 0.0
        %5449 = vmatprep.subr.mxu0 0.0
        %5450 = vmatpush1.msra.mxu0 0.0
        %5451 = vmatprep.subr.mxu0 0.0
        %5452 = vmatpush1.msra.mxu0 0.0
        %5453 = vmatprep.subr.mxu0 0.0
        %5454 = vmatpush1.msra.mxu0 0.0
        %5455 = vmatprep.subr.mxu0 0.0
        %5456 = vmatpush1.msra.mxu0 0.0
        %5457 = vmatprep.subr.mxu0 0.0
        %5458 = vmatpush1.msra.mxu0 0.0
        %5459 = vmatprep.subr.mxu0 0.0
        %5460 = vmatpush1.msra.mxu0 0.0
        %5461 = vmatprep.subr.mxu0 0.0
        %5462 = vmatpush1.msra.mxu0 0.0
        %5463 = vmatprep.subr.mxu0 0.0
        %5464 = vmatpush1.msra.mxu0 0.0
        %5465 = vmatprep.subr.mxu0 0.0
        %5466 = vmatpush1.msra.mxu0 0.0
        %5467 = vmatprep.subr.mxu0 0.0
        %5468 = vmatpush1.msra.mxu0 0.0
        %5469 = vmatprep.subr.mxu0 0.0
        %5470 = vmatpush1.msra.mxu0 0.0
        %5471 = vmatprep.subr.mxu0 0.0
        %5472 = vmatpush1.msra.mxu0 0.0
        %5473 = vmatprep.subr.mxu0 0.0
        %5474 = vmatpush1.msra.mxu0 0.0
        %5475 = vmatprep.subr.mxu0 0.0
        %5476 = vmatpush1.msra.mxu0 0.0
        %5477 = vmatprep.subr.mxu0 0.0
        %5478 = vmatpush1.msra.mxu0 0.0
        %5479 = vmatprep.subr.mxu0 0.0
        %5480 = vmatpush1.msra.mxu0 0.0
        %5481 = vmatprep.subr.mxu0 0.0
        %5482 = vmatpush1.msra.mxu0 0.0
        %5483 = vmatprep.subr.mxu0 0.0
        %5484 = vmatpush1.msra.mxu0 0.0
        %5485 = vmatprep.subr.mxu0 0.0
        %5486 = vmatpush1.msra.mxu0 0.0
        %5487 = vmatprep.subr.mxu0 0.0
        %5488 = vmatpush1.msra.mxu0 0.0
        %5489 = vmatprep.subr.mxu0 0.0
        %5490 = vmatpush1.msra.mxu0 0.0
        %5491 = vmatprep.mubr.f32.mxu0 0.0
        %5492 = vmatmul.mubr.f32.gmra.mrb[0].mxu0 %v436
        %v5493 = vpop.f32.mrb[0].mxu0
        %v5494 = vadd.f32 %v306, %v5493
        %v5495 = vpop.f32.mrb[0].mxu0
        %5496 = vdwg.mxu0
        %v5497 = vmul.f32 %v5494, 2.0
        %v5498 = vadd.f32 %v5335, %v5497
        %v5499 = vmul.f32 %v5494, 0.125
        %v5500 = vadd.f32 %v4999, %v5499
        %5501 = vmatprep.subr.mxu0 0.0
        %5502 = vmatpush1.msra.mxu0 %v5500
        %5503 = vmatprep.subr.mxu0 0.0
        %5504 = vmatpush1.msra.mxu0 0.0
        %5505 = vmatprep.subr.mxu0 0.0
        %5506 = vmatpush1.msra.mxu0 0.0
        %5507 = vmatprep.subr.mxu0 0.0
        %5508 = vmatpush1.msra.mxu0 0.0
        %5509 = vmatprep.subr.mxu0 0.0
        %5510 = vmatpush1.msra.mxu0 0.0
        %5511 = vmatprep.subr.mxu0 0.0
        %5512 = vmatpush1.msra.mxu0 0.0
        %5513 = vmatprep.subr.mxu0 0.0
        %5514 = vmatpush1.msra.mxu0 0.0
        %5515 = vmatprep.subr.mxu0 0.0
        %5516 = vmatpush1.msra.mxu0 0.0
        %5517 = vmatprep.subr.mxu0 0.0
        %5518 = vmatpush1.msra.mxu0 0.0
        %5519 = vmatprep.subr.mxu0 0.0
        %5520 = vmatpush1.msra.mxu0 0.0
        %5521 = vmatprep.subr.mxu0 0.0
        %5522 = vmatpush1.msra.mxu0 0.0
        %5523 = vmatprep.subr.mxu0 0.0
        %5524 = vmatpush1.msra.mxu0 0.0
        %5525 = vmatprep.subr.mxu0 0.0
        %5526 = vmatpush1.msra.mxu0 0.0
        %5527 = vmatprep.subr.mxu0 0.0
        %5528 = vmatpush1.msra.mxu0 0.0
        %5529 = vmatprep.subr.mxu0 0.0
        %5530 = vmatpush1.msra.mxu0 0.0
        %5531 = vmatprep.subr.mxu0 0.0
        %5532 = vmatpush1.msra.mxu0 0.0
        %5533 = vmatprep.subr.mxu0 0.0
        %5534 = vmatpush1.msra.mxu0 0.0
        %5535 = vmatprep.subr.mxu0 0.0
        %5536 = vmatpush1.msra.mxu0 0.0
        %5537 = vmatprep.subr.mxu0 0.0
        %5538 = vmatpush1.msra.mxu0 0.0
        %5539 = vmatprep.subr.mxu0 0.0
        %5540 = vmatpush1.msra.mxu0 0.0
        %5541 = vmatprep.subr.mxu0 0.0
        %5542 = vmatpush1.msra.mxu0 0.0
        %5543 = vmatprep.subr.mxu0 0.0
        %5544 = vmatpush1.msra.mxu0 0.0
        %5545 = vmatprep.subr.mxu0 0.0
        %5546 = vmatpush1.msra.mxu0 0.0
        %5547 = vmatprep.subr.mxu0 0.0
        %5548 = vmatpush1.msra.mxu0 0.0
        %5549 = vmatprep.subr.mxu0 0.0
        %5550 = vmatpush1.msra.mxu0 0.0
        %5551 = vmatprep.subr.mxu0 0.0
        %5552 = vmatpush1.msra.mxu0 0.0
        %5553 = vmatprep.subr.mxu0 0.0
        %5554 = vmatpush1.msra.mxu0 0.0
        %5555 = vmatprep.subr.mxu0 0.0
        %5556 = vmatpush1.msra.mxu0 0.0
        %5557 = vmatprep.subr.mxu0 0.0
        %5558 = vmatpush1.msra.mxu0 0.0
        %5559 = vmatprep.subr.mxu0 0.0
        %5560 = vmatpush1.msra.mxu0 0.0
        %5561 = vmatprep.subr.mxu0 0.0
        %5562 = vmatpush1.msra.mxu0 0.0
        %5563 = vmatprep.subr.mxu0 0.0
        %5564 = vmatpush1.msra.mxu0 0.0
        %5565 = vmatprep.mubr.f32.mxu0 0.0
        %5566 = vmatmul.mubr.f32.gmra.mrb[0].mxu0 %v334
        %v5567 = vpop.f32.mrb[0].mxu0
        %v5568 = vadd.f32 %v5010, %v5567
        %v5569 = vpop.f32.mrb[0].mxu0
        %5570 = vmatprep.mubr.f32.mxu0 0.0
        %5571 = vmatmul.mubr.f32.gmra.mrb[0].mxu0 %v337
        %v5572 = vpop.f32.mrb[0].mxu0
        %v5573 = vadd.f32 %v5011, %v5572
        %v5574 = vpop.f32.mrb[0].mxu0
        %5575 = vmatprep.mubr.f32.mxu0 0.0
        %5576 = vmatmul.mubr.f32.gmra.mrb[0].mxu0 %v340
        %v5577 = vpop.f32.mrb[0].mxu0
        %v5578 = vadd.f32 %v5012, %v5577
        %v5579 = vpop.f32.mrb[0].mxu0
        %5580 = vmatprep.mubr.f32.mxu0 0.0
        %5581 = vmatmul.mubr.f32.gmra.mrb[0].mxu0 %v343
        %v5582 = vpop.f32.mrb[0].mxu0
        %v5583 = vadd.f32 %v5013, %v5582
        %v5584 = vpop.f32.mrb[0].mxu0
        %5585 = vdwg.mxu0
        %v5586 = vtanh.pop %v5568
        %v5587 = vtanh.pop %v5573
        %v5588 = vtanh.pop %v5578
        %v5589 = vtanh.pop %v5583
        %5590 = vmatprep.subr.mxu0 0.0
        %5591 = vmatpush1.msra.mxu0 %v5586
        %5592 = vmatprep.subr.mxu0 0.0
        %5593 = vmatpush1.msra.mxu0 %v5587
        %5594 = vmatprep.subr.mxu0 0.0
        %5595 = vmatpush1.msra.mxu0 %v5588
        %5596 = vmatprep.subr.mxu0 0.0
        %5597 = vmatpush1.msra.mxu0 %v5589
        %5598 = vmatprep.subr.mxu0 0.0
        %5599 = vmatpush1.msra.mxu0 0.0
        %5600 = vmatprep.subr.mxu0 0.0
        %5601 = vmatpush1.msra.mxu0 0.0
        %5602 = vmatprep.subr.mxu0 0.0
        %5603 = vmatpush1.msra.mxu0 0.0
        %5604 = vmatprep.subr.mxu0 0.0
        %5605 = vmatpush1.msra.mxu0 0.0
        %5606 = vmatprep.subr.mxu0 0.0
        %5607 = vmatpush1.msra.mxu0 0.0
        %5608 = vmatprep.subr.mxu0 0.0
        %5609 = vmatpush1.msra.mxu0 0.0
        %5610 = vmatprep.subr.mxu0 0.0
        %5611 = vmatpush1.msra.mxu0 0.0
        %5612 = vmatprep.subr.mxu0 0.0
        %5613 = vmatpush1.msra.mxu0 0.0
        %5614 = vmatprep.subr.mxu0 0.0
        %5615 = vmatpush1.msra.mxu0 0.0
        %5616 = vmatprep.subr.mxu0 0.0
        %5617 = vmatpush1.msra.mxu0 0.0
        %5618 = vmatprep.subr.mxu0 0.0
        %5619 = vmatpush1.msra.mxu0 0.0
        %5620 = vmatprep.subr.mxu0 0.0
        %5621 = vmatpush1.msra.mxu0 0.0
        %5622 = vmatprep.subr.mxu0 0.0
        %5623 = vmatpush1.msra.mxu0 0.0
        %5624 = vmatprep.subr.mxu0 0.0
        %5625 = vmatpush1.msra.mxu0 0.0
        %5626 = vmatprep.subr.mxu0 0.0
        %5627 = vmatpush1.msra.mxu0 0.0
        %5628 = vmatprep.subr.mxu0 0.0
        %5629 = vmatpush1.msra.mxu0 0.0
        %5630 = vmatprep.subr.mxu0 0.0
        %5631 = vmatpush1.msra.mxu0 0.0
        %5632 = vmatprep.subr.mxu0 0.0
        %5633 = vmatpush1.msra.mxu0 0.0
        %5634 = vmatprep.subr.mxu0 0.0
        %5635 = vmatpush1.msra.mxu0 0.0
        %5636 = vmatprep.subr.mxu0 0.0
        %5637 = vmatpush1.msra.mxu0 0.0
        %5638 = vmatprep.subr.mxu0 0.0
        %5639 = vmatpush1.msra.mxu0 0.0
        %5640 = vmatprep.subr.mxu0 0.0
        %5641 = vmatpush1.msra.mxu0 0.0
        %5642 = vmatprep.subr.mxu0 0.0
        %5643 = vmatpush1.msra.mxu0 0.0
        %5644 = vmatprep.subr.mxu0 0.0
        %5645 = vmatpush1.msra.mxu0 0.0
        %5646 = vmatprep.subr.mxu0 0.0
        %5647 = vmatpush1.msra.mxu0 0.0
        %5648 = vmatprep.subr.mxu0 0.0
        %5649 = vmatpush1.msra.mxu0 0.0
        %5650 = vmatprep.subr.mxu0 0.0
        %5651 = vmatpush1.msra.mxu0 0.0
        %5652 = vmatprep.subr.mxu0 0.0
        %5653 = vmatpush1.msra.mxu0 0.0
        %5654 = vmatprep.mubr.f32.mxu0 0.0
        %5655 = vmatmul.mubr.f32.gmra.mrb[0].mxu0 %v436
        %v5656 = vpop.f32.mrb[0].mxu0
        %v5657 = vadd.f32 %v306, %v5656
        %v5658 = vpop.f32.mrb[0].mxu0
        %5659 = vdwg.mxu0
        %v5660 = vadd.f32 %v5498, %v5657
        %v5661 = vmul.f32 %v5660, 0.020833334
        %v5662 = vadd.f32 %v4999, %v5661
        %s5663 = scalar_lea.vmem %s242, 64 [#allocation2]
        %5664 = vst [vmem:[%s5663] sm:$0xff] %v5662
        %s5665 = sand.u32 %s159, 1
        %s5666 = scalar_lea.sflag [#allocation3], %s5665
        %s5667 = sand.u32 %s159, 1
        %s5668 = smul.addr %s5667, 72
        %s5669 = scalar_lea.vmem [#allocation2], %s5668
        // Predicated region
        $region45: #{node_block_forward.1} parent=43 // pred_check
          %p5670 = pneg %p169
        $region46: #{node_block_forward.1} parent=43 // pred_check_branch
          %5672 = sbr.rel (%p5670) target = $region48
        $region47: #{node_block_forward.1} parent=43 // pred_region
          %s5674 = ssub.s32 1152, 1152
          %5675 = vsyncadd %s5666, %s5674
          %s5676 = smul.addr %s20, 128
          %s5677 = scalar_lea.hbm %s6, %s5676
          %s5678 = sshll.u32 %s5669, 4
          %s5679 = int_to_ptr.vmem [resolvable:$true] %s5678
          %5684 = dma.vmem_to_hbm [thread:$0]  %s5679, 1152, %s5677, %s5666, 128, 256, 8
        $region48: #{node_block_forward.1} parent=43 // pred_fallthru
          _
      $region44: #{node_block_forward.1} parent=5 // pred_fallthru
        _
      %p5685 = scmp.le.s32.totalorder 2, %s15
      // Predicated region
      $region49: #{node_block_forward.1} parent=5 // pred_check
        %p5686 = pneg %p5685
      $region50: #{node_block_forward.1} parent=5 // pred_check_branch
        %5688 = sbr.rel (%p5686) target = $region52
      $region51: #{node_block_forward.1} parent=5 // pred_region
        %s5689 = ssub.s32 %s15, 2
        // Predicated region
        $region53: #{node_block_forward.1} parent=51 // pred_check
          %p5690 = pneg %p175
        $region54: #{node_block_forward.1} parent=51 // pred_check_branch
          %5692 = sbr.rel (%p5690) target = $region56
        $region55: #{node_block_forward.1} parent=51 // pred_region
          %s5693 = sand.u32 %s160, 1
          %s5694 = scalar_lea.sflag [#allocation3], %s5693
          %s5695 = sand.u32 %s160, 1
          %s5696 = smul.addr %s5695, 72
          %s5697 = scalar_lea.vmem [#allocation2], %s5696
          %5698 = dma.done %s5694, 1152
        $region56: #{node_block_forward.1} parent=51 // pred_fallthru
          _
      $region52: #{node_block_forward.1} parent=5 // pred_fallthru
        _
    $region6: #{node_block_forward.1} parent=1 // loop_footer
      %s19 = sadd.s32 1, %s15
    $region7: #{node_block_forward.1} parent=1 // loop_footer_branch
      %14 = sbr.rel target = $region3
    $region8: #{node_block_forward.1} parent=1 // loop_exit
      _
    %5699 = vsyncpa [#allocation3], 1
    %s5700 = scalar_lea.sflag [#allocation3], 1
    %5701 = vsyncpa %s5700, 1

</llo_original>
